<compile_context>
chip_gen: v5e
topology: v5e:2x2
jax: 0.10.0
libtpu: 0.0.40
codegen_flags: <defaults>
</compile_context>

<pallas_src>
import jax
import jax.numpy as jnp
from jax.experimental import pallas as pl
from jax.experimental.pallas import tpu as pltpu

LANE = 128      # vreg lane width
SUB_BF16 = 16   # bf16 packs 2 rows per sublane -> align row tiles to 16

# bf16 MXU inputs, f32 accumulate. Set to jnp.float32 if bit-closer-to-PyTorch
# f32 numerics matter more than MXU throughput.
MATMUL_IN_DTYPE = jnp.bfloat16
ACT_DTYPE = jnp.bfloat16   # inter-stage activation dtype


def _round_up(x, m):
    return (x + m - 1) // m * m


def _pad_axis(x, axis, target):
    pad = target - x.shape[axis]
    if pad == 0:
        return x
    cfg = [(0, 0)] * x.ndim
    cfg[axis] = (0, pad)
    return jnp.pad(x, cfg)


def _choose_m_tiling(M, *, max_tile_m=256, min_tiles=2, align=SUB_BF16):
    """Balanced M tiling: >=2 tiles (both TCs on v7x), roughly equal tiles."""
    n_tiles = max(min_tiles, -(-M // max_tile_m))
    tm = _round_up(-(-M // n_tiles), align)
    return n_tiles, tm, n_tiles * tm


# ---------------------------------------------------------------------------
# Pallas kernels
# ---------------------------------------------------------------------------
def _conv_pool_kernel(c00_ref, c01_ref, c10_ref, c11_ref, w_ref, b_ref, o_ref):
    # Fused Conv2d + bias + MaxPool2d(2):
    #   o = max over the 4 pool-window positions of (cols @ W) + b
    # cols_*: [tm, Kp] bf16, w: [Kp, Cop] bf16, b: [1, Cop] f32 -> o: [tm, Cop] bf16.
    w = w_ref[...]
    m00 = jnp.dot(c00_ref[...], w, preferred_element_type=jnp.float32)
    m01 = jnp.dot(c01_ref[...], w, preferred_element_type=jnp.float32)
    m10 = jnp.dot(c10_ref[...], w, preferred_element_type=jnp.float32)
    m11 = jnp.dot(c11_ref[...], w, preferred_element_type=jnp.float32)
    m = jnp.maximum(jnp.maximum(m00, m01), jnp.maximum(m10, m11))
    o_ref[...] = (m + b_ref[...]).astype(o_ref.dtype)


def _fused_linear_kernel(x_ref, w1_ref, b1_ref, w2_ref, b2_ref, o_ref):
    # Two chained matmuls; the [Mp, 128] intermediate stays in VMEM/vregs.
    h = (
        jnp.dot(x_ref[...], w1_ref[...], preferred_element_type=jnp.float32)
        + b1_ref[...]
    )
    o_ref[...] = (
        jnp.dot(h.astype(w2_ref.dtype), w2_ref[...],
                preferred_element_type=jnp.float32)
        + b2_ref[...]
    )


# ---------------------------------------------------------------------------
# Pallas wrappers
# ---------------------------------------------------------------------------
def conv_pool_stage(x_nhwc, w_packed, b_packed, *, kh, kw, padding):
    """Fused PyTorch Conv2d(stride 1, symmetric padding) + MaxPool2d(2) (floor).

    x_nhwc:   [N, H, W, C]   (C may be lane-padded; padded channels are zero)
    w_packed: [round_up(kh*kw*C, 128), Cop] bf16, prepacked
    b_packed: [1, Cop] f32, prepacked
    Returns   [N, Ho//2, Wo//2, Cop] in ACT_DTYPE (Cop lane-padded channels).
    """
    N, H, W, C = x_nhwc.shape
    Ho = H + 2 * padding - kh + 1
    Wo = W + 2 * padding - kw + 1
    hop, wop = Ho // 2, Wo // 2
    M = N * hop * wop
    K = kh * kw * C
    Kp, Cop = w_packed.shape
    assert Kp == _round_up(K, LANE) and Cop % LANE == 0

    xp = jnp.pad(x_nhwc, ((0, 0), (padding, padding), (padding, padding), (0, 0)))
    xp = xp.astype(MATMUL_IN_DTYPE)

    n_tiles, tm, Mp = _choose_m_tiling(M)

    # One im2col view per 2x2 pool-window offset (dy, dx); only the conv output
    # pixels the pool actually consumes are ever computed.
    views = []
    for dy in range(2):
        for dx in range(2):
            slabs = []
            for i in range(kh):
                for j in range(kw):
                    hs, ws = dy + i, dx + j
                    slabs.append(
                        xp[:, hs:hs + 2 * (hop - 1) + 1:2,
                              ws:ws + 2 * (wop - 1) + 1:2, :])
            cols = jnp.concatenate(slabs, axis=-1).reshape(M, K)
            views.append(_pad_axis(_pad_axis(cols, 1, Kp), 0, Mp))

    out = pl.pallas_call(
        _conv_pool_kernel,
        out_shape=jax.ShapeDtypeStruct((Mp, Cop), ACT_DTYPE),
        grid=(n_tiles,),
        in_specs=[pl.BlockSpec((tm, Kp), lambda i: (i, 0))] * 4
        + [pl.BlockSpec((Kp, Cop), lambda i: (0, 0)),   # weight resident
           pl.BlockSpec((1, Cop), lambda i: (0, 0))],
        out_specs=pl.BlockSpec((tm, Cop), lambda i: (i, 0)),
        compiler_params=pltpu.CompilerParams(
            dimension_semantics=("parallel",)),
    )(*views, w_packed, b_packed)

    if Mp != M:
        out = out[:M]
    return out.reshape(N, hop, wop, Cop)


def fused_linear(x2d, w1p, b1p, w2p, b2p, *, n_out):
    """x2d [M, K1p] -> Linear1 -> Linear2, one pallas_call. Weights prepacked."""
    M, K1 = x2d.shape
    K1p, N1p = w1p.shape
    _, N2p = w2p.shape
    assert K1 == K1p
    Mp = _round_up(max(M, SUB_BF16), SUB_BF16)
    xp = _pad_axis(x2d.astype(MATMUL_IN_DTYPE), 0, Mp)

    out = pl.pallas_call(
        _fused_linear_kernel,
        out_shape=jax.ShapeDtypeStruct((Mp, N2p), jnp.float32),
        grid=(1,),
        in_specs=[
            pl.BlockSpec((Mp, K1p), lambda i: (0, 0)),
            pl.BlockSpec((K1p, N1p), lambda i: (0, 0)),
            pl.BlockSpec((1, N1p), lambda i: (0, 0)),
            pl.BlockSpec((N1p, N2p), lambda i: (0, 0)),
            pl.BlockSpec((1, N2p), lambda i: (0, 0)),
        ],
        out_specs=pl.BlockSpec((Mp, N2p), lambda i: (0, 0)),
    )(xp, w1p, b1p, w2p, b2p)
    return out[:M, :n_out]


# ---------------------------------------------------------------------------
# Parameters (torch layout) and one-time prepacking
# ---------------------------------------------------------------------------
def init_params(key):
    ks = jax.random.split(key, 10)
    scale = 0.05
    return {
        "w1": scale * jax.random.normal(ks[0], (32, 3, 5, 5), jnp.float32),
        "b1": scale * jax.random.normal(ks[1], (32,), jnp.float32),
        "w2": scale * jax.random.normal(ks[2], (32, 32, 2, 2), jnp.float32),
        "b2": scale * jax.random.normal(ks[3], (32,), jnp.float32),
        "w3": scale * jax.random.normal(ks[4], (64, 32, 5, 5), jnp.float32),
        "b3": scale * jax.random.normal(ks[5], (64,), jnp.float32),
        "fw1": scale * jax.random.normal(ks[6], (64, 1024), jnp.float32),  # torch Linear: [out, in]
        "fb1": scale * jax.random.normal(ks[7], (64,), jnp.float32),
        "fw2": scale * jax.random.normal(ks[8], (10, 64), jnp.float32),
        "fb2": scale * jax.random.normal(ks[9], (10,), jnp.float32),
    }


def prepack_params(p):
    """One-time packing (outside the jitted forward): transpose to (kh,kw,Ci,Co),
    zero-pad channels/K/N to 128 lanes, cast to the MXU input dtype, and fold the
    pre-Flatten (C,H,W) permutation into fw1's column order."""
    def pack_conv(w, b, cin_pad, cout_pad):
        co, ci, kh, kw = w.shape
        wt = jnp.transpose(w, (2, 3, 1, 0))                 # [kh, kw, Ci, Co]
        wf = jnp.zeros((kh, kw, cin_pad, cout_pad), jnp.float32)
        wf = wf.at[:, :, :ci, :co].set(wt)
        k = kh * kw * cin_pad
        wp = _pad_axis(wf.reshape(k, cout_pad), 0, _round_up(k, LANE))
        bp = _pad_axis(b.reshape(1, co), 1, cout_pad).astype(jnp.float32)
        return wp.astype(MATMUL_IN_DTYPE), bp

    c1 = pack_conv(p["w1"], p["b1"], 3, LANE)      # K: 75  -> 128
    c2 = pack_conv(p["w2"], p["b2"], LANE, LANE)   # K: 512 (channels kept padded)
    c3 = pack_conv(p["w3"], p["b3"], LANE, LANE)   # K: 3200

    # Linear1: activation is flattened as (h, w, c_padded); PyTorch Flatten is
    # (c, h, w) -> permute fw1's columns instead of transposing the activation.
    fw1_4d = p["fw1"].reshape(64, 64, 4, 4)               # (out, c, h, w)
    fw1_hwco = jnp.transpose(fw1_4d, (2, 3, 1, 0))        # (h, w, c, out)
    fw1_full = jnp.zeros((4, 4, LANE, LANE), jnp.float32)
    fw1_full = fw1_full.at[:, :, :64, :64].set(fw1_hwco)
    fw1p = fw1_full.reshape(4 * 4 * LANE, LANE).astype(MATMUL_IN_DTYPE)  # [2048, 128]
    fb1p = _pad_axis(p["fb1"].reshape(1, 64), 1, LANE).astype(jnp.float32)

    fw2_full = jnp.zeros((LANE, LANE), jnp.float32)
    fw2_full = fw2_full.at[:64, :10].set(p["fw2"].T)
    fw2p = fw2_full.astype(MATMUL_IN_DTYPE)
    fb2p = _pad_axis(p["fb2"].reshape(1, 10), 1, LANE).astype(jnp.float32)

    return {"c1": c1, "c2": c2, "c3": c3, "lin": (fw1p, fb1p, fw2p, fb2p)}


# ---------------------------------------------------------------------------
# Gration forward (4 pallas_calls total)
# ---------------------------------------------------------------------------
def gration_forward(x_nchw, pk):
    # Single layout conversion at the model boundary; everything else is NHWC
    # with channels lane-padded to 128.
    x = jnp.transpose(x_nchw, (0, 2, 3, 1))                       # [N, 32, 32, 3]
    x = conv_pool_stage(x, *pk["c1"], kh=5, kw=5, padding=2)      # [N, 16, 16, 128] (32 real)
    x = conv_pool_stage(x, *pk["c2"], kh=2, kw=2, padding=2)      # [N,  9,  9, 128] (32 real)
    x = conv_pool_stage(x, *pk["c3"], kh=5, kw=5, padding=2)      # [N,  4,  4, 128] (64 real)
    N = x.shape[0]
    x2d = x.reshape(N, 4 * 4 * LANE)      # Flatten order already folded into fw1
    return fused_linear(x2d, *pk["lin"], n_out=10)                # [N, 10] f32


if __name__ == "__main__":
    key = jax.random.PRNGKey(0)
    k_x, k_p = jax.random.split(key)
    x = jax.random.normal(k_x, (2, 3, 32, 32), jnp.float32)  # NCHW, like PyTorch
    params = init_params(k_p)
    packed = prepack_params(params)   # one-time weight packing, outside the jit

    fwd = jax.jit(gration_forward)
    out = fwd(x, packed)
    jax.block_until_ready(out)

    assert out.shape == (2, 10), out.shape
    assert out.dtype == jnp.float32
    assert bool(jnp.all(jnp.isfinite(out)))
    print("KERNEL_OK")
</pallas_src>

<mosaic_0001>
module attributes {stable_mosaic.version = 11 : i64} {
  func.func @_conv_pool_kernel(%arg0: i32, %arg1: memref<256x128xbf16, #tpu.memory_space<vmem>>, %arg2: memref<256x128xbf16, #tpu.memory_space<vmem>>, %arg3: memref<256x128xbf16, #tpu.memory_space<vmem>>, %arg4: memref<256x128xbf16, #tpu.memory_space<vmem>>, %arg5: memref<128x128xbf16, #tpu.memory_space<vmem>>, %arg6: memref<1x128xf32, #tpu.memory_space<vmem>>, %arg7: memref<256x128xbf16, #tpu.memory_space<vmem>>) attributes {dimension_semantics = [#tpu.dimension_semantics<parallel>], iteration_bounds = array<i64: 2>, scalar_prefetch = 0 : i64, scratch_operands = 0 : i64, tpu.core_type = #tpu.core_type<tc>, window_params = [{transform_indices = @transform_0, window_bounds = array<i64: 256, 128>}, {transform_indices = @transform_1, window_bounds = array<i64: 256, 128>}, {transform_indices = @transform_2, window_bounds = array<i64: 256, 128>}, {transform_indices = @transform_3, window_bounds = array<i64: 256, 128>}, {pipeline_mode = #tpu.pipeline_mode<synchronous>, transform_indices = @transform_4, window_bounds = array<i64: 128, 128>}, {pipeline_mode = #tpu.pipeline_mode<synchronous>, transform_indices = @transform_5, window_bounds = array<i64: 1, 128>}, {transform_indices = @transform_6, window_bounds = array<i64: 256, 128>}]} {
    %c0 = arith.constant 0 : index
    %c0_0 = arith.constant 0 : index
    %0 = vector.load %arg5[%c0, %c0_0] : memref<128x128xbf16, #tpu.memory_space<vmem>>, vector<128x128xbf16>
    %c0_1 = arith.constant 0 : index
    %c0_2 = arith.constant 0 : index
    %1 = vector.load %arg1[%c0_1, %c0_2] : memref<256x128xbf16, #tpu.memory_space<vmem>>, vector<256x128xbf16>
    %cst = arith.constant dense<0.000000e+00> : vector<256x128xf32>
    %2 = tpu.matmul %1, %0, %cst {dimension_numbers = #tpu.dot_dimension_numbers<[1], [0], [0], [1], [0, 0, 1, 1], [], []>} : vector<256x128xbf16>, vector<128x128xbf16>, vector<256x128xf32> -> vector<256x128xf32>
    %c0_3 = arith.constant 0 : index
    %c0_4 = arith.constant 0 : index
    %3 = vector.load %arg2[%c0_3, %c0_4] : memref<256x128xbf16, #tpu.memory_space<vmem>>, vector<256x128xbf16>
    %cst_5 = arith.constant dense<0.000000e+00> : vector<256x128xf32>
    %4 = tpu.matmul %3, %0, %cst_5 {dimension_numbers = #tpu.dot_dimension_numbers<[1], [0], [0], [1], [0, 0, 1, 1], [], []>} : vector<256x128xbf16>, vector<128x128xbf16>, vector<256x128xf32> -> vector<256x128xf32>
    %c0_6 = arith.constant 0 : index
    %c0_7 = arith.constant 0 : index
    %5 = vector.load %arg3[%c0_6, %c0_7] : memref<256x128xbf16, #tpu.memory_space<vmem>>, vector<256x128xbf16>
    %cst_8 = arith.constant dense<0.000000e+00> : vector<256x128xf32>
    %6 = tpu.matmul %5, %0, %cst_8 {dimension_numbers = #tpu.dot_dimension_numbers<[1], [0], [0], [1], [0, 0, 1, 1], [], []>} : vector<256x128xbf16>, vector<128x128xbf16>, vector<256x128xf32> -> vector<256x128xf32>
    %c0_9 = arith.constant 0 : index
    %c0_10 = arith.constant 0 : index
    %7 = vector.load %arg4[%c0_9, %c0_10] : memref<256x128xbf16, #tpu.memory_space<vmem>>, vector<256x128xbf16>
    %cst_11 = arith.constant dense<0.000000e+00> : vector<256x128xf32>
    %8 = tpu.matmul %7, %0, %cst_11 {dimension_numbers = #tpu.dot_dimension_numbers<[1], [0], [0], [1], [0, 0, 1, 1], [], []>} : vector<256x128xbf16>, vector<128x128xbf16>, vector<256x128xf32> -> vector<256x128xf32>
    %9 = arith.maximumf %2, %4 : vector<256x128xf32>
    %10 = arith.maximumf %6, %8 : vector<256x128xf32>
    %11 = arith.maximumf %9, %10 : vector<256x128xf32>
    %c0_12 = arith.constant 0 : index
    %c0_13 = arith.constant 0 : index
    %12 = vector.load %arg6[%c0_12, %c0_13] : memref<1x128xf32, #tpu.memory_space<vmem>>, vector<1x128xf32>
    %13 = vector.broadcast %12 : vector<1x128xf32> to vector<256x128xf32>
    %14 = arith.addf %11, %13 : vector<256x128xf32>
    %15 = arith.truncf %14 : vector<256x128xf32> to vector<256x128xbf16>
    %c0_14 = arith.constant 0 : index
    %c0_15 = arith.constant 0 : index
    %16 = vector.load %arg7[%c0_14, %c0_15] : memref<256x128xbf16, #tpu.memory_space<vmem>>, vector<256x128xbf16>
    tpu.vector_store %arg7[%c0_14, %c0_15], %15 {strides = array<i32>} : memref<256x128xbf16, #tpu.memory_space<vmem>>, vector<256x128xbf16>,
    return
  }
  func.func @transform_0(%arg0: i32) -> (i32, i32) {
    %c0_i32 = arith.constant 0 : i32
    %c0_i32_0 = arith.constant 0 : i32
    return %arg0, %c0_i32 : i32, i32
  }
  func.func @transform_1(%arg0: i32) -> (i32, i32) {
    %c0_i32 = arith.constant 0 : i32
    %c0_i32_0 = arith.constant 0 : i32
    return %arg0, %c0_i32 : i32, i32
  }
  func.func @transform_2(%arg0: i32) -> (i32, i32) {
    %c0_i32 = arith.constant 0 : i32
    %c0_i32_0 = arith.constant 0 : i32
    return %arg0, %c0_i32 : i32, i32
  }
  func.func @transform_3(%arg0: i32) -> (i32, i32) {
    %c0_i32 = arith.constant 0 : i32
    %c0_i32_0 = arith.constant 0 : i32
    return %arg0, %c0_i32 : i32, i32
  }
  func.func @transform_4(%arg0: i32) -> (i32, i32) {
    %c0_i32 = arith.constant 0 : i32
    %c0_i32_0 = arith.constant 0 : i32
    %c0_i32_1 = arith.constant 0 : i32
    return %c0_i32, %c0_i32_0 : i32, i32
  }
  func.func @transform_5(%arg0: i32) -> (i32, i32) {
    %c0_i32 = arith.constant 0 : i32
    %c0_i32_0 = arith.constant 0 : i32
    %c0_i32_1 = arith.constant 0 : i32
    return %c0_i32, %c0_i32_0 : i32, i32
  }
  func.func @transform_6(%arg0: i32) -> (i32, i32) {
    %c0_i32 = arith.constant 0 : i32
    %c0_i32_0 = arith.constant 0 : i32
    return %arg0, %c0_i32 : i32, i32
  }
}

module attributes {stable_mosaic.version = 11 : i64} {
  func.func @_conv_pool_kernel(%arg0: i32, %arg1: memref<96x512xbf16, #tpu.memory_space<vmem>>, %arg2: memref<96x512xbf16, #tpu.memory_space<vmem>>, %arg3: memref<96x512xbf16, #tpu.memory_space<vmem>>, %arg4: memref<96x512xbf16, #tpu.memory_space<vmem>>, %arg5: memref<512x128xbf16, #tpu.memory_space<vmem>>, %arg6: memref<1x128xf32, #tpu.memory_space<vmem>>, %arg7: memref<96x128xbf16, #tpu.memory_space<vmem>>) attributes {dimension_semantics = [#tpu.dimension_semantics<parallel>], iteration_bounds = array<i64: 2>, scalar_prefetch = 0 : i64, scratch_operands = 0 : i64, tpu.core_type = #tpu.core_type<tc>, window_params = [{transform_indices = @transform_0, window_bounds = array<i64: 96, 512>}, {transform_indices = @transform_1, window_bounds = array<i64: 96, 512>}, {transform_indices = @transform_2, window_bounds = array<i64: 96, 512>}, {transform_indices = @transform_3, window_bounds = array<i64: 96, 512>}, {pipeline_mode = #tpu.pipeline_mode<synchronous>, transform_indices = @transform_4, window_bounds = array<i64: 512, 128>}, {pipeline_mode = #tpu.pipeline_mode<synchronous>, transform_indices = @transform_5, window_bounds = array<i64: 1, 128>}, {transform_indices = @transform_6, window_bounds = array<i64: 96, 128>}]} {
    %c0 = arith.constant 0 : index
    %c0_0 = arith.constant 0 : index
    %0 = vector.load %arg5[%c0, %c0_0] : memref<512x128xbf16, #tpu.memory_space<vmem>>, vector<512x128xbf16>
    %c0_1 = arith.constant 0 : index
    %c0_2 = arith.constant 0 : index
    %1 = vector.load %arg1[%c0_1, %c0_2] : memref<96x512xbf16, #tpu.memory_space<vmem>>, vector<96x512xbf16>
    %cst = arith.constant dense<0.000000e+00> : vector<96x128xf32>
    %2 = tpu.matmul %1, %0, %cst {dimension_numbers = #tpu.dot_dimension_numbers<[1], [0], [0], [1], [0, 0, 1, 1], [], []>} : vector<96x512xbf16>, vector<512x128xbf16>, vector<96x128xf32> -> vector<96x128xf32>
    %c0_3 = arith.constant 0 : index
    %c0_4 = arith.constant 0 : index
    %3 = vector.load %arg2[%c0_3, %c0_4] : memref<96x512xbf16, #tpu.memory_space<vmem>>, vector<96x512xbf16>
    %cst_5 = arith.constant dense<0.000000e+00> : vector<96x128xf32>
    %4 = tpu.matmul %3, %0, %cst_5 {dimension_numbers = #tpu.dot_dimension_numbers<[1], [0], [0], [1], [0, 0, 1, 1], [], []>} : vector<96x512xbf16>, vector<512x128xbf16>, vector<96x128xf32> -> vector<96x128xf32>
    %c0_6 = arith.constant 0 : index
    %c0_7 = arith.constant 0 : index
    %5 = vector.load %arg3[%c0_6, %c0_7] : memref<96x512xbf16, #tpu.memory_space<vmem>>, vector<96x512xbf16>
    %cst_8 = arith.constant dense<0.000000e+00> : vector<96x128xf32>
    %6 = tpu.matmul %5, %0, %cst_8 {dimension_numbers = #tpu.dot_dimension_numbers<[1], [0], [0], [1], [0, 0, 1, 1], [], []>} : vector<96x512xbf16>, vector<512x128xbf16>, vector<96x128xf32> -> vector<96x128xf32>
    %c0_9 = arith.constant 0 : index
    %c0_10 = arith.constant 0 : index
    %7 = vector.load %arg4[%c0_9, %c0_10] : memref<96x512xbf16, #tpu.memory_space<vmem>>, vector<96x512xbf16>
    %cst_11 = arith.constant dense<0.000000e+00> : vector<96x128xf32>
    %8 = tpu.matmul %7, %0, %cst_11 {dimension_numbers = #tpu.dot_dimension_numbers<[1], [0], [0], [1], [0, 0, 1, 1], [], []>} : vector<96x512xbf16>, vector<512x128xbf16>, vector<96x128xf32> -> vector<96x128xf32>
    %9 = arith.maximumf %2, %4 : vector<96x128xf32>
    %10 = arith.maximumf %6, %8 : vector<96x128xf32>
    %11 = arith.maximumf %9, %10 : vector<96x128xf32>
    %c0_12 = arith.constant 0 : index
    %c0_13 = arith.constant 0 : index
    %12 = vector.load %arg6[%c0_12, %c0_13] : memref<1x128xf32, #tpu.memory_space<vmem>>, vector<1x128xf32>
    %13 = vector.broadcast %12 : vector<1x128xf32> to vector<96x128xf32>
    %14 = arith.addf %11, %13 : vector<96x128xf32>
    %15 = arith.truncf %14 : vector<96x128xf32> to vector<96x128xbf16>
    %c0_14 = arith.constant 0 : index
    %c0_15 = arith.constant 0 : index
    %16 = vector.load %arg7[%c0_14, %c0_15] : memref<96x128xbf16, #tpu.memory_space<vmem>>, vector<96x128xbf16>
    tpu.vector_store %arg7[%c0_14, %c0_15], %15 {strides = array<i32>} : memref<96x128xbf16, #tpu.memory_space<vmem>>, vector<96x128xbf16>,
    return
  }
  func.func @transform_0(%arg0: i32) -> (i32, i32) {
    %c0_i32 = arith.constant 0 : i32
    %c0_i32_0 = arith.constant 0 : i32
    return %arg0, %c0_i32 : i32, i32
  }
  func.func @transform_1(%arg0: i32) -> (i32, i32) {
    %c0_i32 = arith.constant 0 : i32
    %c0_i32_0 = arith.constant 0 : i32
    return %arg0, %c0_i32 : i32, i32
  }
  func.func @transform_2(%arg0: i32) -> (i32, i32) {
    %c0_i32 = arith.constant 0 : i32
    %c0_i32_0 = arith.constant 0 : i32
    return %arg0, %c0_i32 : i32, i32
  }
  func.func @transform_3(%arg0: i32) -> (i32, i32) {
    %c0_i32 = arith.constant 0 : i32
    %c0_i32_0 = arith.constant 0 : i32
    return %arg0, %c0_i32 : i32, i32
  }
  func.func @transform_4(%arg0: i32) -> (i32, i32) {
    %c0_i32 = arith.constant 0 : i32
    %c0_i32_0 = arith.constant 0 : i32
    %c0_i32_1 = arith.constant 0 : i32
    return %c0_i32, %c0_i32_0 : i32, i32
  }
  func.func @transform_5(%arg0: i32) -> (i32, i32) {
    %c0_i32 = arith.constant 0 : i32
    %c0_i32_0 = arith.constant 0 : i32
    %c0_i32_1 = arith.constant 0 : i32
    return %c0_i32, %c0_i32_0 : i32, i32
  }
  func.func @transform_6(%arg0: i32) -> (i32, i32) {
    %c0_i32 = arith.constant 0 : i32
    %c0_i32_0 = arith.constant 0 : i32
    return %arg0, %c0_i32 : i32, i32
  }
}

module attributes {stable_mosaic.version = 11 : i64} {
  func.func @_conv_pool_kernel(%arg0: i32, %arg1: memref<16x3200xbf16, #tpu.memory_space<vmem>>, %arg2: memref<16x3200xbf16, #tpu.memory_space<vmem>>, %arg3: memref<16x3200xbf16, #tpu.memory_space<vmem>>, %arg4: memref<16x3200xbf16, #tpu.memory_space<vmem>>, %arg5: memref<3200x128xbf16, #tpu.memory_space<vmem>>, %arg6: memref<1x128xf32, #tpu.memory_space<vmem>>, %arg7: memref<16x128xbf16, #tpu.memory_space<vmem>>) attributes {dimension_semantics = [#tpu.dimension_semantics<parallel>], iteration_bounds = array<i64: 2>, scalar_prefetch = 0 : i64, scratch_operands = 0 : i64, tpu.core_type = #tpu.core_type<tc>, window_params = [{transform_indices = @transform_0, window_bounds = array<i64: 16, 3200>}, {transform_indices = @transform_1, window_bounds = array<i64: 16, 3200>}, {transform_indices = @transform_2, window_bounds = array<i64: 16, 3200>}, {transform_indices = @transform_3, window_bounds = array<i64: 16, 3200>}, {pipeline_mode = #tpu.pipeline_mode<synchronous>, transform_indices = @transform_4, window_bounds = array<i64: 3200, 128>}, {pipeline_mode = #tpu.pipeline_mode<synchronous>, transform_indices = @transform_5, window_bounds = array<i64: 1, 128>}, {transform_indices = @transform_6, window_bounds = array<i64: 16, 128>}]} {
    %c0 = arith.constant 0 : index
    %c0_0 = arith.constant 0 : index
    %0 = vector.load %arg5[%c0, %c0_0] : memref<3200x128xbf16, #tpu.memory_space<vmem>>, vector<3200x128xbf16>
    %c0_1 = arith.constant 0 : index
    %c0_2 = arith.constant 0 : index
    %1 = vector.load %arg1[%c0_1, %c0_2] : memref<16x3200xbf16, #tpu.memory_space<vmem>>, vector<16x3200xbf16>
    %cst = arith.constant dense<0.000000e+00> : vector<16x128xf32>
    %2 = tpu.matmul %1, %0, %cst {dimension_numbers = #tpu.dot_dimension_numbers<[1], [0], [0], [1], [0, 0, 1, 1], [], []>} : vector<16x3200xbf16>, vector<3200x128xbf16>, vector<16x128xf32> -> vector<16x128xf32>
    %c0_3 = arith.constant 0 : index
    %c0_4 = arith.constant 0 : index
    %3 = vector.load %arg2[%c0_3, %c0_4] : memref<16x3200xbf16, #tpu.memory_space<vmem>>, vector<16x3200xbf16>
    %cst_5 = arith.constant dense<0.000000e+00> : vector<16x128xf32>
    %4 = tpu.matmul %3, %0, %cst_5 {dimension_numbers = #tpu.dot_dimension_numbers<[1], [0], [0], [1], [0, 0, 1, 1], [], []>} : vector<16x3200xbf16>, vector<3200x128xbf16>, vector<16x128xf32> -> vector<16x128xf32>
    %c0_6 = arith.constant 0 : index
    %c0_7 = arith.constant 0 : index
    %5 = vector.load %arg3[%c0_6, %c0_7] : memref<16x3200xbf16, #tpu.memory_space<vmem>>, vector<16x3200xbf16>
    %cst_8 = arith.constant dense<0.000000e+00> : vector<16x128xf32>
    %6 = tpu.matmul %5, %0, %cst_8 {dimension_numbers = #tpu.dot_dimension_numbers<[1], [0], [0], [1], [0, 0, 1, 1], [], []>} : vector<16x3200xbf16>, vector<3200x128xbf16>, vector<16x128xf32> -> vector<16x128xf32>
    %c0_9 = arith.constant 0 : index
    %c0_10 = arith.constant 0 : index
    %7 = vector.load %arg4[%c0_9, %c0_10] : memref<16x3200xbf16, #tpu.memory_space<vmem>>, vector<16x3200xbf16>
    %cst_11 = arith.constant dense<0.000000e+00> : vector<16x128xf32>
    %8 = tpu.matmul %7, %0, %cst_11 {dimension_numbers = #tpu.dot_dimension_numbers<[1], [0], [0], [1], [0, 0, 1, 1], [], []>} : vector<16x3200xbf16>, vector<3200x128xbf16>, vector<16x128xf32> -> vector<16x128xf32>
    %9 = arith.maximumf %2, %4 : vector<16x128xf32>
    %10 = arith.maximumf %6, %8 : vector<16x128xf32>
    %11 = arith.maximumf %9, %10 : vector<16x128xf32>
    %c0_12 = arith.constant 0 : index
    %c0_13 = arith.constant 0 : index
    %12 = vector.load %arg6[%c0_12, %c0_13] : memref<1x128xf32, #tpu.memory_space<vmem>>, vector<1x128xf32>
    %13 = vector.broadcast %12 : vector<1x128xf32> to vector<16x128xf32>
    %14 = arith.addf %11, %13 : vector<16x128xf32>
    %15 = arith.truncf %14 : vector<16x128xf32> to vector<16x128xbf16>
    %c0_14 = arith.constant 0 : index
    %c0_15 = arith.constant 0 : index
    %16 = vector.load %arg7[%c0_14, %c0_15] : memref<16x128xbf16, #tpu.memory_space<vmem>>, vector<16x128xbf16>
    tpu.vector_store %arg7[%c0_14, %c0_15], %15 {strides = array<i32>} : memref<16x128xbf16, #tpu.memory_space<vmem>>, vector<16x128xbf16>,
    return
  }
  func.func @transform_0(%arg0: i32) -> (i32, i32) {
    %c0_i32 = arith.constant 0 : i32
    %c0_i32_0 = arith.constant 0 : i32
    return %arg0, %c0_i32 : i32, i32
  }
  func.func @transform_1(%arg0: i32) -> (i32, i32) {
    %c0_i32 = arith.constant 0 : i32
    %c0_i32_0 = arith.constant 0 : i32
    return %arg0, %c0_i32 : i32, i32
  }
  func.func @transform_2(%arg0: i32) -> (i32, i32) {
    %c0_i32 = arith.constant 0 : i32
    %c0_i32_0 = arith.constant 0 : i32
    return %arg0, %c0_i32 : i32, i32
  }
  func.func @transform_3(%arg0: i32) -> (i32, i32) {
    %c0_i32 = arith.constant 0 : i32
    %c0_i32_0 = arith.constant 0 : i32
    return %arg0, %c0_i32 : i32, i32
  }
  func.func @transform_4(%arg0: i32) -> (i32, i32) {
    %c0_i32 = arith.constant 0 : i32
    %c0_i32_0 = arith.constant 0 : i32
    %c0_i32_1 = arith.constant 0 : i32
    return %c0_i32, %c0_i32_0 : i32, i32
  }
  func.func @transform_5(%arg0: i32) -> (i32, i32) {
    %c0_i32 = arith.constant 0 : i32
    %c0_i32_0 = arith.constant 0 : i32
    %c0_i32_1 = arith.constant 0 : i32
    return %c0_i32, %c0_i32_0 : i32, i32
  }
  func.func @transform_6(%arg0: i32) -> (i32, i32) {
    %c0_i32 = arith.constant 0 : i32
    %c0_i32_0 = arith.constant 0 : i32
    return %arg0, %c0_i32 : i32, i32
  }
}

module attributes {stable_mosaic.version = 11 : i64} {
  func.func @_fused_linear_kernel(%arg0: i32, %arg1: memref<16x2048xbf16, #tpu.memory_space<vmem>>, %arg2: memref<2048x128xbf16, #tpu.memory_space<vmem>>, %arg3: memref<1x128xf32, #tpu.memory_space<vmem>>, %arg4: memref<128x128xbf16, #tpu.memory_space<vmem>>, %arg5: memref<1x128xf32, #tpu.memory_space<vmem>>, %arg6: memref<16x128xf32, #tpu.memory_space<vmem>>) attributes {dimension_semantics = [#tpu.dimension_semantics<arbitrary>], iteration_bounds = array<i64: 1>, scalar_prefetch = 0 : i64, scratch_operands = 0 : i64, tpu.core_type = #tpu.core_type<tc>, window_params = [{pipeline_mode = #tpu.pipeline_mode<synchronous>, transform_indices = @transform_0, window_bounds = array<i64: 16, 2048>}, {pipeline_mode = #tpu.pipeline_mode<synchronous>, transform_indices = @transform_1, window_bounds = array<i64: 2048, 128>}, {pipeline_mode = #tpu.pipeline_mode<synchronous>, transform_indices = @transform_2, window_bounds = array<i64: 1, 128>}, {pipeline_mode = #tpu.pipeline_mode<synchronous>, transform_indices = @transform_3, window_bounds = array<i64: 128, 128>}, {pipeline_mode = #tpu.pipeline_mode<synchronous>, transform_indices = @transform_4, window_bounds = array<i64: 1, 128>}, {pipeline_mode = #tpu.pipeline_mode<synchronous>, transform_indices = @transform_5, window_bounds = array<i64: 16, 128>}]} {
    %c0 = arith.constant 0 : index
    %c0_0 = arith.constant 0 : index
    %0 = vector.load %arg1[%c0, %c0_0] : memref<16x2048xbf16, #tpu.memory_space<vmem>>, vector<16x2048xbf16>
    %c0_1 = arith.constant 0 : index
    %c0_2 = arith.constant 0 : index
    %1 = vector.load %arg2[%c0_1, %c0_2] : memref<2048x128xbf16, #tpu.memory_space<vmem>>, vector<2048x128xbf16>
    %cst = arith.constant dense<0.000000e+00> : vector<16x128xf32>
    %2 = tpu.matmul %0, %1, %cst {dimension_numbers = #tpu.dot_dimension_numbers<[1], [0], [0], [1], [0, 0, 1, 1], [], []>} : vector<16x2048xbf16>, vector<2048x128xbf16>, vector<16x128xf32> -> vector<16x128xf32>
    %c0_3 = arith.constant 0 : index
    %c0_4 = arith.constant 0 : index
    %3 = vector.load %arg3[%c0_3, %c0_4] : memref<1x128xf32, #tpu.memory_space<vmem>>, vector<1x128xf32>
    %4 = vector.broadcast %3 : vector<1x128xf32> to vector<16x128xf32>
    %5 = arith.addf %2, %4 : vector<16x128xf32>
    %6 = arith.truncf %5 : vector<16x128xf32> to vector<16x128xbf16>
    %c0_5 = arith.constant 0 : index
    %c0_6 = arith.constant 0 : index
    %7 = vector.load %arg4[%c0_5, %c0_6] : memref<128x128xbf16, #tpu.memory_space<vmem>>, vector<128x128xbf16>
    %cst_7 = arith.constant dense<0.000000e+00> : vector<16x128xf32>
    %8 = tpu.matmul %6, %7, %cst_7 {dimension_numbers = #tpu.dot_dimension_numbers<[1], [0], [0], [1], [0, 0, 1, 1], [], []>} : vector<16x128xbf16>, vector<128x128xbf16>, vector<16x128xf32> -> vector<16x128xf32>
    %c0_8 = arith.constant 0 : index
    %c0_9 = arith.constant 0 : index
    %9 = vector.load %arg5[%c0_8, %c0_9] : memref<1x128xf32, #tpu.memory_space<vmem>>, vector<1x128xf32>
    %10 = vector.broadcast %9 : vector<1x128xf32> to vector<16x128xf32>
    %11 = arith.addf %8, %10 : vector<16x128xf32>
    %c0_10 = arith.constant 0 : index
    %c0_11 = arith.constant 0 : index
    %12 = vector.load %arg6[%c0_10, %c0_11] : memref<16x128xf32, #tpu.memory_space<vmem>>, vector<16x128xf32>
    tpu.vector_store %arg6[%c0_10, %c0_11], %11 {strides = array<i32>} : memref<16x128xf32, #tpu.memory_space<vmem>>, vector<16x128xf32>,
    return
  }
  func.func @transform_0(%arg0: i32) -> (i32, i32) {
    %c0_i32 = arith.constant 0 : i32
    %c0_i32_0 = arith.constant 0 : i32
    %c0_i32_1 = arith.constant 0 : i32
    return %c0_i32, %c0_i32_0 : i32, i32
  }
  func.func @transform_1(%arg0: i32) -> (i32, i32) {
    %c0_i32 = arith.constant 0 : i32
    %c0_i32_0 = arith.constant 0 : i32
    %c0_i32_1 = arith.constant 0 : i32
    return %c0_i32, %c0_i32_0 : i32, i32
  }
  func.func @transform_2(%arg0: i32) -> (i32, i32) {
    %c0_i32 = arith.constant 0 : i32
    %c0_i32_0 = arith.constant 0 : i32
    %c0_i32_1 = arith.constant 0 : i32
    return %c0_i32, %c0_i32_0 : i32, i32
  }
  func.func @transform_3(%arg0: i32) -> (i32, i32) {
    %c0_i32 = arith.constant 0 : i32
    %c0_i32_0 = arith.constant 0 : i32
    %c0_i32_1 = arith.constant 0 : i32
    return %c0_i32, %c0_i32_0 : i32, i32
  }
  func.func @transform_4(%arg0: i32) -> (i32, i32) {
    %c0_i32 = arith.constant 0 : i32
    %c0_i32_0 = arith.constant 0 : i32
    %c0_i32_1 = arith.constant 0 : i32
    return %c0_i32, %c0_i32_0 : i32, i32
  }
  func.func @transform_5(%arg0: i32) -> (i32, i32) {
    %c0_i32 = arith.constant 0 : i32
    %c0_i32_0 = arith.constant 0 : i32
    %c0_i32_1 = arith.constant 0 : i32
    return %c0_i32, %c0_i32_0 : i32, i32
  }
}

</mosaic_0001>

<llo_original>
// kernel: gration_forward.4
$region0: #{gration_forward.4}
  #allocation0 [shape = 'u32[]', space=smem, size = 0x4, offset = 0x4, fixed_abs, tag = 'smem constant byte address 0x4 - core index']
  #allocation1 [shape = 'u32[72,128]{1,0:T(1,128)}', space=vmem, size = 0x9000, scoped, tag = 'internal scratch']
  %s0 = inlined_call_operand.vmem [shape: bf16[512,128], index: 0, kind: input, shape index: {}]
  %s1 = inlined_call_operand.vmem [shape: bf16[512,128], index: 1, kind: input, shape index: {}]
  %s2 = inlined_call_operand.vmem [shape: bf16[512,128], index: 2, kind: input, shape index: {}]
  %s3 = inlined_call_operand.vmem [shape: bf16[512,128], index: 3, kind: input, shape index: {}]
  %s4 = inlined_call_operand.vmem [shape: bf16[128,128], index: 4, kind: input, shape index: {}]
  %s5 = inlined_call_operand.vmem [shape: f32[1,128], index: 5, kind: input, shape index: {}]
  %s6 = inlined_call_operand.vmem [shape: bf16[512,128], index: 6, kind: output, shape index: {}]
  %s7 = sld [smem:[#allocation0]]
  $region57: #{gration_forward.4} parent=0
    _
  %s9 = ssub.s32 1, %s7
  %s10 = scalar_select 0, %s9, %s7
  loop: start=0, step=1, limit=4
  $region2: #{gration_forward.4} parent=0 // loop_pre_header
    _
  $region3: #{gration_forward.4} parent=0 // loop_header
    %s12 = sphi 0, %s16
    %p13 = scmp.ge.s32.totalorder %s12, 4
    %s22 = sphi 0, %s24
    %s25 = sphi 0, %s22
    %s26 = sphi 0, %s25
    %s42 = sphi 0, %s26
    %s48 = sphi 0, %s50
    %s51 = sphi 0, %s48
    %s52 = sphi 0, %s51
    %s68 = sphi 0, %s52
    %s74 = sphi 0, %s76
    %s77 = sphi 0, %s74
    %s78 = sphi 0, %s77
    %s94 = sphi 0, %s78
    %s100 = sphi 0, %s102
    %s103 = sphi 0, %s100
    %s104 = sphi 0, %s103
    %s120 = sphi 0, %s104
    %s124 = sphi 0, %s124
    %s126 = sphi 0, %s124
    %s127 = sphi 0, %s126
    %s141 = sphi 0, %s127
    %s145 = sphi 0, %s145
    %s147 = sphi 0, %s145
    %s148 = sphi 0, %s147
    %s162 = sphi 0, %s148
    %s168 = sphi 0, %s170
    %s171 = sphi 0, %s168
    %s172 = sphi 0, %s171
    %s188 = sphi 0, %s172
  $region4: #{gration_forward.4} parent=0 // loop_header_branch
    %15 = sbr.rel (%p13) target = $region8
  $region5: #{gration_forward.4} parent=0 // loop_body
    %s17 = ssub.s32 %s12, 1
    %s18 = ssub.s32 %s12, 2
    %s19 = sadd.s32 %s12, 1
    %s20 = ssub.s32 %s12, %s19
    %p21 = scmp.eq.s32.totalorder %s20, 0
    %s23 = sadd.s32 %s22, 1
    %s24 = scalar_select %p21, %s22, %s23
    %p27 = pneg %p21
    %p28 = scmp.eq.s32.totalorder %s12, 1
    %p29 = por %p27, %p28
    %p30 = scmp.ne.s32.totalorder %s22, %s25
    %p31 = scmp.eq.s32.totalorder %s12, 0
    %p32 = por %p30, %p31
    %p33 = scmp.ne.s32.totalorder %s22, %s25
    %p34 = scmp.eq.s32.totalorder %s17, 1
    %p35 = por %p33, %p34
    %p36 = scmp.ne.s32.totalorder %s25, %s26
    %p37 = scmp.eq.s32.totalorder %s17, 0
    %p38 = por %p36, %p37
    %p39 = scmp.ne.s32.totalorder %s25, %s26
    %p40 = scmp.eq.s32.totalorder %s18, 1
    %p41 = por %p39, %p40
    %p43 = scmp.ne.s32.totalorder %s26, %s42
    %p44 = scmp.eq.s32.totalorder %s18, 0
    %p45 = por %p43, %p44
    %s46 = ssub.s32 %s12, %s19
    %p47 = scmp.eq.s32.totalorder %s46, 0
    %s49 = sadd.s32 %s48, 1
    %s50 = scalar_select %p47, %s48, %s49
    %p53 = pneg %p47
    %p54 = scmp.eq.s32.totalorder %s12, 1
    %p55 = por %p53, %p54
    %p56 = scmp.ne.s32.totalorder %s48, %s51
    %p57 = scmp.eq.s32.totalorder %s12, 0
    %p58 = por %p56, %p57
    %p59 = scmp.ne.s32.totalorder %s48, %s51
    %p60 = scmp.eq.s32.totalorder %s17, 1
    %p61 = por %p59, %p60
    %p62 = scmp.ne.s32.totalorder %s51, %s52
    %p63 = scmp.eq.s32.totalorder %s17, 0
    %p64 = por %p62, %p63
    %p65 = scmp.ne.s32.totalorder %s51, %s52
    %p66 = scmp.eq.s32.totalorder %s18, 1
    %p67 = por %p65, %p66
    %p69 = scmp.ne.s32.totalorder %s52, %s68
    %p70 = scmp.eq.s32.totalorder %s18, 0
    %p71 = por %p69, %p70
    %s72 = ssub.s32 %s12, %s19
    %p73 = scmp.eq.s32.totalorder %s72, 0
    %s75 = sadd.s32 %s74, 1
    %s76 = scalar_select %p73, %s74, %s75
    %p79 = pneg %p73
    %p80 = scmp.eq.s32.totalorder %s12, 1
    %p81 = por %p79, %p80
    %p82 = scmp.ne.s32.totalorder %s74, %s77
    %p83 = scmp.eq.s32.totalorder %s12, 0
    %p84 = por %p82, %p83
    %p85 = scmp.ne.s32.totalorder %s74, %s77
    %p86 = scmp.eq.s32.totalorder %s17, 1
    %p87 = por %p85, %p86
    %p88 = scmp.ne.s32.totalorder %s77, %s78
    %p89 = scmp.eq.s32.totalorder %s17, 0
    %p90 = por %p88, %p89
    %p91 = scmp.ne.s32.totalorder %s77, %s78
    %p92 = scmp.eq.s32.totalorder %s18, 1
    %p93 = por %p91, %p92
    %p95 = scmp.ne.s32.totalorder %s78, %s94
    %p96 = scmp.eq.s32.totalorder %s18, 0
    %p97 = por %p95, %p96
    %s98 = ssub.s32 %s12, %s19
    %p99 = scmp.eq.s32.totalorder %s98, 0
    %s101 = sadd.s32 %s100, 1
    %s102 = scalar_select %p99, %s100, %s101
    %p105 = pneg %p99
    %p106 = scmp.eq.s32.totalorder %s12, 1
    %p107 = por %p105, %p106
    %p108 = scmp.ne.s32.totalorder %s100, %s103
    %p109 = scmp.eq.s32.totalorder %s12, 0
    %p110 = por %p108, %p109
    %p111 = scmp.ne.s32.totalorder %s100, %s103
    %p112 = scmp.eq.s32.totalorder %s17, 1
    %p113 = por %p111, %p112
    %p114 = scmp.ne.s32.totalorder %s103, %s104
    %p115 = scmp.eq.s32.totalorder %s17, 0
    %p116 = por %p114, %p115
    %p117 = scmp.ne.s32.totalorder %s103, %s104
    %p118 = scmp.eq.s32.totalorder %s18, 1
    %p119 = por %p117, %p118
    %p121 = scmp.ne.s32.totalorder %s104, %s120
    %p122 = scmp.eq.s32.totalorder %s18, 0
    %p123 = por %p121, %p122
    %s125 = sadd.s32 %s124, 1
    %p128 = scmp.eq.s32.totalorder %s12, 1
    %p129 = scmp.ne.s32.totalorder %s124, %s126
    %p130 = scmp.eq.s32.totalorder %s12, 0
    %p131 = por %p129, %p130
    %p132 = scmp.ne.s32.totalorder %s124, %s126
    %p133 = scmp.eq.s32.totalorder %s17, 1
    %p134 = por %p132, %p133
    %p135 = scmp.ne.s32.totalorder %s126, %s127
    %p136 = scmp.eq.s32.totalorder %s17, 0
    %p137 = por %p135, %p136
    %p138 = scmp.ne.s32.totalorder %s126, %s127
    %p139 = scmp.eq.s32.totalorder %s18, 1
    %p140 = por %p138, %p139
    %p142 = scmp.ne.s32.totalorder %s127, %s141
    %p143 = scmp.eq.s32.totalorder %s18, 0
    %p144 = por %p142, %p143
    %s146 = sadd.s32 %s145, 1
    %p149 = scmp.eq.s32.totalorder %s12, 1
    %p150 = scmp.ne.s32.totalorder %s145, %s147
    %p151 = scmp.eq.s32.totalorder %s12, 0
    %p152 = por %p150, %p151
    %p153 = scmp.ne.s32.totalorder %s145, %s147
    %p154 = scmp.eq.s32.totalorder %s17, 1
    %p155 = por %p153, %p154
    %p156 = scmp.ne.s32.totalorder %s147, %s148
    %p157 = scmp.eq.s32.totalorder %s17, 0
    %p158 = por %p156, %p157
    %p159 = scmp.ne.s32.totalorder %s147, %s148
    %p160 = scmp.eq.s32.totalorder %s18, 1
    %p161 = por %p159, %p160
    %p163 = scmp.ne.s32.totalorder %s148, %s162
    %p164 = scmp.eq.s32.totalorder %s18, 0
    %p165 = por %p163, %p164
    %s166 = ssub.s32 %s12, %s19
    %p167 = scmp.eq.s32.totalorder %s166, 0
    %s169 = sadd.s32 %s168, 1
    %s170 = scalar_select %p167, %s168, %s169
    %p173 = pneg %p167
    %p174 = scmp.eq.s32.totalorder %s12, 1
    %p175 = por %p173, %p174
    %p176 = scmp.ne.s32.totalorder %s168, %s171
    %p177 = scmp.eq.s32.totalorder %s12, 0
    %p178 = por %p176, %p177
    %p179 = scmp.ne.s32.totalorder %s168, %s171
    %p180 = scmp.eq.s32.totalorder %s17, 1
    %p181 = por %p179, %p180
    %p182 = scmp.ne.s32.totalorder %s171, %s172
    %p183 = scmp.eq.s32.totalorder %s17, 0
    %p184 = por %p182, %p183
    %p185 = scmp.ne.s32.totalorder %s171, %s172
    %p186 = scmp.eq.s32.totalorder %s18, 1
    %p187 = por %p185, %p186
    %p189 = scmp.ne.s32.totalorder %s172, %s188
    %p190 = scmp.eq.s32.totalorder %s18, 0
    %p191 = por %p189, %p190
    %p192 = scmp.le.s32.totalorder 1, %s12
    %p193 = scmp.lt.s32.totalorder %s12, 3
    %p194 = pnand %p192, %p193
    %p195 = pneg %p194
    // Predicated region
    $region9: #{gration_forward.4} parent=5 // pred_check
      _
    $region10: #{gration_forward.4} parent=5 // pred_check_branch
      %197 = sbr.rel (%p194) target = $region12
    $region11: #{gration_forward.4} parent=5 // pred_region
      %s198 = ssub.s32 %s12, 1
      // Predicated region
      $region13: #{gration_forward.4} parent=11 // pred_check
        %p199 = pneg %p137
      $region14: #{gration_forward.4} parent=11 // pred_check_branch
        %201 = sbr.rel (%p199) target = $region16
      $region15: #{gration_forward.4} parent=11 // pred_region
        _
      $region16: #{gration_forward.4} parent=11 // pred_fallthru
        _
      // Predicated region
      $region17: #{gration_forward.4} parent=11 // pred_check
        %p202 = pneg %p158
      $region18: #{gration_forward.4} parent=11 // pred_check_branch
        %204 = sbr.rel (%p202) target = $region20
      $region19: #{gration_forward.4} parent=11 // pred_region
        _
      $region20: #{gration_forward.4} parent=11 // pred_fallthru
        _
    $region12: #{gration_forward.4} parent=5 // pred_fallthru
      _
    %p205 = scmp.lt.s32.totalorder %s12, 2
    // Predicated region
    $region21: #{gration_forward.4} parent=5 // pred_check
      %p206 = pneg %p205
    $region22: #{gration_forward.4} parent=5 // pred_check_branch
      %208 = sbr.rel (%p206) target = $region24
    $region23: #{gration_forward.4} parent=5 // pred_region
      // Predicated region
      $region25: #{gration_forward.4} parent=23 // pred_check
        %p209 = pneg %p32
      $region26: #{gration_forward.4} parent=23 // pred_check_branch
        %211 = sbr.rel (%p209) target = $region28
      $region27: #{gration_forward.4} parent=23 // pred_region
        %s212 = smul.u32 32, %s12
        %p213 = scmp.lt.s32.totalorder %s212, 63
        %s214 = scalar_select %p213, %s212, 63
        %s215 = smul.addr %s214, 4
        %s216 = scalar_lea.vmem %s0, %s215
        %s217 = smul.u32 32, %s12
      $region28: #{gration_forward.4} parent=23 // pred_fallthru
        _
      // Predicated region
      $region29: #{gration_forward.4} parent=23 // pred_check
        %p218 = pneg %p58
      $region30: #{gration_forward.4} parent=23 // pred_check_branch
        %220 = sbr.rel (%p218) target = $region32
      $region31: #{gration_forward.4} parent=23 // pred_region
        %s221 = smul.u32 32, %s12
        %p222 = scmp.lt.s32.totalorder %s221, 63
        %s223 = scalar_select %p222, %s221, 63
        %s224 = smul.addr %s223, 4
        %s225 = scalar_lea.vmem %s1, %s224
        %s226 = smul.u32 32, %s12
      $region32: #{gration_forward.4} parent=23 // pred_fallthru
        _
      // Predicated region
      $region33: #{gration_forward.4} parent=23 // pred_check
        %p227 = pneg %p84
      $region34: #{gration_forward.4} parent=23 // pred_check_branch
        %229 = sbr.rel (%p227) target = $region36
      $region35: #{gration_forward.4} parent=23 // pred_region
        %s230 = smul.u32 32, %s12
        %p231 = scmp.lt.s32.totalorder %s230, 63
        %s232 = scalar_select %p231, %s230, 63
        %s233 = smul.addr %s232, 4
        %s234 = scalar_lea.vmem %s2, %s233
        %s235 = smul.u32 32, %s12
      $region36: #{gration_forward.4} parent=23 // pred_fallthru
        _
      // Predicated region
      $region37: #{gration_forward.4} parent=23 // pred_check
        %p236 = pneg %p110
      $region38: #{gration_forward.4} parent=23 // pred_check_branch
        %238 = sbr.rel (%p236) target = $region40
      $region39: #{gration_forward.4} parent=23 // pred_region
        %s239 = smul.u32 32, %s12
        %p240 = scmp.lt.s32.totalorder %s239, 63
        %s241 = scalar_select %p240, %s239, 63
        %s242 = smul.addr %s241, 4
        %s243 = scalar_lea.vmem %s3, %s242
        %s244 = smul.u32 32, %s12
      $region40: #{gration_forward.4} parent=23 // pred_fallthru
        _
    $region24: #{gration_forward.4} parent=5 // pred_fallthru
      _
    %p245 = scmp.le.s32.totalorder 1, %s12
    %p246 = scmp.lt.s32.totalorder %s12, 3
    %p247 = pnand %p245, %p246
    %p248 = pneg %p247
    // Predicated region
    $region41: #{gration_forward.4} parent=5 // pred_check
      _
    $region42: #{gration_forward.4} parent=5 // pred_check_branch
      %250 = sbr.rel (%p247) target = $region44
    $region43: #{gration_forward.4} parent=5 // pred_region
      %s251 = ssub.s32 %s12, 1
      %s252 = smul.u32 32, %s17
      %p253 = scmp.lt.s32.totalorder %s252, 63
      %s254 = scalar_select %p253, %s252, 63
      %s255 = smul.addr %s254, 4
      %s256 = scalar_lea.vmem %s0, %s255
      %p257 = pneg %p38
      %p258 = pneg %p35
      %s259 = smul.u32 32, %s17
      %p260 = scmp.lt.s32.totalorder %s259, 63
      %s261 = scalar_select %p260, %s259, 63
      %s262 = smul.addr %s261, 4
      %s263 = scalar_lea.vmem %s1, %s262
      %p264 = pneg %p64
      %p265 = pneg %p61
      %s266 = smul.u32 32, %s17
      %p267 = scmp.lt.s32.totalorder %s266, 63
      %s268 = scalar_select %p267, %s266, 63
      %s269 = smul.addr %s268, 4
      %s270 = scalar_lea.vmem %s2, %s269
      %p271 = pneg %p90
      %p272 = pneg %p87
      %s273 = smul.u32 32, %s17
      %p274 = scmp.lt.s32.totalorder %s273, 63
      %s275 = scalar_select %p274, %s273, 63
      %s276 = smul.addr %s275, 4
      %s277 = scalar_lea.vmem %s3, %s276
      %p278 = pneg %p116
      %p279 = pneg %p113
      %p280 = pneg %p137
      %p281 = pneg %p134
      %p282 = pneg %p158
      %p283 = pneg %p155
      %p284 = pneg %p184
      %p285 = pneg %p181
      %s286 = smul.u32 32, %s17
      %p287 = scmp.lt.s32.totalorder %s286, 63
      %s288 = scalar_select %p287, %s286, 63
      %s289 = smul.addr %s288, 4
      %s290 = scalar_lea.vmem %s6, %s289
      %s291 = smul.u32 32, %s17
      %p292 = scmp.lt.s32.totalorder %s291, 63
      %s293 = scalar_select %p292, %s291, 63
      %s294 = smul.addr %s293, 4
      %s295 = scalar_lea.vmem %s0, %s294
      %s296 = smul.u32 32, %s17
      %s297 = smul.u32 32, %s17
      %p298 = scmp.lt.s32.totalorder %s297, 63
      %s299 = scalar_select %p298, %s297, 63
      %s300 = smul.addr %s299, 4
      %s301 = scalar_lea.vmem %s1, %s300
      %s302 = smul.u32 32, %s17
      %s303 = smul.u32 32, %s17
      %p304 = scmp.lt.s32.totalorder %s303, 63
      %s305 = scalar_select %p304, %s303, 63
      %s306 = smul.addr %s305, 4
      %s307 = scalar_lea.vmem %s2, %s306
      %s308 = smul.u32 32, %s17
      %s309 = smul.u32 32, %s17
      %p310 = scmp.lt.s32.totalorder %s309, 63
      %s311 = scalar_select %p310, %s309, 63
      %s312 = smul.addr %s311, 4
      %s313 = scalar_lea.vmem %s3, %s312
      %s314 = smul.u32 32, %s17
      %s315 = smul.u32 32, %s17
      %p316 = scmp.lt.s32.totalorder %s315, 63
      %s317 = scalar_select %p316, %s315, 63
      %s318 = smul.addr %s317, 4
      %s319 = scalar_lea.vmem %s6, %s318
      %s320 = smul.u32 32, %s17
      %v321 = vld [vmem:[%s4] sm:$0xf]
      %v322 = vld [vmem:[%s4 + $0x4] sm:$0xf]
      %v323 = vld [vmem:[%s4 + $0x8] sm:$0xf]
      %v324 = vld [vmem:[%s4 + $0xc] sm:$0xf]
      %v325 = vld [vmem:[%s4 + $0x10] sm:$0xf]
      %v326 = vld [vmem:[%s4 + $0x14] sm:$0xf]
      %v327 = vld [vmem:[%s4 + $0x18] sm:$0xf]
      %v328 = vld [vmem:[%s4 + $0x1c] sm:$0xf]
      %v329 = vld [vmem:[%s4 + $0x20] sm:$0xf]
      %v330 = vld [vmem:[%s4 + $0x24] sm:$0xf]
      %v331 = vld [vmem:[%s4 + $0x28] sm:$0xf]
      %v332 = vld [vmem:[%s4 + $0x2c] sm:$0xf]
      %v333 = vld [vmem:[%s4 + $0x30] sm:$0xf]
      %v334 = vld [vmem:[%s4 + $0x34] sm:$0xf]
      %v335 = vld [vmem:[%s4 + $0x38] sm:$0xf]
      %v336 = vld [vmem:[%s4 + $0x3c] sm:$0xf]
      %v337 = vld [vmem:[%s295] sm:$0xf]
      %v338 = vld [vmem:[%s295 + $0x4] sm:$0xf]
      %v339 = vld [vmem:[%s295 + $0x8] sm:$0xf]
      %v340 = vld [vmem:[%s295 + $0xc] sm:$0xf]
      %v341 = vld [vmem:[%s295 + $0x10] sm:$0xf]
      %v342 = vld [vmem:[%s295 + $0x14] sm:$0xf]
      %v343 = vld [vmem:[%s295 + $0x18] sm:$0xf]
      %v344 = vld [vmem:[%s295 + $0x1c] sm:$0xf]
      %v345 = vld [vmem:[%s295 + $0x20] sm:$0xf]
      %v346 = vld [vmem:[%s295 + $0x24] sm:$0xf]
      %v347 = vld [vmem:[%s295 + $0x28] sm:$0xf]
      %v348 = vld [vmem:[%s295 + $0x2c] sm:$0xf]
      %v349 = vld [vmem:[%s295 + $0x30] sm:$0xf]
      %v350 = vld [vmem:[%s295 + $0x34] sm:$0xf]
      %v351 = vld [vmem:[%s295 + $0x38] sm:$0xf]
      %v352 = vld [vmem:[%s295 + $0x3c] sm:$0xf]
      %v353 = vld [vmem:[%s295 + $0x40] sm:$0xf]
      %v354 = vld [vmem:[%s295 + $0x44] sm:$0xf]
      %v355 = vld [vmem:[%s295 + $0x48] sm:$0xf]
      %v356 = vld [vmem:[%s295 + $0x4c] sm:$0xf]
      %v357 = vld [vmem:[%s295 + $0x50] sm:$0xf]
      %v358 = vld [vmem:[%s295 + $0x54] sm:$0xf]
      %v359 = vld [vmem:[%s295 + $0x58] sm:$0xf]
      %v360 = vld [vmem:[%s295 + $0x5c] sm:$0xf]
      %v361 = vld [vmem:[%s295 + $0x60] sm:$0xf]
      %v362 = vld [vmem:[%s295 + $0x64] sm:$0xf]
      %v363 = vld [vmem:[%s295 + $0x68] sm:$0xf]
      %v364 = vld [vmem:[%s295 + $0x6c] sm:$0xf]
      %v365 = vld [vmem:[%s295 + $0x70] sm:$0xf]
      %v366 = vld [vmem:[%s295 + $0x74] sm:$0xf]
      %v367 = vld [vmem:[%s295 + $0x78] sm:$0xf]
      %v368 = vld [vmem:[%s295 + $0x7c] sm:$0xf]
      %v401 = vunpack.c.l.b16 %v337
      %v402 = vunpack.c.l.b16 %v338
      %v403 = vunpack.c.l.b16 %v339
      %v404 = vunpack.c.l.b16 %v340
      %v405 = vunpack.c.l.b16 %v341
      %v406 = vunpack.c.l.b16 %v342
      %v407 = vunpack.c.l.b16 %v343
      %v408 = vunpack.c.l.b16 %v344
      %v409 = vunpack.c.l.b16 %v345
      %v410 = vunpack.c.l.b16 %v346
      %v411 = vunpack.c.l.b16 %v347
      %v412 = vunpack.c.l.b16 %v348
      %v413 = vunpack.c.l.b16 %v349
      %v414 = vunpack.c.l.b16 %v350
      %v415 = vunpack.c.l.b16 %v351
      %v416 = vunpack.c.l.b16 %v352
      %v417 = vunpack.c.l.b16 %v353
      %v418 = vunpack.c.l.b16 %v354
      %v419 = vunpack.c.l.b16 %v355
      %v420 = vunpack.c.l.b16 %v356
      %v421 = vunpack.c.l.b16 %v357
      %v422 = vunpack.c.l.b16 %v358
      %v423 = vunpack.c.l.b16 %v359
      %v424 = vunpack.c.l.b16 %v360
      %v425 = vunpack.c.l.b16 %v361
      %v426 = vunpack.c.l.b16 %v362
      %v427 = vunpack.c.l.b16 %v363
      %v428 = vunpack.c.l.b16 %v364
      %v429 = vunpack.c.l.b16 %v365
      %v430 = vunpack.c.l.b16 %v366
      %v431 = vunpack.c.l.b16 %v367
      %v432 = vunpack.c.l.b16 %v368
      %v433 = vpack.c.b16 %v402, %v401
      %v434 = vpack.c.b16 %v404, %v403
      %v435 = vpack.c.b16 %v406, %v405
      %v436 = vpack.c.b16 %v408, %v407
      %v437 = vpack.c.b16 %v410, %v409
      %v438 = vpack.c.b16 %v412, %v411
      %v439 = vpack.c.b16 %v414, %v413
      %v440 = vpack.c.b16 %v416, %v415
      %v441 = vpack.c.b16 %v418, %v417
      %v442 = vpack.c.b16 %v420, %v419
      %v443 = vpack.c.b16 %v422, %v421
      %v444 = vpack.c.b16 %v424, %v423
      %v445 = vpack.c.b16 %v426, %v425
      %v446 = vpack.c.b16 %v428, %v427
      %v447 = vpack.c.b16 %v430, %v429
      %v448 = vpack.c.b16 %v432, %v431
      %v481 = vunpack.c.l.b16 %v321
      %v482 = vunpack.c.l.b16 %v322
      %v483 = vunpack.c.l.b16 %v323
      %v484 = vunpack.c.l.b16 %v324
      %v485 = vunpack.c.l.b16 %v325
      %v486 = vunpack.c.l.b16 %v326
      %v487 = vunpack.c.l.b16 %v327
      %v488 = vunpack.c.l.b16 %v328
      %v489 = vunpack.c.l.b16 %v329
      %v490 = vunpack.c.l.b16 %v330
      %v491 = vunpack.c.l.b16 %v331
      %v492 = vunpack.c.l.b16 %v332
      %v493 = vunpack.c.l.b16 %v333
      %v494 = vunpack.c.l.b16 %v334
      %v495 = vunpack.c.l.b16 %v335
      %v496 = vunpack.c.l.b16 %v336
      %v497 = vpack.c.b16 %v482, %v481
      %v498 = vpack.c.b16 %v484, %v483
      %v499 = vpack.c.b16 %v486, %v485
      %v500 = vpack.c.b16 %v488, %v487
      %v501 = vpack.c.b16 %v490, %v489
      %v502 = vpack.c.b16 %v492, %v491
      %v503 = vpack.c.b16 %v494, %v493
      %v504 = vpack.c.b16 %v496, %v495
      %513 = vmatpush.bf16.msra.mxu0 %v504
      %514 = vmatpush.bf16.msra.mxu0 %v503
      %515 = vmatpush.bf16.msra.mxu0 %v502
      %516 = vmatpush.bf16.msra.mxu0 %v501
      %517 = vmatpush.bf16.msra.mxu0 %v500
      %518 = vmatpush.bf16.msra.mxu0 %v499
      %519 = vmatpush.bf16.msra.mxu0 %v498
      %520 = vmatpush.bf16.msra.mxu0 %v497
      %521 = vmatmul.bf16.gmra.mxu0 %v433
      %v522 = vpop.f32.mrf.mxu0
      %v523 = vadd.f32 0.0, %v522
      %v524 = vpop.f32.mrf.mxu0
      %v525 = vadd.f32 0.0, %v524
      %526 = vmatmul.bf16.gmra.mxu0 %v434
      %v527 = vpop.f32.mrf.mxu0
      %v528 = vadd.f32 0.0, %v527
      %v529 = vpop.f32.mrf.mxu0
      %v530 = vadd.f32 0.0, %v529
      %531 = vmatmul.bf16.gmra.mxu0 %v435
      %v532 = vpop.f32.mrf.mxu0
      %v533 = vadd.f32 0.0, %v532
      %v534 = vpop.f32.mrf.mxu0
      %v535 = vadd.f32 0.0, %v534
      %536 = vmatmul.bf16.gmra.mxu0 %v436
      %v537 = vpop.f32.mrf.mxu0
      %v538 = vadd.f32 0.0, %v537
      %v539 = vpop.f32.mrf.mxu0
      %v540 = vadd.f32 0.0, %v539
      %541 = vmatmul.bf16.gmra.mxu0 %v437
      %v542 = vpop.f32.mrf.mxu0
      %v543 = vadd.f32 0.0, %v542
      %v544 = vpop.f32.mrf.mxu0
      %v545 = vadd.f32 0.0, %v544
      %546 = vmatmul.bf16.gmra.mxu0 %v438
      %v547 = vpop.f32.mrf.mxu0
      %v548 = vadd.f32 0.0, %v547
      %v549 = vpop.f32.mrf.mxu0
      %v550 = vadd.f32 0.0, %v549
      %551 = vmatmul.bf16.gmra.mxu0 %v439
      %v552 = vpop.f32.mrf.mxu0
      %v553 = vadd.f32 0.0, %v552
      %v554 = vpop.f32.mrf.mxu0
      %v555 = vadd.f32 0.0, %v554
      %556 = vmatmul.bf16.gmra.mxu0 %v440
      %v557 = vpop.f32.mrf.mxu0
      %v558 = vadd.f32 0.0, %v557
      %v559 = vpop.f32.mrf.mxu0
      %v560 = vadd.f32 0.0, %v559
      %561 = vmatmul.bf16.gmra.mxu0 %v441
      %v562 = vpop.f32.mrf.mxu0
      %v563 = vadd.f32 0.0, %v562
      %v564 = vpop.f32.mrf.mxu0
      %v565 = vadd.f32 0.0, %v564
      %566 = vmatmul.bf16.gmra.mxu0 %v442
      %v567 = vpop.f32.mrf.mxu0
      %v568 = vadd.f32 0.0, %v567
      %v569 = vpop.f32.mrf.mxu0
      %v570 = vadd.f32 0.0, %v569
      %571 = vmatmul.bf16.gmra.mxu0 %v443
      %v572 = vpop.f32.mrf.mxu0
      %v573 = vadd.f32 0.0, %v572
      %v574 = vpop.f32.mrf.mxu0
      %v575 = vadd.f32 0.0, %v574
      %576 = vmatmul.bf16.gmra.mxu0 %v444
      %v577 = vpop.f32.mrf.mxu0
      %v578 = vadd.f32 0.0, %v577
      %v579 = vpop.f32.mrf.mxu0
      %v580 = vadd.f32 0.0, %v579
      %581 = vmatmul.bf16.gmra.mxu0 %v445
      %v582 = vpop.f32.mrf.mxu0
      %v583 = vadd.f32 0.0, %v582
      %v584 = vpop.f32.mrf.mxu0
      %v585 = vadd.f32 0.0, %v584
      %586 = vmatmul.bf16.gmra.mxu0 %v446
      %v587 = vpop.f32.mrf.mxu0
      %v588 = vadd.f32 0.0, %v587
      %v589 = vpop.f32.mrf.mxu0
      %v590 = vadd.f32 0.0, %v589
      %591 = vmatmul.bf16.gmra.mxu0 %v447
      %v592 = vpop.f32.mrf.mxu0
      %v593 = vadd.f32 0.0, %v592
      %v594 = vpop.f32.mrf.mxu0
      %v595 = vadd.f32 0.0, %v594
      %596 = vmatmul.bf16.gmra.mxu0 %v448
      %v597 = vpop.f32.mrf.mxu0
      %v598 = vadd.f32 0.0, %v597
      %v599 = vpop.f32.mrf.mxu0
      %v600 = vadd.f32 0.0, %v599
      %601 = vdwg.mxu0
      %v602 = vld [vmem:[%s301] sm:$0xf]
      %v603 = vld [vmem:[%s301 + $0x4] sm:$0xf]
      %v604 = vld [vmem:[%s301 + $0x8] sm:$0xf]
      %v605 = vld [vmem:[%s301 + $0xc] sm:$0xf]
      %v606 = vld [vmem:[%s301 + $0x10] sm:$0xf]
      %v607 = vld [vmem:[%s301 + $0x14] sm:$0xf]
      %v608 = vld [vmem:[%s301 + $0x18] sm:$0xf]
      %v609 = vld [vmem:[%s301 + $0x1c] sm:$0xf]
      %v610 = vld [vmem:[%s301 + $0x20] sm:$0xf]
      %v611 = vld [vmem:[%s301 + $0x24] sm:$0xf]
      %v612 = vld [vmem:[%s301 + $0x28] sm:$0xf]
      %v613 = vld [vmem:[%s301 + $0x2c] sm:$0xf]
      %v614 = vld [vmem:[%s301 + $0x30] sm:$0xf]
      %v615 = vld [vmem:[%s301 + $0x34] sm:$0xf]
      %v616 = vld [vmem:[%s301 + $0x38] sm:$0xf]
      %v617 = vld [vmem:[%s301 + $0x3c] sm:$0xf]
      %v618 = vld [vmem:[%s301 + $0x40] sm:$0xf]
      %v619 = vld [vmem:[%s301 + $0x44] sm:$0xf]
      %v620 = vld [vmem:[%s301 + $0x48] sm:$0xf]
      %v621 = vld [vmem:[%s301 + $0x4c] sm:$0xf]
      %v622 = vld [vmem:[%s301 + $0x50] sm:$0xf]
      %v623 = vld [vmem:[%s301 + $0x54] sm:$0xf]
      %v624 = vld [vmem:[%s301 + $0x58] sm:$0xf]
      %v625 = vld [vmem:[%s301 + $0x5c] sm:$0xf]
      %v626 = vld [vmem:[%s301 + $0x60] sm:$0xf]
      %v627 = vld [vmem:[%s301 + $0x64] sm:$0xf]
      %v628 = vld [vmem:[%s301 + $0x68] sm:$0xf]
      %v629 = vld [vmem:[%s301 + $0x6c] sm:$0xf]
      %v630 = vld [vmem:[%s301 + $0x70] sm:$0xf]
      %v631 = vld [vmem:[%s301 + $0x74] sm:$0xf]
      %v632 = vld [vmem:[%s301 + $0x78] sm:$0xf]
      %v633 = vld [vmem:[%s301 + $0x7c] sm:$0xf]
      %v666 = vunpack.c.l.b16 %v602
      %v667 = vunpack.c.l.b16 %v603
      %v668 = vunpack.c.l.b16 %v604
      %v669 = vunpack.c.l.b16 %v605
      %v670 = vunpack.c.l.b16 %v606
      %v671 = vunpack.c.l.b16 %v607
      %v672 = vunpack.c.l.b16 %v608
      %v673 = vunpack.c.l.b16 %v609
      %v674 = vunpack.c.l.b16 %v610
      %v675 = vunpack.c.l.b16 %v611
      %v676 = vunpack.c.l.b16 %v612
      %v677 = vunpack.c.l.b16 %v613
      %v678 = vunpack.c.l.b16 %v614
      %v679 = vunpack.c.l.b16 %v615
      %v680 = vunpack.c.l.b16 %v616
      %v681 = vunpack.c.l.b16 %v617
      %v682 = vunpack.c.l.b16 %v618
      %v683 = vunpack.c.l.b16 %v619
      %v684 = vunpack.c.l.b16 %v620
      %v685 = vunpack.c.l.b16 %v621
      %v686 = vunpack.c.l.b16 %v622
      %v687 = vunpack.c.l.b16 %v623
      %v688 = vunpack.c.l.b16 %v624
      %v689 = vunpack.c.l.b16 %v625
      %v690 = vunpack.c.l.b16 %v626
      %v691 = vunpack.c.l.b16 %v627
      %v692 = vunpack.c.l.b16 %v628
      %v693 = vunpack.c.l.b16 %v629
      %v694 = vunpack.c.l.b16 %v630
      %v695 = vunpack.c.l.b16 %v631
      %v696 = vunpack.c.l.b16 %v632
      %v697 = vunpack.c.l.b16 %v633
      %v698 = vpack.c.b16 %v667, %v666
      %v699 = vpack.c.b16 %v669, %v668
      %v700 = vpack.c.b16 %v671, %v670
      %v701 = vpack.c.b16 %v673, %v672
      %v702 = vpack.c.b16 %v675, %v674
      %v703 = vpack.c.b16 %v677, %v676
      %v704 = vpack.c.b16 %v679, %v678
      %v705 = vpack.c.b16 %v681, %v680
      %v706 = vpack.c.b16 %v683, %v682
      %v707 = vpack.c.b16 %v685, %v684
      %v708 = vpack.c.b16 %v687, %v686
      %v709 = vpack.c.b16 %v689, %v688
      %v710 = vpack.c.b16 %v691, %v690
      %v711 = vpack.c.b16 %v693, %v692
      %v712 = vpack.c.b16 %v695, %v694
      %v713 = vpack.c.b16 %v697, %v696
      %730 = vmatpush.bf16.msra.mxu0 %v504
      %731 = vmatpush.bf16.msra.mxu0 %v503
      %732 = vmatpush.bf16.msra.mxu0 %v502
      %733 = vmatpush.bf16.msra.mxu0 %v501
      %734 = vmatpush.bf16.msra.mxu0 %v500
      %735 = vmatpush.bf16.msra.mxu0 %v499
      %736 = vmatpush.bf16.msra.mxu0 %v498
      %737 = vmatpush.bf16.msra.mxu0 %v497
      %738 = vmatmul.bf16.gmra.mxu0 %v698
      %v739 = vpop.f32.mrf.mxu0
      %v740 = vadd.f32 0.0, %v739
      %v741 = vpop.f32.mrf.mxu0
      %v742 = vadd.f32 0.0, %v741
      %743 = vmatmul.bf16.gmra.mxu0 %v699
      %v744 = vpop.f32.mrf.mxu0
      %v745 = vadd.f32 0.0, %v744
      %v746 = vpop.f32.mrf.mxu0
      %v747 = vadd.f32 0.0, %v746
      %748 = vmatmul.bf16.gmra.mxu0 %v700
      %v749 = vpop.f32.mrf.mxu0
      %v750 = vadd.f32 0.0, %v749
      %v751 = vpop.f32.mrf.mxu0
      %v752 = vadd.f32 0.0, %v751
      %753 = vmatmul.bf16.gmra.mxu0 %v701
      %v754 = vpop.f32.mrf.mxu0
      %v755 = vadd.f32 0.0, %v754
      %v756 = vpop.f32.mrf.mxu0
      %v757 = vadd.f32 0.0, %v756
      %758 = vmatmul.bf16.gmra.mxu0 %v702
      %v759 = vpop.f32.mrf.mxu0
      %v760 = vadd.f32 0.0, %v759
      %v761 = vpop.f32.mrf.mxu0
      %v762 = vadd.f32 0.0, %v761
      %763 = vmatmul.bf16.gmra.mxu0 %v703
      %v764 = vpop.f32.mrf.mxu0
      %v765 = vadd.f32 0.0, %v764
      %v766 = vpop.f32.mrf.mxu0
      %v767 = vadd.f32 0.0, %v766
      %768 = vmatmul.bf16.gmra.mxu0 %v704
      %v769 = vpop.f32.mrf.mxu0
      %v770 = vadd.f32 0.0, %v769
      %v771 = vpop.f32.mrf.mxu0
      %v772 = vadd.f32 0.0, %v771
      %773 = vmatmul.bf16.gmra.mxu0 %v705
      %v774 = vpop.f32.mrf.mxu0
      %v775 = vadd.f32 0.0, %v774
      %v776 = vpop.f32.mrf.mxu0
      %v777 = vadd.f32 0.0, %v776
      %778 = vmatmul.bf16.gmra.mxu0 %v706
      %v779 = vpop.f32.mrf.mxu0
      %v780 = vadd.f32 0.0, %v779
      %v781 = vpop.f32.mrf.mxu0
      %v782 = vadd.f32 0.0, %v781
      %783 = vmatmul.bf16.gmra.mxu0 %v707
      %v784 = vpop.f32.mrf.mxu0
      %v785 = vadd.f32 0.0, %v784
      %v786 = vpop.f32.mrf.mxu0
      %v787 = vadd.f32 0.0, %v786
      %788 = vmatmul.bf16.gmra.mxu0 %v708
      %v789 = vpop.f32.mrf.mxu0
      %v790 = vadd.f32 0.0, %v789
      %v791 = vpop.f32.mrf.mxu0
      %v792 = vadd.f32 0.0, %v791
      %793 = vmatmul.bf16.gmra.mxu0 %v709
      %v794 = vpop.f32.mrf.mxu0
      %v795 = vadd.f32 0.0, %v794
      %v796 = vpop.f32.mrf.mxu0
      %v797 = vadd.f32 0.0, %v796
      %798 = vmatmul.bf16.gmra.mxu0 %v710
      %v799 = vpop.f32.mrf.mxu0
      %v800 = vadd.f32 0.0, %v799
      %v801 = vpop.f32.mrf.mxu0
      %v802 = vadd.f32 0.0, %v801
      %803 = vmatmul.bf16.gmra.mxu0 %v711
      %v804 = vpop.f32.mrf.mxu0
      %v805 = vadd.f32 0.0, %v804
      %v806 = vpop.f32.mrf.mxu0
      %v807 = vadd.f32 0.0, %v806
      %808 = vmatmul.bf16.gmra.mxu0 %v712
      %v809 = vpop.f32.mrf.mxu0
      %v810 = vadd.f32 0.0, %v809
      %v811 = vpop.f32.mrf.mxu0
      %v812 = vadd.f32 0.0, %v811
      %813 = vmatmul.bf16.gmra.mxu0 %v713
      %v814 = vpop.f32.mrf.mxu0
      %v815 = vadd.f32 0.0, %v814
      %v816 = vpop.f32.mrf.mxu0
      %v817 = vadd.f32 0.0, %v816
      %818 = vdwg.mxu0
      %v819 = vld [vmem:[%s307] sm:$0xf]
      %v820 = vld [vmem:[%s307 + $0x4] sm:$0xf]
      %v821 = vld [vmem:[%s307 + $0x8] sm:$0xf]
      %v822 = vld [vmem:[%s307 + $0xc] sm:$0xf]
      %v823 = vld [vmem:[%s307 + $0x10] sm:$0xf]
      %v824 = vld [vmem:[%s307 + $0x14] sm:$0xf]
      %v825 = vld [vmem:[%s307 + $0x18] sm:$0xf]
      %v826 = vld [vmem:[%s307 + $0x1c] sm:$0xf]
      %v827 = vld [vmem:[%s307 + $0x20] sm:$0xf]
      %v828 = vld [vmem:[%s307 + $0x24] sm:$0xf]
      %v829 = vld [vmem:[%s307 + $0x28] sm:$0xf]
      %v830 = vld [vmem:[%s307 + $0x2c] sm:$0xf]
      %v831 = vld [vmem:[%s307 + $0x30] sm:$0xf]
      %v832 = vld [vmem:[%s307 + $0x34] sm:$0xf]
      %v833 = vld [vmem:[%s307 + $0x38] sm:$0xf]
      %v834 = vld [vmem:[%s307 + $0x3c] sm:$0xf]
      %v835 = vld [vmem:[%s307 + $0x40] sm:$0xf]
      %v836 = vld [vmem:[%s307 + $0x44] sm:$0xf]
      %v837 = vld [vmem:[%s307 + $0x48] sm:$0xf]
      %v838 = vld [vmem:[%s307 + $0x4c] sm:$0xf]
      %v839 = vld [vmem:[%s307 + $0x50] sm:$0xf]
      %v840 = vld [vmem:[%s307 + $0x54] sm:$0xf]
      %v841 = vld [vmem:[%s307 + $0x58] sm:$0xf]
      %v842 = vld [vmem:[%s307 + $0x5c] sm:$0xf]
      %v843 = vld [vmem:[%s307 + $0x60] sm:$0xf]
      %v844 = vld [vmem:[%s307 + $0x64] sm:$0xf]
      %v845 = vld [vmem:[%s307 + $0x68] sm:$0xf]
      %v846 = vld [vmem:[%s307 + $0x6c] sm:$0xf]
      %v847 = vld [vmem:[%s307 + $0x70] sm:$0xf]
      %v848 = vld [vmem:[%s307 + $0x74] sm:$0xf]
      %v849 = vld [vmem:[%s307 + $0x78] sm:$0xf]
      %v850 = vld [vmem:[%s307 + $0x7c] sm:$0xf]
      %v883 = vunpack.c.l.b16 %v819
      %v884 = vunpack.c.l.b16 %v820
      %v885 = vunpack.c.l.b16 %v821
      %v886 = vunpack.c.l.b16 %v822
      %v887 = vunpack.c.l.b16 %v823
      %v888 = vunpack.c.l.b16 %v824
      %v889 = vunpack.c.l.b16 %v825
      %v890 = vunpack.c.l.b16 %v826
      %v891 = vunpack.c.l.b16 %v827
      %v892 = vunpack.c.l.b16 %v828
      %v893 = vunpack.c.l.b16 %v829
      %v894 = vunpack.c.l.b16 %v830
      %v895 = vunpack.c.l.b16 %v831
      %v896 = vunpack.c.l.b16 %v832
      %v897 = vunpack.c.l.b16 %v833
      %v898 = vunpack.c.l.b16 %v834
      %v899 = vunpack.c.l.b16 %v835
      %v900 = vunpack.c.l.b16 %v836
      %v901 = vunpack.c.l.b16 %v837
      %v902 = vunpack.c.l.b16 %v838
      %v903 = vunpack.c.l.b16 %v839
      %v904 = vunpack.c.l.b16 %v840
      %v905 = vunpack.c.l.b16 %v841
      %v906 = vunpack.c.l.b16 %v842
      %v907 = vunpack.c.l.b16 %v843
      %v908 = vunpack.c.l.b16 %v844
      %v909 = vunpack.c.l.b16 %v845
      %v910 = vunpack.c.l.b16 %v846
      %v911 = vunpack.c.l.b16 %v847
      %v912 = vunpack.c.l.b16 %v848
      %v913 = vunpack.c.l.b16 %v849
      %v914 = vunpack.c.l.b16 %v850
      %v915 = vpack.c.b16 %v884, %v883
      %v916 = vpack.c.b16 %v886, %v885
      %v917 = vpack.c.b16 %v888, %v887
      %v918 = vpack.c.b16 %v890, %v889
      %v919 = vpack.c.b16 %v892, %v891
      %v920 = vpack.c.b16 %v894, %v893
      %v921 = vpack.c.b16 %v896, %v895
      %v922 = vpack.c.b16 %v898, %v897
      %v923 = vpack.c.b16 %v900, %v899
      %v924 = vpack.c.b16 %v902, %v901
      %v925 = vpack.c.b16 %v904, %v903
      %v926 = vpack.c.b16 %v906, %v905
      %v927 = vpack.c.b16 %v908, %v907
      %v928 = vpack.c.b16 %v910, %v909
      %v929 = vpack.c.b16 %v912, %v911
      %v930 = vpack.c.b16 %v914, %v913
      %947 = vmatpush.bf16.msra.mxu0 %v504
      %948 = vmatpush.bf16.msra.mxu0 %v503
      %949 = vmatpush.bf16.msra.mxu0 %v502
      %950 = vmatpush.bf16.msra.mxu0 %v501
      %951 = vmatpush.bf16.msra.mxu0 %v500
      %952 = vmatpush.bf16.msra.mxu0 %v499
      %953 = vmatpush.bf16.msra.mxu0 %v498
      %954 = vmatpush.bf16.msra.mxu0 %v497
      %955 = vmatmul.bf16.gmra.mxu0 %v915
      %v956 = vpop.f32.mrf.mxu0
      %v957 = vadd.f32 0.0, %v956
      %v958 = vpop.f32.mrf.mxu0
      %v959 = vadd.f32 0.0, %v958
      %960 = vmatmul.bf16.gmra.mxu0 %v916
      %v961 = vpop.f32.mrf.mxu0
      %v962 = vadd.f32 0.0, %v961
      %v963 = vpop.f32.mrf.mxu0
      %v964 = vadd.f32 0.0, %v963
      %965 = vmatmul.bf16.gmra.mxu0 %v917
      %v966 = vpop.f32.mrf.mxu0
      %v967 = vadd.f32 0.0, %v966
      %v968 = vpop.f32.mrf.mxu0
      %v969 = vadd.f32 0.0, %v968
      %970 = vmatmul.bf16.gmra.mxu0 %v918
      %v971 = vpop.f32.mrf.mxu0
      %v972 = vadd.f32 0.0, %v971
      %v973 = vpop.f32.mrf.mxu0
      %v974 = vadd.f32 0.0, %v973
      %975 = vmatmul.bf16.gmra.mxu0 %v919
      %v976 = vpop.f32.mrf.mxu0
      %v977 = vadd.f32 0.0, %v976
      %v978 = vpop.f32.mrf.mxu0
      %v979 = vadd.f32 0.0, %v978
      %980 = vmatmul.bf16.gmra.mxu0 %v920
      %v981 = vpop.f32.mrf.mxu0
      %v982 = vadd.f32 0.0, %v981
      %v983 = vpop.f32.mrf.mxu0
      %v984 = vadd.f32 0.0, %v983
      %985 = vmatmul.bf16.gmra.mxu0 %v921
      %v986 = vpop.f32.mrf.mxu0
      %v987 = vadd.f32 0.0, %v986
      %v988 = vpop.f32.mrf.mxu0
      %v989 = vadd.f32 0.0, %v988
      %990 = vmatmul.bf16.gmra.mxu0 %v922
      %v991 = vpop.f32.mrf.mxu0
      %v992 = vadd.f32 0.0, %v991
      %v993 = vpop.f32.mrf.mxu0
      %v994 = vadd.f32 0.0, %v993
      %995 = vmatmul.bf16.gmra.mxu0 %v923
      %v996 = vpop.f32.mrf.mxu0
      %v997 = vadd.f32 0.0, %v996
      %v998 = vpop.f32.mrf.mxu0
      %v999 = vadd.f32 0.0, %v998
      %1000 = vmatmul.bf16.gmra.mxu0 %v924
      %v1001 = vpop.f32.mrf.mxu0
      %v1002 = vadd.f32 0.0, %v1001
      %v1003 = vpop.f32.mrf.mxu0
      %v1004 = vadd.f32 0.0, %v1003
      %1005 = vmatmul.bf16.gmra.mxu0 %v925
      %v1006 = vpop.f32.mrf.mxu0
      %v1007 = vadd.f32 0.0, %v1006
      %v1008 = vpop.f32.mrf.mxu0
      %v1009 = vadd.f32 0.0, %v1008
      %1010 = vmatmul.bf16.gmra.mxu0 %v926
      %v1011 = vpop.f32.mrf.mxu0
      %v1012 = vadd.f32 0.0, %v1011
      %v1013 = vpop.f32.mrf.mxu0
      %v1014 = vadd.f32 0.0, %v1013
      %1015 = vmatmul.bf16.gmra.mxu0 %v927
      %v1016 = vpop.f32.mrf.mxu0
      %v1017 = vadd.f32 0.0, %v1016
      %v1018 = vpop.f32.mrf.mxu0
      %v1019 = vadd.f32 0.0, %v1018
      %1020 = vmatmul.bf16.gmra.mxu0 %v928
      %v1021 = vpop.f32.mrf.mxu0
      %v1022 = vadd.f32 0.0, %v1021
      %v1023 = vpop.f32.mrf.mxu0
      %v1024 = vadd.f32 0.0, %v1023
      %1025 = vmatmul.bf16.gmra.mxu0 %v929
      %v1026 = vpop.f32.mrf.mxu0
      %v1027 = vadd.f32 0.0, %v1026
      %v1028 = vpop.f32.mrf.mxu0
      %v1029 = vadd.f32 0.0, %v1028
      %1030 = vmatmul.bf16.gmra.mxu0 %v930
      %v1031 = vpop.f32.mrf.mxu0
      %v1032 = vadd.f32 0.0, %v1031
      %v1033 = vpop.f32.mrf.mxu0
      %v1034 = vadd.f32 0.0, %v1033
      %1035 = vdwg.mxu0
      %v1036 = vld [vmem:[%s313] sm:$0xf]
      %v1037 = vld [vmem:[%s313 + $0x4] sm:$0xf]
      %v1038 = vld [vmem:[%s313 + $0x8] sm:$0xf]
      %v1039 = vld [vmem:[%s313 + $0xc] sm:$0xf]
      %v1040 = vld [vmem:[%s313 + $0x10] sm:$0xf]
      %v1041 = vld [vmem:[%s313 + $0x14] sm:$0xf]
      %v1042 = vld [vmem:[%s313 + $0x18] sm:$0xf]
      %v1043 = vld [vmem:[%s313 + $0x1c] sm:$0xf]
      %v1044 = vld [vmem:[%s313 + $0x20] sm:$0xf]
      %v1045 = vld [vmem:[%s313 + $0x24] sm:$0xf]
      %v1046 = vld [vmem:[%s313 + $0x28] sm:$0xf]
      %v1047 = vld [vmem:[%s313 + $0x2c] sm:$0xf]
      %v1048 = vld [vmem:[%s313 + $0x30] sm:$0xf]
      %v1049 = vld [vmem:[%s313 + $0x34] sm:$0xf]
      %v1050 = vld [vmem:[%s313 + $0x38] sm:$0xf]
      %v1051 = vld [vmem:[%s313 + $0x3c] sm:$0xf]
      %v1052 = vld [vmem:[%s313 + $0x40] sm:$0xf]
      %v1053 = vld [vmem:[%s313 + $0x44] sm:$0xf]
      %v1054 = vld [vmem:[%s313 + $0x48] sm:$0xf]
      %v1055 = vld [vmem:[%s313 + $0x4c] sm:$0xf]
      %v1056 = vld [vmem:[%s313 + $0x50] sm:$0xf]
      %v1057 = vld [vmem:[%s313 + $0x54] sm:$0xf]
      %v1058 = vld [vmem:[%s313 + $0x58] sm:$0xf]
      %v1059 = vld [vmem:[%s313 + $0x5c] sm:$0xf]
      %v1060 = vld [vmem:[%s313 + $0x60] sm:$0xf]
      %v1061 = vld [vmem:[%s313 + $0x64] sm:$0xf]
      %v1062 = vld [vmem:[%s313 + $0x68] sm:$0xf]
      %v1063 = vld [vmem:[%s313 + $0x6c] sm:$0xf]
      %v1064 = vld [vmem:[%s313 + $0x70] sm:$0xf]
      %v1065 = vld [vmem:[%s313 + $0x74] sm:$0xf]
      %v1066 = vld [vmem:[%s313 + $0x78] sm:$0xf]
      %v1067 = vld [vmem:[%s313 + $0x7c] sm:$0xf]
      %v1100 = vunpack.c.l.b16 %v1036
      %v1101 = vunpack.c.l.b16 %v1037
      %v1102 = vunpack.c.l.b16 %v1038
      %v1103 = vunpack.c.l.b16 %v1039
      %v1104 = vunpack.c.l.b16 %v1040
      %v1105 = vunpack.c.l.b16 %v1041
      %v1106 = vunpack.c.l.b16 %v1042
      %v1107 = vunpack.c.l.b16 %v1043
      %v1108 = vunpack.c.l.b16 %v1044
      %v1109 = vunpack.c.l.b16 %v1045
      %v1110 = vunpack.c.l.b16 %v1046
      %v1111 = vunpack.c.l.b16 %v1047
      %v1112 = vunpack.c.l.b16 %v1048
      %v1113 = vunpack.c.l.b16 %v1049
      %v1114 = vunpack.c.l.b16 %v1050
      %v1115 = vunpack.c.l.b16 %v1051
      %v1116 = vunpack.c.l.b16 %v1052
      %v1117 = vunpack.c.l.b16 %v1053
      %v1118 = vunpack.c.l.b16 %v1054
      %v1119 = vunpack.c.l.b16 %v1055
      %v1120 = vunpack.c.l.b16 %v1056
      %v1121 = vunpack.c.l.b16 %v1057
      %v1122 = vunpack.c.l.b16 %v1058
      %v1123 = vunpack.c.l.b16 %v1059
      %v1124 = vunpack.c.l.b16 %v1060
      %v1125 = vunpack.c.l.b16 %v1061
      %v1126 = vunpack.c.l.b16 %v1062
      %v1127 = vunpack.c.l.b16 %v1063
      %v1128 = vunpack.c.l.b16 %v1064
      %v1129 = vunpack.c.l.b16 %v1065
      %v1130 = vunpack.c.l.b16 %v1066
      %v1131 = vunpack.c.l.b16 %v1067
      %v1132 = vpack.c.b16 %v1101, %v1100
      %v1133 = vpack.c.b16 %v1103, %v1102
      %v1134 = vpack.c.b16 %v1105, %v1104
      %v1135 = vpack.c.b16 %v1107, %v1106
      %v1136 = vpack.c.b16 %v1109, %v1108
      %v1137 = vpack.c.b16 %v1111, %v1110
      %v1138 = vpack.c.b16 %v1113, %v1112
      %v1139 = vpack.c.b16 %v1115, %v1114
      %v1140 = vpack.c.b16 %v1117, %v1116
      %v1141 = vpack.c.b16 %v1119, %v1118
      %v1142 = vpack.c.b16 %v1121, %v1120
      %v1143 = vpack.c.b16 %v1123, %v1122
      %v1144 = vpack.c.b16 %v1125, %v1124
      %v1145 = vpack.c.b16 %v1127, %v1126
      %v1146 = vpack.c.b16 %v1129, %v1128
      %v1147 = vpack.c.b16 %v1131, %v1130
      %1164 = vmatpush.bf16.msra.mxu0 %v504
      %1165 = vmatpush.bf16.msra.mxu0 %v503
      %1166 = vmatpush.bf16.msra.mxu0 %v502
      %1167 = vmatpush.bf16.msra.mxu0 %v501
      %1168 = vmatpush.bf16.msra.mxu0 %v500
      %1169 = vmatpush.bf16.msra.mxu0 %v499
      %1170 = vmatpush.bf16.msra.mxu0 %v498
      %1171 = vmatpush.bf16.msra.mxu0 %v497
      %1172 = vmatmul.bf16.gmra.mxu0 %v1132
      %v1173 = vpop.f32.mrf.mxu0
      %v1174 = vadd.f32 0.0, %v1173
      %v1175 = vpop.f32.mrf.mxu0
      %v1176 = vadd.f32 0.0, %v1175
      %1177 = vmatmul.bf16.gmra.mxu0 %v1133
      %v1178 = vpop.f32.mrf.mxu0
      %v1179 = vadd.f32 0.0, %v1178
      %v1180 = vpop.f32.mrf.mxu0
      %v1181 = vadd.f32 0.0, %v1180
      %1182 = vmatmul.bf16.gmra.mxu0 %v1134
      %v1183 = vpop.f32.mrf.mxu0
      %v1184 = vadd.f32 0.0, %v1183
      %v1185 = vpop.f32.mrf.mxu0
      %v1186 = vadd.f32 0.0, %v1185
      %1187 = vmatmul.bf16.gmra.mxu0 %v1135
      %v1188 = vpop.f32.mrf.mxu0
      %v1189 = vadd.f32 0.0, %v1188
      %v1190 = vpop.f32.mrf.mxu0
      %v1191 = vadd.f32 0.0, %v1190
      %1192 = vmatmul.bf16.gmra.mxu0 %v1136
      %v1193 = vpop.f32.mrf.mxu0
      %v1194 = vadd.f32 0.0, %v1193
      %v1195 = vpop.f32.mrf.mxu0
      %v1196 = vadd.f32 0.0, %v1195
      %1197 = vmatmul.bf16.gmra.mxu0 %v1137
      %v1198 = vpop.f32.mrf.mxu0
      %v1199 = vadd.f32 0.0, %v1198
      %v1200 = vpop.f32.mrf.mxu0
      %v1201 = vadd.f32 0.0, %v1200
      %1202 = vmatmul.bf16.gmra.mxu0 %v1138
      %v1203 = vpop.f32.mrf.mxu0
      %v1204 = vadd.f32 0.0, %v1203
      %v1205 = vpop.f32.mrf.mxu0
      %v1206 = vadd.f32 0.0, %v1205
      %1207 = vmatmul.bf16.gmra.mxu0 %v1139
      %v1208 = vpop.f32.mrf.mxu0
      %v1209 = vadd.f32 0.0, %v1208
      %v1210 = vpop.f32.mrf.mxu0
      %v1211 = vadd.f32 0.0, %v1210
      %1212 = vmatmul.bf16.gmra.mxu0 %v1140
      %v1213 = vpop.f32.mrf.mxu0
      %v1214 = vadd.f32 0.0, %v1213
      %v1215 = vpop.f32.mrf.mxu0
      %v1216 = vadd.f32 0.0, %v1215
      %1217 = vmatmul.bf16.gmra.mxu0 %v1141
      %v1218 = vpop.f32.mrf.mxu0
      %v1219 = vadd.f32 0.0, %v1218
      %v1220 = vpop.f32.mrf.mxu0
      %v1221 = vadd.f32 0.0, %v1220
      %1222 = vmatmul.bf16.gmra.mxu0 %v1142
      %v1223 = vpop.f32.mrf.mxu0
      %v1224 = vadd.f32 0.0, %v1223
      %v1225 = vpop.f32.mrf.mxu0
      %v1226 = vadd.f32 0.0, %v1225
      %1227 = vmatmul.bf16.gmra.mxu0 %v1143
      %v1228 = vpop.f32.mrf.mxu0
      %v1229 = vadd.f32 0.0, %v1228
      %v1230 = vpop.f32.mrf.mxu0
      %v1231 = vadd.f32 0.0, %v1230
      %1232 = vmatmul.bf16.gmra.mxu0 %v1144
      %v1233 = vpop.f32.mrf.mxu0
      %v1234 = vadd.f32 0.0, %v1233
      %v1235 = vpop.f32.mrf.mxu0
      %v1236 = vadd.f32 0.0, %v1235
      %1237 = vmatmul.bf16.gmra.mxu0 %v1145
      %v1238 = vpop.f32.mrf.mxu0
      %v1239 = vadd.f32 0.0, %v1238
      %v1240 = vpop.f32.mrf.mxu0
      %v1241 = vadd.f32 0.0, %v1240
      %1242 = vmatmul.bf16.gmra.mxu0 %v1146
      %v1243 = vpop.f32.mrf.mxu0
      %v1244 = vadd.f32 0.0, %v1243
      %v1245 = vpop.f32.mrf.mxu0
      %v1246 = vadd.f32 0.0, %v1245
      %1247 = vmatmul.bf16.gmra.mxu0 %v1147
      %v1248 = vpop.f32.mrf.mxu0
      %v1249 = vadd.f32 0.0, %v1248
      %v1250 = vpop.f32.mrf.mxu0
      %v1251 = vadd.f32 0.0, %v1250
      %1252 = vdwg.mxu0
      %v1253 = vmax.f32 %v523, %v740
      %v1254 = vmax.f32 %v525, %v742
      %v1255 = vmax.f32 %v528, %v745
      %v1256 = vmax.f32 %v530, %v747
      %v1257 = vmax.f32 %v533, %v750
      %v1258 = vmax.f32 %v535, %v752
      %v1259 = vmax.f32 %v538, %v755
      %v1260 = vmax.f32 %v540, %v757
      %v1261 = vmax.f32 %v543, %v760
      %v1262 = vmax.f32 %v545, %v762
      %v1263 = vmax.f32 %v548, %v765
      %v1264 = vmax.f32 %v550, %v767
      %v1265 = vmax.f32 %v553, %v770
      %v1266 = vmax.f32 %v555, %v772
      %v1267 = vmax.f32 %v558, %v775
      %v1268 = vmax.f32 %v560, %v777
      %v1269 = vmax.f32 %v563, %v780
      %v1270 = vmax.f32 %v565, %v782
      %v1271 = vmax.f32 %v568, %v785
      %v1272 = vmax.f32 %v570, %v787
      %v1273 = vmax.f32 %v573, %v790
      %v1274 = vmax.f32 %v575, %v792
      %v1275 = vmax.f32 %v578, %v795
      %v1276 = vmax.f32 %v580, %v797
      %v1277 = vmax.f32 %v583, %v800
      %v1278 = vmax.f32 %v585, %v802
      %v1279 = vmax.f32 %v588, %v805
      %v1280 = vmax.f32 %v590, %v807
      %v1281 = vmax.f32 %v593, %v810
      %v1282 = vmax.f32 %v595, %v812
      %v1283 = vmax.f32 %v598, %v815
      %v1284 = vmax.f32 %v600, %v817
      %v1285 = vmax.f32 %v957, %v1174
      %v1286 = vmax.f32 %v959, %v1176
      %v1287 = vmax.f32 %v962, %v1179
      %v1288 = vmax.f32 %v964, %v1181
      %v1289 = vmax.f32 %v967, %v1184
      %v1290 = vmax.f32 %v969, %v1186
      %v1291 = vmax.f32 %v972, %v1189
      %v1292 = vmax.f32 %v974, %v1191
      %v1293 = vmax.f32 %v977, %v1194
      %v1294 = vmax.f32 %v979, %v1196
      %v1295 = vmax.f32 %v982, %v1199
      %v1296 = vmax.f32 %v984, %v1201
      %v1297 = vmax.f32 %v987, %v1204
      %v1298 = vmax.f32 %v989, %v1206
      %v1299 = vmax.f32 %v992, %v1209
      %v1300 = vmax.f32 %v994, %v1211
      %v1301 = vmax.f32 %v997, %v1214
      %v1302 = vmax.f32 %v999, %v1216
      %v1303 = vmax.f32 %v1002, %v1219
      %v1304 = vmax.f32 %v1004, %v1221
      %v1305 = vmax.f32 %v1007, %v1224
      %v1306 = vmax.f32 %v1009, %v1226
      %v1307 = vmax.f32 %v1012, %v1229
      %v1308 = vmax.f32 %v1014, %v1231
      %v1309 = vmax.f32 %v1017, %v1234
      %v1310 = vmax.f32 %v1019, %v1236
      %v1311 = vmax.f32 %v1022, %v1239
      %v1312 = vmax.f32 %v1024, %v1241
      %v1313 = vmax.f32 %v1027, %v1244
      %v1314 = vmax.f32 %v1029, %v1246
      %v1315 = vmax.f32 %v1032, %v1249
      %v1316 = vmax.f32 %v1034, %v1251
      %v1317 = vmax.f32 %v1253, %v1285
      %v1318 = vmax.f32 %v1254, %v1286
      %v1319 = vmax.f32 %v1255, %v1287
      %v1320 = vmax.f32 %v1256, %v1288
      %v1321 = vmax.f32 %v1257, %v1289
      %v1322 = vmax.f32 %v1258, %v1290
      %v1323 = vmax.f32 %v1259, %v1291
      %v1324 = vmax.f32 %v1260, %v1292
      %v1325 = vmax.f32 %v1261, %v1293
      %v1326 = vmax.f32 %v1262, %v1294
      %v1327 = vmax.f32 %v1263, %v1295
      %v1328 = vmax.f32 %v1264, %v1296
      %v1329 = vmax.f32 %v1265, %v1297
      %v1330 = vmax.f32 %v1266, %v1298
      %v1331 = vmax.f32 %v1267, %v1299
      %v1332 = vmax.f32 %v1268, %v1300
      %v1333 = vmax.f32 %v1269, %v1301
      %v1334 = vmax.f32 %v1270, %v1302
      %v1335 = vmax.f32 %v1271, %v1303
      %v1336 = vmax.f32 %v1272, %v1304
      %v1337 = vmax.f32 %v1273, %v1305
      %v1338 = vmax.f32 %v1274, %v1306
      %v1339 = vmax.f32 %v1275, %v1307
      %v1340 = vmax.f32 %v1276, %v1308
      %v1341 = vmax.f32 %v1277, %v1309
      %v1342 = vmax.f32 %v1278, %v1310
      %v1343 = vmax.f32 %v1279, %v1311
      %v1344 = vmax.f32 %v1280, %v1312
      %v1345 = vmax.f32 %v1281, %v1313
      %v1346 = vmax.f32 %v1282, %v1314
      %v1347 = vmax.f32 %v1283, %v1315
      %v1348 = vmax.f32 %v1284, %v1316
      %v1349 = vld [vmem:[%s5] sm:$0x1]
      %v1351 = vperm.slane %v1349, 0
      %v1353 = vadd.f32 %v1317, %v1351
      %v1354 = vadd.f32 %v1318, %v1351
      %v1355 = vadd.f32 %v1319, %v1351
      %v1356 = vadd.f32 %v1320, %v1351
      %v1357 = vadd.f32 %v1321, %v1351
      %v1358 = vadd.f32 %v1322, %v1351
      %v1359 = vadd.f32 %v1323, %v1351
      %v1360 = vadd.f32 %v1324, %v1351
      %v1361 = vadd.f32 %v1325, %v1351
      %v1362 = vadd.f32 %v1326, %v1351
      %v1363 = vadd.f32 %v1327, %v1351
      %v1364 = vadd.f32 %v1328, %v1351
      %v1365 = vadd.f32 %v1329, %v1351
      %v1366 = vadd.f32 %v1330, %v1351
      %v1367 = vadd.f32 %v1331, %v1351
      %v1368 = vadd.f32 %v1332, %v1351
      %v1369 = vadd.f32 %v1333, %v1351
      %v1370 = vadd.f32 %v1334, %v1351
      %v1371 = vadd.f32 %v1335, %v1351
      %v1372 = vadd.f32 %v1336, %v1351
      %v1373 = vadd.f32 %v1337, %v1351
      %v1374 = vadd.f32 %v1338, %v1351
      %v1375 = vadd.f32 %v1339, %v1351
      %v1376 = vadd.f32 %v1340, %v1351
      %v1377 = vadd.f32 %v1341, %v1351
      %v1378 = vadd.f32 %v1342, %v1351
      %v1379 = vadd.f32 %v1343, %v1351
      %v1380 = vadd.f32 %v1344, %v1351
      %v1381 = vadd.f32 %v1345, %v1351
      %v1382 = vadd.f32 %v1346, %v1351
      %v1383 = vadd.f32 %v1347, %v1351
      %v1384 = vadd.f32 %v1348, %v1351
      %v1385 = vpack.c.bf16 %v1353, %v1353
      %v1386 = vpack.c.bf16 %v1354, %v1354
      %v1387 = vpack.c.bf16 %v1355, %v1355
      %v1388 = vpack.c.bf16 %v1356, %v1356
      %v1389 = vpack.c.bf16 %v1357, %v1357
      %v1390 = vpack.c.bf16 %v1358, %v1358
      %v1391 = vpack.c.bf16 %v1359, %v1359
      %v1392 = vpack.c.bf16 %v1360, %v1360
      %v1393 = vpack.c.bf16 %v1361, %v1361
      %v1394 = vpack.c.bf16 %v1362, %v1362
      %v1395 = vpack.c.bf16 %v1363, %v1363
      %v1396 = vpack.c.bf16 %v1364, %v1364
      %v1397 = vpack.c.bf16 %v1365, %v1365
      %v1398 = vpack.c.bf16 %v1366, %v1366
      %v1399 = vpack.c.bf16 %v1367, %v1367
      %v1400 = vpack.c.bf16 %v1368, %v1368
      %v1401 = vpack.c.bf16 %v1369, %v1369
      %v1402 = vpack.c.bf16 %v1370, %v1370
      %v1403 = vpack.c.bf16 %v1371, %v1371
      %v1404 = vpack.c.bf16 %v1372, %v1372
      %v1405 = vpack.c.bf16 %v1373, %v1373
      %v1406 = vpack.c.bf16 %v1374, %v1374
      %v1407 = vpack.c.bf16 %v1375, %v1375
      %v1408 = vpack.c.bf16 %v1376, %v1376
      %v1409 = vpack.c.bf16 %v1377, %v1377
      %v1410 = vpack.c.bf16 %v1378, %v1378
      %v1411 = vpack.c.bf16 %v1379, %v1379
      %v1412 = vpack.c.bf16 %v1380, %v1380
      %v1413 = vpack.c.bf16 %v1381, %v1381
      %v1414 = vpack.c.bf16 %v1382, %v1382
      %v1415 = vpack.c.bf16 %v1383, %v1383
      %v1416 = vpack.c.bf16 %v1384, %v1384
      %1417 = vst [vmem:[%s319] sm:$0xf] %v1385
      %1418 = vst [vmem:[%s319 + $0x4] sm:$0xf] %v1386
      %1419 = vst [vmem:[%s319 + $0x8] sm:$0xf] %v1387
      %1420 = vst [vmem:[%s319 + $0xc] sm:$0xf] %v1388
      %1421 = vst [vmem:[%s319 + $0x10] sm:$0xf] %v1389
      %1422 = vst [vmem:[%s319 + $0x14] sm:$0xf] %v1390
      %1423 = vst [vmem:[%s319 + $0x18] sm:$0xf] %v1391
      %1424 = vst [vmem:[%s319 + $0x1c] sm:$0xf] %v1392
      %1425 = vst [vmem:[%s319 + $0x20] sm:$0xf] %v1393
      %1426 = vst [vmem:[%s319 + $0x24] sm:$0xf] %v1394
      %1427 = vst [vmem:[%s319 + $0x28] sm:$0xf] %v1395
      %1428 = vst [vmem:[%s319 + $0x2c] sm:$0xf] %v1396
      %1429 = vst [vmem:[%s319 + $0x30] sm:$0xf] %v1397
      %1430 = vst [vmem:[%s319 + $0x34] sm:$0xf] %v1398
      %1431 = vst [vmem:[%s319 + $0x38] sm:$0xf] %v1399
      %1432 = vst [vmem:[%s319 + $0x3c] sm:$0xf] %v1400
      %1433 = vst [vmem:[%s319 + $0x40] sm:$0xf] %v1401
      %1434 = vst [vmem:[%s319 + $0x44] sm:$0xf] %v1402
      %1435 = vst [vmem:[%s319 + $0x48] sm:$0xf] %v1403
      %1436 = vst [vmem:[%s319 + $0x4c] sm:$0xf] %v1404
      %1437 = vst [vmem:[%s319 + $0x50] sm:$0xf] %v1405
      %1438 = vst [vmem:[%s319 + $0x54] sm:$0xf] %v1406
      %1439 = vst [vmem:[%s319 + $0x58] sm:$0xf] %v1407
      %1440 = vst [vmem:[%s319 + $0x5c] sm:$0xf] %v1408
      %1441 = vst [vmem:[%s319 + $0x60] sm:$0xf] %v1409
      %1442 = vst [vmem:[%s319 + $0x64] sm:$0xf] %v1410
      %1443 = vst [vmem:[%s319 + $0x68] sm:$0xf] %v1411
      %1444 = vst [vmem:[%s319 + $0x6c] sm:$0xf] %v1412
      %1445 = vst [vmem:[%s319 + $0x70] sm:$0xf] %v1413
      %1446 = vst [vmem:[%s319 + $0x74] sm:$0xf] %v1414
      %1447 = vst [vmem:[%s319 + $0x78] sm:$0xf] %v1415
      %1448 = vst [vmem:[%s319 + $0x7c] sm:$0xf] %v1416
      %s1449 = smul.u32 32, %s17
      %p1450 = scmp.lt.s32.totalorder %s1449, 63
      %s1451 = scalar_select %p1450, %s1449, 63
      %s1452 = smul.addr %s1451, 4
      %s1453 = scalar_lea.vmem %s6, %s1452
      // Predicated region
      $region45: #{gration_forward.4} parent=43 // pred_check
        %p1454 = pneg %p181
      $region46: #{gration_forward.4} parent=43 // pred_check_branch
        %1456 = sbr.rel (%p1454) target = $region48
      $region47: #{gration_forward.4} parent=43 // pred_region
        %s1457 = smul.u32 32, %s17
      $region48: #{gration_forward.4} parent=43 // pred_fallthru
        _
    $region44: #{gration_forward.4} parent=5 // pred_fallthru
      _
    %p1458 = scmp.le.s32.totalorder 2, %s12
    // Predicated region
    $region49: #{gration_forward.4} parent=5 // pred_check
      %p1459 = pneg %p1458
    $region50: #{gration_forward.4} parent=5 // pred_check_branch
      %1461 = sbr.rel (%p1459) target = $region52
    $region51: #{gration_forward.4} parent=5 // pred_region
      %s1462 = ssub.s32 %s12, 2
      // Predicated region
      $region53: #{gration_forward.4} parent=51 // pred_check
        %p1463 = pneg %p187
      $region54: #{gration_forward.4} parent=51 // pred_check_branch
        %1465 = sbr.rel (%p1463) target = $region56
      $region55: #{gration_forward.4} parent=51 // pred_region
        %s1466 = smul.u32 32, %s18
        %p1467 = scmp.lt.s32.totalorder %s1466, 63
        %s1468 = scalar_select %p1467, %s1466, 63
        %s1469 = smul.addr %s1468, 4
        %s1470 = scalar_lea.vmem %s6, %s1469
      $region56: #{gration_forward.4} parent=51 // pred_fallthru
        _
    $region52: #{gration_forward.4} parent=5 // pred_fallthru
      _
  $region6: #{gration_forward.4} parent=0 // loop_footer
    %s16 = sadd.s32 1, %s12
  $region7: #{gration_forward.4} parent=0 // loop_footer_branch
    %11 = sbr.rel target = $region3
  $region8: #{gration_forward.4} parent=0 // loop_exit
    _

// kernel: gration_forward.5
$region0: #{gration_forward.5}
  #allocation0 [shape = 'u32[]', space=smem, size = 0x4, offset = 0x4, fixed_abs, tag = 'smem constant byte address 0x4 - core index']
  #allocation1 [shape = 'u32[72,128]{1,0:T(1,128)}', space=vmem, size = 0x9000, scoped, tag = 'internal scratch']
  %s0 = inlined_call_operand.vmem [shape: bf16[192,512], index: 0, kind: input, shape index: {}]
  %s1 = inlined_call_operand.vmem [shape: bf16[192,512], index: 1, kind: input, shape index: {}]
  %s2 = inlined_call_operand.vmem [shape: bf16[192,512], index: 2, kind: input, shape index: {}]
  %s3 = inlined_call_operand.vmem [shape: bf16[192,512], index: 3, kind: input, shape index: {}]
  %s4 = inlined_call_operand.vmem [shape: bf16[512,128], index: 4, kind: input, shape index: {}]
  %s5 = inlined_call_operand.vmem [shape: f32[1,128], index: 5, kind: input, shape index: {}]
  %s6 = inlined_call_operand.vmem [shape: bf16[192,128], index: 6, kind: output, shape index: {}]
  %s7 = sld [smem:[#allocation0]]
  $region57: #{gration_forward.5} parent=0
    _
  %s9 = ssub.s32 1, %s7
  %s10 = scalar_select 0, %s9, %s7
  loop: start=0, step=1, limit=4
  $region2: #{gration_forward.5} parent=0 // loop_pre_header
    _
  $region3: #{gration_forward.5} parent=0 // loop_header
    %s12 = sphi 0, %s16
    %p13 = scmp.ge.s32.totalorder %s12, 4
    %s22 = sphi 0, %s24
    %s25 = sphi 0, %s22
    %s26 = sphi 0, %s25
    %s42 = sphi 0, %s26
    %s48 = sphi 0, %s50
    %s51 = sphi 0, %s48
    %s52 = sphi 0, %s51
    %s68 = sphi 0, %s52
    %s74 = sphi 0, %s76
    %s77 = sphi 0, %s74
    %s78 = sphi 0, %s77
    %s94 = sphi 0, %s78
    %s100 = sphi 0, %s102
    %s103 = sphi 0, %s100
    %s104 = sphi 0, %s103
    %s120 = sphi 0, %s104
    %s124 = sphi 0, %s124
    %s126 = sphi 0, %s124
    %s127 = sphi 0, %s126
    %s141 = sphi 0, %s127
    %s145 = sphi 0, %s145
    %s147 = sphi 0, %s145
    %s148 = sphi 0, %s147
    %s162 = sphi 0, %s148
    %s168 = sphi 0, %s170
    %s171 = sphi 0, %s168
    %s172 = sphi 0, %s171
    %s188 = sphi 0, %s172
  $region4: #{gration_forward.5} parent=0 // loop_header_branch
    %15 = sbr.rel (%p13) target = $region8
  $region5: #{gration_forward.5} parent=0 // loop_body
    %s17 = ssub.s32 %s12, 1
    %s18 = ssub.s32 %s12, 2
    %s19 = sadd.s32 %s12, 1
    %s20 = ssub.s32 %s12, %s19
    %p21 = scmp.eq.s32.totalorder %s20, 0
    %s23 = sadd.s32 %s22, 1
    %s24 = scalar_select %p21, %s22, %s23
    %p27 = pneg %p21
    %p28 = scmp.eq.s32.totalorder %s12, 1
    %p29 = por %p27, %p28
    %p30 = scmp.ne.s32.totalorder %s22, %s25
    %p31 = scmp.eq.s32.totalorder %s12, 0
    %p32 = por %p30, %p31
    %p33 = scmp.ne.s32.totalorder %s22, %s25
    %p34 = scmp.eq.s32.totalorder %s17, 1
    %p35 = por %p33, %p34
    %p36 = scmp.ne.s32.totalorder %s25, %s26
    %p37 = scmp.eq.s32.totalorder %s17, 0
    %p38 = por %p36, %p37
    %p39 = scmp.ne.s32.totalorder %s25, %s26
    %p40 = scmp.eq.s32.totalorder %s18, 1
    %p41 = por %p39, %p40
    %p43 = scmp.ne.s32.totalorder %s26, %s42
    %p44 = scmp.eq.s32.totalorder %s18, 0
    %p45 = por %p43, %p44
    %s46 = ssub.s32 %s12, %s19
    %p47 = scmp.eq.s32.totalorder %s46, 0
    %s49 = sadd.s32 %s48, 1
    %s50 = scalar_select %p47, %s48, %s49
    %p53 = pneg %p47
    %p54 = scmp.eq.s32.totalorder %s12, 1
    %p55 = por %p53, %p54
    %p56 = scmp.ne.s32.totalorder %s48, %s51
    %p57 = scmp.eq.s32.totalorder %s12, 0
    %p58 = por %p56, %p57
    %p59 = scmp.ne.s32.totalorder %s48, %s51
    %p60 = scmp.eq.s32.totalorder %s17, 1
    %p61 = por %p59, %p60
    %p62 = scmp.ne.s32.totalorder %s51, %s52
    %p63 = scmp.eq.s32.totalorder %s17, 0
    %p64 = por %p62, %p63
    %p65 = scmp.ne.s32.totalorder %s51, %s52
    %p66 = scmp.eq.s32.totalorder %s18, 1
    %p67 = por %p65, %p66
    %p69 = scmp.ne.s32.totalorder %s52, %s68
    %p70 = scmp.eq.s32.totalorder %s18, 0
    %p71 = por %p69, %p70
    %s72 = ssub.s32 %s12, %s19
    %p73 = scmp.eq.s32.totalorder %s72, 0
    %s75 = sadd.s32 %s74, 1
    %s76 = scalar_select %p73, %s74, %s75
    %p79 = pneg %p73
    %p80 = scmp.eq.s32.totalorder %s12, 1
    %p81 = por %p79, %p80
    %p82 = scmp.ne.s32.totalorder %s74, %s77
    %p83 = scmp.eq.s32.totalorder %s12, 0
    %p84 = por %p82, %p83
    %p85 = scmp.ne.s32.totalorder %s74, %s77
    %p86 = scmp.eq.s32.totalorder %s17, 1
    %p87 = por %p85, %p86
    %p88 = scmp.ne.s32.totalorder %s77, %s78
    %p89 = scmp.eq.s32.totalorder %s17, 0
    %p90 = por %p88, %p89
    %p91 = scmp.ne.s32.totalorder %s77, %s78
    %p92 = scmp.eq.s32.totalorder %s18, 1
    %p93 = por %p91, %p92
    %p95 = scmp.ne.s32.totalorder %s78, %s94
    %p96 = scmp.eq.s32.totalorder %s18, 0
    %p97 = por %p95, %p96
    %s98 = ssub.s32 %s12, %s19
    %p99 = scmp.eq.s32.totalorder %s98, 0
    %s101 = sadd.s32 %s100, 1
    %s102 = scalar_select %p99, %s100, %s101
    %p105 = pneg %p99
    %p106 = scmp.eq.s32.totalorder %s12, 1
    %p107 = por %p105, %p106
    %p108 = scmp.ne.s32.totalorder %s100, %s103
    %p109 = scmp.eq.s32.totalorder %s12, 0
    %p110 = por %p108, %p109
    %p111 = scmp.ne.s32.totalorder %s100, %s103
    %p112 = scmp.eq.s32.totalorder %s17, 1
    %p113 = por %p111, %p112
    %p114 = scmp.ne.s32.totalorder %s103, %s104
    %p115 = scmp.eq.s32.totalorder %s17, 0
    %p116 = por %p114, %p115
    %p117 = scmp.ne.s32.totalorder %s103, %s104
    %p118 = scmp.eq.s32.totalorder %s18, 1
    %p119 = por %p117, %p118
    %p121 = scmp.ne.s32.totalorder %s104, %s120
    %p122 = scmp.eq.s32.totalorder %s18, 0
    %p123 = por %p121, %p122
    %s125 = sadd.s32 %s124, 1
    %p128 = scmp.eq.s32.totalorder %s12, 1
    %p129 = scmp.ne.s32.totalorder %s124, %s126
    %p130 = scmp.eq.s32.totalorder %s12, 0
    %p131 = por %p129, %p130
    %p132 = scmp.ne.s32.totalorder %s124, %s126
    %p133 = scmp.eq.s32.totalorder %s17, 1
    %p134 = por %p132, %p133
    %p135 = scmp.ne.s32.totalorder %s126, %s127
    %p136 = scmp.eq.s32.totalorder %s17, 0
    %p137 = por %p135, %p136
    %p138 = scmp.ne.s32.totalorder %s126, %s127
    %p139 = scmp.eq.s32.totalorder %s18, 1
    %p140 = por %p138, %p139
    %p142 = scmp.ne.s32.totalorder %s127, %s141
    %p143 = scmp.eq.s32.totalorder %s18, 0
    %p144 = por %p142, %p143
    %s146 = sadd.s32 %s145, 1
    %p149 = scmp.eq.s32.totalorder %s12, 1
    %p150 = scmp.ne.s32.totalorder %s145, %s147
    %p151 = scmp.eq.s32.totalorder %s12, 0
    %p152 = por %p150, %p151
    %p153 = scmp.ne.s32.totalorder %s145, %s147
    %p154 = scmp.eq.s32.totalorder %s17, 1
    %p155 = por %p153, %p154
    %p156 = scmp.ne.s32.totalorder %s147, %s148
    %p157 = scmp.eq.s32.totalorder %s17, 0
    %p158 = por %p156, %p157
    %p159 = scmp.ne.s32.totalorder %s147, %s148
    %p160 = scmp.eq.s32.totalorder %s18, 1
    %p161 = por %p159, %p160
    %p163 = scmp.ne.s32.totalorder %s148, %s162
    %p164 = scmp.eq.s32.totalorder %s18, 0
    %p165 = por %p163, %p164
    %s166 = ssub.s32 %s12, %s19
    %p167 = scmp.eq.s32.totalorder %s166, 0
    %s169 = sadd.s32 %s168, 1
    %s170 = scalar_select %p167, %s168, %s169
    %p173 = pneg %p167
    %p174 = scmp.eq.s32.totalorder %s12, 1
    %p175 = por %p173, %p174
    %p176 = scmp.ne.s32.totalorder %s168, %s171
    %p177 = scmp.eq.s32.totalorder %s12, 0
    %p178 = por %p176, %p177
    %p179 = scmp.ne.s32.totalorder %s168, %s171
    %p180 = scmp.eq.s32.totalorder %s17, 1
    %p181 = por %p179, %p180
    %p182 = scmp.ne.s32.totalorder %s171, %s172
    %p183 = scmp.eq.s32.totalorder %s17, 0
    %p184 = por %p182, %p183
    %p185 = scmp.ne.s32.totalorder %s171, %s172
    %p186 = scmp.eq.s32.totalorder %s18, 1
    %p187 = por %p185, %p186
    %p189 = scmp.ne.s32.totalorder %s172, %s188
    %p190 = scmp.eq.s32.totalorder %s18, 0
    %p191 = por %p189, %p190
    %p192 = scmp.le.s32.totalorder 1, %s12
    %p193 = scmp.lt.s32.totalorder %s12, 3
    %p194 = pnand %p192, %p193
    %p195 = pneg %p194
    // Predicated region
    $region9: #{gration_forward.5} parent=5 // pred_check
      _
    $region10: #{gration_forward.5} parent=5 // pred_check_branch
      %197 = sbr.rel (%p194) target = $region12
    $region11: #{gration_forward.5} parent=5 // pred_region
      %s198 = ssub.s32 %s12, 1
      // Predicated region
      $region13: #{gration_forward.5} parent=11 // pred_check
        %p199 = pneg %p137
      $region14: #{gration_forward.5} parent=11 // pred_check_branch
        %201 = sbr.rel (%p199) target = $region16
      $region15: #{gration_forward.5} parent=11 // pred_region
        _
      $region16: #{gration_forward.5} parent=11 // pred_fallthru
        _
      // Predicated region
      $region17: #{gration_forward.5} parent=11 // pred_check
        %p202 = pneg %p158
      $region18: #{gration_forward.5} parent=11 // pred_check_branch
        %204 = sbr.rel (%p202) target = $region20
      $region19: #{gration_forward.5} parent=11 // pred_region
        _
      $region20: #{gration_forward.5} parent=11 // pred_fallthru
        _
    $region12: #{gration_forward.5} parent=5 // pred_fallthru
      _
    %p205 = scmp.lt.s32.totalorder %s12, 2
    // Predicated region
    $region21: #{gration_forward.5} parent=5 // pred_check
      %p206 = pneg %p205
    $region22: #{gration_forward.5} parent=5 // pred_check_branch
      %208 = sbr.rel (%p206) target = $region24
    $region23: #{gration_forward.5} parent=5 // pred_region
      // Predicated region
      $region25: #{gration_forward.5} parent=23 // pred_check
        %p209 = pneg %p32
      $region26: #{gration_forward.5} parent=23 // pred_check_branch
        %211 = sbr.rel (%p209) target = $region28
      $region27: #{gration_forward.5} parent=23 // pred_region
        %s212 = smul.u32 12, %s12
        %p213 = scmp.lt.s32.totalorder %s212, 23
        %s214 = scalar_select %p213, %s212, 23
        %s215 = smul.addr %s214, 4
        %s216 = smul.addr %s215, 4
        %s217 = scalar_lea.vmem %s0, %s216
        %s218 = smul.u32 12, %s12
      $region28: #{gration_forward.5} parent=23 // pred_fallthru
        _
      // Predicated region
      $region29: #{gration_forward.5} parent=23 // pred_check
        %p219 = pneg %p58
      $region30: #{gration_forward.5} parent=23 // pred_check_branch
        %221 = sbr.rel (%p219) target = $region32
      $region31: #{gration_forward.5} parent=23 // pred_region
        %s222 = smul.u32 12, %s12
        %p223 = scmp.lt.s32.totalorder %s222, 23
        %s224 = scalar_select %p223, %s222, 23
        %s225 = smul.addr %s224, 4
        %s226 = smul.addr %s225, 4
        %s227 = scalar_lea.vmem %s1, %s226
        %s228 = smul.u32 12, %s12
      $region32: #{gration_forward.5} parent=23 // pred_fallthru
        _
      // Predicated region
      $region33: #{gration_forward.5} parent=23 // pred_check
        %p229 = pneg %p84
      $region34: #{gration_forward.5} parent=23 // pred_check_branch
        %231 = sbr.rel (%p229) target = $region36
      $region35: #{gration_forward.5} parent=23 // pred_region
        %s232 = smul.u32 12, %s12
        %p233 = scmp.lt.s32.totalorder %s232, 23
        %s234 = scalar_select %p233, %s232, 23
        %s235 = smul.addr %s234, 4
        %s236 = smul.addr %s235, 4
        %s237 = scalar_lea.vmem %s2, %s236
        %s238 = smul.u32 12, %s12
      $region36: #{gration_forward.5} parent=23 // pred_fallthru
        _
      // Predicated region
      $region37: #{gration_forward.5} parent=23 // pred_check
        %p239 = pneg %p110
      $region38: #{gration_forward.5} parent=23 // pred_check_branch
        %241 = sbr.rel (%p239) target = $region40
      $region39: #{gration_forward.5} parent=23 // pred_region
        %s242 = smul.u32 12, %s12
        %p243 = scmp.lt.s32.totalorder %s242, 23
        %s244 = scalar_select %p243, %s242, 23
        %s245 = smul.addr %s244, 4
        %s246 = smul.addr %s245, 4
        %s247 = scalar_lea.vmem %s3, %s246
        %s248 = smul.u32 12, %s12
      $region40: #{gration_forward.5} parent=23 // pred_fallthru
        _
    $region24: #{gration_forward.5} parent=5 // pred_fallthru
      _
    %p249 = scmp.le.s32.totalorder 1, %s12
    %p250 = scmp.lt.s32.totalorder %s12, 3
    %p251 = pnand %p249, %p250
    %p252 = pneg %p251
    // Predicated region
    $region41: #{gration_forward.5} parent=5 // pred_check
      _
    $region42: #{gration_forward.5} parent=5 // pred_check_branch
      %254 = sbr.rel (%p251) target = $region44
    $region43: #{gration_forward.5} parent=5 // pred_region
      %s255 = ssub.s32 %s12, 1
      %s256 = smul.u32 12, %s17
      %p257 = scmp.lt.s32.totalorder %s256, 23
      %s258 = scalar_select %p257, %s256, 23
      %s259 = smul.addr %s258, 4
      %s260 = smul.addr %s259, 4
      %s261 = scalar_lea.vmem %s0, %s260
      %p262 = pneg %p38
      %p263 = pneg %p35
      %s264 = smul.u32 12, %s17
      %p265 = scmp.lt.s32.totalorder %s264, 23
      %s266 = scalar_select %p265, %s264, 23
      %s267 = smul.addr %s266, 4
      %s268 = smul.addr %s267, 4
      %s269 = scalar_lea.vmem %s1, %s268
      %p270 = pneg %p64
      %p271 = pneg %p61
      %s272 = smul.u32 12, %s17
      %p273 = scmp.lt.s32.totalorder %s272, 23
      %s274 = scalar_select %p273, %s272, 23
      %s275 = smul.addr %s274, 4
      %s276 = smul.addr %s275, 4
      %s277 = scalar_lea.vmem %s2, %s276
      %p278 = pneg %p90
      %p279 = pneg %p87
      %s280 = smul.u32 12, %s17
      %p281 = scmp.lt.s32.totalorder %s280, 23
      %s282 = scalar_select %p281, %s280, 23
      %s283 = smul.addr %s282, 4
      %s284 = smul.addr %s283, 4
      %s285 = scalar_lea.vmem %s3, %s284
      %p286 = pneg %p116
      %p287 = pneg %p113
      %p288 = pneg %p137
      %p289 = pneg %p134
      %p290 = pneg %p158
      %p291 = pneg %p155
      %p292 = pneg %p184
      %p293 = pneg %p181
      %s294 = smul.u32 12, %s17
      %p295 = scmp.lt.s32.totalorder %s294, 23
      %s296 = scalar_select %p295, %s294, 23
      %s297 = smul.addr %s296, 4
      %s298 = scalar_lea.vmem %s6, %s297
      %s299 = smul.u32 12, %s17
      %p300 = scmp.lt.s32.totalorder %s299, 23
      %s301 = scalar_select %p300, %s299, 23
      %s302 = smul.addr %s301, 4
      %s303 = smul.addr %s302, 4
      %s304 = scalar_lea.vmem %s0, %s303
      %s305 = smul.u32 12, %s17
      %s306 = smul.u32 12, %s17
      %p307 = scmp.lt.s32.totalorder %s306, 23
      %s308 = scalar_select %p307, %s306, 23
      %s309 = smul.addr %s308, 4
      %s310 = smul.addr %s309, 4
      %s311 = scalar_lea.vmem %s1, %s310
      %s312 = smul.u32 12, %s17
      %s313 = smul.u32 12, %s17
      %p314 = scmp.lt.s32.totalorder %s313, 23
      %s315 = scalar_select %p314, %s313, 23
      %s316 = smul.addr %s315, 4
      %s317 = smul.addr %s316, 4
      %s318 = scalar_lea.vmem %s2, %s317
      %s319 = smul.u32 12, %s17
      %s320 = smul.u32 12, %s17
      %p321 = scmp.lt.s32.totalorder %s320, 23
      %s322 = scalar_select %p321, %s320, 23
      %s323 = smul.addr %s322, 4
      %s324 = smul.addr %s323, 4
      %s325 = scalar_lea.vmem %s3, %s324
      %s326 = smul.u32 12, %s17
      %s327 = smul.u32 12, %s17
      %p328 = scmp.lt.s32.totalorder %s327, 23
      %s329 = scalar_select %p328, %s327, 23
      %s330 = smul.addr %s329, 4
      %s331 = scalar_lea.vmem %s6, %s330
      %s332 = smul.u32 12, %s17
      %v333 = vld [vmem:[%s4] sm:$0xf]
      %v334 = vld [vmem:[%s4 + $0x4] sm:$0xf]
      %v335 = vld [vmem:[%s4 + $0x8] sm:$0xf]
      %v336 = vld [vmem:[%s4 + $0xc] sm:$0xf]
      %v337 = vld [vmem:[%s4 + $0x10] sm:$0xf]
      %v338 = vld [vmem:[%s4 + $0x14] sm:$0xf]
      %v339 = vld [vmem:[%s4 + $0x18] sm:$0xf]
      %v340 = vld [vmem:[%s4 + $0x1c] sm:$0xf]
      %v341 = vld [vmem:[%s4 + $0x20] sm:$0xf]
      %v342 = vld [vmem:[%s4 + $0x24] sm:$0xf]
      %v343 = vld [vmem:[%s4 + $0x28] sm:$0xf]
      %v344 = vld [vmem:[%s4 + $0x2c] sm:$0xf]
      %v345 = vld [vmem:[%s4 + $0x30] sm:$0xf]
      %v346 = vld [vmem:[%s4 + $0x34] sm:$0xf]
      %v347 = vld [vmem:[%s4 + $0x38] sm:$0xf]
      %v348 = vld [vmem:[%s4 + $0x3c] sm:$0xf]
      %v349 = vld [vmem:[%s4 + $0x40] sm:$0xf]
      %v350 = vld [vmem:[%s4 + $0x44] sm:$0xf]
      %v351 = vld [vmem:[%s4 + $0x48] sm:$0xf]
      %v352 = vld [vmem:[%s4 + $0x4c] sm:$0xf]
      %v353 = vld [vmem:[%s4 + $0x50] sm:$0xf]
      %v354 = vld [vmem:[%s4 + $0x54] sm:$0xf]
      %v355 = vld [vmem:[%s4 + $0x58] sm:$0xf]
      %v356 = vld [vmem:[%s4 + $0x5c] sm:$0xf]
      %v357 = vld [vmem:[%s4 + $0x60] sm:$0xf]
      %v358 = vld [vmem:[%s4 + $0x64] sm:$0xf]
      %v359 = vld [vmem:[%s4 + $0x68] sm:$0xf]
      %v360 = vld [vmem:[%s4 + $0x6c] sm:$0xf]
      %v361 = vld [vmem:[%s4 + $0x70] sm:$0xf]
      %v362 = vld [vmem:[%s4 + $0x74] sm:$0xf]
      %v363 = vld [vmem:[%s4 + $0x78] sm:$0xf]
      %v364 = vld [vmem:[%s4 + $0x7c] sm:$0xf]
      %v365 = vld [vmem:[%s4 + $0x80] sm:$0xf]
      %v366 = vld [vmem:[%s4 + $0x84] sm:$0xf]
      %v367 = vld [vmem:[%s4 + $0x88] sm:$0xf]
      %v368 = vld [vmem:[%s4 + $0x8c] sm:$0xf]
      %v369 = vld [vmem:[%s4 + $0x90] sm:$0xf]
      %v370 = vld [vmem:[%s4 + $0x94] sm:$0xf]
      %v371 = vld [vmem:[%s4 + $0x98] sm:$0xf]
      %v372 = vld [vmem:[%s4 + $0x9c] sm:$0xf]
      %v373 = vld [vmem:[%s4 + $0xa0] sm:$0xf]
      %v374 = vld [vmem:[%s4 + $0xa4] sm:$0xf]
      %v375 = vld [vmem:[%s4 + $0xa8] sm:$0xf]
      %v376 = vld [vmem:[%s4 + $0xac] sm:$0xf]
      %v377 = vld [vmem:[%s4 + $0xb0] sm:$0xf]
      %v378 = vld [vmem:[%s4 + $0xb4] sm:$0xf]
      %v379 = vld [vmem:[%s4 + $0xb8] sm:$0xf]
      %v380 = vld [vmem:[%s4 + $0xbc] sm:$0xf]
      %v381 = vld [vmem:[%s4 + $0xc0] sm:$0xf]
      %v382 = vld [vmem:[%s4 + $0xc4] sm:$0xf]
      %v383 = vld [vmem:[%s4 + $0xc8] sm:$0xf]
      %v384 = vld [vmem:[%s4 + $0xcc] sm:$0xf]
      %v385 = vld [vmem:[%s4 + $0xd0] sm:$0xf]
      %v386 = vld [vmem:[%s4 + $0xd4] sm:$0xf]
      %v387 = vld [vmem:[%s4 + $0xd8] sm:$0xf]
      %v388 = vld [vmem:[%s4 + $0xdc] sm:$0xf]
      %v389 = vld [vmem:[%s4 + $0xe0] sm:$0xf]
      %v390 = vld [vmem:[%s4 + $0xe4] sm:$0xf]
      %v391 = vld [vmem:[%s4 + $0xe8] sm:$0xf]
      %v392 = vld [vmem:[%s4 + $0xec] sm:$0xf]
      %v393 = vld [vmem:[%s4 + $0xf0] sm:$0xf]
      %v394 = vld [vmem:[%s4 + $0xf4] sm:$0xf]
      %v395 = vld [vmem:[%s4 + $0xf8] sm:$0xf]
      %v396 = vld [vmem:[%s4 + $0xfc] sm:$0xf]
      %v397 = vld [vmem:[%s304] sm:$0xff]
      %v398 = vld [vmem:[%s304 + $0x8] sm:$0xff]
      %v399 = vld [vmem:[%s304 + $0x10] sm:$0xff]
      %v400 = vld [vmem:[%s304 + $0x18] sm:$0xff]
      %v401 = vld [vmem:[%s304 + $0x20] sm:$0xff]
      %v402 = vld [vmem:[%s304 + $0x28] sm:$0xff]
      %v403 = vld [vmem:[%s304 + $0x30] sm:$0xff]
      %v404 = vld [vmem:[%s304 + $0x38] sm:$0xff]
      %v405 = vld [vmem:[%s304 + $0x40] sm:$0xff]
      %v406 = vld [vmem:[%s304 + $0x48] sm:$0xff]
      %v407 = vld [vmem:[%s304 + $0x50] sm:$0xff]
      %v408 = vld [vmem:[%s304 + $0x58] sm:$0xff]
      %v409 = vld [vmem:[%s304 + $0x60] sm:$0xff]
      %v410 = vld [vmem:[%s304 + $0x68] sm:$0xff]
      %v411 = vld [vmem:[%s304 + $0x70] sm:$0xff]
      %v412 = vld [vmem:[%s304 + $0x78] sm:$0xff]
      %v413 = vld [vmem:[%s304 + $0x80] sm:$0xff]
      %v414 = vld [vmem:[%s304 + $0x88] sm:$0xff]
      %v415 = vld [vmem:[%s304 + $0x90] sm:$0xff]
      %v416 = vld [vmem:[%s304 + $0x98] sm:$0xff]
      %v417 = vld [vmem:[%s304 + $0xa0] sm:$0xff]
      %v418 = vld [vmem:[%s304 + $0xa8] sm:$0xff]
      %v419 = vld [vmem:[%s304 + $0xb0] sm:$0xff]
      %v420 = vld [vmem:[%s304 + $0xb8] sm:$0xff]
      %v445 = vunpack.c.l.b16 %v397
      %v446 = vunpack.c.h.b16 %v397
      %v447 = vunpack.c.l.b16 %v398
      %v448 = vunpack.c.h.b16 %v398
      %v449 = vunpack.c.l.b16 %v399
      %v450 = vunpack.c.h.b16 %v399
      %v451 = vunpack.c.l.b16 %v400
      %v452 = vunpack.c.h.b16 %v400
      %v453 = vunpack.c.l.b16 %v401
      %v454 = vunpack.c.h.b16 %v401
      %v455 = vunpack.c.l.b16 %v402
      %v456 = vunpack.c.h.b16 %v402
      %v457 = vunpack.c.l.b16 %v403
      %v458 = vunpack.c.h.b16 %v403
      %v459 = vunpack.c.l.b16 %v404
      %v460 = vunpack.c.h.b16 %v404
      %v461 = vunpack.c.l.b16 %v405
      %v462 = vunpack.c.h.b16 %v405
      %v463 = vunpack.c.l.b16 %v406
      %v464 = vunpack.c.h.b16 %v406
      %v465 = vunpack.c.l.b16 %v407
      %v466 = vunpack.c.h.b16 %v407
      %v467 = vunpack.c.l.b16 %v408
      %v468 = vunpack.c.h.b16 %v408
      %v469 = vunpack.c.l.b16 %v409
      %v470 = vunpack.c.h.b16 %v409
      %v471 = vunpack.c.l.b16 %v410
      %v472 = vunpack.c.h.b16 %v410
      %v473 = vunpack.c.l.b16 %v411
      %v474 = vunpack.c.h.b16 %v411
      %v475 = vunpack.c.l.b16 %v412
      %v476 = vunpack.c.h.b16 %v412
      %v477 = vunpack.c.l.b16 %v413
      %v478 = vunpack.c.h.b16 %v413
      %v479 = vunpack.c.l.b16 %v414
      %v480 = vunpack.c.h.b16 %v414
      %v481 = vunpack.c.l.b16 %v415
      %v482 = vunpack.c.h.b16 %v415
      %v483 = vunpack.c.l.b16 %v416
      %v484 = vunpack.c.h.b16 %v416
      %v485 = vunpack.c.l.b16 %v417
      %v486 = vunpack.c.h.b16 %v417
      %v487 = vunpack.c.l.b16 %v418
      %v488 = vunpack.c.h.b16 %v418
      %v489 = vunpack.c.l.b16 %v419
      %v490 = vunpack.c.h.b16 %v419
      %v491 = vunpack.c.l.b16 %v420
      %v492 = vunpack.c.h.b16 %v420
      %v493 = vpack.c.b16 %v449, %v445
      %v494 = vpack.c.b16 %v450, %v446
      %v495 = vpack.c.b16 %v451, %v447
      %v496 = vpack.c.b16 %v452, %v448
      %v497 = vpack.c.b16 %v457, %v453
      %v498 = vpack.c.b16 %v458, %v454
      %v499 = vpack.c.b16 %v459, %v455
      %v500 = vpack.c.b16 %v460, %v456
      %v501 = vpack.c.b16 %v465, %v461
      %v502 = vpack.c.b16 %v466, %v462
      %v503 = vpack.c.b16 %v467, %v463
      %v504 = vpack.c.b16 %v468, %v464
      %v505 = vpack.c.b16 %v473, %v469
      %v506 = vpack.c.b16 %v474, %v470
      %v507 = vpack.c.b16 %v475, %v471
      %v508 = vpack.c.b16 %v476, %v472
      %v509 = vpack.c.b16 %v481, %v477
      %v510 = vpack.c.b16 %v482, %v478
      %v511 = vpack.c.b16 %v483, %v479
      %v512 = vpack.c.b16 %v484, %v480
      %v513 = vpack.c.b16 %v489, %v485
      %v514 = vpack.c.b16 %v490, %v486
      %v515 = vpack.c.b16 %v491, %v487
      %v516 = vpack.c.b16 %v492, %v488
      %v605 = vunpack.c.l.b16 %v333
      %v606 = vunpack.c.l.b16 %v334
      %v607 = vunpack.c.l.b16 %v335
      %v608 = vunpack.c.l.b16 %v336
      %v609 = vunpack.c.l.b16 %v337
      %v610 = vunpack.c.l.b16 %v338
      %v611 = vunpack.c.l.b16 %v339
      %v612 = vunpack.c.l.b16 %v340
      %v613 = vunpack.c.l.b16 %v341
      %v614 = vunpack.c.l.b16 %v342
      %v615 = vunpack.c.l.b16 %v343
      %v616 = vunpack.c.l.b16 %v344
      %v617 = vunpack.c.l.b16 %v345
      %v618 = vunpack.c.l.b16 %v346
      %v619 = vunpack.c.l.b16 %v347
      %v620 = vunpack.c.l.b16 %v348
      %v621 = vunpack.c.l.b16 %v349
      %v622 = vunpack.c.l.b16 %v350
      %v623 = vunpack.c.l.b16 %v351
      %v624 = vunpack.c.l.b16 %v352
      %v625 = vunpack.c.l.b16 %v353
      %v626 = vunpack.c.l.b16 %v354
      %v627 = vunpack.c.l.b16 %v355
      %v628 = vunpack.c.l.b16 %v356
      %v629 = vunpack.c.l.b16 %v357
      %v630 = vunpack.c.l.b16 %v358
      %v631 = vunpack.c.l.b16 %v359
      %v632 = vunpack.c.l.b16 %v360
      %v633 = vunpack.c.l.b16 %v361
      %v634 = vunpack.c.l.b16 %v362
      %v635 = vunpack.c.l.b16 %v363
      %v636 = vunpack.c.l.b16 %v364
      %v637 = vunpack.c.l.b16 %v365
      %v638 = vunpack.c.l.b16 %v366
      %v639 = vunpack.c.l.b16 %v367
      %v640 = vunpack.c.l.b16 %v368
      %v641 = vunpack.c.l.b16 %v369
      %v642 = vunpack.c.l.b16 %v370
      %v643 = vunpack.c.l.b16 %v371
      %v644 = vunpack.c.l.b16 %v372
      %v645 = vunpack.c.l.b16 %v373
      %v646 = vunpack.c.l.b16 %v374
      %v647 = vunpack.c.l.b16 %v375
      %v648 = vunpack.c.l.b16 %v376
      %v649 = vunpack.c.l.b16 %v377
      %v650 = vunpack.c.l.b16 %v378
      %v651 = vunpack.c.l.b16 %v379
      %v652 = vunpack.c.l.b16 %v380
      %v653 = vunpack.c.l.b16 %v381
      %v654 = vunpack.c.l.b16 %v382
      %v655 = vunpack.c.l.b16 %v383
      %v656 = vunpack.c.l.b16 %v384
      %v657 = vunpack.c.l.b16 %v385
      %v658 = vunpack.c.l.b16 %v386
      %v659 = vunpack.c.l.b16 %v387
      %v660 = vunpack.c.l.b16 %v388
      %v661 = vunpack.c.l.b16 %v389
      %v662 = vunpack.c.l.b16 %v390
      %v663 = vunpack.c.l.b16 %v391
      %v664 = vunpack.c.l.b16 %v392
      %v665 = vunpack.c.l.b16 %v393
      %v666 = vunpack.c.l.b16 %v394
      %v667 = vunpack.c.l.b16 %v395
      %v668 = vunpack.c.l.b16 %v396
      %v669 = vpack.c.b16 %v606, %v605
      %v670 = vpack.c.b16 %v608, %v607
      %v671 = vpack.c.b16 %v610, %v609
      %v672 = vpack.c.b16 %v612, %v611
      %v673 = vpack.c.b16 %v614, %v613
      %v674 = vpack.c.b16 %v616, %v615
      %v675 = vpack.c.b16 %v618, %v617
      %v676 = vpack.c.b16 %v620, %v619
      %v677 = vpack.c.b16 %v622, %v621
      %v678 = vpack.c.b16 %v624, %v623
      %v679 = vpack.c.b16 %v626, %v625
      %v680 = vpack.c.b16 %v628, %v627
      %v681 = vpack.c.b16 %v630, %v629
      %v682 = vpack.c.b16 %v632, %v631
      %v683 = vpack.c.b16 %v634, %v633
      %v684 = vpack.c.b16 %v636, %v635
      %v685 = vpack.c.b16 %v638, %v637
      %v686 = vpack.c.b16 %v640, %v639
      %v687 = vpack.c.b16 %v642, %v641
      %v688 = vpack.c.b16 %v644, %v643
      %v689 = vpack.c.b16 %v646, %v645
      %v690 = vpack.c.b16 %v648, %v647
      %v691 = vpack.c.b16 %v650, %v649
      %v692 = vpack.c.b16 %v652, %v651
      %v693 = vpack.c.b16 %v654, %v653
      %v694 = vpack.c.b16 %v656, %v655
      %v695 = vpack.c.b16 %v658, %v657
      %v696 = vpack.c.b16 %v660, %v659
      %v697 = vpack.c.b16 %v662, %v661
      %v698 = vpack.c.b16 %v664, %v663
      %v699 = vpack.c.b16 %v666, %v665
      %v700 = vpack.c.b16 %v668, %v667
      %733 = vmatpush.bf16.msra.mxu0 %v676
      %734 = vmatpush.bf16.msra.mxu0 %v675
      %735 = vmatpush.bf16.msra.mxu0 %v674
      %736 = vmatpush.bf16.msra.mxu0 %v673
      %737 = vmatpush.bf16.msra.mxu0 %v672
      %738 = vmatpush.bf16.msra.mxu0 %v671
      %739 = vmatpush.bf16.msra.mxu0 %v670
      %740 = vmatpush.bf16.msra.mxu0 %v669
      %741 = vmatmul.bf16.gmra.mxu0 %v493
      %v742 = vpop.f32.mrf.mxu0
      %v743 = vadd.f32 0.0, %v742
      %v744 = vpop.f32.mrf.mxu0
      %v745 = vadd.f32 0.0, %v744
      %746 = vmatmul.bf16.gmra.mxu0 %v497
      %v747 = vpop.f32.mrf.mxu0
      %v748 = vadd.f32 0.0, %v747
      %v749 = vpop.f32.mrf.mxu0
      %v750 = vadd.f32 0.0, %v749
      %751 = vmatmul.bf16.gmra.mxu0 %v501
      %v752 = vpop.f32.mrf.mxu0
      %v753 = vadd.f32 0.0, %v752
      %v754 = vpop.f32.mrf.mxu0
      %v755 = vadd.f32 0.0, %v754
      %756 = vmatmul.bf16.gmra.mxu0 %v505
      %v757 = vpop.f32.mrf.mxu0
      %v758 = vadd.f32 0.0, %v757
      %v759 = vpop.f32.mrf.mxu0
      %v760 = vadd.f32 0.0, %v759
      %761 = vmatmul.bf16.gmra.mxu0 %v509
      %v762 = vpop.f32.mrf.mxu0
      %v763 = vadd.f32 0.0, %v762
      %v764 = vpop.f32.mrf.mxu0
      %v765 = vadd.f32 0.0, %v764
      %766 = vmatmul.bf16.gmra.mxu0 %v513
      %v767 = vpop.f32.mrf.mxu0
      %v768 = vadd.f32 0.0, %v767
      %v769 = vpop.f32.mrf.mxu0
      %v770 = vadd.f32 0.0, %v769
      %771 = vdwg.mxu0
      %772 = vmatpush.bf16.msra.mxu0 %v684
      %773 = vmatpush.bf16.msra.mxu0 %v683
      %774 = vmatpush.bf16.msra.mxu0 %v682
      %775 = vmatpush.bf16.msra.mxu0 %v681
      %776 = vmatpush.bf16.msra.mxu0 %v680
      %777 = vmatpush.bf16.msra.mxu0 %v679
      %778 = vmatpush.bf16.msra.mxu0 %v678
      %779 = vmatpush.bf16.msra.mxu0 %v677
      %780 = vmatmul.bf16.gmra.mxu0 %v494
      %v781 = vpop.f32.mrf.mxu0
      %v782 = vadd.f32 %v743, %v781
      %v783 = vpop.f32.mrf.mxu0
      %v784 = vadd.f32 %v745, %v783
      %785 = vmatmul.bf16.gmra.mxu0 %v498
      %v786 = vpop.f32.mrf.mxu0
      %v787 = vadd.f32 %v748, %v786
      %v788 = vpop.f32.mrf.mxu0
      %v789 = vadd.f32 %v750, %v788
      %790 = vmatmul.bf16.gmra.mxu0 %v502
      %v791 = vpop.f32.mrf.mxu0
      %v792 = vadd.f32 %v753, %v791
      %v793 = vpop.f32.mrf.mxu0
      %v794 = vadd.f32 %v755, %v793
      %795 = vmatmul.bf16.gmra.mxu0 %v506
      %v796 = vpop.f32.mrf.mxu0
      %v797 = vadd.f32 %v758, %v796
      %v798 = vpop.f32.mrf.mxu0
      %v799 = vadd.f32 %v760, %v798
      %800 = vmatmul.bf16.gmra.mxu0 %v510
      %v801 = vpop.f32.mrf.mxu0
      %v802 = vadd.f32 %v763, %v801
      %v803 = vpop.f32.mrf.mxu0
      %v804 = vadd.f32 %v765, %v803
      %805 = vmatmul.bf16.gmra.mxu0 %v514
      %v806 = vpop.f32.mrf.mxu0
      %v807 = vadd.f32 %v768, %v806
      %v808 = vpop.f32.mrf.mxu0
      %v809 = vadd.f32 %v770, %v808
      %810 = vdwg.mxu0
      %811 = vmatpush.bf16.msra.mxu0 %v692
      %812 = vmatpush.bf16.msra.mxu0 %v691
      %813 = vmatpush.bf16.msra.mxu0 %v690
      %814 = vmatpush.bf16.msra.mxu0 %v689
      %815 = vmatpush.bf16.msra.mxu0 %v688
      %816 = vmatpush.bf16.msra.mxu0 %v687
      %817 = vmatpush.bf16.msra.mxu0 %v686
      %818 = vmatpush.bf16.msra.mxu0 %v685
      %819 = vmatmul.bf16.gmra.mxu0 %v495
      %v820 = vpop.f32.mrf.mxu0
      %v821 = vadd.f32 %v782, %v820
      %v822 = vpop.f32.mrf.mxu0
      %v823 = vadd.f32 %v784, %v822
      %824 = vmatmul.bf16.gmra.mxu0 %v499
      %v825 = vpop.f32.mrf.mxu0
      %v826 = vadd.f32 %v787, %v825
      %v827 = vpop.f32.mrf.mxu0
      %v828 = vadd.f32 %v789, %v827
      %829 = vmatmul.bf16.gmra.mxu0 %v503
      %v830 = vpop.f32.mrf.mxu0
      %v831 = vadd.f32 %v792, %v830
      %v832 = vpop.f32.mrf.mxu0
      %v833 = vadd.f32 %v794, %v832
      %834 = vmatmul.bf16.gmra.mxu0 %v507
      %v835 = vpop.f32.mrf.mxu0
      %v836 = vadd.f32 %v797, %v835
      %v837 = vpop.f32.mrf.mxu0
      %v838 = vadd.f32 %v799, %v837
      %839 = vmatmul.bf16.gmra.mxu0 %v511
      %v840 = vpop.f32.mrf.mxu0
      %v841 = vadd.f32 %v802, %v840
      %v842 = vpop.f32.mrf.mxu0
      %v843 = vadd.f32 %v804, %v842
      %844 = vmatmul.bf16.gmra.mxu0 %v515
      %v845 = vpop.f32.mrf.mxu0
      %v846 = vadd.f32 %v807, %v845
      %v847 = vpop.f32.mrf.mxu0
      %v848 = vadd.f32 %v809, %v847
      %849 = vdwg.mxu0
      %850 = vmatpush.bf16.msra.mxu0 %v700
      %851 = vmatpush.bf16.msra.mxu0 %v699
      %852 = vmatpush.bf16.msra.mxu0 %v698
      %853 = vmatpush.bf16.msra.mxu0 %v697
      %854 = vmatpush.bf16.msra.mxu0 %v696
      %855 = vmatpush.bf16.msra.mxu0 %v695
      %856 = vmatpush.bf16.msra.mxu0 %v694
      %857 = vmatpush.bf16.msra.mxu0 %v693
      %858 = vmatmul.bf16.gmra.mxu0 %v496
      %v859 = vpop.f32.mrf.mxu0
      %v860 = vadd.f32 %v821, %v859
      %v861 = vpop.f32.mrf.mxu0
      %v862 = vadd.f32 %v823, %v861
      %863 = vmatmul.bf16.gmra.mxu0 %v500
      %v864 = vpop.f32.mrf.mxu0
      %v865 = vadd.f32 %v826, %v864
      %v866 = vpop.f32.mrf.mxu0
      %v867 = vadd.f32 %v828, %v866
      %868 = vmatmul.bf16.gmra.mxu0 %v504
      %v869 = vpop.f32.mrf.mxu0
      %v870 = vadd.f32 %v831, %v869
      %v871 = vpop.f32.mrf.mxu0
      %v872 = vadd.f32 %v833, %v871
      %873 = vmatmul.bf16.gmra.mxu0 %v508
      %v874 = vpop.f32.mrf.mxu0
      %v875 = vadd.f32 %v836, %v874
      %v876 = vpop.f32.mrf.mxu0
      %v877 = vadd.f32 %v838, %v876
      %878 = vmatmul.bf16.gmra.mxu0 %v512
      %v879 = vpop.f32.mrf.mxu0
      %v880 = vadd.f32 %v841, %v879
      %v881 = vpop.f32.mrf.mxu0
      %v882 = vadd.f32 %v843, %v881
      %883 = vmatmul.bf16.gmra.mxu0 %v516
      %v884 = vpop.f32.mrf.mxu0
      %v885 = vadd.f32 %v846, %v884
      %v886 = vpop.f32.mrf.mxu0
      %v887 = vadd.f32 %v848, %v886
      %888 = vdwg.mxu0
      %v889 = vld [vmem:[%s311] sm:$0xff]
      %v890 = vld [vmem:[%s311 + $0x8] sm:$0xff]
      %v891 = vld [vmem:[%s311 + $0x10] sm:$0xff]
      %v892 = vld [vmem:[%s311 + $0x18] sm:$0xff]
      %v893 = vld [vmem:[%s311 + $0x20] sm:$0xff]
      %v894 = vld [vmem:[%s311 + $0x28] sm:$0xff]
      %v895 = vld [vmem:[%s311 + $0x30] sm:$0xff]
      %v896 = vld [vmem:[%s311 + $0x38] sm:$0xff]
      %v897 = vld [vmem:[%s311 + $0x40] sm:$0xff]
      %v898 = vld [vmem:[%s311 + $0x48] sm:$0xff]
      %v899 = vld [vmem:[%s311 + $0x50] sm:$0xff]
      %v900 = vld [vmem:[%s311 + $0x58] sm:$0xff]
      %v901 = vld [vmem:[%s311 + $0x60] sm:$0xff]
      %v902 = vld [vmem:[%s311 + $0x68] sm:$0xff]
      %v903 = vld [vmem:[%s311 + $0x70] sm:$0xff]
      %v904 = vld [vmem:[%s311 + $0x78] sm:$0xff]
      %v905 = vld [vmem:[%s311 + $0x80] sm:$0xff]
      %v906 = vld [vmem:[%s311 + $0x88] sm:$0xff]
      %v907 = vld [vmem:[%s311 + $0x90] sm:$0xff]
      %v908 = vld [vmem:[%s311 + $0x98] sm:$0xff]
      %v909 = vld [vmem:[%s311 + $0xa0] sm:$0xff]
      %v910 = vld [vmem:[%s311 + $0xa8] sm:$0xff]
      %v911 = vld [vmem:[%s311 + $0xb0] sm:$0xff]
      %v912 = vld [vmem:[%s311 + $0xb8] sm:$0xff]
      %v937 = vunpack.c.l.b16 %v889
      %v938 = vunpack.c.h.b16 %v889
      %v939 = vunpack.c.l.b16 %v890
      %v940 = vunpack.c.h.b16 %v890
      %v941 = vunpack.c.l.b16 %v891
      %v942 = vunpack.c.h.b16 %v891
      %v943 = vunpack.c.l.b16 %v892
      %v944 = vunpack.c.h.b16 %v892
      %v945 = vunpack.c.l.b16 %v893
      %v946 = vunpack.c.h.b16 %v893
      %v947 = vunpack.c.l.b16 %v894
      %v948 = vunpack.c.h.b16 %v894
      %v949 = vunpack.c.l.b16 %v895
      %v950 = vunpack.c.h.b16 %v895
      %v951 = vunpack.c.l.b16 %v896
      %v952 = vunpack.c.h.b16 %v896
      %v953 = vunpack.c.l.b16 %v897
      %v954 = vunpack.c.h.b16 %v897
      %v955 = vunpack.c.l.b16 %v898
      %v956 = vunpack.c.h.b16 %v898
      %v957 = vunpack.c.l.b16 %v899
      %v958 = vunpack.c.h.b16 %v899
      %v959 = vunpack.c.l.b16 %v900
      %v960 = vunpack.c.h.b16 %v900
      %v961 = vunpack.c.l.b16 %v901
      %v962 = vunpack.c.h.b16 %v901
      %v963 = vunpack.c.l.b16 %v902
      %v964 = vunpack.c.h.b16 %v902
      %v965 = vunpack.c.l.b16 %v903
      %v966 = vunpack.c.h.b16 %v903
      %v967 = vunpack.c.l.b16 %v904
      %v968 = vunpack.c.h.b16 %v904
      %v969 = vunpack.c.l.b16 %v905
      %v970 = vunpack.c.h.b16 %v905
      %v971 = vunpack.c.l.b16 %v906
      %v972 = vunpack.c.h.b16 %v906
      %v973 = vunpack.c.l.b16 %v907
      %v974 = vunpack.c.h.b16 %v907
      %v975 = vunpack.c.l.b16 %v908
      %v976 = vunpack.c.h.b16 %v908
      %v977 = vunpack.c.l.b16 %v909
      %v978 = vunpack.c.h.b16 %v909
      %v979 = vunpack.c.l.b16 %v910
      %v980 = vunpack.c.h.b16 %v910
      %v981 = vunpack.c.l.b16 %v911
      %v982 = vunpack.c.h.b16 %v911
      %v983 = vunpack.c.l.b16 %v912
      %v984 = vunpack.c.h.b16 %v912
      %v985 = vpack.c.b16 %v941, %v937
      %v986 = vpack.c.b16 %v942, %v938
      %v987 = vpack.c.b16 %v943, %v939
      %v988 = vpack.c.b16 %v944, %v940
      %v989 = vpack.c.b16 %v949, %v945
      %v990 = vpack.c.b16 %v950, %v946
      %v991 = vpack.c.b16 %v951, %v947
      %v992 = vpack.c.b16 %v952, %v948
      %v993 = vpack.c.b16 %v957, %v953
      %v994 = vpack.c.b16 %v958, %v954
      %v995 = vpack.c.b16 %v959, %v955
      %v996 = vpack.c.b16 %v960, %v956
      %v997 = vpack.c.b16 %v965, %v961
      %v998 = vpack.c.b16 %v966, %v962
      %v999 = vpack.c.b16 %v967, %v963
      %v1000 = vpack.c.b16 %v968, %v964
      %v1001 = vpack.c.b16 %v973, %v969
      %v1002 = vpack.c.b16 %v974, %v970
      %v1003 = vpack.c.b16 %v975, %v971
      %v1004 = vpack.c.b16 %v976, %v972
      %v1005 = vpack.c.b16 %v981, %v977
      %v1006 = vpack.c.b16 %v982, %v978
      %v1007 = vpack.c.b16 %v983, %v979
      %v1008 = vpack.c.b16 %v984, %v980
      %1033 = vmatpush.bf16.msra.mxu0 %v676
      %1034 = vmatpush.bf16.msra.mxu0 %v675
      %1035 = vmatpush.bf16.msra.mxu0 %v674
      %1036 = vmatpush.bf16.msra.mxu0 %v673
      %1037 = vmatpush.bf16.msra.mxu0 %v672
      %1038 = vmatpush.bf16.msra.mxu0 %v671
      %1039 = vmatpush.bf16.msra.mxu0 %v670
      %1040 = vmatpush.bf16.msra.mxu0 %v669
      %1041 = vmatmul.bf16.gmra.mxu0 %v985
      %v1042 = vpop.f32.mrf.mxu0
      %v1043 = vadd.f32 0.0, %v1042
      %v1044 = vpop.f32.mrf.mxu0
      %v1045 = vadd.f32 0.0, %v1044
      %1046 = vmatmul.bf16.gmra.mxu0 %v989
      %v1047 = vpop.f32.mrf.mxu0
      %v1048 = vadd.f32 0.0, %v1047
      %v1049 = vpop.f32.mrf.mxu0
      %v1050 = vadd.f32 0.0, %v1049
      %1051 = vmatmul.bf16.gmra.mxu0 %v993
      %v1052 = vpop.f32.mrf.mxu0
      %v1053 = vadd.f32 0.0, %v1052
      %v1054 = vpop.f32.mrf.mxu0
      %v1055 = vadd.f32 0.0, %v1054
      %1056 = vmatmul.bf16.gmra.mxu0 %v997
      %v1057 = vpop.f32.mrf.mxu0
      %v1058 = vadd.f32 0.0, %v1057
      %v1059 = vpop.f32.mrf.mxu0
      %v1060 = vadd.f32 0.0, %v1059
      %1061 = vmatmul.bf16.gmra.mxu0 %v1001
      %v1062 = vpop.f32.mrf.mxu0
      %v1063 = vadd.f32 0.0, %v1062
      %v1064 = vpop.f32.mrf.mxu0
      %v1065 = vadd.f32 0.0, %v1064
      %1066 = vmatmul.bf16.gmra.mxu0 %v1005
      %v1067 = vpop.f32.mrf.mxu0
      %v1068 = vadd.f32 0.0, %v1067
      %v1069 = vpop.f32.mrf.mxu0
      %v1070 = vadd.f32 0.0, %v1069
      %1071 = vdwg.mxu0
      %1072 = vmatpush.bf16.msra.mxu0 %v684
      %1073 = vmatpush.bf16.msra.mxu0 %v683
      %1074 = vmatpush.bf16.msra.mxu0 %v682
      %1075 = vmatpush.bf16.msra.mxu0 %v681
      %1076 = vmatpush.bf16.msra.mxu0 %v680
      %1077 = vmatpush.bf16.msra.mxu0 %v679
      %1078 = vmatpush.bf16.msra.mxu0 %v678
      %1079 = vmatpush.bf16.msra.mxu0 %v677
      %1080 = vmatmul.bf16.gmra.mxu0 %v986
      %v1081 = vpop.f32.mrf.mxu0
      %v1082 = vadd.f32 %v1043, %v1081
      %v1083 = vpop.f32.mrf.mxu0
      %v1084 = vadd.f32 %v1045, %v1083
      %1085 = vmatmul.bf16.gmra.mxu0 %v990
      %v1086 = vpop.f32.mrf.mxu0
      %v1087 = vadd.f32 %v1048, %v1086
      %v1088 = vpop.f32.mrf.mxu0
      %v1089 = vadd.f32 %v1050, %v1088
      %1090 = vmatmul.bf16.gmra.mxu0 %v994
      %v1091 = vpop.f32.mrf.mxu0
      %v1092 = vadd.f32 %v1053, %v1091
      %v1093 = vpop.f32.mrf.mxu0
      %v1094 = vadd.f32 %v1055, %v1093
      %1095 = vmatmul.bf16.gmra.mxu0 %v998
      %v1096 = vpop.f32.mrf.mxu0
      %v1097 = vadd.f32 %v1058, %v1096
      %v1098 = vpop.f32.mrf.mxu0
      %v1099 = vadd.f32 %v1060, %v1098
      %1100 = vmatmul.bf16.gmra.mxu0 %v1002
      %v1101 = vpop.f32.mrf.mxu0
      %v1102 = vadd.f32 %v1063, %v1101
      %v1103 = vpop.f32.mrf.mxu0
      %v1104 = vadd.f32 %v1065, %v1103
      %1105 = vmatmul.bf16.gmra.mxu0 %v1006
      %v1106 = vpop.f32.mrf.mxu0
      %v1107 = vadd.f32 %v1068, %v1106
      %v1108 = vpop.f32.mrf.mxu0
      %v1109 = vadd.f32 %v1070, %v1108
      %1110 = vdwg.mxu0
      %1111 = vmatpush.bf16.msra.mxu0 %v692
      %1112 = vmatpush.bf16.msra.mxu0 %v691
      %1113 = vmatpush.bf16.msra.mxu0 %v690
      %1114 = vmatpush.bf16.msra.mxu0 %v689
      %1115 = vmatpush.bf16.msra.mxu0 %v688
      %1116 = vmatpush.bf16.msra.mxu0 %v687
      %1117 = vmatpush.bf16.msra.mxu0 %v686
      %1118 = vmatpush.bf16.msra.mxu0 %v685
      %1119 = vmatmul.bf16.gmra.mxu0 %v987
      %v1120 = vpop.f32.mrf.mxu0
      %v1121 = vadd.f32 %v1082, %v1120
      %v1122 = vpop.f32.mrf.mxu0
      %v1123 = vadd.f32 %v1084, %v1122
      %1124 = vmatmul.bf16.gmra.mxu0 %v991
      %v1125 = vpop.f32.mrf.mxu0
      %v1126 = vadd.f32 %v1087, %v1125
      %v1127 = vpop.f32.mrf.mxu0
      %v1128 = vadd.f32 %v1089, %v1127
      %1129 = vmatmul.bf16.gmra.mxu0 %v995
      %v1130 = vpop.f32.mrf.mxu0
      %v1131 = vadd.f32 %v1092, %v1130
      %v1132 = vpop.f32.mrf.mxu0
      %v1133 = vadd.f32 %v1094, %v1132
      %1134 = vmatmul.bf16.gmra.mxu0 %v999
      %v1135 = vpop.f32.mrf.mxu0
      %v1136 = vadd.f32 %v1097, %v1135
      %v1137 = vpop.f32.mrf.mxu0
      %v1138 = vadd.f32 %v1099, %v1137
      %1139 = vmatmul.bf16.gmra.mxu0 %v1003
      %v1140 = vpop.f32.mrf.mxu0
      %v1141 = vadd.f32 %v1102, %v1140
      %v1142 = vpop.f32.mrf.mxu0
      %v1143 = vadd.f32 %v1104, %v1142
      %1144 = vmatmul.bf16.gmra.mxu0 %v1007
      %v1145 = vpop.f32.mrf.mxu0
      %v1146 = vadd.f32 %v1107, %v1145
      %v1147 = vpop.f32.mrf.mxu0
      %v1148 = vadd.f32 %v1109, %v1147
      %1149 = vdwg.mxu0
      %1150 = vmatpush.bf16.msra.mxu0 %v700
      %1151 = vmatpush.bf16.msra.mxu0 %v699
      %1152 = vmatpush.bf16.msra.mxu0 %v698
      %1153 = vmatpush.bf16.msra.mxu0 %v697
      %1154 = vmatpush.bf16.msra.mxu0 %v696
      %1155 = vmatpush.bf16.msra.mxu0 %v695
      %1156 = vmatpush.bf16.msra.mxu0 %v694
      %1157 = vmatpush.bf16.msra.mxu0 %v693
      %1158 = vmatmul.bf16.gmra.mxu0 %v988
      %v1159 = vpop.f32.mrf.mxu0
      %v1160 = vadd.f32 %v1121, %v1159
      %v1161 = vpop.f32.mrf.mxu0
      %v1162 = vadd.f32 %v1123, %v1161
      %1163 = vmatmul.bf16.gmra.mxu0 %v992
      %v1164 = vpop.f32.mrf.mxu0
      %v1165 = vadd.f32 %v1126, %v1164
      %v1166 = vpop.f32.mrf.mxu0
      %v1167 = vadd.f32 %v1128, %v1166
      %1168 = vmatmul.bf16.gmra.mxu0 %v996
      %v1169 = vpop.f32.mrf.mxu0
      %v1170 = vadd.f32 %v1131, %v1169
      %v1171 = vpop.f32.mrf.mxu0
      %v1172 = vadd.f32 %v1133, %v1171
      %1173 = vmatmul.bf16.gmra.mxu0 %v1000
      %v1174 = vpop.f32.mrf.mxu0
      %v1175 = vadd.f32 %v1136, %v1174
      %v1176 = vpop.f32.mrf.mxu0
      %v1177 = vadd.f32 %v1138, %v1176
      %1178 = vmatmul.bf16.gmra.mxu0 %v1004
      %v1179 = vpop.f32.mrf.mxu0
      %v1180 = vadd.f32 %v1141, %v1179
      %v1181 = vpop.f32.mrf.mxu0
      %v1182 = vadd.f32 %v1143, %v1181
      %1183 = vmatmul.bf16.gmra.mxu0 %v1008
      %v1184 = vpop.f32.mrf.mxu0
      %v1185 = vadd.f32 %v1146, %v1184
      %v1186 = vpop.f32.mrf.mxu0
      %v1187 = vadd.f32 %v1148, %v1186
      %1188 = vdwg.mxu0
      %v1189 = vld [vmem:[%s318] sm:$0xff]
      %v1190 = vld [vmem:[%s318 + $0x8] sm:$0xff]
      %v1191 = vld [vmem:[%s318 + $0x10] sm:$0xff]
      %v1192 = vld [vmem:[%s318 + $0x18] sm:$0xff]
      %v1193 = vld [vmem:[%s318 + $0x20] sm:$0xff]
      %v1194 = vld [vmem:[%s318 + $0x28] sm:$0xff]
      %v1195 = vld [vmem:[%s318 + $0x30] sm:$0xff]
      %v1196 = vld [vmem:[%s318 + $0x38] sm:$0xff]
      %v1197 = vld [vmem:[%s318 + $0x40] sm:$0xff]
      %v1198 = vld [vmem:[%s318 + $0x48] sm:$0xff]
      %v1199 = vld [vmem:[%s318 + $0x50] sm:$0xff]
      %v1200 = vld [vmem:[%s318 + $0x58] sm:$0xff]
      %v1201 = vld [vmem:[%s318 + $0x60] sm:$0xff]
      %v1202 = vld [vmem:[%s318 + $0x68] sm:$0xff]
      %v1203 = vld [vmem:[%s318 + $0x70] sm:$0xff]
      %v1204 = vld [vmem:[%s318 + $0x78] sm:$0xff]
      %v1205 = vld [vmem:[%s318 + $0x80] sm:$0xff]
      %v1206 = vld [vmem:[%s318 + $0x88] sm:$0xff]
      %v1207 = vld [vmem:[%s318 + $0x90] sm:$0xff]
      %v1208 = vld [vmem:[%s318 + $0x98] sm:$0xff]
      %v1209 = vld [vmem:[%s318 + $0xa0] sm:$0xff]
      %v1210 = vld [vmem:[%s318 + $0xa8] sm:$0xff]
      %v1211 = vld [vmem:[%s318 + $0xb0] sm:$0xff]
      %v1212 = vld [vmem:[%s318 + $0xb8] sm:$0xff]
      %v1237 = vunpack.c.l.b16 %v1189
      %v1238 = vunpack.c.h.b16 %v1189
      %v1239 = vunpack.c.l.b16 %v1190
      %v1240 = vunpack.c.h.b16 %v1190
      %v1241 = vunpack.c.l.b16 %v1191
      %v1242 = vunpack.c.h.b16 %v1191
      %v1243 = vunpack.c.l.b16 %v1192
      %v1244 = vunpack.c.h.b16 %v1192
      %v1245 = vunpack.c.l.b16 %v1193
      %v1246 = vunpack.c.h.b16 %v1193
      %v1247 = vunpack.c.l.b16 %v1194
      %v1248 = vunpack.c.h.b16 %v1194
      %v1249 = vunpack.c.l.b16 %v1195
      %v1250 = vunpack.c.h.b16 %v1195
      %v1251 = vunpack.c.l.b16 %v1196
      %v1252 = vunpack.c.h.b16 %v1196
      %v1253 = vunpack.c.l.b16 %v1197
      %v1254 = vunpack.c.h.b16 %v1197
      %v1255 = vunpack.c.l.b16 %v1198
      %v1256 = vunpack.c.h.b16 %v1198
      %v1257 = vunpack.c.l.b16 %v1199
      %v1258 = vunpack.c.h.b16 %v1199
      %v1259 = vunpack.c.l.b16 %v1200
      %v1260 = vunpack.c.h.b16 %v1200
      %v1261 = vunpack.c.l.b16 %v1201
      %v1262 = vunpack.c.h.b16 %v1201
      %v1263 = vunpack.c.l.b16 %v1202
      %v1264 = vunpack.c.h.b16 %v1202
      %v1265 = vunpack.c.l.b16 %v1203
      %v1266 = vunpack.c.h.b16 %v1203
      %v1267 = vunpack.c.l.b16 %v1204
      %v1268 = vunpack.c.h.b16 %v1204
      %v1269 = vunpack.c.l.b16 %v1205
      %v1270 = vunpack.c.h.b16 %v1205
      %v1271 = vunpack.c.l.b16 %v1206
      %v1272 = vunpack.c.h.b16 %v1206
      %v1273 = vunpack.c.l.b16 %v1207
      %v1274 = vunpack.c.h.b16 %v1207
      %v1275 = vunpack.c.l.b16 %v1208
      %v1276 = vunpack.c.h.b16 %v1208
      %v1277 = vunpack.c.l.b16 %v1209
      %v1278 = vunpack.c.h.b16 %v1209
      %v1279 = vunpack.c.l.b16 %v1210
      %v1280 = vunpack.c.h.b16 %v1210
      %v1281 = vunpack.c.l.b16 %v1211
      %v1282 = vunpack.c.h.b16 %v1211
      %v1283 = vunpack.c.l.b16 %v1212
      %v1284 = vunpack.c.h.b16 %v1212
      %v1285 = vpack.c.b16 %v1241, %v1237
      %v1286 = vpack.c.b16 %v1242, %v1238
      %v1287 = vpack.c.b16 %v1243, %v1239
      %v1288 = vpack.c.b16 %v1244, %v1240
      %v1289 = vpack.c.b16 %v1249, %v1245
      %v1290 = vpack.c.b16 %v1250, %v1246
      %v1291 = vpack.c.b16 %v1251, %v1247
      %v1292 = vpack.c.b16 %v1252, %v1248
      %v1293 = vpack.c.b16 %v1257, %v1253
      %v1294 = vpack.c.b16 %v1258, %v1254
      %v1295 = vpack.c.b16 %v1259, %v1255
      %v1296 = vpack.c.b16 %v1260, %v1256
      %v1297 = vpack.c.b16 %v1265, %v1261
      %v1298 = vpack.c.b16 %v1266, %v1262
      %v1299 = vpack.c.b16 %v1267, %v1263
      %v1300 = vpack.c.b16 %v1268, %v1264
      %v1301 = vpack.c.b16 %v1273, %v1269
      %v1302 = vpack.c.b16 %v1274, %v1270
      %v1303 = vpack.c.b16 %v1275, %v1271
      %v1304 = vpack.c.b16 %v1276, %v1272
      %v1305 = vpack.c.b16 %v1281, %v1277
      %v1306 = vpack.c.b16 %v1282, %v1278
      %v1307 = vpack.c.b16 %v1283, %v1279
      %v1308 = vpack.c.b16 %v1284, %v1280
      %1333 = vmatpush.bf16.msra.mxu0 %v676
      %1334 = vmatpush.bf16.msra.mxu0 %v675
      %1335 = vmatpush.bf16.msra.mxu0 %v674
      %1336 = vmatpush.bf16.msra.mxu0 %v673
      %1337 = vmatpush.bf16.msra.mxu0 %v672
      %1338 = vmatpush.bf16.msra.mxu0 %v671
      %1339 = vmatpush.bf16.msra.mxu0 %v670
      %1340 = vmatpush.bf16.msra.mxu0 %v669
      %1341 = vmatmul.bf16.gmra.mxu0 %v1285
      %v1342 = vpop.f32.mrf.mxu0
      %v1343 = vadd.f32 0.0, %v1342
      %v1344 = vpop.f32.mrf.mxu0
      %v1345 = vadd.f32 0.0, %v1344
      %1346 = vmatmul.bf16.gmra.mxu0 %v1289
      %v1347 = vpop.f32.mrf.mxu0
      %v1348 = vadd.f32 0.0, %v1347
      %v1349 = vpop.f32.mrf.mxu0
      %v1350 = vadd.f32 0.0, %v1349
      %1351 = vmatmul.bf16.gmra.mxu0 %v1293
      %v1352 = vpop.f32.mrf.mxu0
      %v1353 = vadd.f32 0.0, %v1352
      %v1354 = vpop.f32.mrf.mxu0
      %v1355 = vadd.f32 0.0, %v1354
      %1356 = vmatmul.bf16.gmra.mxu0 %v1297
      %v1357 = vpop.f32.mrf.mxu0
      %v1358 = vadd.f32 0.0, %v1357
      %v1359 = vpop.f32.mrf.mxu0
      %v1360 = vadd.f32 0.0, %v1359
      %1361 = vmatmul.bf16.gmra.mxu0 %v1301
      %v1362 = vpop.f32.mrf.mxu0
      %v1363 = vadd.f32 0.0, %v1362
      %v1364 = vpop.f32.mrf.mxu0
      %v1365 = vadd.f32 0.0, %v1364
      %1366 = vmatmul.bf16.gmra.mxu0 %v1305
      %v1367 = vpop.f32.mrf.mxu0
      %v1368 = vadd.f32 0.0, %v1367
      %v1369 = vpop.f32.mrf.mxu0
      %v1370 = vadd.f32 0.0, %v1369
      %1371 = vdwg.mxu0
      %1372 = vmatpush.bf16.msra.mxu0 %v684
      %1373 = vmatpush.bf16.msra.mxu0 %v683
      %1374 = vmatpush.bf16.msra.mxu0 %v682
      %1375 = vmatpush.bf16.msra.mxu0 %v681
      %1376 = vmatpush.bf16.msra.mxu0 %v680
      %1377 = vmatpush.bf16.msra.mxu0 %v679
      %1378 = vmatpush.bf16.msra.mxu0 %v678
      %1379 = vmatpush.bf16.msra.mxu0 %v677
      %1380 = vmatmul.bf16.gmra.mxu0 %v1286
      %v1381 = vpop.f32.mrf.mxu0
      %v1382 = vadd.f32 %v1343, %v1381
      %v1383 = vpop.f32.mrf.mxu0
      %v1384 = vadd.f32 %v1345, %v1383
      %1385 = vmatmul.bf16.gmra.mxu0 %v1290
      %v1386 = vpop.f32.mrf.mxu0
      %v1387 = vadd.f32 %v1348, %v1386
      %v1388 = vpop.f32.mrf.mxu0
      %v1389 = vadd.f32 %v1350, %v1388
      %1390 = vmatmul.bf16.gmra.mxu0 %v1294
      %v1391 = vpop.f32.mrf.mxu0
      %v1392 = vadd.f32 %v1353, %v1391
      %v1393 = vpop.f32.mrf.mxu0
      %v1394 = vadd.f32 %v1355, %v1393
      %1395 = vmatmul.bf16.gmra.mxu0 %v1298
      %v1396 = vpop.f32.mrf.mxu0
      %v1397 = vadd.f32 %v1358, %v1396
      %v1398 = vpop.f32.mrf.mxu0
      %v1399 = vadd.f32 %v1360, %v1398
      %1400 = vmatmul.bf16.gmra.mxu0 %v1302
      %v1401 = vpop.f32.mrf.mxu0
      %v1402 = vadd.f32 %v1363, %v1401
      %v1403 = vpop.f32.mrf.mxu0
      %v1404 = vadd.f32 %v1365, %v1403
      %1405 = vmatmul.bf16.gmra.mxu0 %v1306
      %v1406 = vpop.f32.mrf.mxu0
      %v1407 = vadd.f32 %v1368, %v1406
      %v1408 = vpop.f32.mrf.mxu0
      %v1409 = vadd.f32 %v1370, %v1408
      %1410 = vdwg.mxu0
      %1411 = vmatpush.bf16.msra.mxu0 %v692
      %1412 = vmatpush.bf16.msra.mxu0 %v691
      %1413 = vmatpush.bf16.msra.mxu0 %v690
      %1414 = vmatpush.bf16.msra.mxu0 %v689
      %1415 = vmatpush.bf16.msra.mxu0 %v688
      %1416 = vmatpush.bf16.msra.mxu0 %v687
      %1417 = vmatpush.bf16.msra.mxu0 %v686
      %1418 = vmatpush.bf16.msra.mxu0 %v685
      %1419 = vmatmul.bf16.gmra.mxu0 %v1287
      %v1420 = vpop.f32.mrf.mxu0
      %v1421 = vadd.f32 %v1382, %v1420
      %v1422 = vpop.f32.mrf.mxu0
      %v1423 = vadd.f32 %v1384, %v1422
      %1424 = vmatmul.bf16.gmra.mxu0 %v1291
      %v1425 = vpop.f32.mrf.mxu0
      %v1426 = vadd.f32 %v1387, %v1425
      %v1427 = vpop.f32.mrf.mxu0
      %v1428 = vadd.f32 %v1389, %v1427
      %1429 = vmatmul.bf16.gmra.mxu0 %v1295
      %v1430 = vpop.f32.mrf.mxu0
      %v1431 = vadd.f32 %v1392, %v1430
      %v1432 = vpop.f32.mrf.mxu0
      %v1433 = vadd.f32 %v1394, %v1432
      %1434 = vmatmul.bf16.gmra.mxu0 %v1299
      %v1435 = vpop.f32.mrf.mxu0
      %v1436 = vadd.f32 %v1397, %v1435
      %v1437 = vpop.f32.mrf.mxu0
      %v1438 = vadd.f32 %v1399, %v1437
      %1439 = vmatmul.bf16.gmra.mxu0 %v1303
      %v1440 = vpop.f32.mrf.mxu0
      %v1441 = vadd.f32 %v1402, %v1440
      %v1442 = vpop.f32.mrf.mxu0
      %v1443 = vadd.f32 %v1404, %v1442
      %1444 = vmatmul.bf16.gmra.mxu0 %v1307
      %v1445 = vpop.f32.mrf.mxu0
      %v1446 = vadd.f32 %v1407, %v1445
      %v1447 = vpop.f32.mrf.mxu0
      %v1448 = vadd.f32 %v1409, %v1447
      %1449 = vdwg.mxu0
      %1450 = vmatpush.bf16.msra.mxu0 %v700
      %1451 = vmatpush.bf16.msra.mxu0 %v699
      %1452 = vmatpush.bf16.msra.mxu0 %v698
      %1453 = vmatpush.bf16.msra.mxu0 %v697
      %1454 = vmatpush.bf16.msra.mxu0 %v696
      %1455 = vmatpush.bf16.msra.mxu0 %v695
      %1456 = vmatpush.bf16.msra.mxu0 %v694
      %1457 = vmatpush.bf16.msra.mxu0 %v693
      %1458 = vmatmul.bf16.gmra.mxu0 %v1288
      %v1459 = vpop.f32.mrf.mxu0
      %v1460 = vadd.f32 %v1421, %v1459
      %v1461 = vpop.f32.mrf.mxu0
      %v1462 = vadd.f32 %v1423, %v1461
      %1463 = vmatmul.bf16.gmra.mxu0 %v1292
      %v1464 = vpop.f32.mrf.mxu0
      %v1465 = vadd.f32 %v1426, %v1464
      %v1466 = vpop.f32.mrf.mxu0
      %v1467 = vadd.f32 %v1428, %v1466
      %1468 = vmatmul.bf16.gmra.mxu0 %v1296
      %v1469 = vpop.f32.mrf.mxu0
      %v1470 = vadd.f32 %v1431, %v1469
      %v1471 = vpop.f32.mrf.mxu0
      %v1472 = vadd.f32 %v1433, %v1471
      %1473 = vmatmul.bf16.gmra.mxu0 %v1300
      %v1474 = vpop.f32.mrf.mxu0
      %v1475 = vadd.f32 %v1436, %v1474
      %v1476 = vpop.f32.mrf.mxu0
      %v1477 = vadd.f32 %v1438, %v1476
      %1478 = vmatmul.bf16.gmra.mxu0 %v1304
      %v1479 = vpop.f32.mrf.mxu0
      %v1480 = vadd.f32 %v1441, %v1479
      %v1481 = vpop.f32.mrf.mxu0
      %v1482 = vadd.f32 %v1443, %v1481
      %1483 = vmatmul.bf16.gmra.mxu0 %v1308
      %v1484 = vpop.f32.mrf.mxu0
      %v1485 = vadd.f32 %v1446, %v1484
      %v1486 = vpop.f32.mrf.mxu0
      %v1487 = vadd.f32 %v1448, %v1486
      %1488 = vdwg.mxu0
      %v1489 = vld [vmem:[%s325] sm:$0xff]
      %v1490 = vld [vmem:[%s325 + $0x8] sm:$0xff]
      %v1491 = vld [vmem:[%s325 + $0x10] sm:$0xff]
      %v1492 = vld [vmem:[%s325 + $0x18] sm:$0xff]
      %v1493 = vld [vmem:[%s325 + $0x20] sm:$0xff]
      %v1494 = vld [vmem:[%s325 + $0x28] sm:$0xff]
      %v1495 = vld [vmem:[%s325 + $0x30] sm:$0xff]
      %v1496 = vld [vmem:[%s325 + $0x38] sm:$0xff]
      %v1497 = vld [vmem:[%s325 + $0x40] sm:$0xff]
      %v1498 = vld [vmem:[%s325 + $0x48] sm:$0xff]
      %v1499 = vld [vmem:[%s325 + $0x50] sm:$0xff]
      %v1500 = vld [vmem:[%s325 + $0x58] sm:$0xff]
      %v1501 = vld [vmem:[%s325 + $0x60] sm:$0xff]
      %v1502 = vld [vmem:[%s325 + $0x68] sm:$0xff]
      %v1503 = vld [vmem:[%s325 + $0x70] sm:$0xff]
      %v1504 = vld [vmem:[%s325 + $0x78] sm:$0xff]
      %v1505 = vld [vmem:[%s325 + $0x80] sm:$0xff]
      %v1506 = vld [vmem:[%s325 + $0x88] sm:$0xff]
      %v1507 = vld [vmem:[%s325 + $0x90] sm:$0xff]
      %v1508 = vld [vmem:[%s325 + $0x98] sm:$0xff]
      %v1509 = vld [vmem:[%s325 + $0xa0] sm:$0xff]
      %v1510 = vld [vmem:[%s325 + $0xa8] sm:$0xff]
      %v1511 = vld [vmem:[%s325 + $0xb0] sm:$0xff]
      %v1512 = vld [vmem:[%s325 + $0xb8] sm:$0xff]
      %v1537 = vunpack.c.l.b16 %v1489
      %v1538 = vunpack.c.h.b16 %v1489
      %v1539 = vunpack.c.l.b16 %v1490
      %v1540 = vunpack.c.h.b16 %v1490
      %v1541 = vunpack.c.l.b16 %v1491
      %v1542 = vunpack.c.h.b16 %v1491
      %v1543 = vunpack.c.l.b16 %v1492
      %v1544 = vunpack.c.h.b16 %v1492
      %v1545 = vunpack.c.l.b16 %v1493
      %v1546 = vunpack.c.h.b16 %v1493
      %v1547 = vunpack.c.l.b16 %v1494
      %v1548 = vunpack.c.h.b16 %v1494
      %v1549 = vunpack.c.l.b16 %v1495
      %v1550 = vunpack.c.h.b16 %v1495
      %v1551 = vunpack.c.l.b16 %v1496
      %v1552 = vunpack.c.h.b16 %v1496
      %v1553 = vunpack.c.l.b16 %v1497
      %v1554 = vunpack.c.h.b16 %v1497
      %v1555 = vunpack.c.l.b16 %v1498
      %v1556 = vunpack.c.h.b16 %v1498
      %v1557 = vunpack.c.l.b16 %v1499
      %v1558 = vunpack.c.h.b16 %v1499
      %v1559 = vunpack.c.l.b16 %v1500
      %v1560 = vunpack.c.h.b16 %v1500
      %v1561 = vunpack.c.l.b16 %v1501
      %v1562 = vunpack.c.h.b16 %v1501
      %v1563 = vunpack.c.l.b16 %v1502
      %v1564 = vunpack.c.h.b16 %v1502
      %v1565 = vunpack.c.l.b16 %v1503
      %v1566 = vunpack.c.h.b16 %v1503
      %v1567 = vunpack.c.l.b16 %v1504
      %v1568 = vunpack.c.h.b16 %v1504
      %v1569 = vunpack.c.l.b16 %v1505
      %v1570 = vunpack.c.h.b16 %v1505
      %v1571 = vunpack.c.l.b16 %v1506
      %v1572 = vunpack.c.h.b16 %v1506
      %v1573 = vunpack.c.l.b16 %v1507
      %v1574 = vunpack.c.h.b16 %v1507
      %v1575 = vunpack.c.l.b16 %v1508
      %v1576 = vunpack.c.h.b16 %v1508
      %v1577 = vunpack.c.l.b16 %v1509
      %v1578 = vunpack.c.h.b16 %v1509
      %v1579 = vunpack.c.l.b16 %v1510
      %v1580 = vunpack.c.h.b16 %v1510
      %v1581 = vunpack.c.l.b16 %v1511
      %v1582 = vunpack.c.h.b16 %v1511
      %v1583 = vunpack.c.l.b16 %v1512
      %v1584 = vunpack.c.h.b16 %v1512
      %v1585 = vpack.c.b16 %v1541, %v1537
      %v1586 = vpack.c.b16 %v1542, %v1538
      %v1587 = vpack.c.b16 %v1543, %v1539
      %v1588 = vpack.c.b16 %v1544, %v1540
      %v1589 = vpack.c.b16 %v1549, %v1545
      %v1590 = vpack.c.b16 %v1550, %v1546
      %v1591 = vpack.c.b16 %v1551, %v1547
      %v1592 = vpack.c.b16 %v1552, %v1548
      %v1593 = vpack.c.b16 %v1557, %v1553
      %v1594 = vpack.c.b16 %v1558, %v1554
      %v1595 = vpack.c.b16 %v1559, %v1555
      %v1596 = vpack.c.b16 %v1560, %v1556
      %v1597 = vpack.c.b16 %v1565, %v1561
      %v1598 = vpack.c.b16 %v1566, %v1562
      %v1599 = vpack.c.b16 %v1567, %v1563
      %v1600 = vpack.c.b16 %v1568, %v1564
      %v1601 = vpack.c.b16 %v1573, %v1569
      %v1602 = vpack.c.b16 %v1574, %v1570
      %v1603 = vpack.c.b16 %v1575, %v1571
      %v1604 = vpack.c.b16 %v1576, %v1572
      %v1605 = vpack.c.b16 %v1581, %v1577
      %v1606 = vpack.c.b16 %v1582, %v1578
      %v1607 = vpack.c.b16 %v1583, %v1579
      %v1608 = vpack.c.b16 %v1584, %v1580
      %1633 = vmatpush.bf16.msra.mxu0 %v676
      %1634 = vmatpush.bf16.msra.mxu0 %v675
      %1635 = vmatpush.bf16.msra.mxu0 %v674
      %1636 = vmatpush.bf16.msra.mxu0 %v673
      %1637 = vmatpush.bf16.msra.mxu0 %v672
      %1638 = vmatpush.bf16.msra.mxu0 %v671
      %1639 = vmatpush.bf16.msra.mxu0 %v670
      %1640 = vmatpush.bf16.msra.mxu0 %v669
      %1641 = vmatmul.bf16.gmra.mxu0 %v1585
      %v1642 = vpop.f32.mrf.mxu0
      %v1643 = vadd.f32 0.0, %v1642
      %v1644 = vpop.f32.mrf.mxu0
      %v1645 = vadd.f32 0.0, %v1644
      %1646 = vmatmul.bf16.gmra.mxu0 %v1589
      %v1647 = vpop.f32.mrf.mxu0
      %v1648 = vadd.f32 0.0, %v1647
      %v1649 = vpop.f32.mrf.mxu0
      %v1650 = vadd.f32 0.0, %v1649
      %1651 = vmatmul.bf16.gmra.mxu0 %v1593
      %v1652 = vpop.f32.mrf.mxu0
      %v1653 = vadd.f32 0.0, %v1652
      %v1654 = vpop.f32.mrf.mxu0
      %v1655 = vadd.f32 0.0, %v1654
      %1656 = vmatmul.bf16.gmra.mxu0 %v1597
      %v1657 = vpop.f32.mrf.mxu0
      %v1658 = vadd.f32 0.0, %v1657
      %v1659 = vpop.f32.mrf.mxu0
      %v1660 = vadd.f32 0.0, %v1659
      %1661 = vmatmul.bf16.gmra.mxu0 %v1601
      %v1662 = vpop.f32.mrf.mxu0
      %v1663 = vadd.f32 0.0, %v1662
      %v1664 = vpop.f32.mrf.mxu0
      %v1665 = vadd.f32 0.0, %v1664
      %1666 = vmatmul.bf16.gmra.mxu0 %v1605
      %v1667 = vpop.f32.mrf.mxu0
      %v1668 = vadd.f32 0.0, %v1667
      %v1669 = vpop.f32.mrf.mxu0
      %v1670 = vadd.f32 0.0, %v1669
      %1671 = vdwg.mxu0
      %1672 = vmatpush.bf16.msra.mxu0 %v684
      %1673 = vmatpush.bf16.msra.mxu0 %v683
      %1674 = vmatpush.bf16.msra.mxu0 %v682
      %1675 = vmatpush.bf16.msra.mxu0 %v681
      %1676 = vmatpush.bf16.msra.mxu0 %v680
      %1677 = vmatpush.bf16.msra.mxu0 %v679
      %1678 = vmatpush.bf16.msra.mxu0 %v678
      %1679 = vmatpush.bf16.msra.mxu0 %v677
      %1680 = vmatmul.bf16.gmra.mxu0 %v1586
      %v1681 = vpop.f32.mrf.mxu0
      %v1682 = vadd.f32 %v1643, %v1681
      %v1683 = vpop.f32.mrf.mxu0
      %v1684 = vadd.f32 %v1645, %v1683
      %1685 = vmatmul.bf16.gmra.mxu0 %v1590
      %v1686 = vpop.f32.mrf.mxu0
      %v1687 = vadd.f32 %v1648, %v1686
      %v1688 = vpop.f32.mrf.mxu0
      %v1689 = vadd.f32 %v1650, %v1688
      %1690 = vmatmul.bf16.gmra.mxu0 %v1594
      %v1691 = vpop.f32.mrf.mxu0
      %v1692 = vadd.f32 %v1653, %v1691
      %v1693 = vpop.f32.mrf.mxu0
      %v1694 = vadd.f32 %v1655, %v1693
      %1695 = vmatmul.bf16.gmra.mxu0 %v1598
      %v1696 = vpop.f32.mrf.mxu0
      %v1697 = vadd.f32 %v1658, %v1696
      %v1698 = vpop.f32.mrf.mxu0
      %v1699 = vadd.f32 %v1660, %v1698
      %1700 = vmatmul.bf16.gmra.mxu0 %v1602
      %v1701 = vpop.f32.mrf.mxu0
      %v1702 = vadd.f32 %v1663, %v1701
      %v1703 = vpop.f32.mrf.mxu0
      %v1704 = vadd.f32 %v1665, %v1703
      %1705 = vmatmul.bf16.gmra.mxu0 %v1606
      %v1706 = vpop.f32.mrf.mxu0
      %v1707 = vadd.f32 %v1668, %v1706
      %v1708 = vpop.f32.mrf.mxu0
      %v1709 = vadd.f32 %v1670, %v1708
      %1710 = vdwg.mxu0
      %1711 = vmatpush.bf16.msra.mxu0 %v692
      %1712 = vmatpush.bf16.msra.mxu0 %v691
      %1713 = vmatpush.bf16.msra.mxu0 %v690
      %1714 = vmatpush.bf16.msra.mxu0 %v689
      %1715 = vmatpush.bf16.msra.mxu0 %v688
      %1716 = vmatpush.bf16.msra.mxu0 %v687
      %1717 = vmatpush.bf16.msra.mxu0 %v686
      %1718 = vmatpush.bf16.msra.mxu0 %v685
      %1719 = vmatmul.bf16.gmra.mxu0 %v1587
      %v1720 = vpop.f32.mrf.mxu0
      %v1721 = vadd.f32 %v1682, %v1720
      %v1722 = vpop.f32.mrf.mxu0
      %v1723 = vadd.f32 %v1684, %v1722
      %1724 = vmatmul.bf16.gmra.mxu0 %v1591
      %v1725 = vpop.f32.mrf.mxu0
      %v1726 = vadd.f32 %v1687, %v1725
      %v1727 = vpop.f32.mrf.mxu0
      %v1728 = vadd.f32 %v1689, %v1727
      %1729 = vmatmul.bf16.gmra.mxu0 %v1595
      %v1730 = vpop.f32.mrf.mxu0
      %v1731 = vadd.f32 %v1692, %v1730
      %v1732 = vpop.f32.mrf.mxu0
      %v1733 = vadd.f32 %v1694, %v1732
      %1734 = vmatmul.bf16.gmra.mxu0 %v1599
      %v1735 = vpop.f32.mrf.mxu0
      %v1736 = vadd.f32 %v1697, %v1735
      %v1737 = vpop.f32.mrf.mxu0
      %v1738 = vadd.f32 %v1699, %v1737
      %1739 = vmatmul.bf16.gmra.mxu0 %v1603
      %v1740 = vpop.f32.mrf.mxu0
      %v1741 = vadd.f32 %v1702, %v1740
      %v1742 = vpop.f32.mrf.mxu0
      %v1743 = vadd.f32 %v1704, %v1742
      %1744 = vmatmul.bf16.gmra.mxu0 %v1607
      %v1745 = vpop.f32.mrf.mxu0
      %v1746 = vadd.f32 %v1707, %v1745
      %v1747 = vpop.f32.mrf.mxu0
      %v1748 = vadd.f32 %v1709, %v1747
      %1749 = vdwg.mxu0
      %1750 = vmatpush.bf16.msra.mxu0 %v700
      %1751 = vmatpush.bf16.msra.mxu0 %v699
      %1752 = vmatpush.bf16.msra.mxu0 %v698
      %1753 = vmatpush.bf16.msra.mxu0 %v697
      %1754 = vmatpush.bf16.msra.mxu0 %v696
      %1755 = vmatpush.bf16.msra.mxu0 %v695
      %1756 = vmatpush.bf16.msra.mxu0 %v694
      %1757 = vmatpush.bf16.msra.mxu0 %v693
      %1758 = vmatmul.bf16.gmra.mxu0 %v1588
      %v1759 = vpop.f32.mrf.mxu0
      %v1760 = vadd.f32 %v1721, %v1759
      %v1761 = vpop.f32.mrf.mxu0
      %v1762 = vadd.f32 %v1723, %v1761
      %1763 = vmatmul.bf16.gmra.mxu0 %v1592
      %v1764 = vpop.f32.mrf.mxu0
      %v1765 = vadd.f32 %v1726, %v1764
      %v1766 = vpop.f32.mrf.mxu0
      %v1767 = vadd.f32 %v1728, %v1766
      %1768 = vmatmul.bf16.gmra.mxu0 %v1596
      %v1769 = vpop.f32.mrf.mxu0
      %v1770 = vadd.f32 %v1731, %v1769
      %v1771 = vpop.f32.mrf.mxu0
      %v1772 = vadd.f32 %v1733, %v1771
      %1773 = vmatmul.bf16.gmra.mxu0 %v1600
      %v1774 = vpop.f32.mrf.mxu0
      %v1775 = vadd.f32 %v1736, %v1774
      %v1776 = vpop.f32.mrf.mxu0
      %v1777 = vadd.f32 %v1738, %v1776
      %1778 = vmatmul.bf16.gmra.mxu0 %v1604
      %v1779 = vpop.f32.mrf.mxu0
      %v1780 = vadd.f32 %v1741, %v1779
      %v1781 = vpop.f32.mrf.mxu0
      %v1782 = vadd.f32 %v1743, %v1781
      %1783 = vmatmul.bf16.gmra.mxu0 %v1608
      %v1784 = vpop.f32.mrf.mxu0
      %v1785 = vadd.f32 %v1746, %v1784
      %v1786 = vpop.f32.mrf.mxu0
      %v1787 = vadd.f32 %v1748, %v1786
      %1788 = vdwg.mxu0
      %v1789 = vmax.f32 %v860, %v1160
      %v1790 = vmax.f32 %v862, %v1162
      %v1791 = vmax.f32 %v865, %v1165
      %v1792 = vmax.f32 %v867, %v1167
      %v1793 = vmax.f32 %v870, %v1170
      %v1794 = vmax.f32 %v872, %v1172
      %v1795 = vmax.f32 %v875, %v1175
      %v1796 = vmax.f32 %v877, %v1177
      %v1797 = vmax.f32 %v880, %v1180
      %v1798 = vmax.f32 %v882, %v1182
      %v1799 = vmax.f32 %v885, %v1185
      %v1800 = vmax.f32 %v887, %v1187
      %v1801 = vmax.f32 %v1460, %v1760
      %v1802 = vmax.f32 %v1462, %v1762
      %v1803 = vmax.f32 %v1465, %v1765
      %v1804 = vmax.f32 %v1467, %v1767
      %v1805 = vmax.f32 %v1470, %v1770
      %v1806 = vmax.f32 %v1472, %v1772
      %v1807 = vmax.f32 %v1475, %v1775
      %v1808 = vmax.f32 %v1477, %v1777
      %v1809 = vmax.f32 %v1480, %v1780
      %v1810 = vmax.f32 %v1482, %v1782
      %v1811 = vmax.f32 %v1485, %v1785
      %v1812 = vmax.f32 %v1487, %v1787
      %v1813 = vmax.f32 %v1789, %v1801
      %v1814 = vmax.f32 %v1790, %v1802
      %v1815 = vmax.f32 %v1791, %v1803
      %v1816 = vmax.f32 %v1792, %v1804
      %v1817 = vmax.f32 %v1793, %v1805
      %v1818 = vmax.f32 %v1794, %v1806
      %v1819 = vmax.f32 %v1795, %v1807
      %v1820 = vmax.f32 %v1796, %v1808
      %v1821 = vmax.f32 %v1797, %v1809
      %v1822 = vmax.f32 %v1798, %v1810
      %v1823 = vmax.f32 %v1799, %v1811
      %v1824 = vmax.f32 %v1800, %v1812
      %v1825 = vld [vmem:[%s5] sm:$0x1]
      %v1827 = vperm.slane %v1825, 0
      %v1829 = vadd.f32 %v1813, %v1827
      %v1830 = vadd.f32 %v1814, %v1827
      %v1831 = vadd.f32 %v1815, %v1827
      %v1832 = vadd.f32 %v1816, %v1827
      %v1833 = vadd.f32 %v1817, %v1827
      %v1834 = vadd.f32 %v1818, %v1827
      %v1835 = vadd.f32 %v1819, %v1827
      %v1836 = vadd.f32 %v1820, %v1827
      %v1837 = vadd.f32 %v1821, %v1827
      %v1838 = vadd.f32 %v1822, %v1827
      %v1839 = vadd.f32 %v1823, %v1827
      %v1840 = vadd.f32 %v1824, %v1827
      %v1841 = vpack.c.bf16 %v1829, %v1829
      %v1842 = vpack.c.bf16 %v1830, %v1830
      %v1843 = vpack.c.bf16 %v1831, %v1831
      %v1844 = vpack.c.bf16 %v1832, %v1832
      %v1845 = vpack.c.bf16 %v1833, %v1833
      %v1846 = vpack.c.bf16 %v1834, %v1834
      %v1847 = vpack.c.bf16 %v1835, %v1835
      %v1848 = vpack.c.bf16 %v1836, %v1836
      %v1849 = vpack.c.bf16 %v1837, %v1837
      %v1850 = vpack.c.bf16 %v1838, %v1838
      %v1851 = vpack.c.bf16 %v1839, %v1839
      %v1852 = vpack.c.bf16 %v1840, %v1840
      %1853 = vst [vmem:[%s331] sm:$0xf] %v1841
      %1854 = vst [vmem:[%s331 + $0x4] sm:$0xf] %v1842
      %1855 = vst [vmem:[%s331 + $0x8] sm:$0xf] %v1843
      %1856 = vst [vmem:[%s331 + $0xc] sm:$0xf] %v1844
      %1857 = vst [vmem:[%s331 + $0x10] sm:$0xf] %v1845
      %1858 = vst [vmem:[%s331 + $0x14] sm:$0xf] %v1846
      %1859 = vst [vmem:[%s331 + $0x18] sm:$0xf] %v1847
      %1860 = vst [vmem:[%s331 + $0x1c] sm:$0xf] %v1848
      %1861 = vst [vmem:[%s331 + $0x20] sm:$0xf] %v1849
      %1862 = vst [vmem:[%s331 + $0x24] sm:$0xf] %v1850
      %1863 = vst [vmem:[%s331 + $0x28] sm:$0xf] %v1851
      %1864 = vst [vmem:[%s331 + $0x2c] sm:$0xf] %v1852
      %s1865 = smul.u32 12, %s17
      %p1866 = scmp.lt.s32.totalorder %s1865, 23
      %s1867 = scalar_select %p1866, %s1865, 23
      %s1868 = smul.addr %s1867, 4
      %s1869 = scalar_lea.vmem %s6, %s1868
      // Predicated region
      $region45: #{gration_forward.5} parent=43 // pred_check
        %p1870 = pneg %p181
      $region46: #{gration_forward.5} parent=43 // pred_check_branch
        %1872 = sbr.rel (%p1870) target = $region48
      $region47: #{gration_forward.5} parent=43 // pred_region
        %s1873 = smul.u32 12, %s17
      $region48: #{gration_forward.5} parent=43 // pred_fallthru
        _
    $region44: #{gration_forward.5} parent=5 // pred_fallthru
      _
    %p1874 = scmp.le.s32.totalorder 2, %s12
    // Predicated region
    $region49: #{gration_forward.5} parent=5 // pred_check
      %p1875 = pneg %p1874
    $region50: #{gration_forward.5} parent=5 // pred_check_branch
      %1877 = sbr.rel (%p1875) target = $region52
    $region51: #{gration_forward.5} parent=5 // pred_region
      %s1878 = ssub.s32 %s12, 2
      // Predicated region
      $region53: #{gration_forward.5} parent=51 // pred_check
        %p1879 = pneg %p187
      $region54: #{gration_forward.5} parent=51 // pred_check_branch
        %1881 = sbr.rel (%p1879) target = $region56
      $region55: #{gration_forward.5} parent=51 // pred_region
        %s1882 = smul.u32 12, %s18
        %p1883 = scmp.lt.s32.totalorder %s1882, 23
        %s1884 = scalar_select %p1883, %s1882, 23
        %s1885 = smul.addr %s1884, 4
        %s1886 = scalar_lea.vmem %s6, %s1885
      $region56: #{gration_forward.5} parent=51 // pred_fallthru
        _
    $region52: #{gration_forward.5} parent=5 // pred_fallthru
      _
  $region6: #{gration_forward.5} parent=0 // loop_footer
    %s16 = sadd.s32 1, %s12
  $region7: #{gration_forward.5} parent=0 // loop_footer_branch
    %11 = sbr.rel target = $region3
  $region8: #{gration_forward.5} parent=0 // loop_exit
    _

// kernel: gration_forward.7
$region0: #{gration_forward.7}
  #allocation0 [shape = 'u32[]', space=smem, size = 0x4, offset = 0x4, fixed_abs, tag = 'smem constant byte address 0x4 - core index']
  #allocation1 [shape = 'u32[72,128]{1,0:T(1,128)}', space=vmem, size = 0x9000, scoped, tag = 'internal scratch']
  %s0 = inlined_call_operand.vmem [shape: bf16[16,2048], index: 0, kind: input, shape index: {}]
  %s1 = inlined_call_operand.vmem [shape: bf16[2048,128], index: 1, kind: input, shape index: {}]
  %s2 = inlined_call_operand.vmem [shape: f32[1,128], index: 2, kind: input, shape index: {}]
  %s3 = inlined_call_operand.vmem [shape: bf16[128,128], index: 3, kind: input, shape index: {}]
  %s4 = inlined_call_operand.vmem [shape: f32[1,128], index: 4, kind: input, shape index: {}]
  %s5 = inlined_call_operand.vmem [shape: f32[16,128], index: 5, kind: output, shape index: {}]
  %s6 = sld [smem:[#allocation0]]
  $region30: #{gration_forward.7} parent=0
    _
  %s8 = ssub.s32 1, %s6
  %s9 = scalar_select 0, %s8, %s6
  // Predicated region
  $region2: #{gration_forward.7} parent=0 // pred_check
    _
  $region3: #{gration_forward.7} parent=0 // pred_check_branch
    %11 = sbr.rel (0) target = $region5
  $region4: #{gration_forward.7} parent=0 // pred_region
    _
  $region5: #{gration_forward.7} parent=0 // pred_fallthru
    _
  // Predicated region
  $region6: #{gration_forward.7} parent=0 // pred_check
    _
  $region7: #{gration_forward.7} parent=0 // pred_check_branch
    %13 = sbr.rel (0) target = $region9
  $region8: #{gration_forward.7} parent=0 // pred_region
    _
  $region9: #{gration_forward.7} parent=0 // pred_fallthru
    _
  // Predicated region
  $region10: #{gration_forward.7} parent=0 // pred_check
    _
  $region11: #{gration_forward.7} parent=0 // pred_check_branch
    %15 = sbr.rel (0) target = $region13
  $region12: #{gration_forward.7} parent=0 // pred_region
    _
  $region13: #{gration_forward.7} parent=0 // pred_fallthru
    _
  // Predicated region
  $region14: #{gration_forward.7} parent=0 // pred_check
    _
  $region15: #{gration_forward.7} parent=0 // pred_check_branch
    %17 = sbr.rel (0) target = $region17
  $region16: #{gration_forward.7} parent=0 // pred_region
    _
  $region17: #{gration_forward.7} parent=0 // pred_fallthru
    _
  // Predicated region
  $region18: #{gration_forward.7} parent=0 // pred_check
    _
  $region19: #{gration_forward.7} parent=0 // pred_check_branch
    %19 = sbr.rel (0) target = $region21
  $region20: #{gration_forward.7} parent=0 // pred_region
    _
  $region21: #{gration_forward.7} parent=0 // pred_fallthru
    _
  %v20 = vld [vmem:[%s0] sm:$0xff]
  %v21 = vld [vmem:[%s0 + $0x8] sm:$0xff]
  %v22 = vld [vmem:[%s0 + $0x10] sm:$0xff]
  %v23 = vld [vmem:[%s0 + $0x18] sm:$0xff]
  %v24 = vld [vmem:[%s0 + $0x20] sm:$0xff]
  %v25 = vld [vmem:[%s0 + $0x28] sm:$0xff]
  %v26 = vld [vmem:[%s0 + $0x30] sm:$0xff]
  %v27 = vld [vmem:[%s0 + $0x38] sm:$0xff]
  %v28 = vld [vmem:[%s0 + $0x40] sm:$0xff]
  %v29 = vld [vmem:[%s0 + $0x48] sm:$0xff]
  %v30 = vld [vmem:[%s0 + $0x50] sm:$0xff]
  %v31 = vld [vmem:[%s0 + $0x58] sm:$0xff]
  %v32 = vld [vmem:[%s0 + $0x60] sm:$0xff]
  %v33 = vld [vmem:[%s0 + $0x68] sm:$0xff]
  %v34 = vld [vmem:[%s0 + $0x70] sm:$0xff]
  %v35 = vld [vmem:[%s0 + $0x78] sm:$0xff]
  %v36 = vld [vmem:[%s1] sm:$0xf]
  %v37 = vld [vmem:[%s1 + $0x4] sm:$0xf]
  %v38 = vld [vmem:[%s1 + $0x8] sm:$0xf]
  %v39 = vld [vmem:[%s1 + $0xc] sm:$0xf]
  %v40 = vld [vmem:[%s1 + $0x10] sm:$0xf]
  %v41 = vld [vmem:[%s1 + $0x14] sm:$0xf]
  %v42 = vld [vmem:[%s1 + $0x18] sm:$0xf]
  %v43 = vld [vmem:[%s1 + $0x1c] sm:$0xf]
  %v44 = vld [vmem:[%s1 + $0x20] sm:$0xf]
  %v45 = vld [vmem:[%s1 + $0x24] sm:$0xf]
  %v46 = vld [vmem:[%s1 + $0x28] sm:$0xf]
  %v47 = vld [vmem:[%s1 + $0x2c] sm:$0xf]
  %v48 = vld [vmem:[%s1 + $0x30] sm:$0xf]
  %v49 = vld [vmem:[%s1 + $0x34] sm:$0xf]
  %v50 = vld [vmem:[%s1 + $0x38] sm:$0xf]
  %v51 = vld [vmem:[%s1 + $0x3c] sm:$0xf]
  %v52 = vld [vmem:[%s1 + $0x40] sm:$0xf]
  %v53 = vld [vmem:[%s1 + $0x44] sm:$0xf]
  %v54 = vld [vmem:[%s1 + $0x48] sm:$0xf]
  %v55 = vld [vmem:[%s1 + $0x4c] sm:$0xf]
  %v56 = vld [vmem:[%s1 + $0x50] sm:$0xf]
  %v57 = vld [vmem:[%s1 + $0x54] sm:$0xf]
  %v58 = vld [vmem:[%s1 + $0x58] sm:$0xf]
  %v59 = vld [vmem:[%s1 + $0x5c] sm:$0xf]
  %v60 = vld [vmem:[%s1 + $0x60] sm:$0xf]
  %v61 = vld [vmem:[%s1 + $0x64] sm:$0xf]
  %v62 = vld [vmem:[%s1 + $0x68] sm:$0xf]
  %v63 = vld [vmem:[%s1 + $0x6c] sm:$0xf]
  %v64 = vld [vmem:[%s1 + $0x70] sm:$0xf]
  %v65 = vld [vmem:[%s1 + $0x74] sm:$0xf]
  %v66 = vld [vmem:[%s1 + $0x78] sm:$0xf]
  %v67 = vld [vmem:[%s1 + $0x7c] sm:$0xf]
  %v68 = vld [vmem:[%s1 + $0x80] sm:$0xf]
  %v69 = vld [vmem:[%s1 + $0x84] sm:$0xf]
  %v70 = vld [vmem:[%s1 + $0x88] sm:$0xf]
  %v71 = vld [vmem:[%s1 + $0x8c] sm:$0xf]
  %v72 = vld [vmem:[%s1 + $0x90] sm:$0xf]
  %v73 = vld [vmem:[%s1 + $0x94] sm:$0xf]
  %v74 = vld [vmem:[%s1 + $0x98] sm:$0xf]
  %v75 = vld [vmem:[%s1 + $0x9c] sm:$0xf]
  %v76 = vld [vmem:[%s1 + $0xa0] sm:$0xf]
  %v77 = vld [vmem:[%s1 + $0xa4] sm:$0xf]
  %v78 = vld [vmem:[%s1 + $0xa8] sm:$0xf]
  %v79 = vld [vmem:[%s1 + $0xac] sm:$0xf]
  %v80 = vld [vmem:[%s1 + $0xb0] sm:$0xf]
  %v81 = vld [vmem:[%s1 + $0xb4] sm:$0xf]
  %v82 = vld [vmem:[%s1 + $0xb8] sm:$0xf]
  %v83 = vld [vmem:[%s1 + $0xbc] sm:$0xf]
  %v84 = vld [vmem:[%s1 + $0xc0] sm:$0xf]
  %v85 = vld [vmem:[%s1 + $0xc4] sm:$0xf]
  %v86 = vld [vmem:[%s1 + $0xc8] sm:$0xf]
  %v87 = vld [vmem:[%s1 + $0xcc] sm:$0xf]
  %v88 = vld [vmem:[%s1 + $0xd0] sm:$0xf]
  %v89 = vld [vmem:[%s1 + $0xd4] sm:$0xf]
  %v90 = vld [vmem:[%s1 + $0xd8] sm:$0xf]
  %v91 = vld [vmem:[%s1 + $0xdc] sm:$0xf]
  %v92 = vld [vmem:[%s1 + $0xe0] sm:$0xf]
  %v93 = vld [vmem:[%s1 + $0xe4] sm:$0xf]
  %v94 = vld [vmem:[%s1 + $0xe8] sm:$0xf]
  %v95 = vld [vmem:[%s1 + $0xec] sm:$0xf]
  %v96 = vld [vmem:[%s1 + $0xf0] sm:$0xf]
  %v97 = vld [vmem:[%s1 + $0xf4] sm:$0xf]
  %v98 = vld [vmem:[%s1 + $0xf8] sm:$0xf]
  %v99 = vld [vmem:[%s1 + $0xfc] sm:$0xf]
  %v100 = vld [vmem:[%s1 + $0x100] sm:$0xf]
  %v101 = vld [vmem:[%s1 + $0x104] sm:$0xf]
  %v102 = vld [vmem:[%s1 + $0x108] sm:$0xf]
  %v103 = vld [vmem:[%s1 + $0x10c] sm:$0xf]
  %v104 = vld [vmem:[%s1 + $0x110] sm:$0xf]
  %v105 = vld [vmem:[%s1 + $0x114] sm:$0xf]
  %v106 = vld [vmem:[%s1 + $0x118] sm:$0xf]
  %v107 = vld [vmem:[%s1 + $0x11c] sm:$0xf]
  %v108 = vld [vmem:[%s1 + $0x120] sm:$0xf]
  %v109 = vld [vmem:[%s1 + $0x124] sm:$0xf]
  %v110 = vld [vmem:[%s1 + $0x128] sm:$0xf]
  %v111 = vld [vmem:[%s1 + $0x12c] sm:$0xf]
  %v112 = vld [vmem:[%s1 + $0x130] sm:$0xf]
  %v113 = vld [vmem:[%s1 + $0x134] sm:$0xf]
  %v114 = vld [vmem:[%s1 + $0x138] sm:$0xf]
  %v115 = vld [vmem:[%s1 + $0x13c] sm:$0xf]
  %v116 = vld [vmem:[%s1 + $0x140] sm:$0xf]
  %v117 = vld [vmem:[%s1 + $0x144] sm:$0xf]
  %v118 = vld [vmem:[%s1 + $0x148] sm:$0xf]
  %v119 = vld [vmem:[%s1 + $0x14c] sm:$0xf]
  %v120 = vld [vmem:[%s1 + $0x150] sm:$0xf]
  %v121 = vld [vmem:[%s1 + $0x154] sm:$0xf]
  %v122 = vld [vmem:[%s1 + $0x158] sm:$0xf]
  %v123 = vld [vmem:[%s1 + $0x15c] sm:$0xf]
  %v124 = vld [vmem:[%s1 + $0x160] sm:$0xf]
  %v125 = vld [vmem:[%s1 + $0x164] sm:$0xf]
  %v126 = vld [vmem:[%s1 + $0x168] sm:$0xf]
  %v127 = vld [vmem:[%s1 + $0x16c] sm:$0xf]
  %v128 = vld [vmem:[%s1 + $0x170] sm:$0xf]
  %v129 = vld [vmem:[%s1 + $0x174] sm:$0xf]
  %v130 = vld [vmem:[%s1 + $0x178] sm:$0xf]
  %v131 = vld [vmem:[%s1 + $0x17c] sm:$0xf]
  %v132 = vld [vmem:[%s1 + $0x180] sm:$0xf]
  %v133 = vld [vmem:[%s1 + $0x184] sm:$0xf]
  %v134 = vld [vmem:[%s1 + $0x188] sm:$0xf]
  %v135 = vld [vmem:[%s1 + $0x18c] sm:$0xf]
  %v136 = vld [vmem:[%s1 + $0x190] sm:$0xf]
  %v137 = vld [vmem:[%s1 + $0x194] sm:$0xf]
  %v138 = vld [vmem:[%s1 + $0x198] sm:$0xf]
  %v139 = vld [vmem:[%s1 + $0x19c] sm:$0xf]
  %v140 = vld [vmem:[%s1 + $0x1a0] sm:$0xf]
  %v141 = vld [vmem:[%s1 + $0x1a4] sm:$0xf]
  %v142 = vld [vmem:[%s1 + $0x1a8] sm:$0xf]
  %v143 = vld [vmem:[%s1 + $0x1ac] sm:$0xf]
  %v144 = vld [vmem:[%s1 + $0x1b0] sm:$0xf]
  %v145 = vld [vmem:[%s1 + $0x1b4] sm:$0xf]
  %v146 = vld [vmem:[%s1 + $0x1b8] sm:$0xf]
  %v147 = vld [vmem:[%s1 + $0x1bc] sm:$0xf]
  %v148 = vld [vmem:[%s1 + $0x1c0] sm:$0xf]
  %v149 = vld [vmem:[%s1 + $0x1c4] sm:$0xf]
  %v150 = vld [vmem:[%s1 + $0x1c8] sm:$0xf]
  %v151 = vld [vmem:[%s1 + $0x1cc] sm:$0xf]
  %v152 = vld [vmem:[%s1 + $0x1d0] sm:$0xf]
  %v153 = vld [vmem:[%s1 + $0x1d4] sm:$0xf]
  %v154 = vld [vmem:[%s1 + $0x1d8] sm:$0xf]
  %v155 = vld [vmem:[%s1 + $0x1dc] sm:$0xf]
  %v156 = vld [vmem:[%s1 + $0x1e0] sm:$0xf]
  %v157 = vld [vmem:[%s1 + $0x1e4] sm:$0xf]
  %v158 = vld [vmem:[%s1 + $0x1e8] sm:$0xf]
  %v159 = vld [vmem:[%s1 + $0x1ec] sm:$0xf]
  %v160 = vld [vmem:[%s1 + $0x1f0] sm:$0xf]
  %v161 = vld [vmem:[%s1 + $0x1f4] sm:$0xf]
  %v162 = vld [vmem:[%s1 + $0x1f8] sm:$0xf]
  %v163 = vld [vmem:[%s1 + $0x1fc] sm:$0xf]
  %v164 = vld [vmem:[%s1 + $0x200] sm:$0xf]
  %v165 = vld [vmem:[%s1 + $0x204] sm:$0xf]
  %v166 = vld [vmem:[%s1 + $0x208] sm:$0xf]
  %v167 = vld [vmem:[%s1 + $0x20c] sm:$0xf]
  %v168 = vld [vmem:[%s1 + $0x210] sm:$0xf]
  %v169 = vld [vmem:[%s1 + $0x214] sm:$0xf]
  %v170 = vld [vmem:[%s1 + $0x218] sm:$0xf]
  %v171 = vld [vmem:[%s1 + $0x21c] sm:$0xf]
  %v172 = vld [vmem:[%s1 + $0x220] sm:$0xf]
  %v173 = vld [vmem:[%s1 + $0x224] sm:$0xf]
  %v174 = vld [vmem:[%s1 + $0x228] sm:$0xf]
  %v175 = vld [vmem:[%s1 + $0x22c] sm:$0xf]
  %v176 = vld [vmem:[%s1 + $0x230] sm:$0xf]
  %v177 = vld [vmem:[%s1 + $0x234] sm:$0xf]
  %v178 = vld [vmem:[%s1 + $0x238] sm:$0xf]
  %v179 = vld [vmem:[%s1 + $0x23c] sm:$0xf]
  %v180 = vld [vmem:[%s1 + $0x240] sm:$0xf]
  %v181 = vld [vmem:[%s1 + $0x244] sm:$0xf]
  %v182 = vld [vmem:[%s1 + $0x248] sm:$0xf]
  %v183 = vld [vmem:[%s1 + $0x24c] sm:$0xf]
  %v184 = vld [vmem:[%s1 + $0x250] sm:$0xf]
  %v185 = vld [vmem:[%s1 + $0x254] sm:$0xf]
  %v186 = vld [vmem:[%s1 + $0x258] sm:$0xf]
  %v187 = vld [vmem:[%s1 + $0x25c] sm:$0xf]
  %v188 = vld [vmem:[%s1 + $0x260] sm:$0xf]
  %v189 = vld [vmem:[%s1 + $0x264] sm:$0xf]
  %v190 = vld [vmem:[%s1 + $0x268] sm:$0xf]
  %v191 = vld [vmem:[%s1 + $0x26c] sm:$0xf]
  %v192 = vld [vmem:[%s1 + $0x270] sm:$0xf]
  %v193 = vld [vmem:[%s1 + $0x274] sm:$0xf]
  %v194 = vld [vmem:[%s1 + $0x278] sm:$0xf]
  %v195 = vld [vmem:[%s1 + $0x27c] sm:$0xf]
  %v196 = vld [vmem:[%s1 + $0x280] sm:$0xf]
  %v197 = vld [vmem:[%s1 + $0x284] sm:$0xf]
  %v198 = vld [vmem:[%s1 + $0x288] sm:$0xf]
  %v199 = vld [vmem:[%s1 + $0x28c] sm:$0xf]
  %v200 = vld [vmem:[%s1 + $0x290] sm:$0xf]
  %v201 = vld [vmem:[%s1 + $0x294] sm:$0xf]
  %v202 = vld [vmem:[%s1 + $0x298] sm:$0xf]
  %v203 = vld [vmem:[%s1 + $0x29c] sm:$0xf]
  %v204 = vld [vmem:[%s1 + $0x2a0] sm:$0xf]
  %v205 = vld [vmem:[%s1 + $0x2a4] sm:$0xf]
  %v206 = vld [vmem:[%s1 + $0x2a8] sm:$0xf]
  %v207 = vld [vmem:[%s1 + $0x2ac] sm:$0xf]
  %v208 = vld [vmem:[%s1 + $0x2b0] sm:$0xf]
  %v209 = vld [vmem:[%s1 + $0x2b4] sm:$0xf]
  %v210 = vld [vmem:[%s1 + $0x2b8] sm:$0xf]
  %v211 = vld [vmem:[%s1 + $0x2bc] sm:$0xf]
  %v212 = vld [vmem:[%s1 + $0x2c0] sm:$0xf]
  %v213 = vld [vmem:[%s1 + $0x2c4] sm:$0xf]
  %v214 = vld [vmem:[%s1 + $0x2c8] sm:$0xf]
  %v215 = vld [vmem:[%s1 + $0x2cc] sm:$0xf]
  %v216 = vld [vmem:[%s1 + $0x2d0] sm:$0xf]
  %v217 = vld [vmem:[%s1 + $0x2d4] sm:$0xf]
  %v218 = vld [vmem:[%s1 + $0x2d8] sm:$0xf]
  %v219 = vld [vmem:[%s1 + $0x2dc] sm:$0xf]
  %v220 = vld [vmem:[%s1 + $0x2e0] sm:$0xf]
  %v221 = vld [vmem:[%s1 + $0x2e4] sm:$0xf]
  %v222 = vld [vmem:[%s1 + $0x2e8] sm:$0xf]
  %v223 = vld [vmem:[%s1 + $0x2ec] sm:$0xf]
  %v224 = vld [vmem:[%s1 + $0x2f0] sm:$0xf]
  %v225 = vld [vmem:[%s1 + $0x2f4] sm:$0xf]
  %v226 = vld [vmem:[%s1 + $0x2f8] sm:$0xf]
  %v227 = vld [vmem:[%s1 + $0x2fc] sm:$0xf]
  %v228 = vld [vmem:[%s1 + $0x300] sm:$0xf]
  %v229 = vld [vmem:[%s1 + $0x304] sm:$0xf]
  %v230 = vld [vmem:[%s1 + $0x308] sm:$0xf]
  %v231 = vld [vmem:[%s1 + $0x30c] sm:$0xf]
  %v232 = vld [vmem:[%s1 + $0x310] sm:$0xf]
  %v233 = vld [vmem:[%s1 + $0x314] sm:$0xf]
  %v234 = vld [vmem:[%s1 + $0x318] sm:$0xf]
  %v235 = vld [vmem:[%s1 + $0x31c] sm:$0xf]
  %v236 = vld [vmem:[%s1 + $0x320] sm:$0xf]
  %v237 = vld [vmem:[%s1 + $0x324] sm:$0xf]
  %v238 = vld [vmem:[%s1 + $0x328] sm:$0xf]
  %v239 = vld [vmem:[%s1 + $0x32c] sm:$0xf]
  %v240 = vld [vmem:[%s1 + $0x330] sm:$0xf]
  %v241 = vld [vmem:[%s1 + $0x334] sm:$0xf]
  %v242 = vld [vmem:[%s1 + $0x338] sm:$0xf]
  %v243 = vld [vmem:[%s1 + $0x33c] sm:$0xf]
  %v244 = vld [vmem:[%s1 + $0x340] sm:$0xf]
  %v245 = vld [vmem:[%s1 + $0x344] sm:$0xf]
  %v246 = vld [vmem:[%s1 + $0x348] sm:$0xf]
  %v247 = vld [vmem:[%s1 + $0x34c] sm:$0xf]
  %v248 = vld [vmem:[%s1 + $0x350] sm:$0xf]
  %v249 = vld [vmem:[%s1 + $0x354] sm:$0xf]
  %v250 = vld [vmem:[%s1 + $0x358] sm:$0xf]
  %v251 = vld [vmem:[%s1 + $0x35c] sm:$0xf]
  %v252 = vld [vmem:[%s1 + $0x360] sm:$0xf]
  %v253 = vld [vmem:[%s1 + $0x364] sm:$0xf]
  %v254 = vld [vmem:[%s1 + $0x368] sm:$0xf]
  %v255 = vld [vmem:[%s1 + $0x36c] sm:$0xf]
  %v256 = vld [vmem:[%s1 + $0x370] sm:$0xf]
  %v257 = vld [vmem:[%s1 + $0x374] sm:$0xf]
  %v258 = vld [vmem:[%s1 + $0x378] sm:$0xf]
  %v259 = vld [vmem:[%s1 + $0x37c] sm:$0xf]
  %v260 = vld [vmem:[%s1 + $0x380] sm:$0xf]
  %v261 = vld [vmem:[%s1 + $0x384] sm:$0xf]
  %v262 = vld [vmem:[%s1 + $0x388] sm:$0xf]
  %v263 = vld [vmem:[%s1 + $0x38c] sm:$0xf]
  %v264 = vld [vmem:[%s1 + $0x390] sm:$0xf]
  %v265 = vld [vmem:[%s1 + $0x394] sm:$0xf]
  %v266 = vld [vmem:[%s1 + $0x398] sm:$0xf]
  %v267 = vld [vmem:[%s1 + $0x39c] sm:$0xf]
  %v268 = vld [vmem:[%s1 + $0x3a0] sm:$0xf]
  %v269 = vld [vmem:[%s1 + $0x3a4] sm:$0xf]
  %v270 = vld [vmem:[%s1 + $0x3a8] sm:$0xf]
  %v271 = vld [vmem:[%s1 + $0x3ac] sm:$0xf]
  %v272 = vld [vmem:[%s1 + $0x3b0] sm:$0xf]
  %v273 = vld [vmem:[%s1 + $0x3b4] sm:$0xf]
  %v274 = vld [vmem:[%s1 + $0x3b8] sm:$0xf]
  %v275 = vld [vmem:[%s1 + $0x3bc] sm:$0xf]
  %v276 = vld [vmem:[%s1 + $0x3c0] sm:$0xf]
  %v277 = vld [vmem:[%s1 + $0x3c4] sm:$0xf]
  %v278 = vld [vmem:[%s1 + $0x3c8] sm:$0xf]
  %v279 = vld [vmem:[%s1 + $0x3cc] sm:$0xf]
  %v280 = vld [vmem:[%s1 + $0x3d0] sm:$0xf]
  %v281 = vld [vmem:[%s1 + $0x3d4] sm:$0xf]
  %v282 = vld [vmem:[%s1 + $0x3d8] sm:$0xf]
  %v283 = vld [vmem:[%s1 + $0x3dc] sm:$0xf]
  %v284 = vld [vmem:[%s1 + $0x3e0] sm:$0xf]
  %v285 = vld [vmem:[%s1 + $0x3e4] sm:$0xf]
  %v286 = vld [vmem:[%s1 + $0x3e8] sm:$0xf]
  %v287 = vld [vmem:[%s1 + $0x3ec] sm:$0xf]
  %v288 = vld [vmem:[%s1 + $0x3f0] sm:$0xf]
  %v289 = vld [vmem:[%s1 + $0x3f4] sm:$0xf]
  %v290 = vld [vmem:[%s1 + $0x3f8] sm:$0xf]
  %v291 = vld [vmem:[%s1 + $0x3fc] sm:$0xf]
  %v292 = vld [vmem:[%s2] sm:$0x1]
  %v294 = vperm.slane %v292, 0
  %v312 = vunpack.c.l.b16 %v20
  %v313 = vunpack.c.h.b16 %v20
  %v314 = vunpack.c.l.b16 %v21
  %v315 = vunpack.c.h.b16 %v21
  %v316 = vunpack.c.l.b16 %v22
  %v317 = vunpack.c.h.b16 %v22
  %v318 = vunpack.c.l.b16 %v23
  %v319 = vunpack.c.h.b16 %v23
  %v320 = vunpack.c.l.b16 %v24
  %v321 = vunpack.c.h.b16 %v24
  %v322 = vunpack.c.l.b16 %v25
  %v323 = vunpack.c.h.b16 %v25
  %v324 = vunpack.c.l.b16 %v26
  %v325 = vunpack.c.h.b16 %v26
  %v326 = vunpack.c.l.b16 %v27
  %v327 = vunpack.c.h.b16 %v27
  %v328 = vunpack.c.l.b16 %v28
  %v329 = vunpack.c.h.b16 %v28
  %v330 = vunpack.c.l.b16 %v29
  %v331 = vunpack.c.h.b16 %v29
  %v332 = vunpack.c.l.b16 %v30
  %v333 = vunpack.c.h.b16 %v30
  %v334 = vunpack.c.l.b16 %v31
  %v335 = vunpack.c.h.b16 %v31
  %v336 = vunpack.c.l.b16 %v32
  %v337 = vunpack.c.h.b16 %v32
  %v338 = vunpack.c.l.b16 %v33
  %v339 = vunpack.c.h.b16 %v33
  %v340 = vunpack.c.l.b16 %v34
  %v341 = vunpack.c.h.b16 %v34
  %v342 = vunpack.c.l.b16 %v35
  %v343 = vunpack.c.h.b16 %v35
  %v344 = vpack.c.b16 %v328, %v312
  %v345 = vpack.c.b16 %v329, %v313
  %v346 = vpack.c.b16 %v330, %v314
  %v347 = vpack.c.b16 %v331, %v315
  %v348 = vpack.c.b16 %v332, %v316
  %v349 = vpack.c.b16 %v333, %v317
  %v350 = vpack.c.b16 %v334, %v318
  %v351 = vpack.c.b16 %v335, %v319
  %v352 = vpack.c.b16 %v336, %v320
  %v353 = vpack.c.b16 %v337, %v321
  %v354 = vpack.c.b16 %v338, %v322
  %v355 = vpack.c.b16 %v339, %v323
  %v356 = vpack.c.b16 %v340, %v324
  %v357 = vpack.c.b16 %v341, %v325
  %v358 = vpack.c.b16 %v342, %v326
  %v359 = vpack.c.b16 %v343, %v327
  %v632 = vunpack.c.l.b16 %v36
  %v633 = vunpack.c.l.b16 %v37
  %v634 = vunpack.c.l.b16 %v38
  %v635 = vunpack.c.l.b16 %v39
  %v636 = vunpack.c.l.b16 %v40
  %v637 = vunpack.c.l.b16 %v41
  %v638 = vunpack.c.l.b16 %v42
  %v639 = vunpack.c.l.b16 %v43
  %v640 = vunpack.c.l.b16 %v44
  %v641 = vunpack.c.l.b16 %v45
  %v642 = vunpack.c.l.b16 %v46
  %v643 = vunpack.c.l.b16 %v47
  %v644 = vunpack.c.l.b16 %v48
  %v645 = vunpack.c.l.b16 %v49
  %v646 = vunpack.c.l.b16 %v50
  %v647 = vunpack.c.l.b16 %v51
  %v648 = vunpack.c.l.b16 %v52
  %v649 = vunpack.c.l.b16 %v53
  %v650 = vunpack.c.l.b16 %v54
  %v651 = vunpack.c.l.b16 %v55
  %v652 = vunpack.c.l.b16 %v56
  %v653 = vunpack.c.l.b16 %v57
  %v654 = vunpack.c.l.b16 %v58
  %v655 = vunpack.c.l.b16 %v59
  %v656 = vunpack.c.l.b16 %v60
  %v657 = vunpack.c.l.b16 %v61
  %v658 = vunpack.c.l.b16 %v62
  %v659 = vunpack.c.l.b16 %v63
  %v660 = vunpack.c.l.b16 %v64
  %v661 = vunpack.c.l.b16 %v65
  %v662 = vunpack.c.l.b16 %v66
  %v663 = vunpack.c.l.b16 %v67
  %v664 = vunpack.c.l.b16 %v68
  %v665 = vunpack.c.l.b16 %v69
  %v666 = vunpack.c.l.b16 %v70
  %v667 = vunpack.c.l.b16 %v71
  %v668 = vunpack.c.l.b16 %v72
  %v669 = vunpack.c.l.b16 %v73
  %v670 = vunpack.c.l.b16 %v74
  %v671 = vunpack.c.l.b16 %v75
  %v672 = vunpack.c.l.b16 %v76
  %v673 = vunpack.c.l.b16 %v77
  %v674 = vunpack.c.l.b16 %v78
  %v675 = vunpack.c.l.b16 %v79
  %v676 = vunpack.c.l.b16 %v80
  %v677 = vunpack.c.l.b16 %v81
  %v678 = vunpack.c.l.b16 %v82
  %v679 = vunpack.c.l.b16 %v83
  %v680 = vunpack.c.l.b16 %v84
  %v681 = vunpack.c.l.b16 %v85
  %v682 = vunpack.c.l.b16 %v86
  %v683 = vunpack.c.l.b16 %v87
  %v684 = vunpack.c.l.b16 %v88
  %v685 = vunpack.c.l.b16 %v89
  %v686 = vunpack.c.l.b16 %v90
  %v687 = vunpack.c.l.b16 %v91
  %v688 = vunpack.c.l.b16 %v92
  %v689 = vunpack.c.l.b16 %v93
  %v690 = vunpack.c.l.b16 %v94
  %v691 = vunpack.c.l.b16 %v95
  %v692 = vunpack.c.l.b16 %v96
  %v693 = vunpack.c.l.b16 %v97
  %v694 = vunpack.c.l.b16 %v98
  %v695 = vunpack.c.l.b16 %v99
  %v696 = vunpack.c.l.b16 %v100
  %v697 = vunpack.c.l.b16 %v101
  %v698 = vunpack.c.l.b16 %v102
  %v699 = vunpack.c.l.b16 %v103
  %v700 = vunpack.c.l.b16 %v104
  %v701 = vunpack.c.l.b16 %v105
  %v702 = vunpack.c.l.b16 %v106
  %v703 = vunpack.c.l.b16 %v107
  %v704 = vunpack.c.l.b16 %v108
  %v705 = vunpack.c.l.b16 %v109
  %v706 = vunpack.c.l.b16 %v110
  %v707 = vunpack.c.l.b16 %v111
  %v708 = vunpack.c.l.b16 %v112
  %v709 = vunpack.c.l.b16 %v113
  %v710 = vunpack.c.l.b16 %v114
  %v711 = vunpack.c.l.b16 %v115
  %v712 = vunpack.c.l.b16 %v116
  %v713 = vunpack.c.l.b16 %v117
  %v714 = vunpack.c.l.b16 %v118
  %v715 = vunpack.c.l.b16 %v119
  %v716 = vunpack.c.l.b16 %v120
  %v717 = vunpack.c.l.b16 %v121
  %v718 = vunpack.c.l.b16 %v122
  %v719 = vunpack.c.l.b16 %v123
  %v720 = vunpack.c.l.b16 %v124
  %v721 = vunpack.c.l.b16 %v125
  %v722 = vunpack.c.l.b16 %v126
  %v723 = vunpack.c.l.b16 %v127
  %v724 = vunpack.c.l.b16 %v128
  %v725 = vunpack.c.l.b16 %v129
  %v726 = vunpack.c.l.b16 %v130
  %v727 = vunpack.c.l.b16 %v131
  %v728 = vunpack.c.l.b16 %v132
  %v729 = vunpack.c.l.b16 %v133
  %v730 = vunpack.c.l.b16 %v134
  %v731 = vunpack.c.l.b16 %v135
  %v732 = vunpack.c.l.b16 %v136
  %v733 = vunpack.c.l.b16 %v137
  %v734 = vunpack.c.l.b16 %v138
  %v735 = vunpack.c.l.b16 %v139
  %v736 = vunpack.c.l.b16 %v140
  %v737 = vunpack.c.l.b16 %v141
  %v738 = vunpack.c.l.b16 %v142
  %v739 = vunpack.c.l.b16 %v143
  %v740 = vunpack.c.l.b16 %v144
  %v741 = vunpack.c.l.b16 %v145
  %v742 = vunpack.c.l.b16 %v146
  %v743 = vunpack.c.l.b16 %v147
  %v744 = vunpack.c.l.b16 %v148
  %v745 = vunpack.c.l.b16 %v149
  %v746 = vunpack.c.l.b16 %v150
  %v747 = vunpack.c.l.b16 %v151
  %v748 = vunpack.c.l.b16 %v152
  %v749 = vunpack.c.l.b16 %v153
  %v750 = vunpack.c.l.b16 %v154
  %v751 = vunpack.c.l.b16 %v155
  %v752 = vunpack.c.l.b16 %v156
  %v753 = vunpack.c.l.b16 %v157
  %v754 = vunpack.c.l.b16 %v158
  %v755 = vunpack.c.l.b16 %v159
  %v756 = vunpack.c.l.b16 %v160
  %v757 = vunpack.c.l.b16 %v161
  %v758 = vunpack.c.l.b16 %v162
  %v759 = vunpack.c.l.b16 %v163
  %v760 = vunpack.c.l.b16 %v164
  %v761 = vunpack.c.l.b16 %v165
  %v762 = vunpack.c.l.b16 %v166
  %v763 = vunpack.c.l.b16 %v167
  %v764 = vunpack.c.l.b16 %v168
  %v765 = vunpack.c.l.b16 %v169
  %v766 = vunpack.c.l.b16 %v170
  %v767 = vunpack.c.l.b16 %v171
  %v768 = vunpack.c.l.b16 %v172
  %v769 = vunpack.c.l.b16 %v173
  %v770 = vunpack.c.l.b16 %v174
  %v771 = vunpack.c.l.b16 %v175
  %v772 = vunpack.c.l.b16 %v176
  %v773 = vunpack.c.l.b16 %v177
  %v774 = vunpack.c.l.b16 %v178
  %v775 = vunpack.c.l.b16 %v179
  %v776 = vunpack.c.l.b16 %v180
  %v777 = vunpack.c.l.b16 %v181
  %v778 = vunpack.c.l.b16 %v182
  %v779 = vunpack.c.l.b16 %v183
  %v780 = vunpack.c.l.b16 %v184
  %v781 = vunpack.c.l.b16 %v185
  %v782 = vunpack.c.l.b16 %v186
  %v783 = vunpack.c.l.b16 %v187
  %v784 = vunpack.c.l.b16 %v188
  %v785 = vunpack.c.l.b16 %v189
  %v786 = vunpack.c.l.b16 %v190
  %v787 = vunpack.c.l.b16 %v191
  %v788 = vunpack.c.l.b16 %v192
  %v789 = vunpack.c.l.b16 %v193
  %v790 = vunpack.c.l.b16 %v194
  %v791 = vunpack.c.l.b16 %v195
  %v792 = vunpack.c.l.b16 %v196
  %v793 = vunpack.c.l.b16 %v197
  %v794 = vunpack.c.l.b16 %v198
  %v795 = vunpack.c.l.b16 %v199
  %v796 = vunpack.c.l.b16 %v200
  %v797 = vunpack.c.l.b16 %v201
  %v798 = vunpack.c.l.b16 %v202
  %v799 = vunpack.c.l.b16 %v203
  %v800 = vunpack.c.l.b16 %v204
  %v801 = vunpack.c.l.b16 %v205
  %v802 = vunpack.c.l.b16 %v206
  %v803 = vunpack.c.l.b16 %v207
  %v804 = vunpack.c.l.b16 %v208
  %v805 = vunpack.c.l.b16 %v209
  %v806 = vunpack.c.l.b16 %v210
  %v807 = vunpack.c.l.b16 %v211
  %v808 = vunpack.c.l.b16 %v212
  %v809 = vunpack.c.l.b16 %v213
  %v810 = vunpack.c.l.b16 %v214
  %v811 = vunpack.c.l.b16 %v215
  %v812 = vunpack.c.l.b16 %v216
  %v813 = vunpack.c.l.b16 %v217
  %v814 = vunpack.c.l.b16 %v218
  %v815 = vunpack.c.l.b16 %v219
  %v816 = vunpack.c.l.b16 %v220
  %v817 = vunpack.c.l.b16 %v221
  %v818 = vunpack.c.l.b16 %v222
  %v819 = vunpack.c.l.b16 %v223
  %v820 = vunpack.c.l.b16 %v224
  %v821 = vunpack.c.l.b16 %v225
  %v822 = vunpack.c.l.b16 %v226
  %v823 = vunpack.c.l.b16 %v227
  %v824 = vunpack.c.l.b16 %v228
  %v825 = vunpack.c.l.b16 %v229
  %v826 = vunpack.c.l.b16 %v230
  %v827 = vunpack.c.l.b16 %v231
  %v828 = vunpack.c.l.b16 %v232
  %v829 = vunpack.c.l.b16 %v233
  %v830 = vunpack.c.l.b16 %v234
  %v831 = vunpack.c.l.b16 %v235
  %v832 = vunpack.c.l.b16 %v236
  %v833 = vunpack.c.l.b16 %v237
  %v834 = vunpack.c.l.b16 %v238
  %v835 = vunpack.c.l.b16 %v239
  %v836 = vunpack.c.l.b16 %v240
  %v837 = vunpack.c.l.b16 %v241
  %v838 = vunpack.c.l.b16 %v242
  %v839 = vunpack.c.l.b16 %v243
  %v840 = vunpack.c.l.b16 %v244
  %v841 = vunpack.c.l.b16 %v245
  %v842 = vunpack.c.l.b16 %v246
  %v843 = vunpack.c.l.b16 %v247
  %v844 = vunpack.c.l.b16 %v248
  %v845 = vunpack.c.l.b16 %v249
  %v846 = vunpack.c.l.b16 %v250
  %v847 = vunpack.c.l.b16 %v251
  %v848 = vunpack.c.l.b16 %v252
  %v849 = vunpack.c.l.b16 %v253
  %v850 = vunpack.c.l.b16 %v254
  %v851 = vunpack.c.l.b16 %v255
  %v852 = vunpack.c.l.b16 %v256
  %v853 = vunpack.c.l.b16 %v257
  %v854 = vunpack.c.l.b16 %v258
  %v855 = vunpack.c.l.b16 %v259
  %v856 = vunpack.c.l.b16 %v260
  %v857 = vunpack.c.l.b16 %v261
  %v858 = vunpack.c.l.b16 %v262
  %v859 = vunpack.c.l.b16 %v263
  %v860 = vunpack.c.l.b16 %v264
  %v861 = vunpack.c.l.b16 %v265
  %v862 = vunpack.c.l.b16 %v266
  %v863 = vunpack.c.l.b16 %v267
  %v864 = vunpack.c.l.b16 %v268
  %v865 = vunpack.c.l.b16 %v269
  %v866 = vunpack.c.l.b16 %v270
  %v867 = vunpack.c.l.b16 %v271
  %v868 = vunpack.c.l.b16 %v272
  %v869 = vunpack.c.l.b16 %v273
  %v870 = vunpack.c.l.b16 %v274
  %v871 = vunpack.c.l.b16 %v275
  %v872 = vunpack.c.l.b16 %v276
  %v873 = vunpack.c.l.b16 %v277
  %v874 = vunpack.c.l.b16 %v278
  %v875 = vunpack.c.l.b16 %v279
  %v876 = vunpack.c.l.b16 %v280
  %v877 = vunpack.c.l.b16 %v281
  %v878 = vunpack.c.l.b16 %v282
  %v879 = vunpack.c.l.b16 %v283
  %v880 = vunpack.c.l.b16 %v284
  %v881 = vunpack.c.l.b16 %v285
  %v882 = vunpack.c.l.b16 %v286
  %v883 = vunpack.c.l.b16 %v287
  %v884 = vunpack.c.l.b16 %v288
  %v885 = vunpack.c.l.b16 %v289
  %v886 = vunpack.c.l.b16 %v290
  %v887 = vunpack.c.l.b16 %v291
  %v888 = vpack.c.b16 %v633, %v632
  %v889 = vpack.c.b16 %v635, %v634
  %v890 = vpack.c.b16 %v637, %v636
  %v891 = vpack.c.b16 %v639, %v638
  %v892 = vpack.c.b16 %v641, %v640
  %v893 = vpack.c.b16 %v643, %v642
  %v894 = vpack.c.b16 %v645, %v644
  %v895 = vpack.c.b16 %v647, %v646
  %v896 = vpack.c.b16 %v649, %v648
  %v897 = vpack.c.b16 %v651, %v650
  %v898 = vpack.c.b16 %v653, %v652
  %v899 = vpack.c.b16 %v655, %v654
  %v900 = vpack.c.b16 %v657, %v656
  %v901 = vpack.c.b16 %v659, %v658
  %v902 = vpack.c.b16 %v661, %v660
  %v903 = vpack.c.b16 %v663, %v662
  %v904 = vpack.c.b16 %v665, %v664
  %v905 = vpack.c.b16 %v667, %v666
  %v906 = vpack.c.b16 %v669, %v668
  %v907 = vpack.c.b16 %v671, %v670
  %v908 = vpack.c.b16 %v673, %v672
  %v909 = vpack.c.b16 %v675, %v674
  %v910 = vpack.c.b16 %v677, %v676
  %v911 = vpack.c.b16 %v679, %v678
  %v912 = vpack.c.b16 %v681, %v680
  %v913 = vpack.c.b16 %v683, %v682
  %v914 = vpack.c.b16 %v685, %v684
  %v915 = vpack.c.b16 %v687, %v686
  %v916 = vpack.c.b16 %v689, %v688
  %v917 = vpack.c.b16 %v691, %v690
  %v918 = vpack.c.b16 %v693, %v692
  %v919 = vpack.c.b16 %v695, %v694
  %v920 = vpack.c.b16 %v697, %v696
  %v921 = vpack.c.b16 %v699, %v698
  %v922 = vpack.c.b16 %v701, %v700
  %v923 = vpack.c.b16 %v703, %v702
  %v924 = vpack.c.b16 %v705, %v704
  %v925 = vpack.c.b16 %v707, %v706
  %v926 = vpack.c.b16 %v709, %v708
  %v927 = vpack.c.b16 %v711, %v710
  %v928 = vpack.c.b16 %v713, %v712
  %v929 = vpack.c.b16 %v715, %v714
  %v930 = vpack.c.b16 %v717, %v716
  %v931 = vpack.c.b16 %v719, %v718
  %v932 = vpack.c.b16 %v721, %v720
  %v933 = vpack.c.b16 %v723, %v722
  %v934 = vpack.c.b16 %v725, %v724
  %v935 = vpack.c.b16 %v727, %v726
  %v936 = vpack.c.b16 %v729, %v728
  %v937 = vpack.c.b16 %v731, %v730
  %v938 = vpack.c.b16 %v733, %v732
  %v939 = vpack.c.b16 %v735, %v734
  %v940 = vpack.c.b16 %v737, %v736
  %v941 = vpack.c.b16 %v739, %v738
  %v942 = vpack.c.b16 %v741, %v740
  %v943 = vpack.c.b16 %v743, %v742
  %v944 = vpack.c.b16 %v745, %v744
  %v945 = vpack.c.b16 %v747, %v746
  %v946 = vpack.c.b16 %v749, %v748
  %v947 = vpack.c.b16 %v751, %v750
  %v948 = vpack.c.b16 %v753, %v752
  %v949 = vpack.c.b16 %v755, %v754
  %v950 = vpack.c.b16 %v757, %v756
  %v951 = vpack.c.b16 %v759, %v758
  %v952 = vpack.c.b16 %v761, %v760
  %v953 = vpack.c.b16 %v763, %v762
  %v954 = vpack.c.b16 %v765, %v764
  %v955 = vpack.c.b16 %v767, %v766
  %v956 = vpack.c.b16 %v769, %v768
  %v957 = vpack.c.b16 %v771, %v770
  %v958 = vpack.c.b16 %v773, %v772
  %v959 = vpack.c.b16 %v775, %v774
  %v960 = vpack.c.b16 %v777, %v776
  %v961 = vpack.c.b16 %v779, %v778
  %v962 = vpack.c.b16 %v781, %v780
  %v963 = vpack.c.b16 %v783, %v782
  %v964 = vpack.c.b16 %v785, %v784
  %v965 = vpack.c.b16 %v787, %v786
  %v966 = vpack.c.b16 %v789, %v788
  %v967 = vpack.c.b16 %v791, %v790
  %v968 = vpack.c.b16 %v793, %v792
  %v969 = vpack.c.b16 %v795, %v794
  %v970 = vpack.c.b16 %v797, %v796
  %v971 = vpack.c.b16 %v799, %v798
  %v972 = vpack.c.b16 %v801, %v800
  %v973 = vpack.c.b16 %v803, %v802
  %v974 = vpack.c.b16 %v805, %v804
  %v975 = vpack.c.b16 %v807, %v806
  %v976 = vpack.c.b16 %v809, %v808
  %v977 = vpack.c.b16 %v811, %v810
  %v978 = vpack.c.b16 %v813, %v812
  %v979 = vpack.c.b16 %v815, %v814
  %v980 = vpack.c.b16 %v817, %v816
  %v981 = vpack.c.b16 %v819, %v818
  %v982 = vpack.c.b16 %v821, %v820
  %v983 = vpack.c.b16 %v823, %v822
  %v984 = vpack.c.b16 %v825, %v824
  %v985 = vpack.c.b16 %v827, %v826
  %v986 = vpack.c.b16 %v829, %v828
  %v987 = vpack.c.b16 %v831, %v830
  %v988 = vpack.c.b16 %v833, %v832
  %v989 = vpack.c.b16 %v835, %v834
  %v990 = vpack.c.b16 %v837, %v836
  %v991 = vpack.c.b16 %v839, %v838
  %v992 = vpack.c.b16 %v841, %v840
  %v993 = vpack.c.b16 %v843, %v842
  %v994 = vpack.c.b16 %v845, %v844
  %v995 = vpack.c.b16 %v847, %v846
  %v996 = vpack.c.b16 %v849, %v848
  %v997 = vpack.c.b16 %v851, %v850
  %v998 = vpack.c.b16 %v853, %v852
  %v999 = vpack.c.b16 %v855, %v854
  %v1000 = vpack.c.b16 %v857, %v856
  %v1001 = vpack.c.b16 %v859, %v858
  %v1002 = vpack.c.b16 %v861, %v860
  %v1003 = vpack.c.b16 %v863, %v862
  %v1004 = vpack.c.b16 %v865, %v864
  %v1005 = vpack.c.b16 %v867, %v866
  %v1006 = vpack.c.b16 %v869, %v868
  %v1007 = vpack.c.b16 %v871, %v870
  %v1008 = vpack.c.b16 %v873, %v872
  %v1009 = vpack.c.b16 %v875, %v874
  %v1010 = vpack.c.b16 %v877, %v876
  %v1011 = vpack.c.b16 %v879, %v878
  %v1012 = vpack.c.b16 %v881, %v880
  %v1013 = vpack.c.b16 %v883, %v882
  %v1014 = vpack.c.b16 %v885, %v884
  %v1015 = vpack.c.b16 %v887, %v886
  %1144 = vmatpush.bf16.msra.mxu0 %v895
  %1145 = vmatpush.bf16.msra.mxu0 %v894
  %1146 = vmatpush.bf16.msra.mxu0 %v893
  %1147 = vmatpush.bf16.msra.mxu0 %v892
  %1148 = vmatpush.bf16.msra.mxu0 %v891
  %1149 = vmatpush.bf16.msra.mxu0 %v890
  %1150 = vmatpush.bf16.msra.mxu0 %v889
  %1151 = vmatpush.bf16.msra.mxu0 %v888
  %1152 = vmatmul.bf16.gmra.mxu0 %v344
  %v1153 = vpop.f32.mrf.mxu0
  %v1154 = vadd.f32 %v294, %v1153
  %v1155 = vpop.f32.mrf.mxu0
  %v1156 = vadd.f32 %v294, %v1155
  %1157 = vdwg.mxu0
  %1158 = vmatpush.bf16.msra.mxu0 %v903
  %1159 = vmatpush.bf16.msra.mxu0 %v902
  %1160 = vmatpush.bf16.msra.mxu0 %v901
  %1161 = vmatpush.bf16.msra.mxu0 %v900
  %1162 = vmatpush.bf16.msra.mxu0 %v899
  %1163 = vmatpush.bf16.msra.mxu0 %v898
  %1164 = vmatpush.bf16.msra.mxu0 %v897
  %1165 = vmatpush.bf16.msra.mxu0 %v896
  %1166 = vmatmul.bf16.gmra.mxu0 %v345
  %v1167 = vpop.f32.mrf.mxu0
  %v1168 = vadd.f32 %v1154, %v1167
  %v1169 = vpop.f32.mrf.mxu0
  %v1170 = vadd.f32 %v1156, %v1169
  %1171 = vdwg.mxu0
  %1172 = vmatpush.bf16.msra.mxu0 %v911
  %1173 = vmatpush.bf16.msra.mxu0 %v910
  %1174 = vmatpush.bf16.msra.mxu0 %v909
  %1175 = vmatpush.bf16.msra.mxu0 %v908
  %1176 = vmatpush.bf16.msra.mxu0 %v907
  %1177 = vmatpush.bf16.msra.mxu0 %v906
  %1178 = vmatpush.bf16.msra.mxu0 %v905
  %1179 = vmatpush.bf16.msra.mxu0 %v904
  %1180 = vmatmul.bf16.gmra.mxu0 %v346
  %v1181 = vpop.f32.mrf.mxu0
  %v1182 = vadd.f32 %v1168, %v1181
  %v1183 = vpop.f32.mrf.mxu0
  %v1184 = vadd.f32 %v1170, %v1183
  %1185 = vdwg.mxu0
  %1186 = vmatpush.bf16.msra.mxu0 %v919
  %1187 = vmatpush.bf16.msra.mxu0 %v918
  %1188 = vmatpush.bf16.msra.mxu0 %v917
  %1189 = vmatpush.bf16.msra.mxu0 %v916
  %1190 = vmatpush.bf16.msra.mxu0 %v915
  %1191 = vmatpush.bf16.msra.mxu0 %v914
  %1192 = vmatpush.bf16.msra.mxu0 %v913
  %1193 = vmatpush.bf16.msra.mxu0 %v912
  %1194 = vmatmul.bf16.gmra.mxu0 %v347
  %v1195 = vpop.f32.mrf.mxu0
  %v1196 = vadd.f32 %v1182, %v1195
  %v1197 = vpop.f32.mrf.mxu0
  %v1198 = vadd.f32 %v1184, %v1197
  %1199 = vdwg.mxu0
  %1200 = vmatpush.bf16.msra.mxu0 %v927
  %1201 = vmatpush.bf16.msra.mxu0 %v926
  %1202 = vmatpush.bf16.msra.mxu0 %v925
  %1203 = vmatpush.bf16.msra.mxu0 %v924
  %1204 = vmatpush.bf16.msra.mxu0 %v923
  %1205 = vmatpush.bf16.msra.mxu0 %v922
  %1206 = vmatpush.bf16.msra.mxu0 %v921
  %1207 = vmatpush.bf16.msra.mxu0 %v920
  %1208 = vmatmul.bf16.gmra.mxu0 %v348
  %v1209 = vpop.f32.mrf.mxu0
  %v1210 = vadd.f32 %v1196, %v1209
  %v1211 = vpop.f32.mrf.mxu0
  %v1212 = vadd.f32 %v1198, %v1211
  %1213 = vdwg.mxu0
  %1214 = vmatpush.bf16.msra.mxu0 %v935
  %1215 = vmatpush.bf16.msra.mxu0 %v934
  %1216 = vmatpush.bf16.msra.mxu0 %v933
  %1217 = vmatpush.bf16.msra.mxu0 %v932
  %1218 = vmatpush.bf16.msra.mxu0 %v931
  %1219 = vmatpush.bf16.msra.mxu0 %v930
  %1220 = vmatpush.bf16.msra.mxu0 %v929
  %1221 = vmatpush.bf16.msra.mxu0 %v928
  %1222 = vmatmul.bf16.gmra.mxu0 %v349
  %v1223 = vpop.f32.mrf.mxu0
  %v1224 = vadd.f32 %v1210, %v1223
  %v1225 = vpop.f32.mrf.mxu0
  %v1226 = vadd.f32 %v1212, %v1225
  %1227 = vdwg.mxu0
  %1228 = vmatpush.bf16.msra.mxu0 %v943
  %1229 = vmatpush.bf16.msra.mxu0 %v942
  %1230 = vmatpush.bf16.msra.mxu0 %v941
  %1231 = vmatpush.bf16.msra.mxu0 %v940
  %1232 = vmatpush.bf16.msra.mxu0 %v939
  %1233 = vmatpush.bf16.msra.mxu0 %v938
  %1234 = vmatpush.bf16.msra.mxu0 %v937
  %1235 = vmatpush.bf16.msra.mxu0 %v936
  %1236 = vmatmul.bf16.gmra.mxu0 %v350
  %v1237 = vpop.f32.mrf.mxu0
  %v1238 = vadd.f32 %v1224, %v1237
  %v1239 = vpop.f32.mrf.mxu0
  %v1240 = vadd.f32 %v1226, %v1239
  %1241 = vdwg.mxu0
  %1242 = vmatpush.bf16.msra.mxu0 %v951
  %1243 = vmatpush.bf16.msra.mxu0 %v950
  %1244 = vmatpush.bf16.msra.mxu0 %v949
  %1245 = vmatpush.bf16.msra.mxu0 %v948
  %1246 = vmatpush.bf16.msra.mxu0 %v947
  %1247 = vmatpush.bf16.msra.mxu0 %v946
  %1248 = vmatpush.bf16.msra.mxu0 %v945
  %1249 = vmatpush.bf16.msra.mxu0 %v944
  %1250 = vmatmul.bf16.gmra.mxu0 %v351
  %v1251 = vpop.f32.mrf.mxu0
  %v1252 = vadd.f32 %v1238, %v1251
  %v1253 = vpop.f32.mrf.mxu0
  %v1254 = vadd.f32 %v1240, %v1253
  %1255 = vdwg.mxu0
  %1256 = vmatpush.bf16.msra.mxu0 %v959
  %1257 = vmatpush.bf16.msra.mxu0 %v958
  %1258 = vmatpush.bf16.msra.mxu0 %v957
  %1259 = vmatpush.bf16.msra.mxu0 %v956
  %1260 = vmatpush.bf16.msra.mxu0 %v955
  %1261 = vmatpush.bf16.msra.mxu0 %v954
  %1262 = vmatpush.bf16.msra.mxu0 %v953
  %1263 = vmatpush.bf16.msra.mxu0 %v952
  %1264 = vmatmul.bf16.gmra.mxu0 %v352
  %v1265 = vpop.f32.mrf.mxu0
  %v1266 = vadd.f32 %v1252, %v1265
  %v1267 = vpop.f32.mrf.mxu0
  %v1268 = vadd.f32 %v1254, %v1267
  %1269 = vdwg.mxu0
  %1270 = vmatpush.bf16.msra.mxu0 %v967
  %1271 = vmatpush.bf16.msra.mxu0 %v966
  %1272 = vmatpush.bf16.msra.mxu0 %v965
  %1273 = vmatpush.bf16.msra.mxu0 %v964
  %1274 = vmatpush.bf16.msra.mxu0 %v963
  %1275 = vmatpush.bf16.msra.mxu0 %v962
  %1276 = vmatpush.bf16.msra.mxu0 %v961
  %1277 = vmatpush.bf16.msra.mxu0 %v960
  %1278 = vmatmul.bf16.gmra.mxu0 %v353
  %v1279 = vpop.f32.mrf.mxu0
  %v1280 = vadd.f32 %v1266, %v1279
  %v1281 = vpop.f32.mrf.mxu0
  %v1282 = vadd.f32 %v1268, %v1281
  %1283 = vdwg.mxu0
  %1284 = vmatpush.bf16.msra.mxu0 %v975
  %1285 = vmatpush.bf16.msra.mxu0 %v974
  %1286 = vmatpush.bf16.msra.mxu0 %v973
  %1287 = vmatpush.bf16.msra.mxu0 %v972
  %1288 = vmatpush.bf16.msra.mxu0 %v971
  %1289 = vmatpush.bf16.msra.mxu0 %v970
  %1290 = vmatpush.bf16.msra.mxu0 %v969
  %1291 = vmatpush.bf16.msra.mxu0 %v968
  %1292 = vmatmul.bf16.gmra.mxu0 %v354
  %v1293 = vpop.f32.mrf.mxu0
  %v1294 = vadd.f32 %v1280, %v1293
  %v1295 = vpop.f32.mrf.mxu0
  %v1296 = vadd.f32 %v1282, %v1295
  %1297 = vdwg.mxu0
  %1298 = vmatpush.bf16.msra.mxu0 %v983
  %1299 = vmatpush.bf16.msra.mxu0 %v982
  %1300 = vmatpush.bf16.msra.mxu0 %v981
  %1301 = vmatpush.bf16.msra.mxu0 %v980
  %1302 = vmatpush.bf16.msra.mxu0 %v979
  %1303 = vmatpush.bf16.msra.mxu0 %v978
  %1304 = vmatpush.bf16.msra.mxu0 %v977
  %1305 = vmatpush.bf16.msra.mxu0 %v976
  %1306 = vmatmul.bf16.gmra.mxu0 %v355
  %v1307 = vpop.f32.mrf.mxu0
  %v1308 = vadd.f32 %v1294, %v1307
  %v1309 = vpop.f32.mrf.mxu0
  %v1310 = vadd.f32 %v1296, %v1309
  %1311 = vdwg.mxu0
  %1312 = vmatpush.bf16.msra.mxu0 %v991
  %1313 = vmatpush.bf16.msra.mxu0 %v990
  %1314 = vmatpush.bf16.msra.mxu0 %v989
  %1315 = vmatpush.bf16.msra.mxu0 %v988
  %1316 = vmatpush.bf16.msra.mxu0 %v987
  %1317 = vmatpush.bf16.msra.mxu0 %v986
  %1318 = vmatpush.bf16.msra.mxu0 %v985
  %1319 = vmatpush.bf16.msra.mxu0 %v984
  %1320 = vmatmul.bf16.gmra.mxu0 %v356
  %v1321 = vpop.f32.mrf.mxu0
  %v1322 = vadd.f32 %v1308, %v1321
  %v1323 = vpop.f32.mrf.mxu0
  %v1324 = vadd.f32 %v1310, %v1323
  %1325 = vdwg.mxu0
  %1326 = vmatpush.bf16.msra.mxu0 %v999
  %1327 = vmatpush.bf16.msra.mxu0 %v998
  %1328 = vmatpush.bf16.msra.mxu0 %v997
  %1329 = vmatpush.bf16.msra.mxu0 %v996
  %1330 = vmatpush.bf16.msra.mxu0 %v995
  %1331 = vmatpush.bf16.msra.mxu0 %v994
  %1332 = vmatpush.bf16.msra.mxu0 %v993
  %1333 = vmatpush.bf16.msra.mxu0 %v992
  %1334 = vmatmul.bf16.gmra.mxu0 %v357
  %v1335 = vpop.f32.mrf.mxu0
  %v1336 = vadd.f32 %v1322, %v1335
  %v1337 = vpop.f32.mrf.mxu0
  %v1338 = vadd.f32 %v1324, %v1337
  %1339 = vdwg.mxu0
  %1340 = vmatpush.bf16.msra.mxu0 %v1007
  %1341 = vmatpush.bf16.msra.mxu0 %v1006
  %1342 = vmatpush.bf16.msra.mxu0 %v1005
  %1343 = vmatpush.bf16.msra.mxu0 %v1004
  %1344 = vmatpush.bf16.msra.mxu0 %v1003
  %1345 = vmatpush.bf16.msra.mxu0 %v1002
  %1346 = vmatpush.bf16.msra.mxu0 %v1001
  %1347 = vmatpush.bf16.msra.mxu0 %v1000
  %1348 = vmatmul.bf16.gmra.mxu0 %v358
  %v1349 = vpop.f32.mrf.mxu0
  %v1350 = vadd.f32 %v1336, %v1349
  %v1351 = vpop.f32.mrf.mxu0
  %v1352 = vadd.f32 %v1338, %v1351
  %1353 = vdwg.mxu0
  %1354 = vmatpush.bf16.msra.mxu0 %v1015
  %1355 = vmatpush.bf16.msra.mxu0 %v1014
  %1356 = vmatpush.bf16.msra.mxu0 %v1013
  %1357 = vmatpush.bf16.msra.mxu0 %v1012
  %1358 = vmatpush.bf16.msra.mxu0 %v1011
  %1359 = vmatpush.bf16.msra.mxu0 %v1010
  %1360 = vmatpush.bf16.msra.mxu0 %v1009
  %1361 = vmatpush.bf16.msra.mxu0 %v1008
  %1362 = vmatmul.bf16.gmra.mxu0 %v359
  %v1363 = vpop.f32.mrf.mxu0
  %v1364 = vadd.f32 %v1350, %v1363
  %v1365 = vpop.f32.mrf.mxu0
  %v1366 = vadd.f32 %v1352, %v1365
  %1367 = vdwg.mxu0
  %v1368 = vpack.c.bf16 %v1366, %v1364
  %v1369 = vld [vmem:[%s3] sm:$0xf]
  %v1370 = vld [vmem:[%s3 + $0x4] sm:$0xf]
  %v1371 = vld [vmem:[%s3 + $0x8] sm:$0xf]
  %v1372 = vld [vmem:[%s3 + $0xc] sm:$0xf]
  %v1373 = vld [vmem:[%s3 + $0x10] sm:$0xf]
  %v1374 = vld [vmem:[%s3 + $0x14] sm:$0xf]
  %v1375 = vld [vmem:[%s3 + $0x18] sm:$0xf]
  %v1376 = vld [vmem:[%s3 + $0x1c] sm:$0xf]
  %v1377 = vld [vmem:[%s3 + $0x20] sm:$0xf]
  %v1378 = vld [vmem:[%s3 + $0x24] sm:$0xf]
  %v1379 = vld [vmem:[%s3 + $0x28] sm:$0xf]
  %v1380 = vld [vmem:[%s3 + $0x2c] sm:$0xf]
  %v1381 = vld [vmem:[%s3 + $0x30] sm:$0xf]
  %v1382 = vld [vmem:[%s3 + $0x34] sm:$0xf]
  %v1383 = vld [vmem:[%s3 + $0x38] sm:$0xf]
  %v1384 = vld [vmem:[%s3 + $0x3c] sm:$0xf]
  %v1385 = vld [vmem:[%s4] sm:$0x1]
  %v1387 = vperm.slane %v1385, 0
  %v1405 = vunpack.c.l.b16 %v1369
  %v1406 = vunpack.c.l.b16 %v1370
  %v1407 = vunpack.c.l.b16 %v1371
  %v1408 = vunpack.c.l.b16 %v1372
  %v1409 = vunpack.c.l.b16 %v1373
  %v1410 = vunpack.c.l.b16 %v1374
  %v1411 = vunpack.c.l.b16 %v1375
  %v1412 = vunpack.c.l.b16 %v1376
  %v1413 = vunpack.c.l.b16 %v1377
  %v1414 = vunpack.c.l.b16 %v1378
  %v1415 = vunpack.c.l.b16 %v1379
  %v1416 = vunpack.c.l.b16 %v1380
  %v1417 = vunpack.c.l.b16 %v1381
  %v1418 = vunpack.c.l.b16 %v1382
  %v1419 = vunpack.c.l.b16 %v1383
  %v1420 = vunpack.c.l.b16 %v1384
  %v1421 = vpack.c.b16 %v1406, %v1405
  %v1422 = vpack.c.b16 %v1408, %v1407
  %v1423 = vpack.c.b16 %v1410, %v1409
  %v1424 = vpack.c.b16 %v1412, %v1411
  %v1425 = vpack.c.b16 %v1414, %v1413
  %v1426 = vpack.c.b16 %v1416, %v1415
  %v1427 = vpack.c.b16 %v1418, %v1417
  %v1428 = vpack.c.b16 %v1420, %v1419
  %1437 = vmatpush.bf16.msra.mxu0 %v1428
  %1438 = vmatpush.bf16.msra.mxu0 %v1427
  %1439 = vmatpush.bf16.msra.mxu0 %v1426
  %1440 = vmatpush.bf16.msra.mxu0 %v1425
  %1441 = vmatpush.bf16.msra.mxu0 %v1424
  %1442 = vmatpush.bf16.msra.mxu0 %v1423
  %1443 = vmatpush.bf16.msra.mxu0 %v1422
  %1444 = vmatpush.bf16.msra.mxu0 %v1421
  %1445 = vmatmul.bf16.gmra.mxu0 %v1368
  %v1446 = vpop.f32.mrf.mxu0
  %v1447 = vadd.f32 %v1387, %v1446
  %v1448 = vpop.f32.mrf.mxu0
  %v1449 = vadd.f32 %v1387, %v1448
  %1450 = vdwg.mxu0
  %1451 = vst [vmem:[%s5] sm:$0xff] %v1447
  %1452 = vst [vmem:[%s5 + $0x8] sm:$0xff] %v1449
  // Predicated region
  $region22: #{gration_forward.7} parent=0 // pred_check
    _
  $region23: #{gration_forward.7} parent=0 // pred_check_branch
    %1454 = sbr.rel (0) target = $region25
  $region24: #{gration_forward.7} parent=0 // pred_region
    _
  $region25: #{gration_forward.7} parent=0 // pred_fallthru
    _
  // Predicated region
  $region26: #{gration_forward.7} parent=0 // pred_check
    _
  $region27: #{gration_forward.7} parent=0 // pred_check_branch
    %1456 = sbr.rel (0) target = $region29
  $region28: #{gration_forward.7} parent=0 // pred_region
    _
  $region29: #{gration_forward.7} parent=0 // pred_fallthru
    _

// kernel: gration_forward.6
$region0: #{gration_forward.6}
  #allocation0 [shape = 'u32[]', space=smem, size = 0x4, offset = 0x4, fixed_abs, tag = 'smem constant byte address 0x4 - core index']
  #allocation1 [shape = 'u32[72,128]{1,0:T(1,128)}', space=vmem, size = 0x9000, scoped, tag = 'internal scratch']
  %s0 = inlined_call_operand.vmem [shape: bf16[32,3200], index: 0, kind: input, shape index: {}]
  %s1 = inlined_call_operand.vmem [shape: bf16[32,3200], index: 1, kind: input, shape index: {}]
  %s2 = inlined_call_operand.vmem [shape: bf16[32,3200], index: 2, kind: input, shape index: {}]
  %s3 = inlined_call_operand.vmem [shape: bf16[32,3200], index: 3, kind: input, shape index: {}]
  %s4 = inlined_call_operand.vmem [shape: bf16[3200,128], index: 4, kind: input, shape index: {}]
  %s5 = inlined_call_operand.vmem [shape: f32[1,128], index: 5, kind: input, shape index: {}]
  %s6 = inlined_call_operand.vmem [shape: bf16[32,128], index: 6, kind: output, shape index: {}]
  %s7 = sld [smem:[#allocation0]]
  $region57: #{gration_forward.6} parent=0
    _
  %s9 = ssub.s32 1, %s7
  %s10 = scalar_select 0, %s9, %s7
  loop: start=0, step=1, limit=4
  $region2: #{gration_forward.6} parent=0 // loop_pre_header
    _
  $region3: #{gration_forward.6} parent=0 // loop_header
    %s12 = sphi 0, %s16
    %p13 = scmp.ge.s32.totalorder %s12, 4
    %s22 = sphi 0, %s24
    %s25 = sphi 0, %s22
    %s26 = sphi 0, %s25
    %s42 = sphi 0, %s26
    %s48 = sphi 0, %s50
    %s51 = sphi 0, %s48
    %s52 = sphi 0, %s51
    %s68 = sphi 0, %s52
    %s74 = sphi 0, %s76
    %s77 = sphi 0, %s74
    %s78 = sphi 0, %s77
    %s94 = sphi 0, %s78
    %s100 = sphi 0, %s102
    %s103 = sphi 0, %s100
    %s104 = sphi 0, %s103
    %s120 = sphi 0, %s104
    %s124 = sphi 0, %s124
    %s126 = sphi 0, %s124
    %s127 = sphi 0, %s126
    %s141 = sphi 0, %s127
    %s145 = sphi 0, %s145
    %s147 = sphi 0, %s145
    %s148 = sphi 0, %s147
    %s162 = sphi 0, %s148
    %s168 = sphi 0, %s170
    %s171 = sphi 0, %s168
    %s172 = sphi 0, %s171
    %s188 = sphi 0, %s172
  $region4: #{gration_forward.6} parent=0 // loop_header_branch
    %15 = sbr.rel (%p13) target = $region8
  $region5: #{gration_forward.6} parent=0 // loop_body
    %s17 = ssub.s32 %s12, 1
    %s18 = ssub.s32 %s12, 2
    %s19 = sadd.s32 %s12, 1
    %s20 = ssub.s32 %s12, %s19
    %p21 = scmp.eq.s32.totalorder %s20, 0
    %s23 = sadd.s32 %s22, 1
    %s24 = scalar_select %p21, %s22, %s23
    %p27 = pneg %p21
    %p28 = scmp.eq.s32.totalorder %s12, 1
    %p29 = por %p27, %p28
    %p30 = scmp.ne.s32.totalorder %s22, %s25
    %p31 = scmp.eq.s32.totalorder %s12, 0
    %p32 = por %p30, %p31
    %p33 = scmp.ne.s32.totalorder %s22, %s25
    %p34 = scmp.eq.s32.totalorder %s17, 1
    %p35 = por %p33, %p34
    %p36 = scmp.ne.s32.totalorder %s25, %s26
    %p37 = scmp.eq.s32.totalorder %s17, 0
    %p38 = por %p36, %p37
    %p39 = scmp.ne.s32.totalorder %s25, %s26
    %p40 = scmp.eq.s32.totalorder %s18, 1
    %p41 = por %p39, %p40
    %p43 = scmp.ne.s32.totalorder %s26, %s42
    %p44 = scmp.eq.s32.totalorder %s18, 0
    %p45 = por %p43, %p44
    %s46 = ssub.s32 %s12, %s19
    %p47 = scmp.eq.s32.totalorder %s46, 0
    %s49 = sadd.s32 %s48, 1
    %s50 = scalar_select %p47, %s48, %s49
    %p53 = pneg %p47
    %p54 = scmp.eq.s32.totalorder %s12, 1
    %p55 = por %p53, %p54
    %p56 = scmp.ne.s32.totalorder %s48, %s51
    %p57 = scmp.eq.s32.totalorder %s12, 0
    %p58 = por %p56, %p57
    %p59 = scmp.ne.s32.totalorder %s48, %s51
    %p60 = scmp.eq.s32.totalorder %s17, 1
    %p61 = por %p59, %p60
    %p62 = scmp.ne.s32.totalorder %s51, %s52
    %p63 = scmp.eq.s32.totalorder %s17, 0
    %p64 = por %p62, %p63
    %p65 = scmp.ne.s32.totalorder %s51, %s52
    %p66 = scmp.eq.s32.totalorder %s18, 1
    %p67 = por %p65, %p66
    %p69 = scmp.ne.s32.totalorder %s52, %s68
    %p70 = scmp.eq.s32.totalorder %s18, 0
    %p71 = por %p69, %p70
    %s72 = ssub.s32 %s12, %s19
    %p73 = scmp.eq.s32.totalorder %s72, 0
    %s75 = sadd.s32 %s74, 1
    %s76 = scalar_select %p73, %s74, %s75
    %p79 = pneg %p73
    %p80 = scmp.eq.s32.totalorder %s12, 1
    %p81 = por %p79, %p80
    %p82 = scmp.ne.s32.totalorder %s74, %s77
    %p83 = scmp.eq.s32.totalorder %s12, 0
    %p84 = por %p82, %p83
    %p85 = scmp.ne.s32.totalorder %s74, %s77
    %p86 = scmp.eq.s32.totalorder %s17, 1
    %p87 = por %p85, %p86
    %p88 = scmp.ne.s32.totalorder %s77, %s78
    %p89 = scmp.eq.s32.totalorder %s17, 0
    %p90 = por %p88, %p89
    %p91 = scmp.ne.s32.totalorder %s77, %s78
    %p92 = scmp.eq.s32.totalorder %s18, 1
    %p93 = por %p91, %p92
    %p95 = scmp.ne.s32.totalorder %s78, %s94
    %p96 = scmp.eq.s32.totalorder %s18, 0
    %p97 = por %p95, %p96
    %s98 = ssub.s32 %s12, %s19
    %p99 = scmp.eq.s32.totalorder %s98, 0
    %s101 = sadd.s32 %s100, 1
    %s102 = scalar_select %p99, %s100, %s101
    %p105 = pneg %p99
    %p106 = scmp.eq.s32.totalorder %s12, 1
    %p107 = por %p105, %p106
    %p108 = scmp.ne.s32.totalorder %s100, %s103
    %p109 = scmp.eq.s32.totalorder %s12, 0
    %p110 = por %p108, %p109
    %p111 = scmp.ne.s32.totalorder %s100, %s103
    %p112 = scmp.eq.s32.totalorder %s17, 1
    %p113 = por %p111, %p112
    %p114 = scmp.ne.s32.totalorder %s103, %s104
    %p115 = scmp.eq.s32.totalorder %s17, 0
    %p116 = por %p114, %p115
    %p117 = scmp.ne.s32.totalorder %s103, %s104
    %p118 = scmp.eq.s32.totalorder %s18, 1
    %p119 = por %p117, %p118
    %p121 = scmp.ne.s32.totalorder %s104, %s120
    %p122 = scmp.eq.s32.totalorder %s18, 0
    %p123 = por %p121, %p122
    %s125 = sadd.s32 %s124, 1
    %p128 = scmp.eq.s32.totalorder %s12, 1
    %p129 = scmp.ne.s32.totalorder %s124, %s126
    %p130 = scmp.eq.s32.totalorder %s12, 0
    %p131 = por %p129, %p130
    %p132 = scmp.ne.s32.totalorder %s124, %s126
    %p133 = scmp.eq.s32.totalorder %s17, 1
    %p134 = por %p132, %p133
    %p135 = scmp.ne.s32.totalorder %s126, %s127
    %p136 = scmp.eq.s32.totalorder %s17, 0
    %p137 = por %p135, %p136
    %p138 = scmp.ne.s32.totalorder %s126, %s127
    %p139 = scmp.eq.s32.totalorder %s18, 1
    %p140 = por %p138, %p139
    %p142 = scmp.ne.s32.totalorder %s127, %s141
    %p143 = scmp.eq.s32.totalorder %s18, 0
    %p144 = por %p142, %p143
    %s146 = sadd.s32 %s145, 1
    %p149 = scmp.eq.s32.totalorder %s12, 1
    %p150 = scmp.ne.s32.totalorder %s145, %s147
    %p151 = scmp.eq.s32.totalorder %s12, 0
    %p152 = por %p150, %p151
    %p153 = scmp.ne.s32.totalorder %s145, %s147
    %p154 = scmp.eq.s32.totalorder %s17, 1
    %p155 = por %p153, %p154
    %p156 = scmp.ne.s32.totalorder %s147, %s148
    %p157 = scmp.eq.s32.totalorder %s17, 0
    %p158 = por %p156, %p157
    %p159 = scmp.ne.s32.totalorder %s147, %s148
    %p160 = scmp.eq.s32.totalorder %s18, 1
    %p161 = por %p159, %p160
    %p163 = scmp.ne.s32.totalorder %s148, %s162
    %p164 = scmp.eq.s32.totalorder %s18, 0
    %p165 = por %p163, %p164
    %s166 = ssub.s32 %s12, %s19
    %p167 = scmp.eq.s32.totalorder %s166, 0
    %s169 = sadd.s32 %s168, 1
    %s170 = scalar_select %p167, %s168, %s169
    %p173 = pneg %p167
    %p174 = scmp.eq.s32.totalorder %s12, 1
    %p175 = por %p173, %p174
    %p176 = scmp.ne.s32.totalorder %s168, %s171
    %p177 = scmp.eq.s32.totalorder %s12, 0
    %p178 = por %p176, %p177
    %p179 = scmp.ne.s32.totalorder %s168, %s171
    %p180 = scmp.eq.s32.totalorder %s17, 1
    %p181 = por %p179, %p180
    %p182 = scmp.ne.s32.totalorder %s171, %s172
    %p183 = scmp.eq.s32.totalorder %s17, 0
    %p184 = por %p182, %p183
    %p185 = scmp.ne.s32.totalorder %s171, %s172
    %p186 = scmp.eq.s32.totalorder %s18, 1
    %p187 = por %p185, %p186
    %p189 = scmp.ne.s32.totalorder %s172, %s188
    %p190 = scmp.eq.s32.totalorder %s18, 0
    %p191 = por %p189, %p190
    %p192 = scmp.le.s32.totalorder 1, %s12
    %p193 = scmp.lt.s32.totalorder %s12, 3
    %p194 = pnand %p192, %p193
    %p195 = pneg %p194
    // Predicated region
    $region9: #{gration_forward.6} parent=5 // pred_check
      _
    $region10: #{gration_forward.6} parent=5 // pred_check_branch
      %197 = sbr.rel (%p194) target = $region12
    $region11: #{gration_forward.6} parent=5 // pred_region
      %s198 = ssub.s32 %s12, 1
      // Predicated region
      $region13: #{gration_forward.6} parent=11 // pred_check
        %p199 = pneg %p137
      $region14: #{gration_forward.6} parent=11 // pred_check_branch
        %201 = sbr.rel (%p199) target = $region16
      $region15: #{gration_forward.6} parent=11 // pred_region
        _
      $region16: #{gration_forward.6} parent=11 // pred_fallthru
        _
      // Predicated region
      $region17: #{gration_forward.6} parent=11 // pred_check
        %p202 = pneg %p158
      $region18: #{gration_forward.6} parent=11 // pred_check_branch
        %204 = sbr.rel (%p202) target = $region20
      $region19: #{gration_forward.6} parent=11 // pred_region
        _
      $region20: #{gration_forward.6} parent=11 // pred_fallthru
        _
    $region12: #{gration_forward.6} parent=5 // pred_fallthru
      _
    %p205 = scmp.lt.s32.totalorder %s12, 2
    // Predicated region
    $region21: #{gration_forward.6} parent=5 // pred_check
      %p206 = pneg %p205
    $region22: #{gration_forward.6} parent=5 // pred_check_branch
      %208 = sbr.rel (%p206) target = $region24
    $region23: #{gration_forward.6} parent=5 // pred_region
      // Predicated region
      $region25: #{gration_forward.6} parent=23 // pred_check
        %p209 = pneg %p32
      $region26: #{gration_forward.6} parent=23 // pred_check_branch
        %211 = sbr.rel (%p209) target = $region28
      $region27: #{gration_forward.6} parent=23 // pred_region
        %s212 = smul.u32 2, %s12
        %p213 = scmp.lt.s32.totalorder %s212, 3
        %s214 = scalar_select %p213, %s212, 3
        %s215 = smul.addr %s214, 25
        %s216 = smul.addr %s215, 4
        %s217 = scalar_lea.vmem %s0, %s216
        %s218 = smul.u32 2, %s12
      $region28: #{gration_forward.6} parent=23 // pred_fallthru
        _
      // Predicated region
      $region29: #{gration_forward.6} parent=23 // pred_check
        %p219 = pneg %p58
      $region30: #{gration_forward.6} parent=23 // pred_check_branch
        %221 = sbr.rel (%p219) target = $region32
      $region31: #{gration_forward.6} parent=23 // pred_region
        %s222 = smul.u32 2, %s12
        %p223 = scmp.lt.s32.totalorder %s222, 3
        %s224 = scalar_select %p223, %s222, 3
        %s225 = smul.addr %s224, 25
        %s226 = smul.addr %s225, 4
        %s227 = scalar_lea.vmem %s1, %s226
        %s228 = smul.u32 2, %s12
      $region32: #{gration_forward.6} parent=23 // pred_fallthru
        _
      // Predicated region
      $region33: #{gration_forward.6} parent=23 // pred_check
        %p229 = pneg %p84
      $region34: #{gration_forward.6} parent=23 // pred_check_branch
        %231 = sbr.rel (%p229) target = $region36
      $region35: #{gration_forward.6} parent=23 // pred_region
        %s232 = smul.u32 2, %s12
        %p233 = scmp.lt.s32.totalorder %s232, 3
        %s234 = scalar_select %p233, %s232, 3
        %s235 = smul.addr %s234, 25
        %s236 = smul.addr %s235, 4
        %s237 = scalar_lea.vmem %s2, %s236
        %s238 = smul.u32 2, %s12
      $region36: #{gration_forward.6} parent=23 // pred_fallthru
        _
      // Predicated region
      $region37: #{gration_forward.6} parent=23 // pred_check
        %p239 = pneg %p110
      $region38: #{gration_forward.6} parent=23 // pred_check_branch
        %241 = sbr.rel (%p239) target = $region40
      $region39: #{gration_forward.6} parent=23 // pred_region
        %s242 = smul.u32 2, %s12
        %p243 = scmp.lt.s32.totalorder %s242, 3
        %s244 = scalar_select %p243, %s242, 3
        %s245 = smul.addr %s244, 25
        %s246 = smul.addr %s245, 4
        %s247 = scalar_lea.vmem %s3, %s246
        %s248 = smul.u32 2, %s12
      $region40: #{gration_forward.6} parent=23 // pred_fallthru
        _
    $region24: #{gration_forward.6} parent=5 // pred_fallthru
      _
    %p249 = scmp.le.s32.totalorder 1, %s12
    %p250 = scmp.lt.s32.totalorder %s12, 3
    %p251 = pnand %p249, %p250
    %p252 = pneg %p251
    // Predicated region
    $region41: #{gration_forward.6} parent=5 // pred_check
      _
    $region42: #{gration_forward.6} parent=5 // pred_check_branch
      %254 = sbr.rel (%p251) target = $region44
    $region43: #{gration_forward.6} parent=5 // pred_region
      %s255 = ssub.s32 %s12, 1
      %s256 = smul.u32 2, %s17
      %p257 = scmp.lt.s32.totalorder %s256, 3
      %s258 = scalar_select %p257, %s256, 3
      %s259 = smul.addr %s258, 25
      %s260 = smul.addr %s259, 4
      %s261 = scalar_lea.vmem %s0, %s260
      %p262 = pneg %p38
      %p263 = pneg %p35
      %s264 = smul.u32 2, %s17
      %p265 = scmp.lt.s32.totalorder %s264, 3
      %s266 = scalar_select %p265, %s264, 3
      %s267 = smul.addr %s266, 25
      %s268 = smul.addr %s267, 4
      %s269 = scalar_lea.vmem %s1, %s268
      %p270 = pneg %p64
      %p271 = pneg %p61
      %s272 = smul.u32 2, %s17
      %p273 = scmp.lt.s32.totalorder %s272, 3
      %s274 = scalar_select %p273, %s272, 3
      %s275 = smul.addr %s274, 25
      %s276 = smul.addr %s275, 4
      %s277 = scalar_lea.vmem %s2, %s276
      %p278 = pneg %p90
      %p279 = pneg %p87
      %s280 = smul.u32 2, %s17
      %p281 = scmp.lt.s32.totalorder %s280, 3
      %s282 = scalar_select %p281, %s280, 3
      %s283 = smul.addr %s282, 25
      %s284 = smul.addr %s283, 4
      %s285 = scalar_lea.vmem %s3, %s284
      %p286 = pneg %p116
      %p287 = pneg %p113
      %p288 = pneg %p137
      %p289 = pneg %p134
      %p290 = pneg %p158
      %p291 = pneg %p155
      %p292 = pneg %p184
      %p293 = pneg %p181
      %s294 = smul.u32 2, %s17
      %p295 = scmp.lt.s32.totalorder %s294, 3
      %s296 = scalar_select %p295, %s294, 3
      %s297 = smul.addr %s296, 4
      %s298 = scalar_lea.vmem %s6, %s297
      %s299 = smul.u32 2, %s17
      %p300 = scmp.lt.s32.totalorder %s299, 3
      %s301 = scalar_select %p300, %s299, 3
      %s302 = smul.addr %s301, 25
      %s303 = smul.addr %s302, 4
      %s304 = scalar_lea.vmem %s0, %s303
      %s305 = smul.u32 2, %s17
      %s306 = smul.u32 2, %s17
      %p307 = scmp.lt.s32.totalorder %s306, 3
      %s308 = scalar_select %p307, %s306, 3
      %s309 = smul.addr %s308, 25
      %s310 = smul.addr %s309, 4
      %s311 = scalar_lea.vmem %s1, %s310
      %s312 = smul.u32 2, %s17
      %s313 = smul.u32 2, %s17
      %p314 = scmp.lt.s32.totalorder %s313, 3
      %s315 = scalar_select %p314, %s313, 3
      %s316 = smul.addr %s315, 25
      %s317 = smul.addr %s316, 4
      %s318 = scalar_lea.vmem %s2, %s317
      %s319 = smul.u32 2, %s17
      %s320 = smul.u32 2, %s17
      %p321 = scmp.lt.s32.totalorder %s320, 3
      %s322 = scalar_select %p321, %s320, 3
      %s323 = smul.addr %s322, 25
      %s324 = smul.addr %s323, 4
      %s325 = scalar_lea.vmem %s3, %s324
      %s326 = smul.u32 2, %s17
      %s327 = smul.u32 2, %s17
      %p328 = scmp.lt.s32.totalorder %s327, 3
      %s329 = scalar_select %p328, %s327, 3
      %s330 = smul.addr %s329, 4
      %s331 = scalar_lea.vmem %s6, %s330
      %s332 = smul.u32 2, %s17
      %v333 = vld [vmem:[%s4] sm:$0xf]
      %v334 = vld [vmem:[%s4 + $0x4] sm:$0xf]
      %v335 = vld [vmem:[%s4 + $0x8] sm:$0xf]
      %v336 = vld [vmem:[%s4 + $0xc] sm:$0xf]
      %v337 = vld [vmem:[%s4 + $0x10] sm:$0xf]
      %v338 = vld [vmem:[%s4 + $0x14] sm:$0xf]
      %v339 = vld [vmem:[%s4 + $0x18] sm:$0xf]
      %v340 = vld [vmem:[%s4 + $0x1c] sm:$0xf]
      %v341 = vld [vmem:[%s4 + $0x20] sm:$0xf]
      %v342 = vld [vmem:[%s4 + $0x24] sm:$0xf]
      %v343 = vld [vmem:[%s4 + $0x28] sm:$0xf]
      %v344 = vld [vmem:[%s4 + $0x2c] sm:$0xf]
      %v345 = vld [vmem:[%s4 + $0x30] sm:$0xf]
      %v346 = vld [vmem:[%s4 + $0x34] sm:$0xf]
      %v347 = vld [vmem:[%s4 + $0x38] sm:$0xf]
      %v348 = vld [vmem:[%s4 + $0x3c] sm:$0xf]
      %v349 = vld [vmem:[%s4 + $0x40] sm:$0xf]
      %v350 = vld [vmem:[%s4 + $0x44] sm:$0xf]
      %v351 = vld [vmem:[%s4 + $0x48] sm:$0xf]
      %v352 = vld [vmem:[%s4 + $0x4c] sm:$0xf]
      %v353 = vld [vmem:[%s4 + $0x50] sm:$0xf]
      %v354 = vld [vmem:[%s4 + $0x54] sm:$0xf]
      %v355 = vld [vmem:[%s4 + $0x58] sm:$0xf]
      %v356 = vld [vmem:[%s4 + $0x5c] sm:$0xf]
      %v357 = vld [vmem:[%s4 + $0x60] sm:$0xf]
      %v358 = vld [vmem:[%s4 + $0x64] sm:$0xf]
      %v359 = vld [vmem:[%s4 + $0x68] sm:$0xf]
      %v360 = vld [vmem:[%s4 + $0x6c] sm:$0xf]
      %v361 = vld [vmem:[%s4 + $0x70] sm:$0xf]
      %v362 = vld [vmem:[%s4 + $0x74] sm:$0xf]
      %v363 = vld [vmem:[%s4 + $0x78] sm:$0xf]
      %v364 = vld [vmem:[%s4 + $0x7c] sm:$0xf]
      %v365 = vld [vmem:[%s4 + $0x80] sm:$0xf]
      %v366 = vld [vmem:[%s4 + $0x84] sm:$0xf]
      %v367 = vld [vmem:[%s4 + $0x88] sm:$0xf]
      %v368 = vld [vmem:[%s4 + $0x8c] sm:$0xf]
      %v369 = vld [vmem:[%s4 + $0x90] sm:$0xf]
      %v370 = vld [vmem:[%s4 + $0x94] sm:$0xf]
      %v371 = vld [vmem:[%s4 + $0x98] sm:$0xf]
      %v372 = vld [vmem:[%s4 + $0x9c] sm:$0xf]
      %v373 = vld [vmem:[%s4 + $0xa0] sm:$0xf]
      %v374 = vld [vmem:[%s4 + $0xa4] sm:$0xf]
      %v375 = vld [vmem:[%s4 + $0xa8] sm:$0xf]
      %v376 = vld [vmem:[%s4 + $0xac] sm:$0xf]
      %v377 = vld [vmem:[%s4 + $0xb0] sm:$0xf]
      %v378 = vld [vmem:[%s4 + $0xb4] sm:$0xf]
      %v379 = vld [vmem:[%s4 + $0xb8] sm:$0xf]
      %v380 = vld [vmem:[%s4 + $0xbc] sm:$0xf]
      %v381 = vld [vmem:[%s4 + $0xc0] sm:$0xf]
      %v382 = vld [vmem:[%s4 + $0xc4] sm:$0xf]
      %v383 = vld [vmem:[%s4 + $0xc8] sm:$0xf]
      %v384 = vld [vmem:[%s4 + $0xcc] sm:$0xf]
      %v385 = vld [vmem:[%s4 + $0xd0] sm:$0xf]
      %v386 = vld [vmem:[%s4 + $0xd4] sm:$0xf]
      %v387 = vld [vmem:[%s4 + $0xd8] sm:$0xf]
      %v388 = vld [vmem:[%s4 + $0xdc] sm:$0xf]
      %v389 = vld [vmem:[%s4 + $0xe0] sm:$0xf]
      %v390 = vld [vmem:[%s4 + $0xe4] sm:$0xf]
      %v391 = vld [vmem:[%s4 + $0xe8] sm:$0xf]
      %v392 = vld [vmem:[%s4 + $0xec] sm:$0xf]
      %v393 = vld [vmem:[%s4 + $0xf0] sm:$0xf]
      %v394 = vld [vmem:[%s4 + $0xf4] sm:$0xf]
      %v395 = vld [vmem:[%s4 + $0xf8] sm:$0xf]
      %v396 = vld [vmem:[%s4 + $0xfc] sm:$0xf]
      %v397 = vld [vmem:[%s4 + $0x100] sm:$0xf]
      %v398 = vld [vmem:[%s4 + $0x104] sm:$0xf]
      %v399 = vld [vmem:[%s4 + $0x108] sm:$0xf]
      %v400 = vld [vmem:[%s4 + $0x10c] sm:$0xf]
      %v401 = vld [vmem:[%s4 + $0x110] sm:$0xf]
      %v402 = vld [vmem:[%s4 + $0x114] sm:$0xf]
      %v403 = vld [vmem:[%s4 + $0x118] sm:$0xf]
      %v404 = vld [vmem:[%s4 + $0x11c] sm:$0xf]
      %v405 = vld [vmem:[%s4 + $0x120] sm:$0xf]
      %v406 = vld [vmem:[%s4 + $0x124] sm:$0xf]
      %v407 = vld [vmem:[%s4 + $0x128] sm:$0xf]
      %v408 = vld [vmem:[%s4 + $0x12c] sm:$0xf]
      %v409 = vld [vmem:[%s4 + $0x130] sm:$0xf]
      %v410 = vld [vmem:[%s4 + $0x134] sm:$0xf]
      %v411 = vld [vmem:[%s4 + $0x138] sm:$0xf]
      %v412 = vld [vmem:[%s4 + $0x13c] sm:$0xf]
      %v413 = vld [vmem:[%s4 + $0x140] sm:$0xf]
      %v414 = vld [vmem:[%s4 + $0x144] sm:$0xf]
      %v415 = vld [vmem:[%s4 + $0x148] sm:$0xf]
      %v416 = vld [vmem:[%s4 + $0x14c] sm:$0xf]
      %v417 = vld [vmem:[%s4 + $0x150] sm:$0xf]
      %v418 = vld [vmem:[%s4 + $0x154] sm:$0xf]
      %v419 = vld [vmem:[%s4 + $0x158] sm:$0xf]
      %v420 = vld [vmem:[%s4 + $0x15c] sm:$0xf]
      %v421 = vld [vmem:[%s4 + $0x160] sm:$0xf]
      %v422 = vld [vmem:[%s4 + $0x164] sm:$0xf]
      %v423 = vld [vmem:[%s4 + $0x168] sm:$0xf]
      %v424 = vld [vmem:[%s4 + $0x16c] sm:$0xf]
      %v425 = vld [vmem:[%s4 + $0x170] sm:$0xf]
      %v426 = vld [vmem:[%s4 + $0x174] sm:$0xf]
      %v427 = vld [vmem:[%s4 + $0x178] sm:$0xf]
      %v428 = vld [vmem:[%s4 + $0x17c] sm:$0xf]
      %v429 = vld [vmem:[%s4 + $0x180] sm:$0xf]
      %v430 = vld [vmem:[%s4 + $0x184] sm:$0xf]
      %v431 = vld [vmem:[%s4 + $0x188] sm:$0xf]
      %v432 = vld [vmem:[%s4 + $0x18c] sm:$0xf]
      %v433 = vld [vmem:[%s4 + $0x190] sm:$0xf]
      %v434 = vld [vmem:[%s4 + $0x194] sm:$0xf]
      %v435 = vld [vmem:[%s4 + $0x198] sm:$0xf]
      %v436 = vld [vmem:[%s4 + $0x19c] sm:$0xf]
      %v437 = vld [vmem:[%s4 + $0x1a0] sm:$0xf]
      %v438 = vld [vmem:[%s4 + $0x1a4] sm:$0xf]
      %v439 = vld [vmem:[%s4 + $0x1a8] sm:$0xf]
      %v440 = vld [vmem:[%s4 + $0x1ac] sm:$0xf]
      %v441 = vld [vmem:[%s4 + $0x1b0] sm:$0xf]
      %v442 = vld [vmem:[%s4 + $0x1b4] sm:$0xf]
      %v443 = vld [vmem:[%s4 + $0x1b8] sm:$0xf]
      %v444 = vld [vmem:[%s4 + $0x1bc] sm:$0xf]
      %v445 = vld [vmem:[%s4 + $0x1c0] sm:$0xf]
      %v446 = vld [vmem:[%s4 + $0x1c4] sm:$0xf]
      %v447 = vld [vmem:[%s4 + $0x1c8] sm:$0xf]
      %v448 = vld [vmem:[%s4 + $0x1cc] sm:$0xf]
      %v449 = vld [vmem:[%s4 + $0x1d0] sm:$0xf]
      %v450 = vld [vmem:[%s4 + $0x1d4] sm:$0xf]
      %v451 = vld [vmem:[%s4 + $0x1d8] sm:$0xf]
      %v452 = vld [vmem:[%s4 + $0x1dc] sm:$0xf]
      %v453 = vld [vmem:[%s4 + $0x1e0] sm:$0xf]
      %v454 = vld [vmem:[%s4 + $0x1e4] sm:$0xf]
      %v455 = vld [vmem:[%s4 + $0x1e8] sm:$0xf]
      %v456 = vld [vmem:[%s4 + $0x1ec] sm:$0xf]
      %v457 = vld [vmem:[%s4 + $0x1f0] sm:$0xf]
      %v458 = vld [vmem:[%s4 + $0x1f4] sm:$0xf]
      %v459 = vld [vmem:[%s4 + $0x1f8] sm:$0xf]
      %v460 = vld [vmem:[%s4 + $0x1fc] sm:$0xf]
      %v461 = vld [vmem:[%s4 + $0x200] sm:$0xf]
      %v462 = vld [vmem:[%s4 + $0x204] sm:$0xf]
      %v463 = vld [vmem:[%s4 + $0x208] sm:$0xf]
      %v464 = vld [vmem:[%s4 + $0x20c] sm:$0xf]
      %v465 = vld [vmem:[%s4 + $0x210] sm:$0xf]
      %v466 = vld [vmem:[%s4 + $0x214] sm:$0xf]
      %v467 = vld [vmem:[%s4 + $0x218] sm:$0xf]
      %v468 = vld [vmem:[%s4 + $0x21c] sm:$0xf]
      %v469 = vld [vmem:[%s4 + $0x220] sm:$0xf]
      %v470 = vld [vmem:[%s4 + $0x224] sm:$0xf]
      %v471 = vld [vmem:[%s4 + $0x228] sm:$0xf]
      %v472 = vld [vmem:[%s4 + $0x22c] sm:$0xf]
      %v473 = vld [vmem:[%s4 + $0x230] sm:$0xf]
      %v474 = vld [vmem:[%s4 + $0x234] sm:$0xf]
      %v475 = vld [vmem:[%s4 + $0x238] sm:$0xf]
      %v476 = vld [vmem:[%s4 + $0x23c] sm:$0xf]
      %v477 = vld [vmem:[%s4 + $0x240] sm:$0xf]
      %v478 = vld [vmem:[%s4 + $0x244] sm:$0xf]
      %v479 = vld [vmem:[%s4 + $0x248] sm:$0xf]
      %v480 = vld [vmem:[%s4 + $0x24c] sm:$0xf]
      %v481 = vld [vmem:[%s4 + $0x250] sm:$0xf]
      %v482 = vld [vmem:[%s4 + $0x254] sm:$0xf]
      %v483 = vld [vmem:[%s4 + $0x258] sm:$0xf]
      %v484 = vld [vmem:[%s4 + $0x25c] sm:$0xf]
      %v485 = vld [vmem:[%s4 + $0x260] sm:$0xf]
      %v486 = vld [vmem:[%s4 + $0x264] sm:$0xf]
      %v487 = vld [vmem:[%s4 + $0x268] sm:$0xf]
      %v488 = vld [vmem:[%s4 + $0x26c] sm:$0xf]
      %v489 = vld [vmem:[%s4 + $0x270] sm:$0xf]
      %v490 = vld [vmem:[%s4 + $0x274] sm:$0xf]
      %v491 = vld [vmem:[%s4 + $0x278] sm:$0xf]
      %v492 = vld [vmem:[%s4 + $0x27c] sm:$0xf]
      %v493 = vld [vmem:[%s4 + $0x280] sm:$0xf]
      %v494 = vld [vmem:[%s4 + $0x284] sm:$0xf]
      %v495 = vld [vmem:[%s4 + $0x288] sm:$0xf]
      %v496 = vld [vmem:[%s4 + $0x28c] sm:$0xf]
      %v497 = vld [vmem:[%s4 + $0x290] sm:$0xf]
      %v498 = vld [vmem:[%s4 + $0x294] sm:$0xf]
      %v499 = vld [vmem:[%s4 + $0x298] sm:$0xf]
      %v500 = vld [vmem:[%s4 + $0x29c] sm:$0xf]
      %v501 = vld [vmem:[%s4 + $0x2a0] sm:$0xf]
      %v502 = vld [vmem:[%s4 + $0x2a4] sm:$0xf]
      %v503 = vld [vmem:[%s4 + $0x2a8] sm:$0xf]
      %v504 = vld [vmem:[%s4 + $0x2ac] sm:$0xf]
      %v505 = vld [vmem:[%s4 + $0x2b0] sm:$0xf]
      %v506 = vld [vmem:[%s4 + $0x2b4] sm:$0xf]
      %v507 = vld [vmem:[%s4 + $0x2b8] sm:$0xf]
      %v508 = vld [vmem:[%s4 + $0x2bc] sm:$0xf]
      %v509 = vld [vmem:[%s4 + $0x2c0] sm:$0xf]
      %v510 = vld [vmem:[%s4 + $0x2c4] sm:$0xf]
      %v511 = vld [vmem:[%s4 + $0x2c8] sm:$0xf]
      %v512 = vld [vmem:[%s4 + $0x2cc] sm:$0xf]
      %v513 = vld [vmem:[%s4 + $0x2d0] sm:$0xf]
      %v514 = vld [vmem:[%s4 + $0x2d4] sm:$0xf]
      %v515 = vld [vmem:[%s4 + $0x2d8] sm:$0xf]
      %v516 = vld [vmem:[%s4 + $0x2dc] sm:$0xf]
      %v517 = vld [vmem:[%s4 + $0x2e0] sm:$0xf]
      %v518 = vld [vmem:[%s4 + $0x2e4] sm:$0xf]
      %v519 = vld [vmem:[%s4 + $0x2e8] sm:$0xf]
      %v520 = vld [vmem:[%s4 + $0x2ec] sm:$0xf]
      %v521 = vld [vmem:[%s4 + $0x2f0] sm:$0xf]
      %v522 = vld [vmem:[%s4 + $0x2f4] sm:$0xf]
      %v523 = vld [vmem:[%s4 + $0x2f8] sm:$0xf]
      %v524 = vld [vmem:[%s4 + $0x2fc] sm:$0xf]
      %v525 = vld [vmem:[%s4 + $0x300] sm:$0xf]
      %v526 = vld [vmem:[%s4 + $0x304] sm:$0xf]
      %v527 = vld [vmem:[%s4 + $0x308] sm:$0xf]
      %v528 = vld [vmem:[%s4 + $0x30c] sm:$0xf]
      %v529 = vld [vmem:[%s4 + $0x310] sm:$0xf]
      %v530 = vld [vmem:[%s4 + $0x314] sm:$0xf]
      %v531 = vld [vmem:[%s4 + $0x318] sm:$0xf]
      %v532 = vld [vmem:[%s4 + $0x31c] sm:$0xf]
      %v533 = vld [vmem:[%s4 + $0x320] sm:$0xf]
      %v534 = vld [vmem:[%s4 + $0x324] sm:$0xf]
      %v535 = vld [vmem:[%s4 + $0x328] sm:$0xf]
      %v536 = vld [vmem:[%s4 + $0x32c] sm:$0xf]
      %v537 = vld [vmem:[%s4 + $0x330] sm:$0xf]
      %v538 = vld [vmem:[%s4 + $0x334] sm:$0xf]
      %v539 = vld [vmem:[%s4 + $0x338] sm:$0xf]
      %v540 = vld [vmem:[%s4 + $0x33c] sm:$0xf]
      %v541 = vld [vmem:[%s4 + $0x340] sm:$0xf]
      %v542 = vld [vmem:[%s4 + $0x344] sm:$0xf]
      %v543 = vld [vmem:[%s4 + $0x348] sm:$0xf]
      %v544 = vld [vmem:[%s4 + $0x34c] sm:$0xf]
      %v545 = vld [vmem:[%s4 + $0x350] sm:$0xf]
      %v546 = vld [vmem:[%s4 + $0x354] sm:$0xf]
      %v547 = vld [vmem:[%s4 + $0x358] sm:$0xf]
      %v548 = vld [vmem:[%s4 + $0x35c] sm:$0xf]
      %v549 = vld [vmem:[%s4 + $0x360] sm:$0xf]
      %v550 = vld [vmem:[%s4 + $0x364] sm:$0xf]
      %v551 = vld [vmem:[%s4 + $0x368] sm:$0xf]
      %v552 = vld [vmem:[%s4 + $0x36c] sm:$0xf]
      %v553 = vld [vmem:[%s4 + $0x370] sm:$0xf]
      %v554 = vld [vmem:[%s4 + $0x374] sm:$0xf]
      %v555 = vld [vmem:[%s4 + $0x378] sm:$0xf]
      %v556 = vld [vmem:[%s4 + $0x37c] sm:$0xf]
      %v557 = vld [vmem:[%s4 + $0x380] sm:$0xf]
      %v558 = vld [vmem:[%s4 + $0x384] sm:$0xf]
      %v559 = vld [vmem:[%s4 + $0x388] sm:$0xf]
      %v560 = vld [vmem:[%s4 + $0x38c] sm:$0xf]
      %v561 = vld [vmem:[%s4 + $0x390] sm:$0xf]
      %v562 = vld [vmem:[%s4 + $0x394] sm:$0xf]
      %v563 = vld [vmem:[%s4 + $0x398] sm:$0xf]
      %v564 = vld [vmem:[%s4 + $0x39c] sm:$0xf]
      %v565 = vld [vmem:[%s4 + $0x3a0] sm:$0xf]
      %v566 = vld [vmem:[%s4 + $0x3a4] sm:$0xf]
      %v567 = vld [vmem:[%s4 + $0x3a8] sm:$0xf]
      %v568 = vld [vmem:[%s4 + $0x3ac] sm:$0xf]
      %v569 = vld [vmem:[%s4 + $0x3b0] sm:$0xf]
      %v570 = vld [vmem:[%s4 + $0x3b4] sm:$0xf]
      %v571 = vld [vmem:[%s4 + $0x3b8] sm:$0xf]
      %v572 = vld [vmem:[%s4 + $0x3bc] sm:$0xf]
      %v573 = vld [vmem:[%s4 + $0x3c0] sm:$0xf]
      %v574 = vld [vmem:[%s4 + $0x3c4] sm:$0xf]
      %v575 = vld [vmem:[%s4 + $0x3c8] sm:$0xf]
      %v576 = vld [vmem:[%s4 + $0x3cc] sm:$0xf]
      %v577 = vld [vmem:[%s4 + $0x3d0] sm:$0xf]
      %v578 = vld [vmem:[%s4 + $0x3d4] sm:$0xf]
      %v579 = vld [vmem:[%s4 + $0x3d8] sm:$0xf]
      %v580 = vld [vmem:[%s4 + $0x3dc] sm:$0xf]
      %v581 = vld [vmem:[%s4 + $0x3e0] sm:$0xf]
      %v582 = vld [vmem:[%s4 + $0x3e4] sm:$0xf]
      %v583 = vld [vmem:[%s4 + $0x3e8] sm:$0xf]
      %v584 = vld [vmem:[%s4 + $0x3ec] sm:$0xf]
      %v585 = vld [vmem:[%s4 + $0x3f0] sm:$0xf]
      %v586 = vld [vmem:[%s4 + $0x3f4] sm:$0xf]
      %v587 = vld [vmem:[%s4 + $0x3f8] sm:$0xf]
      %v588 = vld [vmem:[%s4 + $0x3fc] sm:$0xf]
      %v589 = vld [vmem:[%s4 + $0x400] sm:$0xf]
      %v590 = vld [vmem:[%s4 + $0x404] sm:$0xf]
      %v591 = vld [vmem:[%s4 + $0x408] sm:$0xf]
      %v592 = vld [vmem:[%s4 + $0x40c] sm:$0xf]
      %v593 = vld [vmem:[%s4 + $0x410] sm:$0xf]
      %v594 = vld [vmem:[%s4 + $0x414] sm:$0xf]
      %v595 = vld [vmem:[%s4 + $0x418] sm:$0xf]
      %v596 = vld [vmem:[%s4 + $0x41c] sm:$0xf]
      %v597 = vld [vmem:[%s4 + $0x420] sm:$0xf]
      %v598 = vld [vmem:[%s4 + $0x424] sm:$0xf]
      %v599 = vld [vmem:[%s4 + $0x428] sm:$0xf]
      %v600 = vld [vmem:[%s4 + $0x42c] sm:$0xf]
      %v601 = vld [vmem:[%s4 + $0x430] sm:$0xf]
      %v602 = vld [vmem:[%s4 + $0x434] sm:$0xf]
      %v603 = vld [vmem:[%s4 + $0x438] sm:$0xf]
      %v604 = vld [vmem:[%s4 + $0x43c] sm:$0xf]
      %v605 = vld [vmem:[%s4 + $0x440] sm:$0xf]
      %v606 = vld [vmem:[%s4 + $0x444] sm:$0xf]
      %v607 = vld [vmem:[%s4 + $0x448] sm:$0xf]
      %v608 = vld [vmem:[%s4 + $0x44c] sm:$0xf]
      %v609 = vld [vmem:[%s4 + $0x450] sm:$0xf]
      %v610 = vld [vmem:[%s4 + $0x454] sm:$0xf]
      %v611 = vld [vmem:[%s4 + $0x458] sm:$0xf]
      %v612 = vld [vmem:[%s4 + $0x45c] sm:$0xf]
      %v613 = vld [vmem:[%s4 + $0x460] sm:$0xf]
      %v614 = vld [vmem:[%s4 + $0x464] sm:$0xf]
      %v615 = vld [vmem:[%s4 + $0x468] sm:$0xf]
      %v616 = vld [vmem:[%s4 + $0x46c] sm:$0xf]
      %v617 = vld [vmem:[%s4 + $0x470] sm:$0xf]
      %v618 = vld [vmem:[%s4 + $0x474] sm:$0xf]
      %v619 = vld [vmem:[%s4 + $0x478] sm:$0xf]
      %v620 = vld [vmem:[%s4 + $0x47c] sm:$0xf]
      %v621 = vld [vmem:[%s4 + $0x480] sm:$0xf]
      %v622 = vld [vmem:[%s4 + $0x484] sm:$0xf]
      %v623 = vld [vmem:[%s4 + $0x488] sm:$0xf]
      %v624 = vld [vmem:[%s4 + $0x48c] sm:$0xf]
      %v625 = vld [vmem:[%s4 + $0x490] sm:$0xf]
      %v626 = vld [vmem:[%s4 + $0x494] sm:$0xf]
      %v627 = vld [vmem:[%s4 + $0x498] sm:$0xf]
      %v628 = vld [vmem:[%s4 + $0x49c] sm:$0xf]
      %v629 = vld [vmem:[%s4 + $0x4a0] sm:$0xf]
      %v630 = vld [vmem:[%s4 + $0x4a4] sm:$0xf]
      %v631 = vld [vmem:[%s4 + $0x4a8] sm:$0xf]
      %v632 = vld [vmem:[%s4 + $0x4ac] sm:$0xf]
      %v633 = vld [vmem:[%s4 + $0x4b0] sm:$0xf]
      %v634 = vld [vmem:[%s4 + $0x4b4] sm:$0xf]
      %v635 = vld [vmem:[%s4 + $0x4b8] sm:$0xf]
      %v636 = vld [vmem:[%s4 + $0x4bc] sm:$0xf]
      %v637 = vld [vmem:[%s4 + $0x4c0] sm:$0xf]
      %v638 = vld [vmem:[%s4 + $0x4c4] sm:$0xf]
      %v639 = vld [vmem:[%s4 + $0x4c8] sm:$0xf]
      %v640 = vld [vmem:[%s4 + $0x4cc] sm:$0xf]
      %v641 = vld [vmem:[%s4 + $0x4d0] sm:$0xf]
      %v642 = vld [vmem:[%s4 + $0x4d4] sm:$0xf]
      %v643 = vld [vmem:[%s4 + $0x4d8] sm:$0xf]
      %v644 = vld [vmem:[%s4 + $0x4dc] sm:$0xf]
      %v645 = vld [vmem:[%s4 + $0x4e0] sm:$0xf]
      %v646 = vld [vmem:[%s4 + $0x4e4] sm:$0xf]
      %v647 = vld [vmem:[%s4 + $0x4e8] sm:$0xf]
      %v648 = vld [vmem:[%s4 + $0x4ec] sm:$0xf]
      %v649 = vld [vmem:[%s4 + $0x4f0] sm:$0xf]
      %v650 = vld [vmem:[%s4 + $0x4f4] sm:$0xf]
      %v651 = vld [vmem:[%s4 + $0x4f8] sm:$0xf]
      %v652 = vld [vmem:[%s4 + $0x4fc] sm:$0xf]
      %v653 = vld [vmem:[%s4 + $0x500] sm:$0xf]
      %v654 = vld [vmem:[%s4 + $0x504] sm:$0xf]
      %v655 = vld [vmem:[%s4 + $0x508] sm:$0xf]
      %v656 = vld [vmem:[%s4 + $0x50c] sm:$0xf]
      %v657 = vld [vmem:[%s4 + $0x510] sm:$0xf]
      %v658 = vld [vmem:[%s4 + $0x514] sm:$0xf]
      %v659 = vld [vmem:[%s4 + $0x518] sm:$0xf]
      %v660 = vld [vmem:[%s4 + $0x51c] sm:$0xf]
      %v661 = vld [vmem:[%s4 + $0x520] sm:$0xf]
      %v662 = vld [vmem:[%s4 + $0x524] sm:$0xf]
      %v663 = vld [vmem:[%s4 + $0x528] sm:$0xf]
      %v664 = vld [vmem:[%s4 + $0x52c] sm:$0xf]
      %v665 = vld [vmem:[%s4 + $0x530] sm:$0xf]
      %v666 = vld [vmem:[%s4 + $0x534] sm:$0xf]
      %v667 = vld [vmem:[%s4 + $0x538] sm:$0xf]
      %v668 = vld [vmem:[%s4 + $0x53c] sm:$0xf]
      %v669 = vld [vmem:[%s4 + $0x540] sm:$0xf]
      %v670 = vld [vmem:[%s4 + $0x544] sm:$0xf]
      %v671 = vld [vmem:[%s4 + $0x548] sm:$0xf]
      %v672 = vld [vmem:[%s4 + $0x54c] sm:$0xf]
      %v673 = vld [vmem:[%s4 + $0x550] sm:$0xf]
      %v674 = vld [vmem:[%s4 + $0x554] sm:$0xf]
      %v675 = vld [vmem:[%s4 + $0x558] sm:$0xf]
      %v676 = vld [vmem:[%s4 + $0x55c] sm:$0xf]
      %v677 = vld [vmem:[%s4 + $0x560] sm:$0xf]
      %v678 = vld [vmem:[%s4 + $0x564] sm:$0xf]
      %v679 = vld [vmem:[%s4 + $0x568] sm:$0xf]
      %v680 = vld [vmem:[%s4 + $0x56c] sm:$0xf]
      %v681 = vld [vmem:[%s4 + $0x570] sm:$0xf]
      %v682 = vld [vmem:[%s4 + $0x574] sm:$0xf]
      %v683 = vld [vmem:[%s4 + $0x578] sm:$0xf]
      %v684 = vld [vmem:[%s4 + $0x57c] sm:$0xf]
      %v685 = vld [vmem:[%s4 + $0x580] sm:$0xf]
      %v686 = vld [vmem:[%s4 + $0x584] sm:$0xf]
      %v687 = vld [vmem:[%s4 + $0x588] sm:$0xf]
      %v688 = vld [vmem:[%s4 + $0x58c] sm:$0xf]
      %v689 = vld [vmem:[%s4 + $0x590] sm:$0xf]
      %v690 = vld [vmem:[%s4 + $0x594] sm:$0xf]
      %v691 = vld [vmem:[%s4 + $0x598] sm:$0xf]
      %v692 = vld [vmem:[%s4 + $0x59c] sm:$0xf]
      %v693 = vld [vmem:[%s4 + $0x5a0] sm:$0xf]
      %v694 = vld [vmem:[%s4 + $0x5a4] sm:$0xf]
      %v695 = vld [vmem:[%s4 + $0x5a8] sm:$0xf]
      %v696 = vld [vmem:[%s4 + $0x5ac] sm:$0xf]
      %v697 = vld [vmem:[%s4 + $0x5b0] sm:$0xf]
      %v698 = vld [vmem:[%s4 + $0x5b4] sm:$0xf]
      %v699 = vld [vmem:[%s4 + $0x5b8] sm:$0xf]
      %v700 = vld [vmem:[%s4 + $0x5bc] sm:$0xf]
      %v701 = vld [vmem:[%s4 + $0x5c0] sm:$0xf]
      %v702 = vld [vmem:[%s4 + $0x5c4] sm:$0xf]
      %v703 = vld [vmem:[%s4 + $0x5c8] sm:$0xf]
      %v704 = vld [vmem:[%s4 + $0x5cc] sm:$0xf]
      %v705 = vld [vmem:[%s4 + $0x5d0] sm:$0xf]
      %v706 = vld [vmem:[%s4 + $0x5d4] sm:$0xf]
      %v707 = vld [vmem:[%s4 + $0x5d8] sm:$0xf]
      %v708 = vld [vmem:[%s4 + $0x5dc] sm:$0xf]
      %v709 = vld [vmem:[%s4 + $0x5e0] sm:$0xf]
      %v710 = vld [vmem:[%s4 + $0x5e4] sm:$0xf]
      %v711 = vld [vmem:[%s4 + $0x5e8] sm:$0xf]
      %v712 = vld [vmem:[%s4 + $0x5ec] sm:$0xf]
      %v713 = vld [vmem:[%s4 + $0x5f0] sm:$0xf]
      %v714 = vld [vmem:[%s4 + $0x5f4] sm:$0xf]
      %v715 = vld [vmem:[%s4 + $0x5f8] sm:$0xf]
      %v716 = vld [vmem:[%s4 + $0x5fc] sm:$0xf]
      %v717 = vld [vmem:[%s4 + $0x600] sm:$0xf]
      %v718 = vld [vmem:[%s4 + $0x604] sm:$0xf]
      %v719 = vld [vmem:[%s4 + $0x608] sm:$0xf]
      %v720 = vld [vmem:[%s4 + $0x60c] sm:$0xf]
      %v721 = vld [vmem:[%s4 + $0x610] sm:$0xf]
      %v722 = vld [vmem:[%s4 + $0x614] sm:$0xf]
      %v723 = vld [vmem:[%s4 + $0x618] sm:$0xf]
      %v724 = vld [vmem:[%s4 + $0x61c] sm:$0xf]
      %v725 = vld [vmem:[%s4 + $0x620] sm:$0xf]
      %v726 = vld [vmem:[%s4 + $0x624] sm:$0xf]
      %v727 = vld [vmem:[%s4 + $0x628] sm:$0xf]
      %v728 = vld [vmem:[%s4 + $0x62c] sm:$0xf]
      %v729 = vld [vmem:[%s4 + $0x630] sm:$0xf]
      %v730 = vld [vmem:[%s4 + $0x634] sm:$0xf]
      %v731 = vld [vmem:[%s4 + $0x638] sm:$0xf]
      %v732 = vld [vmem:[%s4 + $0x63c] sm:$0xf]
      %v733 = vld [vmem:[%s304] sm:$0xff]
      %v734 = vld [vmem:[%s304 + $0x8] sm:$0xff]
      %v735 = vld [vmem:[%s304 + $0x10] sm:$0xff]
      %v736 = vld [vmem:[%s304 + $0x18] sm:$0xff]
      %v737 = vld [vmem:[%s304 + $0x20] sm:$0xff]
      %v738 = vld [vmem:[%s304 + $0x28] sm:$0xff]
      %v739 = vld [vmem:[%s304 + $0x30] sm:$0xff]
      %v740 = vld [vmem:[%s304 + $0x38] sm:$0xff]
      %v741 = vld [vmem:[%s304 + $0x40] sm:$0xff]
      %v742 = vld [vmem:[%s304 + $0x48] sm:$0xff]
      %v743 = vld [vmem:[%s304 + $0x50] sm:$0xff]
      %v744 = vld [vmem:[%s304 + $0x58] sm:$0xff]
      %v745 = vld [vmem:[%s304 + $0x60] sm:$0xf]
      %v746 = vld [vmem:[%s304 + $0x64] sm:$0xff]
      %v747 = vld [vmem:[%s304 + $0x6c] sm:$0xff]
      %v748 = vld [vmem:[%s304 + $0x74] sm:$0xff]
      %v749 = vld [vmem:[%s304 + $0x7c] sm:$0xff]
      %v750 = vld [vmem:[%s304 + $0x84] sm:$0xff]
      %v751 = vld [vmem:[%s304 + $0x8c] sm:$0xff]
      %v752 = vld [vmem:[%s304 + $0x94] sm:$0xff]
      %v753 = vld [vmem:[%s304 + $0x9c] sm:$0xff]
      %v754 = vld [vmem:[%s304 + $0xa4] sm:$0xff]
      %v755 = vld [vmem:[%s304 + $0xac] sm:$0xff]
      %v756 = vld [vmem:[%s304 + $0xb4] sm:$0xff]
      %v757 = vld [vmem:[%s304 + $0xbc] sm:$0xff]
      %v758 = vld [vmem:[%s304 + $0xc4] sm:$0xf]
      %v785 = vunpack.c.l.b16 %v733
      %v786 = vunpack.c.h.b16 %v733
      %v787 = vunpack.c.l.b16 %v734
      %v788 = vunpack.c.h.b16 %v734
      %v789 = vunpack.c.l.b16 %v735
      %v790 = vunpack.c.h.b16 %v735
      %v791 = vunpack.c.l.b16 %v736
      %v792 = vunpack.c.h.b16 %v736
      %v793 = vunpack.c.l.b16 %v737
      %v794 = vunpack.c.h.b16 %v737
      %v795 = vunpack.c.l.b16 %v738
      %v796 = vunpack.c.h.b16 %v738
      %v797 = vunpack.c.l.b16 %v739
      %v798 = vunpack.c.h.b16 %v739
      %v799 = vunpack.c.l.b16 %v740
      %v800 = vunpack.c.h.b16 %v740
      %v801 = vunpack.c.l.b16 %v741
      %v802 = vunpack.c.h.b16 %v741
      %v803 = vunpack.c.l.b16 %v742
      %v804 = vunpack.c.h.b16 %v742
      %v805 = vunpack.c.l.b16 %v743
      %v806 = vunpack.c.h.b16 %v743
      %v807 = vunpack.c.l.b16 %v744
      %v808 = vunpack.c.h.b16 %v744
      %v809 = vunpack.c.l.b16 %v745
      %v810 = vunpack.c.l.b16 %v746
      %v811 = vunpack.c.h.b16 %v746
      %v812 = vunpack.c.l.b16 %v747
      %v813 = vunpack.c.h.b16 %v747
      %v814 = vunpack.c.l.b16 %v748
      %v815 = vunpack.c.h.b16 %v748
      %v816 = vunpack.c.l.b16 %v749
      %v817 = vunpack.c.h.b16 %v749
      %v818 = vunpack.c.l.b16 %v750
      %v819 = vunpack.c.h.b16 %v750
      %v820 = vunpack.c.l.b16 %v751
      %v821 = vunpack.c.h.b16 %v751
      %v822 = vunpack.c.l.b16 %v752
      %v823 = vunpack.c.h.b16 %v752
      %v824 = vunpack.c.l.b16 %v753
      %v825 = vunpack.c.h.b16 %v753
      %v826 = vunpack.c.l.b16 %v754
      %v827 = vunpack.c.h.b16 %v754
      %v828 = vunpack.c.l.b16 %v755
      %v829 = vunpack.c.h.b16 %v755
      %v830 = vunpack.c.l.b16 %v756
      %v831 = vunpack.c.h.b16 %v756
      %v832 = vunpack.c.l.b16 %v757
      %v833 = vunpack.c.h.b16 %v757
      %v834 = vunpack.c.l.b16 %v758
      %v835 = vpack.c.b16 %v810, %v785
      %v836 = vpack.c.b16 %v811, %v786
      %v837 = vpack.c.b16 %v812, %v787
      %v838 = vpack.c.b16 %v813, %v788
      %v839 = vpack.c.b16 %v814, %v789
      %v840 = vpack.c.b16 %v815, %v790
      %v841 = vpack.c.b16 %v816, %v791
      %v842 = vpack.c.b16 %v817, %v792
      %v843 = vpack.c.b16 %v818, %v793
      %v844 = vpack.c.b16 %v819, %v794
      %v845 = vpack.c.b16 %v820, %v795
      %v846 = vpack.c.b16 %v821, %v796
      %v847 = vpack.c.b16 %v822, %v797
      %v848 = vpack.c.b16 %v823, %v798
      %v849 = vpack.c.b16 %v824, %v799
      %v850 = vpack.c.b16 %v825, %v800
      %v851 = vpack.c.b16 %v826, %v801
      %v852 = vpack.c.b16 %v827, %v802
      %v853 = vpack.c.b16 %v828, %v803
      %v854 = vpack.c.b16 %v829, %v804
      %v855 = vpack.c.b16 %v830, %v805
      %v856 = vpack.c.b16 %v831, %v806
      %v857 = vpack.c.b16 %v832, %v807
      %v858 = vpack.c.b16 %v833, %v808
      %v859 = vpack.c.b16 %v834, %v809
      %v1285 = vunpack.c.l.b16 %v333
      %v1286 = vunpack.c.l.b16 %v334
      %v1287 = vunpack.c.l.b16 %v335
      %v1288 = vunpack.c.l.b16 %v336
      %v1289 = vunpack.c.l.b16 %v337
      %v1290 = vunpack.c.l.b16 %v338
      %v1291 = vunpack.c.l.b16 %v339
      %v1292 = vunpack.c.l.b16 %v340
      %v1293 = vunpack.c.l.b16 %v341
      %v1294 = vunpack.c.l.b16 %v342
      %v1295 = vunpack.c.l.b16 %v343
      %v1296 = vunpack.c.l.b16 %v344
      %v1297 = vunpack.c.l.b16 %v345
      %v1298 = vunpack.c.l.b16 %v346
      %v1299 = vunpack.c.l.b16 %v347
      %v1300 = vunpack.c.l.b16 %v348
      %v1301 = vunpack.c.l.b16 %v349
      %v1302 = vunpack.c.l.b16 %v350
      %v1303 = vunpack.c.l.b16 %v351
      %v1304 = vunpack.c.l.b16 %v352
      %v1305 = vunpack.c.l.b16 %v353
      %v1306 = vunpack.c.l.b16 %v354
      %v1307 = vunpack.c.l.b16 %v355
      %v1308 = vunpack.c.l.b16 %v356
      %v1309 = vunpack.c.l.b16 %v357
      %v1310 = vunpack.c.l.b16 %v358
      %v1311 = vunpack.c.l.b16 %v359
      %v1312 = vunpack.c.l.b16 %v360
      %v1313 = vunpack.c.l.b16 %v361
      %v1314 = vunpack.c.l.b16 %v362
      %v1315 = vunpack.c.l.b16 %v363
      %v1316 = vunpack.c.l.b16 %v364
      %v1317 = vunpack.c.l.b16 %v365
      %v1318 = vunpack.c.l.b16 %v366
      %v1319 = vunpack.c.l.b16 %v367
      %v1320 = vunpack.c.l.b16 %v368
      %v1321 = vunpack.c.l.b16 %v369
      %v1322 = vunpack.c.l.b16 %v370
      %v1323 = vunpack.c.l.b16 %v371
      %v1324 = vunpack.c.l.b16 %v372
      %v1325 = vunpack.c.l.b16 %v373
      %v1326 = vunpack.c.l.b16 %v374
      %v1327 = vunpack.c.l.b16 %v375
      %v1328 = vunpack.c.l.b16 %v376
      %v1329 = vunpack.c.l.b16 %v377
      %v1330 = vunpack.c.l.b16 %v378
      %v1331 = vunpack.c.l.b16 %v379
      %v1332 = vunpack.c.l.b16 %v380
      %v1333 = vunpack.c.l.b16 %v381
      %v1334 = vunpack.c.l.b16 %v382
      %v1335 = vunpack.c.l.b16 %v383
      %v1336 = vunpack.c.l.b16 %v384
      %v1337 = vunpack.c.l.b16 %v385
      %v1338 = vunpack.c.l.b16 %v386
      %v1339 = vunpack.c.l.b16 %v387
      %v1340 = vunpack.c.l.b16 %v388
      %v1341 = vunpack.c.l.b16 %v389
      %v1342 = vunpack.c.l.b16 %v390
      %v1343 = vunpack.c.l.b16 %v391
      %v1344 = vunpack.c.l.b16 %v392
      %v1345 = vunpack.c.l.b16 %v393
      %v1346 = vunpack.c.l.b16 %v394
      %v1347 = vunpack.c.l.b16 %v395
      %v1348 = vunpack.c.l.b16 %v396
      %v1349 = vunpack.c.l.b16 %v397
      %v1350 = vunpack.c.l.b16 %v398
      %v1351 = vunpack.c.l.b16 %v399
      %v1352 = vunpack.c.l.b16 %v400
      %v1353 = vunpack.c.l.b16 %v401
      %v1354 = vunpack.c.l.b16 %v402
      %v1355 = vunpack.c.l.b16 %v403
      %v1356 = vunpack.c.l.b16 %v404
      %v1357 = vunpack.c.l.b16 %v405
      %v1358 = vunpack.c.l.b16 %v406
      %v1359 = vunpack.c.l.b16 %v407
      %v1360 = vunpack.c.l.b16 %v408
      %v1361 = vunpack.c.l.b16 %v409
      %v1362 = vunpack.c.l.b16 %v410
      %v1363 = vunpack.c.l.b16 %v411
      %v1364 = vunpack.c.l.b16 %v412
      %v1365 = vunpack.c.l.b16 %v413
      %v1366 = vunpack.c.l.b16 %v414
      %v1367 = vunpack.c.l.b16 %v415
      %v1368 = vunpack.c.l.b16 %v416
      %v1369 = vunpack.c.l.b16 %v417
      %v1370 = vunpack.c.l.b16 %v418
      %v1371 = vunpack.c.l.b16 %v419
      %v1372 = vunpack.c.l.b16 %v420
      %v1373 = vunpack.c.l.b16 %v421
      %v1374 = vunpack.c.l.b16 %v422
      %v1375 = vunpack.c.l.b16 %v423
      %v1376 = vunpack.c.l.b16 %v424
      %v1377 = vunpack.c.l.b16 %v425
      %v1378 = vunpack.c.l.b16 %v426
      %v1379 = vunpack.c.l.b16 %v427
      %v1380 = vunpack.c.l.b16 %v428
      %v1381 = vunpack.c.l.b16 %v429
      %v1382 = vunpack.c.l.b16 %v430
      %v1383 = vunpack.c.l.b16 %v431
      %v1384 = vunpack.c.l.b16 %v432
      %v1385 = vunpack.c.l.b16 %v433
      %v1386 = vunpack.c.l.b16 %v434
      %v1387 = vunpack.c.l.b16 %v435
      %v1388 = vunpack.c.l.b16 %v436
      %v1389 = vunpack.c.l.b16 %v437
      %v1390 = vunpack.c.l.b16 %v438
      %v1391 = vunpack.c.l.b16 %v439
      %v1392 = vunpack.c.l.b16 %v440
      %v1393 = vunpack.c.l.b16 %v441
      %v1394 = vunpack.c.l.b16 %v442
      %v1395 = vunpack.c.l.b16 %v443
      %v1396 = vunpack.c.l.b16 %v444
      %v1397 = vunpack.c.l.b16 %v445
      %v1398 = vunpack.c.l.b16 %v446
      %v1399 = vunpack.c.l.b16 %v447
      %v1400 = vunpack.c.l.b16 %v448
      %v1401 = vunpack.c.l.b16 %v449
      %v1402 = vunpack.c.l.b16 %v450
      %v1403 = vunpack.c.l.b16 %v451
      %v1404 = vunpack.c.l.b16 %v452
      %v1405 = vunpack.c.l.b16 %v453
      %v1406 = vunpack.c.l.b16 %v454
      %v1407 = vunpack.c.l.b16 %v455
      %v1408 = vunpack.c.l.b16 %v456
      %v1409 = vunpack.c.l.b16 %v457
      %v1410 = vunpack.c.l.b16 %v458
      %v1411 = vunpack.c.l.b16 %v459
      %v1412 = vunpack.c.l.b16 %v460
      %v1413 = vunpack.c.l.b16 %v461
      %v1414 = vunpack.c.l.b16 %v462
      %v1415 = vunpack.c.l.b16 %v463
      %v1416 = vunpack.c.l.b16 %v464
      %v1417 = vunpack.c.l.b16 %v465
      %v1418 = vunpack.c.l.b16 %v466
      %v1419 = vunpack.c.l.b16 %v467
      %v1420 = vunpack.c.l.b16 %v468
      %v1421 = vunpack.c.l.b16 %v469
      %v1422 = vunpack.c.l.b16 %v470
      %v1423 = vunpack.c.l.b16 %v471
      %v1424 = vunpack.c.l.b16 %v472
      %v1425 = vunpack.c.l.b16 %v473
      %v1426 = vunpack.c.l.b16 %v474
      %v1427 = vunpack.c.l.b16 %v475
      %v1428 = vunpack.c.l.b16 %v476
      %v1429 = vunpack.c.l.b16 %v477
      %v1430 = vunpack.c.l.b16 %v478
      %v1431 = vunpack.c.l.b16 %v479
      %v1432 = vunpack.c.l.b16 %v480
      %v1433 = vunpack.c.l.b16 %v481
      %v1434 = vunpack.c.l.b16 %v482
      %v1435 = vunpack.c.l.b16 %v483
      %v1436 = vunpack.c.l.b16 %v484
      %v1437 = vunpack.c.l.b16 %v485
      %v1438 = vunpack.c.l.b16 %v486
      %v1439 = vunpack.c.l.b16 %v487
      %v1440 = vunpack.c.l.b16 %v488
      %v1441 = vunpack.c.l.b16 %v489
      %v1442 = vunpack.c.l.b16 %v490
      %v1443 = vunpack.c.l.b16 %v491
      %v1444 = vunpack.c.l.b16 %v492
      %v1445 = vunpack.c.l.b16 %v493
      %v1446 = vunpack.c.l.b16 %v494
      %v1447 = vunpack.c.l.b16 %v495
      %v1448 = vunpack.c.l.b16 %v496
      %v1449 = vunpack.c.l.b16 %v497
      %v1450 = vunpack.c.l.b16 %v498
      %v1451 = vunpack.c.l.b16 %v499
      %v1452 = vunpack.c.l.b16 %v500
      %v1453 = vunpack.c.l.b16 %v501
      %v1454 = vunpack.c.l.b16 %v502
      %v1455 = vunpack.c.l.b16 %v503
      %v1456 = vunpack.c.l.b16 %v504
      %v1457 = vunpack.c.l.b16 %v505
      %v1458 = vunpack.c.l.b16 %v506
      %v1459 = vunpack.c.l.b16 %v507
      %v1460 = vunpack.c.l.b16 %v508
      %v1461 = vunpack.c.l.b16 %v509
      %v1462 = vunpack.c.l.b16 %v510
      %v1463 = vunpack.c.l.b16 %v511
      %v1464 = vunpack.c.l.b16 %v512
      %v1465 = vunpack.c.l.b16 %v513
      %v1466 = vunpack.c.l.b16 %v514
      %v1467 = vunpack.c.l.b16 %v515
      %v1468 = vunpack.c.l.b16 %v516
      %v1469 = vunpack.c.l.b16 %v517
      %v1470 = vunpack.c.l.b16 %v518
      %v1471 = vunpack.c.l.b16 %v519
      %v1472 = vunpack.c.l.b16 %v520
      %v1473 = vunpack.c.l.b16 %v521
      %v1474 = vunpack.c.l.b16 %v522
      %v1475 = vunpack.c.l.b16 %v523
      %v1476 = vunpack.c.l.b16 %v524
      %v1477 = vunpack.c.l.b16 %v525
      %v1478 = vunpack.c.l.b16 %v526
      %v1479 = vunpack.c.l.b16 %v527
      %v1480 = vunpack.c.l.b16 %v528
      %v1481 = vunpack.c.l.b16 %v529
      %v1482 = vunpack.c.l.b16 %v530
      %v1483 = vunpack.c.l.b16 %v531
      %v1484 = vunpack.c.l.b16 %v532
      %v1485 = vunpack.c.l.b16 %v533
      %v1486 = vunpack.c.l.b16 %v534
      %v1487 = vunpack.c.l.b16 %v535
      %v1488 = vunpack.c.l.b16 %v536
      %v1489 = vunpack.c.l.b16 %v537
      %v1490 = vunpack.c.l.b16 %v538
      %v1491 = vunpack.c.l.b16 %v539
      %v1492 = vunpack.c.l.b16 %v540
      %v1493 = vunpack.c.l.b16 %v541
      %v1494 = vunpack.c.l.b16 %v542
      %v1495 = vunpack.c.l.b16 %v543
      %v1496 = vunpack.c.l.b16 %v544
      %v1497 = vunpack.c.l.b16 %v545
      %v1498 = vunpack.c.l.b16 %v546
      %v1499 = vunpack.c.l.b16 %v547
      %v1500 = vunpack.c.l.b16 %v548
      %v1501 = vunpack.c.l.b16 %v549
      %v1502 = vunpack.c.l.b16 %v550
      %v1503 = vunpack.c.l.b16 %v551
      %v1504 = vunpack.c.l.b16 %v552
      %v1505 = vunpack.c.l.b16 %v553
      %v1506 = vunpack.c.l.b16 %v554
      %v1507 = vunpack.c.l.b16 %v555
      %v1508 = vunpack.c.l.b16 %v556
      %v1509 = vunpack.c.l.b16 %v557
      %v1510 = vunpack.c.l.b16 %v558
      %v1511 = vunpack.c.l.b16 %v559
      %v1512 = vunpack.c.l.b16 %v560
      %v1513 = vunpack.c.l.b16 %v561
      %v1514 = vunpack.c.l.b16 %v562
      %v1515 = vunpack.c.l.b16 %v563
      %v1516 = vunpack.c.l.b16 %v564
      %v1517 = vunpack.c.l.b16 %v565
      %v1518 = vunpack.c.l.b16 %v566
      %v1519 = vunpack.c.l.b16 %v567
      %v1520 = vunpack.c.l.b16 %v568
      %v1521 = vunpack.c.l.b16 %v569
      %v1522 = vunpack.c.l.b16 %v570
      %v1523 = vunpack.c.l.b16 %v571
      %v1524 = vunpack.c.l.b16 %v572
      %v1525 = vunpack.c.l.b16 %v573
      %v1526 = vunpack.c.l.b16 %v574
      %v1527 = vunpack.c.l.b16 %v575
      %v1528 = vunpack.c.l.b16 %v576
      %v1529 = vunpack.c.l.b16 %v577
      %v1530 = vunpack.c.l.b16 %v578
      %v1531 = vunpack.c.l.b16 %v579
      %v1532 = vunpack.c.l.b16 %v580
      %v1533 = vunpack.c.l.b16 %v581
      %v1534 = vunpack.c.l.b16 %v582
      %v1535 = vunpack.c.l.b16 %v583
      %v1536 = vunpack.c.l.b16 %v584
      %v1537 = vunpack.c.l.b16 %v585
      %v1538 = vunpack.c.l.b16 %v586
      %v1539 = vunpack.c.l.b16 %v587
      %v1540 = vunpack.c.l.b16 %v588
      %v1541 = vunpack.c.l.b16 %v589
      %v1542 = vunpack.c.l.b16 %v590
      %v1543 = vunpack.c.l.b16 %v591
      %v1544 = vunpack.c.l.b16 %v592
      %v1545 = vunpack.c.l.b16 %v593
      %v1546 = vunpack.c.l.b16 %v594
      %v1547 = vunpack.c.l.b16 %v595
      %v1548 = vunpack.c.l.b16 %v596
      %v1549 = vunpack.c.l.b16 %v597
      %v1550 = vunpack.c.l.b16 %v598
      %v1551 = vunpack.c.l.b16 %v599
      %v1552 = vunpack.c.l.b16 %v600
      %v1553 = vunpack.c.l.b16 %v601
      %v1554 = vunpack.c.l.b16 %v602
      %v1555 = vunpack.c.l.b16 %v603
      %v1556 = vunpack.c.l.b16 %v604
      %v1557 = vunpack.c.l.b16 %v605
      %v1558 = vunpack.c.l.b16 %v606
      %v1559 = vunpack.c.l.b16 %v607
      %v1560 = vunpack.c.l.b16 %v608
      %v1561 = vunpack.c.l.b16 %v609
      %v1562 = vunpack.c.l.b16 %v610
      %v1563 = vunpack.c.l.b16 %v611
      %v1564 = vunpack.c.l.b16 %v612
      %v1565 = vunpack.c.l.b16 %v613
      %v1566 = vunpack.c.l.b16 %v614
      %v1567 = vunpack.c.l.b16 %v615
      %v1568 = vunpack.c.l.b16 %v616
      %v1569 = vunpack.c.l.b16 %v617
      %v1570 = vunpack.c.l.b16 %v618
      %v1571 = vunpack.c.l.b16 %v619
      %v1572 = vunpack.c.l.b16 %v620
      %v1573 = vunpack.c.l.b16 %v621
      %v1574 = vunpack.c.l.b16 %v622
      %v1575 = vunpack.c.l.b16 %v623
      %v1576 = vunpack.c.l.b16 %v624
      %v1577 = vunpack.c.l.b16 %v625
      %v1578 = vunpack.c.l.b16 %v626
      %v1579 = vunpack.c.l.b16 %v627
      %v1580 = vunpack.c.l.b16 %v628
      %v1581 = vunpack.c.l.b16 %v629
      %v1582 = vunpack.c.l.b16 %v630
      %v1583 = vunpack.c.l.b16 %v631
      %v1584 = vunpack.c.l.b16 %v632
      %v1585 = vunpack.c.l.b16 %v633
      %v1586 = vunpack.c.l.b16 %v634
      %v1587 = vunpack.c.l.b16 %v635
      %v1588 = vunpack.c.l.b16 %v636
      %v1589 = vunpack.c.l.b16 %v637
      %v1590 = vunpack.c.l.b16 %v638
      %v1591 = vunpack.c.l.b16 %v639
      %v1592 = vunpack.c.l.b16 %v640
      %v1593 = vunpack.c.l.b16 %v641
      %v1594 = vunpack.c.l.b16 %v642
      %v1595 = vunpack.c.l.b16 %v643
      %v1596 = vunpack.c.l.b16 %v644
      %v1597 = vunpack.c.l.b16 %v645
      %v1598 = vunpack.c.l.b16 %v646
      %v1599 = vunpack.c.l.b16 %v647
      %v1600 = vunpack.c.l.b16 %v648
      %v1601 = vunpack.c.l.b16 %v649
      %v1602 = vunpack.c.l.b16 %v650
      %v1603 = vunpack.c.l.b16 %v651
      %v1604 = vunpack.c.l.b16 %v652
      %v1605 = vunpack.c.l.b16 %v653
      %v1606 = vunpack.c.l.b16 %v654
      %v1607 = vunpack.c.l.b16 %v655
      %v1608 = vunpack.c.l.b16 %v656
      %v1609 = vunpack.c.l.b16 %v657
      %v1610 = vunpack.c.l.b16 %v658
      %v1611 = vunpack.c.l.b16 %v659
      %v1612 = vunpack.c.l.b16 %v660
      %v1613 = vunpack.c.l.b16 %v661
      %v1614 = vunpack.c.l.b16 %v662
      %v1615 = vunpack.c.l.b16 %v663
      %v1616 = vunpack.c.l.b16 %v664
      %v1617 = vunpack.c.l.b16 %v665
      %v1618 = vunpack.c.l.b16 %v666
      %v1619 = vunpack.c.l.b16 %v667
      %v1620 = vunpack.c.l.b16 %v668
      %v1621 = vunpack.c.l.b16 %v669
      %v1622 = vunpack.c.l.b16 %v670
      %v1623 = vunpack.c.l.b16 %v671
      %v1624 = vunpack.c.l.b16 %v672
      %v1625 = vunpack.c.l.b16 %v673
      %v1626 = vunpack.c.l.b16 %v674
      %v1627 = vunpack.c.l.b16 %v675
      %v1628 = vunpack.c.l.b16 %v676
      %v1629 = vunpack.c.l.b16 %v677
      %v1630 = vunpack.c.l.b16 %v678
      %v1631 = vunpack.c.l.b16 %v679
      %v1632 = vunpack.c.l.b16 %v680
      %v1633 = vunpack.c.l.b16 %v681
      %v1634 = vunpack.c.l.b16 %v682
      %v1635 = vunpack.c.l.b16 %v683
      %v1636 = vunpack.c.l.b16 %v684
      %v1637 = vunpack.c.l.b16 %v685
      %v1638 = vunpack.c.l.b16 %v686
      %v1639 = vunpack.c.l.b16 %v687
      %v1640 = vunpack.c.l.b16 %v688
      %v1641 = vunpack.c.l.b16 %v689
      %v1642 = vunpack.c.l.b16 %v690
      %v1643 = vunpack.c.l.b16 %v691
      %v1644 = vunpack.c.l.b16 %v692
      %v1645 = vunpack.c.l.b16 %v693
      %v1646 = vunpack.c.l.b16 %v694
      %v1647 = vunpack.c.l.b16 %v695
      %v1648 = vunpack.c.l.b16 %v696
      %v1649 = vunpack.c.l.b16 %v697
      %v1650 = vunpack.c.l.b16 %v698
      %v1651 = vunpack.c.l.b16 %v699
      %v1652 = vunpack.c.l.b16 %v700
      %v1653 = vunpack.c.l.b16 %v701
      %v1654 = vunpack.c.l.b16 %v702
      %v1655 = vunpack.c.l.b16 %v703
      %v1656 = vunpack.c.l.b16 %v704
      %v1657 = vunpack.c.l.b16 %v705
      %v1658 = vunpack.c.l.b16 %v706
      %v1659 = vunpack.c.l.b16 %v707
      %v1660 = vunpack.c.l.b16 %v708
      %v1661 = vunpack.c.l.b16 %v709
      %v1662 = vunpack.c.l.b16 %v710
      %v1663 = vunpack.c.l.b16 %v711
      %v1664 = vunpack.c.l.b16 %v712
      %v1665 = vunpack.c.l.b16 %v713
      %v1666 = vunpack.c.l.b16 %v714
      %v1667 = vunpack.c.l.b16 %v715
      %v1668 = vunpack.c.l.b16 %v716
      %v1669 = vunpack.c.l.b16 %v717
      %v1670 = vunpack.c.l.b16 %v718
      %v1671 = vunpack.c.l.b16 %v719
      %v1672 = vunpack.c.l.b16 %v720
      %v1673 = vunpack.c.l.b16 %v721
      %v1674 = vunpack.c.l.b16 %v722
      %v1675 = vunpack.c.l.b16 %v723
      %v1676 = vunpack.c.l.b16 %v724
      %v1677 = vunpack.c.l.b16 %v725
      %v1678 = vunpack.c.l.b16 %v726
      %v1679 = vunpack.c.l.b16 %v727
      %v1680 = vunpack.c.l.b16 %v728
      %v1681 = vunpack.c.l.b16 %v729
      %v1682 = vunpack.c.l.b16 %v730
      %v1683 = vunpack.c.l.b16 %v731
      %v1684 = vunpack.c.l.b16 %v732
      %v1685 = vpack.c.b16 %v1286, %v1285
      %v1686 = vpack.c.b16 %v1288, %v1287
      %v1687 = vpack.c.b16 %v1290, %v1289
      %v1688 = vpack.c.b16 %v1292, %v1291
      %v1689 = vpack.c.b16 %v1294, %v1293
      %v1690 = vpack.c.b16 %v1296, %v1295
      %v1691 = vpack.c.b16 %v1298, %v1297
      %v1692 = vpack.c.b16 %v1300, %v1299
      %v1693 = vpack.c.b16 %v1302, %v1301
      %v1694 = vpack.c.b16 %v1304, %v1303
      %v1695 = vpack.c.b16 %v1306, %v1305
      %v1696 = vpack.c.b16 %v1308, %v1307
      %v1697 = vpack.c.b16 %v1310, %v1309
      %v1698 = vpack.c.b16 %v1312, %v1311
      %v1699 = vpack.c.b16 %v1314, %v1313
      %v1700 = vpack.c.b16 %v1316, %v1315
      %v1701 = vpack.c.b16 %v1318, %v1317
      %v1702 = vpack.c.b16 %v1320, %v1319
      %v1703 = vpack.c.b16 %v1322, %v1321
      %v1704 = vpack.c.b16 %v1324, %v1323
      %v1705 = vpack.c.b16 %v1326, %v1325
      %v1706 = vpack.c.b16 %v1328, %v1327
      %v1707 = vpack.c.b16 %v1330, %v1329
      %v1708 = vpack.c.b16 %v1332, %v1331
      %v1709 = vpack.c.b16 %v1334, %v1333
      %v1710 = vpack.c.b16 %v1336, %v1335
      %v1711 = vpack.c.b16 %v1338, %v1337
      %v1712 = vpack.c.b16 %v1340, %v1339
      %v1713 = vpack.c.b16 %v1342, %v1341
      %v1714 = vpack.c.b16 %v1344, %v1343
      %v1715 = vpack.c.b16 %v1346, %v1345
      %v1716 = vpack.c.b16 %v1348, %v1347
      %v1717 = vpack.c.b16 %v1350, %v1349
      %v1718 = vpack.c.b16 %v1352, %v1351
      %v1719 = vpack.c.b16 %v1354, %v1353
      %v1720 = vpack.c.b16 %v1356, %v1355
      %v1721 = vpack.c.b16 %v1358, %v1357
      %v1722 = vpack.c.b16 %v1360, %v1359
      %v1723 = vpack.c.b16 %v1362, %v1361
      %v1724 = vpack.c.b16 %v1364, %v1363
      %v1725 = vpack.c.b16 %v1366, %v1365
      %v1726 = vpack.c.b16 %v1368, %v1367
      %v1727 = vpack.c.b16 %v1370, %v1369
      %v1728 = vpack.c.b16 %v1372, %v1371
      %v1729 = vpack.c.b16 %v1374, %v1373
      %v1730 = vpack.c.b16 %v1376, %v1375
      %v1731 = vpack.c.b16 %v1378, %v1377
      %v1732 = vpack.c.b16 %v1380, %v1379
      %v1733 = vpack.c.b16 %v1382, %v1381
      %v1734 = vpack.c.b16 %v1384, %v1383
      %v1735 = vpack.c.b16 %v1386, %v1385
      %v1736 = vpack.c.b16 %v1388, %v1387
      %v1737 = vpack.c.b16 %v1390, %v1389
      %v1738 = vpack.c.b16 %v1392, %v1391
      %v1739 = vpack.c.b16 %v1394, %v1393
      %v1740 = vpack.c.b16 %v1396, %v1395
      %v1741 = vpack.c.b16 %v1398, %v1397
      %v1742 = vpack.c.b16 %v1400, %v1399
      %v1743 = vpack.c.b16 %v1402, %v1401
      %v1744 = vpack.c.b16 %v1404, %v1403
      %v1745 = vpack.c.b16 %v1406, %v1405
      %v1746 = vpack.c.b16 %v1408, %v1407
      %v1747 = vpack.c.b16 %v1410, %v1409
      %v1748 = vpack.c.b16 %v1412, %v1411
      %v1749 = vpack.c.b16 %v1414, %v1413
      %v1750 = vpack.c.b16 %v1416, %v1415
      %v1751 = vpack.c.b16 %v1418, %v1417
      %v1752 = vpack.c.b16 %v1420, %v1419
      %v1753 = vpack.c.b16 %v1422, %v1421
      %v1754 = vpack.c.b16 %v1424, %v1423
      %v1755 = vpack.c.b16 %v1426, %v1425
      %v1756 = vpack.c.b16 %v1428, %v1427
      %v1757 = vpack.c.b16 %v1430, %v1429
      %v1758 = vpack.c.b16 %v1432, %v1431
      %v1759 = vpack.c.b16 %v1434, %v1433
      %v1760 = vpack.c.b16 %v1436, %v1435
      %v1761 = vpack.c.b16 %v1438, %v1437
      %v1762 = vpack.c.b16 %v1440, %v1439
      %v1763 = vpack.c.b16 %v1442, %v1441
      %v1764 = vpack.c.b16 %v1444, %v1443
      %v1765 = vpack.c.b16 %v1446, %v1445
      %v1766 = vpack.c.b16 %v1448, %v1447
      %v1767 = vpack.c.b16 %v1450, %v1449
      %v1768 = vpack.c.b16 %v1452, %v1451
      %v1769 = vpack.c.b16 %v1454, %v1453
      %v1770 = vpack.c.b16 %v1456, %v1455
      %v1771 = vpack.c.b16 %v1458, %v1457
      %v1772 = vpack.c.b16 %v1460, %v1459
      %v1773 = vpack.c.b16 %v1462, %v1461
      %v1774 = vpack.c.b16 %v1464, %v1463
      %v1775 = vpack.c.b16 %v1466, %v1465
      %v1776 = vpack.c.b16 %v1468, %v1467
      %v1777 = vpack.c.b16 %v1470, %v1469
      %v1778 = vpack.c.b16 %v1472, %v1471
      %v1779 = vpack.c.b16 %v1474, %v1473
      %v1780 = vpack.c.b16 %v1476, %v1475
      %v1781 = vpack.c.b16 %v1478, %v1477
      %v1782 = vpack.c.b16 %v1480, %v1479
      %v1783 = vpack.c.b16 %v1482, %v1481
      %v1784 = vpack.c.b16 %v1484, %v1483
      %v1785 = vpack.c.b16 %v1486, %v1485
      %v1786 = vpack.c.b16 %v1488, %v1487
      %v1787 = vpack.c.b16 %v1490, %v1489
      %v1788 = vpack.c.b16 %v1492, %v1491
      %v1789 = vpack.c.b16 %v1494, %v1493
      %v1790 = vpack.c.b16 %v1496, %v1495
      %v1791 = vpack.c.b16 %v1498, %v1497
      %v1792 = vpack.c.b16 %v1500, %v1499
      %v1793 = vpack.c.b16 %v1502, %v1501
      %v1794 = vpack.c.b16 %v1504, %v1503
      %v1795 = vpack.c.b16 %v1506, %v1505
      %v1796 = vpack.c.b16 %v1508, %v1507
      %v1797 = vpack.c.b16 %v1510, %v1509
      %v1798 = vpack.c.b16 %v1512, %v1511
      %v1799 = vpack.c.b16 %v1514, %v1513
      %v1800 = vpack.c.b16 %v1516, %v1515
      %v1801 = vpack.c.b16 %v1518, %v1517
      %v1802 = vpack.c.b16 %v1520, %v1519
      %v1803 = vpack.c.b16 %v1522, %v1521
      %v1804 = vpack.c.b16 %v1524, %v1523
      %v1805 = vpack.c.b16 %v1526, %v1525
      %v1806 = vpack.c.b16 %v1528, %v1527
      %v1807 = vpack.c.b16 %v1530, %v1529
      %v1808 = vpack.c.b16 %v1532, %v1531
      %v1809 = vpack.c.b16 %v1534, %v1533
      %v1810 = vpack.c.b16 %v1536, %v1535
      %v1811 = vpack.c.b16 %v1538, %v1537
      %v1812 = vpack.c.b16 %v1540, %v1539
      %v1813 = vpack.c.b16 %v1542, %v1541
      %v1814 = vpack.c.b16 %v1544, %v1543
      %v1815 = vpack.c.b16 %v1546, %v1545
      %v1816 = vpack.c.b16 %v1548, %v1547
      %v1817 = vpack.c.b16 %v1550, %v1549
      %v1818 = vpack.c.b16 %v1552, %v1551
      %v1819 = vpack.c.b16 %v1554, %v1553
      %v1820 = vpack.c.b16 %v1556, %v1555
      %v1821 = vpack.c.b16 %v1558, %v1557
      %v1822 = vpack.c.b16 %v1560, %v1559
      %v1823 = vpack.c.b16 %v1562, %v1561
      %v1824 = vpack.c.b16 %v1564, %v1563
      %v1825 = vpack.c.b16 %v1566, %v1565
      %v1826 = vpack.c.b16 %v1568, %v1567
      %v1827 = vpack.c.b16 %v1570, %v1569
      %v1828 = vpack.c.b16 %v1572, %v1571
      %v1829 = vpack.c.b16 %v1574, %v1573
      %v1830 = vpack.c.b16 %v1576, %v1575
      %v1831 = vpack.c.b16 %v1578, %v1577
      %v1832 = vpack.c.b16 %v1580, %v1579
      %v1833 = vpack.c.b16 %v1582, %v1581
      %v1834 = vpack.c.b16 %v1584, %v1583
      %v1835 = vpack.c.b16 %v1586, %v1585
      %v1836 = vpack.c.b16 %v1588, %v1587
      %v1837 = vpack.c.b16 %v1590, %v1589
      %v1838 = vpack.c.b16 %v1592, %v1591
      %v1839 = vpack.c.b16 %v1594, %v1593
      %v1840 = vpack.c.b16 %v1596, %v1595
      %v1841 = vpack.c.b16 %v1598, %v1597
      %v1842 = vpack.c.b16 %v1600, %v1599
      %v1843 = vpack.c.b16 %v1602, %v1601
      %v1844 = vpack.c.b16 %v1604, %v1603
      %v1845 = vpack.c.b16 %v1606, %v1605
      %v1846 = vpack.c.b16 %v1608, %v1607
      %v1847 = vpack.c.b16 %v1610, %v1609
      %v1848 = vpack.c.b16 %v1612, %v1611
      %v1849 = vpack.c.b16 %v1614, %v1613
      %v1850 = vpack.c.b16 %v1616, %v1615
      %v1851 = vpack.c.b16 %v1618, %v1617
      %v1852 = vpack.c.b16 %v1620, %v1619
      %v1853 = vpack.c.b16 %v1622, %v1621
      %v1854 = vpack.c.b16 %v1624, %v1623
      %v1855 = vpack.c.b16 %v1626, %v1625
      %v1856 = vpack.c.b16 %v1628, %v1627
      %v1857 = vpack.c.b16 %v1630, %v1629
      %v1858 = vpack.c.b16 %v1632, %v1631
      %v1859 = vpack.c.b16 %v1634, %v1633
      %v1860 = vpack.c.b16 %v1636, %v1635
      %v1861 = vpack.c.b16 %v1638, %v1637
      %v1862 = vpack.c.b16 %v1640, %v1639
      %v1863 = vpack.c.b16 %v1642, %v1641
      %v1864 = vpack.c.b16 %v1644, %v1643
      %v1865 = vpack.c.b16 %v1646, %v1645
      %v1866 = vpack.c.b16 %v1648, %v1647
      %v1867 = vpack.c.b16 %v1650, %v1649
      %v1868 = vpack.c.b16 %v1652, %v1651
      %v1869 = vpack.c.b16 %v1654, %v1653
      %v1870 = vpack.c.b16 %v1656, %v1655
      %v1871 = vpack.c.b16 %v1658, %v1657
      %v1872 = vpack.c.b16 %v1660, %v1659
      %v1873 = vpack.c.b16 %v1662, %v1661
      %v1874 = vpack.c.b16 %v1664, %v1663
      %v1875 = vpack.c.b16 %v1666, %v1665
      %v1876 = vpack.c.b16 %v1668, %v1667
      %v1877 = vpack.c.b16 %v1670, %v1669
      %v1878 = vpack.c.b16 %v1672, %v1671
      %v1879 = vpack.c.b16 %v1674, %v1673
      %v1880 = vpack.c.b16 %v1676, %v1675
      %v1881 = vpack.c.b16 %v1678, %v1677
      %v1882 = vpack.c.b16 %v1680, %v1679
      %v1883 = vpack.c.b16 %v1682, %v1681
      %v1884 = vpack.c.b16 %v1684, %v1683
      %2085 = vmatpush.bf16.msra.mxu0 %v1692
      %2086 = vmatpush.bf16.msra.mxu0 %v1691
      %2087 = vmatpush.bf16.msra.mxu0 %v1690
      %2088 = vmatpush.bf16.msra.mxu0 %v1689
      %2089 = vmatpush.bf16.msra.mxu0 %v1688
      %2090 = vmatpush.bf16.msra.mxu0 %v1687
      %2091 = vmatpush.bf16.msra.mxu0 %v1686
      %2092 = vmatpush.bf16.msra.mxu0 %v1685
      %2093 = vmatmul.bf16.gmra.mxu0 %v835
      %v2094 = vpop.f32.mrf.mxu0
      %v2095 = vadd.f32 0.0, %v2094
      %v2096 = vpop.f32.mrf.mxu0
      %v2097 = vadd.f32 0.0, %v2096
      %2098 = vdwg.mxu0
      %2099 = vmatpush.bf16.msra.mxu0 %v1700
      %2100 = vmatpush.bf16.msra.mxu0 %v1699
      %2101 = vmatpush.bf16.msra.mxu0 %v1698
      %2102 = vmatpush.bf16.msra.mxu0 %v1697
      %2103 = vmatpush.bf16.msra.mxu0 %v1696
      %2104 = vmatpush.bf16.msra.mxu0 %v1695
      %2105 = vmatpush.bf16.msra.mxu0 %v1694
      %2106 = vmatpush.bf16.msra.mxu0 %v1693
      %2107 = vmatmul.bf16.gmra.mxu0 %v836
      %v2108 = vpop.f32.mrf.mxu0
      %v2109 = vadd.f32 %v2095, %v2108
      %v2110 = vpop.f32.mrf.mxu0
      %v2111 = vadd.f32 %v2097, %v2110
      %2112 = vdwg.mxu0
      %2113 = vmatpush.bf16.msra.mxu0 %v1708
      %2114 = vmatpush.bf16.msra.mxu0 %v1707
      %2115 = vmatpush.bf16.msra.mxu0 %v1706
      %2116 = vmatpush.bf16.msra.mxu0 %v1705
      %2117 = vmatpush.bf16.msra.mxu0 %v1704
      %2118 = vmatpush.bf16.msra.mxu0 %v1703
      %2119 = vmatpush.bf16.msra.mxu0 %v1702
      %2120 = vmatpush.bf16.msra.mxu0 %v1701
      %2121 = vmatmul.bf16.gmra.mxu0 %v837
      %v2122 = vpop.f32.mrf.mxu0
      %v2123 = vadd.f32 %v2109, %v2122
      %v2124 = vpop.f32.mrf.mxu0
      %v2125 = vadd.f32 %v2111, %v2124
      %2126 = vdwg.mxu0
      %2127 = vmatpush.bf16.msra.mxu0 %v1716
      %2128 = vmatpush.bf16.msra.mxu0 %v1715
      %2129 = vmatpush.bf16.msra.mxu0 %v1714
      %2130 = vmatpush.bf16.msra.mxu0 %v1713
      %2131 = vmatpush.bf16.msra.mxu0 %v1712
      %2132 = vmatpush.bf16.msra.mxu0 %v1711
      %2133 = vmatpush.bf16.msra.mxu0 %v1710
      %2134 = vmatpush.bf16.msra.mxu0 %v1709
      %2135 = vmatmul.bf16.gmra.mxu0 %v838
      %v2136 = vpop.f32.mrf.mxu0
      %v2137 = vadd.f32 %v2123, %v2136
      %v2138 = vpop.f32.mrf.mxu0
      %v2139 = vadd.f32 %v2125, %v2138
      %2140 = vdwg.mxu0
      %2141 = vmatpush.bf16.msra.mxu0 %v1724
      %2142 = vmatpush.bf16.msra.mxu0 %v1723
      %2143 = vmatpush.bf16.msra.mxu0 %v1722
      %2144 = vmatpush.bf16.msra.mxu0 %v1721
      %2145 = vmatpush.bf16.msra.mxu0 %v1720
      %2146 = vmatpush.bf16.msra.mxu0 %v1719
      %2147 = vmatpush.bf16.msra.mxu0 %v1718
      %2148 = vmatpush.bf16.msra.mxu0 %v1717
      %2149 = vmatmul.bf16.gmra.mxu0 %v839
      %v2150 = vpop.f32.mrf.mxu0
      %v2151 = vadd.f32 %v2137, %v2150
      %v2152 = vpop.f32.mrf.mxu0
      %v2153 = vadd.f32 %v2139, %v2152
      %2154 = vdwg.mxu0
      %2155 = vmatpush.bf16.msra.mxu0 %v1732
      %2156 = vmatpush.bf16.msra.mxu0 %v1731
      %2157 = vmatpush.bf16.msra.mxu0 %v1730
      %2158 = vmatpush.bf16.msra.mxu0 %v1729
      %2159 = vmatpush.bf16.msra.mxu0 %v1728
      %2160 = vmatpush.bf16.msra.mxu0 %v1727
      %2161 = vmatpush.bf16.msra.mxu0 %v1726
      %2162 = vmatpush.bf16.msra.mxu0 %v1725
      %2163 = vmatmul.bf16.gmra.mxu0 %v840
      %v2164 = vpop.f32.mrf.mxu0
      %v2165 = vadd.f32 %v2151, %v2164
      %v2166 = vpop.f32.mrf.mxu0
      %v2167 = vadd.f32 %v2153, %v2166
      %2168 = vdwg.mxu0
      %2169 = vmatpush.bf16.msra.mxu0 %v1740
      %2170 = vmatpush.bf16.msra.mxu0 %v1739
      %2171 = vmatpush.bf16.msra.mxu0 %v1738
      %2172 = vmatpush.bf16.msra.mxu0 %v1737
      %2173 = vmatpush.bf16.msra.mxu0 %v1736
      %2174 = vmatpush.bf16.msra.mxu0 %v1735
      %2175 = vmatpush.bf16.msra.mxu0 %v1734
      %2176 = vmatpush.bf16.msra.mxu0 %v1733
      %2177 = vmatmul.bf16.gmra.mxu0 %v841
      %v2178 = vpop.f32.mrf.mxu0
      %v2179 = vadd.f32 %v2165, %v2178
      %v2180 = vpop.f32.mrf.mxu0
      %v2181 = vadd.f32 %v2167, %v2180
      %2182 = vdwg.mxu0
      %2183 = vmatpush.bf16.msra.mxu0 %v1748
      %2184 = vmatpush.bf16.msra.mxu0 %v1747
      %2185 = vmatpush.bf16.msra.mxu0 %v1746
      %2186 = vmatpush.bf16.msra.mxu0 %v1745
      %2187 = vmatpush.bf16.msra.mxu0 %v1744
      %2188 = vmatpush.bf16.msra.mxu0 %v1743
      %2189 = vmatpush.bf16.msra.mxu0 %v1742
      %2190 = vmatpush.bf16.msra.mxu0 %v1741
      %2191 = vmatmul.bf16.gmra.mxu0 %v842
      %v2192 = vpop.f32.mrf.mxu0
      %v2193 = vadd.f32 %v2179, %v2192
      %v2194 = vpop.f32.mrf.mxu0
      %v2195 = vadd.f32 %v2181, %v2194
      %2196 = vdwg.mxu0
      %2197 = vmatpush.bf16.msra.mxu0 %v1756
      %2198 = vmatpush.bf16.msra.mxu0 %v1755
      %2199 = vmatpush.bf16.msra.mxu0 %v1754
      %2200 = vmatpush.bf16.msra.mxu0 %v1753
      %2201 = vmatpush.bf16.msra.mxu0 %v1752
      %2202 = vmatpush.bf16.msra.mxu0 %v1751
      %2203 = vmatpush.bf16.msra.mxu0 %v1750
      %2204 = vmatpush.bf16.msra.mxu0 %v1749
      %2205 = vmatmul.bf16.gmra.mxu0 %v843
      %v2206 = vpop.f32.mrf.mxu0
      %v2207 = vadd.f32 %v2193, %v2206
      %v2208 = vpop.f32.mrf.mxu0
      %v2209 = vadd.f32 %v2195, %v2208
      %2210 = vdwg.mxu0
      %2211 = vmatpush.bf16.msra.mxu0 %v1764
      %2212 = vmatpush.bf16.msra.mxu0 %v1763
      %2213 = vmatpush.bf16.msra.mxu0 %v1762
      %2214 = vmatpush.bf16.msra.mxu0 %v1761
      %2215 = vmatpush.bf16.msra.mxu0 %v1760
      %2216 = vmatpush.bf16.msra.mxu0 %v1759
      %2217 = vmatpush.bf16.msra.mxu0 %v1758
      %2218 = vmatpush.bf16.msra.mxu0 %v1757
      %2219 = vmatmul.bf16.gmra.mxu0 %v844
      %v2220 = vpop.f32.mrf.mxu0
      %v2221 = vadd.f32 %v2207, %v2220
      %v2222 = vpop.f32.mrf.mxu0
      %v2223 = vadd.f32 %v2209, %v2222
      %2224 = vdwg.mxu0
      %2225 = vmatpush.bf16.msra.mxu0 %v1772
      %2226 = vmatpush.bf16.msra.mxu0 %v1771
      %2227 = vmatpush.bf16.msra.mxu0 %v1770
      %2228 = vmatpush.bf16.msra.mxu0 %v1769
      %2229 = vmatpush.bf16.msra.mxu0 %v1768
      %2230 = vmatpush.bf16.msra.mxu0 %v1767
      %2231 = vmatpush.bf16.msra.mxu0 %v1766
      %2232 = vmatpush.bf16.msra.mxu0 %v1765
      %2233 = vmatmul.bf16.gmra.mxu0 %v845
      %v2234 = vpop.f32.mrf.mxu0
      %v2235 = vadd.f32 %v2221, %v2234
      %v2236 = vpop.f32.mrf.mxu0
      %v2237 = vadd.f32 %v2223, %v2236
      %2238 = vdwg.mxu0
      %2239 = vmatpush.bf16.msra.mxu0 %v1780
      %2240 = vmatpush.bf16.msra.mxu0 %v1779
      %2241 = vmatpush.bf16.msra.mxu0 %v1778
      %2242 = vmatpush.bf16.msra.mxu0 %v1777
      %2243 = vmatpush.bf16.msra.mxu0 %v1776
      %2244 = vmatpush.bf16.msra.mxu0 %v1775
      %2245 = vmatpush.bf16.msra.mxu0 %v1774
      %2246 = vmatpush.bf16.msra.mxu0 %v1773
      %2247 = vmatmul.bf16.gmra.mxu0 %v846
      %v2248 = vpop.f32.mrf.mxu0
      %v2249 = vadd.f32 %v2235, %v2248
      %v2250 = vpop.f32.mrf.mxu0
      %v2251 = vadd.f32 %v2237, %v2250
      %2252 = vdwg.mxu0
      %2253 = vmatpush.bf16.msra.mxu0 %v1788
      %2254 = vmatpush.bf16.msra.mxu0 %v1787
      %2255 = vmatpush.bf16.msra.mxu0 %v1786
      %2256 = vmatpush.bf16.msra.mxu0 %v1785
      %2257 = vmatpush.bf16.msra.mxu0 %v1784
      %2258 = vmatpush.bf16.msra.mxu0 %v1783
      %2259 = vmatpush.bf16.msra.mxu0 %v1782
      %2260 = vmatpush.bf16.msra.mxu0 %v1781
      %2261 = vmatmul.bf16.gmra.mxu0 %v847
      %v2262 = vpop.f32.mrf.mxu0
      %v2263 = vadd.f32 %v2249, %v2262
      %v2264 = vpop.f32.mrf.mxu0
      %v2265 = vadd.f32 %v2251, %v2264
      %2266 = vdwg.mxu0
      %2267 = vmatpush.bf16.msra.mxu0 %v1796
      %2268 = vmatpush.bf16.msra.mxu0 %v1795
      %2269 = vmatpush.bf16.msra.mxu0 %v1794
      %2270 = vmatpush.bf16.msra.mxu0 %v1793
      %2271 = vmatpush.bf16.msra.mxu0 %v1792
      %2272 = vmatpush.bf16.msra.mxu0 %v1791
      %2273 = vmatpush.bf16.msra.mxu0 %v1790
      %2274 = vmatpush.bf16.msra.mxu0 %v1789
      %2275 = vmatmul.bf16.gmra.mxu0 %v848
      %v2276 = vpop.f32.mrf.mxu0
      %v2277 = vadd.f32 %v2263, %v2276
      %v2278 = vpop.f32.mrf.mxu0
      %v2279 = vadd.f32 %v2265, %v2278
      %2280 = vdwg.mxu0
      %2281 = vmatpush.bf16.msra.mxu0 %v1804
      %2282 = vmatpush.bf16.msra.mxu0 %v1803
      %2283 = vmatpush.bf16.msra.mxu0 %v1802
      %2284 = vmatpush.bf16.msra.mxu0 %v1801
      %2285 = vmatpush.bf16.msra.mxu0 %v1800
      %2286 = vmatpush.bf16.msra.mxu0 %v1799
      %2287 = vmatpush.bf16.msra.mxu0 %v1798
      %2288 = vmatpush.bf16.msra.mxu0 %v1797
      %2289 = vmatmul.bf16.gmra.mxu0 %v849
      %v2290 = vpop.f32.mrf.mxu0
      %v2291 = vadd.f32 %v2277, %v2290
      %v2292 = vpop.f32.mrf.mxu0
      %v2293 = vadd.f32 %v2279, %v2292
      %2294 = vdwg.mxu0
      %2295 = vmatpush.bf16.msra.mxu0 %v1812
      %2296 = vmatpush.bf16.msra.mxu0 %v1811
      %2297 = vmatpush.bf16.msra.mxu0 %v1810
      %2298 = vmatpush.bf16.msra.mxu0 %v1809
      %2299 = vmatpush.bf16.msra.mxu0 %v1808
      %2300 = vmatpush.bf16.msra.mxu0 %v1807
      %2301 = vmatpush.bf16.msra.mxu0 %v1806
      %2302 = vmatpush.bf16.msra.mxu0 %v1805
      %2303 = vmatmul.bf16.gmra.mxu0 %v850
      %v2304 = vpop.f32.mrf.mxu0
      %v2305 = vadd.f32 %v2291, %v2304
      %v2306 = vpop.f32.mrf.mxu0
      %v2307 = vadd.f32 %v2293, %v2306
      %2308 = vdwg.mxu0
      %2309 = vmatpush.bf16.msra.mxu0 %v1820
      %2310 = vmatpush.bf16.msra.mxu0 %v1819
      %2311 = vmatpush.bf16.msra.mxu0 %v1818
      %2312 = vmatpush.bf16.msra.mxu0 %v1817
      %2313 = vmatpush.bf16.msra.mxu0 %v1816
      %2314 = vmatpush.bf16.msra.mxu0 %v1815
      %2315 = vmatpush.bf16.msra.mxu0 %v1814
      %2316 = vmatpush.bf16.msra.mxu0 %v1813
      %2317 = vmatmul.bf16.gmra.mxu0 %v851
      %v2318 = vpop.f32.mrf.mxu0
      %v2319 = vadd.f32 %v2305, %v2318
      %v2320 = vpop.f32.mrf.mxu0
      %v2321 = vadd.f32 %v2307, %v2320
      %2322 = vdwg.mxu0
      %2323 = vmatpush.bf16.msra.mxu0 %v1828
      %2324 = vmatpush.bf16.msra.mxu0 %v1827
      %2325 = vmatpush.bf16.msra.mxu0 %v1826
      %2326 = vmatpush.bf16.msra.mxu0 %v1825
      %2327 = vmatpush.bf16.msra.mxu0 %v1824
      %2328 = vmatpush.bf16.msra.mxu0 %v1823
      %2329 = vmatpush.bf16.msra.mxu0 %v1822
      %2330 = vmatpush.bf16.msra.mxu0 %v1821
      %2331 = vmatmul.bf16.gmra.mxu0 %v852
      %v2332 = vpop.f32.mrf.mxu0
      %v2333 = vadd.f32 %v2319, %v2332
      %v2334 = vpop.f32.mrf.mxu0
      %v2335 = vadd.f32 %v2321, %v2334
      %2336 = vdwg.mxu0
      %2337 = vmatpush.bf16.msra.mxu0 %v1836
      %2338 = vmatpush.bf16.msra.mxu0 %v1835
      %2339 = vmatpush.bf16.msra.mxu0 %v1834
      %2340 = vmatpush.bf16.msra.mxu0 %v1833
      %2341 = vmatpush.bf16.msra.mxu0 %v1832
      %2342 = vmatpush.bf16.msra.mxu0 %v1831
      %2343 = vmatpush.bf16.msra.mxu0 %v1830
      %2344 = vmatpush.bf16.msra.mxu0 %v1829
      %2345 = vmatmul.bf16.gmra.mxu0 %v853
      %v2346 = vpop.f32.mrf.mxu0
      %v2347 = vadd.f32 %v2333, %v2346
      %v2348 = vpop.f32.mrf.mxu0
      %v2349 = vadd.f32 %v2335, %v2348
      %2350 = vdwg.mxu0
      %2351 = vmatpush.bf16.msra.mxu0 %v1844
      %2352 = vmatpush.bf16.msra.mxu0 %v1843
      %2353 = vmatpush.bf16.msra.mxu0 %v1842
      %2354 = vmatpush.bf16.msra.mxu0 %v1841
      %2355 = vmatpush.bf16.msra.mxu0 %v1840
      %2356 = vmatpush.bf16.msra.mxu0 %v1839
      %2357 = vmatpush.bf16.msra.mxu0 %v1838
      %2358 = vmatpush.bf16.msra.mxu0 %v1837
      %2359 = vmatmul.bf16.gmra.mxu0 %v854
      %v2360 = vpop.f32.mrf.mxu0
      %v2361 = vadd.f32 %v2347, %v2360
      %v2362 = vpop.f32.mrf.mxu0
      %v2363 = vadd.f32 %v2349, %v2362
      %2364 = vdwg.mxu0
      %2365 = vmatpush.bf16.msra.mxu0 %v1852
      %2366 = vmatpush.bf16.msra.mxu0 %v1851
      %2367 = vmatpush.bf16.msra.mxu0 %v1850
      %2368 = vmatpush.bf16.msra.mxu0 %v1849
      %2369 = vmatpush.bf16.msra.mxu0 %v1848
      %2370 = vmatpush.bf16.msra.mxu0 %v1847
      %2371 = vmatpush.bf16.msra.mxu0 %v1846
      %2372 = vmatpush.bf16.msra.mxu0 %v1845
      %2373 = vmatmul.bf16.gmra.mxu0 %v855
      %v2374 = vpop.f32.mrf.mxu0
      %v2375 = vadd.f32 %v2361, %v2374
      %v2376 = vpop.f32.mrf.mxu0
      %v2377 = vadd.f32 %v2363, %v2376
      %2378 = vdwg.mxu0
      %2379 = vmatpush.bf16.msra.mxu0 %v1860
      %2380 = vmatpush.bf16.msra.mxu0 %v1859
      %2381 = vmatpush.bf16.msra.mxu0 %v1858
      %2382 = vmatpush.bf16.msra.mxu0 %v1857
      %2383 = vmatpush.bf16.msra.mxu0 %v1856
      %2384 = vmatpush.bf16.msra.mxu0 %v1855
      %2385 = vmatpush.bf16.msra.mxu0 %v1854
      %2386 = vmatpush.bf16.msra.mxu0 %v1853
      %2387 = vmatmul.bf16.gmra.mxu0 %v856
      %v2388 = vpop.f32.mrf.mxu0
      %v2389 = vadd.f32 %v2375, %v2388
      %v2390 = vpop.f32.mrf.mxu0
      %v2391 = vadd.f32 %v2377, %v2390
      %2392 = vdwg.mxu0
      %2393 = vmatpush.bf16.msra.mxu0 %v1868
      %2394 = vmatpush.bf16.msra.mxu0 %v1867
      %2395 = vmatpush.bf16.msra.mxu0 %v1866
      %2396 = vmatpush.bf16.msra.mxu0 %v1865
      %2397 = vmatpush.bf16.msra.mxu0 %v1864
      %2398 = vmatpush.bf16.msra.mxu0 %v1863
      %2399 = vmatpush.bf16.msra.mxu0 %v1862
      %2400 = vmatpush.bf16.msra.mxu0 %v1861
      %2401 = vmatmul.bf16.gmra.mxu0 %v857
      %v2402 = vpop.f32.mrf.mxu0
      %v2403 = vadd.f32 %v2389, %v2402
      %v2404 = vpop.f32.mrf.mxu0
      %v2405 = vadd.f32 %v2391, %v2404
      %2406 = vdwg.mxu0
      %2407 = vmatpush.bf16.msra.mxu0 %v1876
      %2408 = vmatpush.bf16.msra.mxu0 %v1875
      %2409 = vmatpush.bf16.msra.mxu0 %v1874
      %2410 = vmatpush.bf16.msra.mxu0 %v1873
      %2411 = vmatpush.bf16.msra.mxu0 %v1872
      %2412 = vmatpush.bf16.msra.mxu0 %v1871
      %2413 = vmatpush.bf16.msra.mxu0 %v1870
      %2414 = vmatpush.bf16.msra.mxu0 %v1869
      %2415 = vmatmul.bf16.gmra.mxu0 %v858
      %v2416 = vpop.f32.mrf.mxu0
      %v2417 = vadd.f32 %v2403, %v2416
      %v2418 = vpop.f32.mrf.mxu0
      %v2419 = vadd.f32 %v2405, %v2418
      %2420 = vdwg.mxu0
      %2421 = vmatpush.bf16.msra.mxu0 %v1884
      %2422 = vmatpush.bf16.msra.mxu0 %v1883
      %2423 = vmatpush.bf16.msra.mxu0 %v1882
      %2424 = vmatpush.bf16.msra.mxu0 %v1881
      %2425 = vmatpush.bf16.msra.mxu0 %v1880
      %2426 = vmatpush.bf16.msra.mxu0 %v1879
      %2427 = vmatpush.bf16.msra.mxu0 %v1878
      %2428 = vmatpush.bf16.msra.mxu0 %v1877
      %2429 = vmatmul.bf16.gmra.mxu0 %v859
      %v2430 = vpop.f32.mrf.mxu0
      %v2431 = vadd.f32 %v2417, %v2430
      %v2432 = vpop.f32.mrf.mxu0
      %v2433 = vadd.f32 %v2419, %v2432
      %2434 = vdwg.mxu0
      %v2435 = vld [vmem:[%s311] sm:$0xff]
      %v2436 = vld [vmem:[%s311 + $0x8] sm:$0xff]
      %v2437 = vld [vmem:[%s311 + $0x10] sm:$0xff]
      %v2438 = vld [vmem:[%s311 + $0x18] sm:$0xff]
      %v2439 = vld [vmem:[%s311 + $0x20] sm:$0xff]
      %v2440 = vld [vmem:[%s311 + $0x28] sm:$0xff]
      %v2441 = vld [vmem:[%s311 + $0x30] sm:$0xff]
      %v2442 = vld [vmem:[%s311 + $0x38] sm:$0xff]
      %v2443 = vld [vmem:[%s311 + $0x40] sm:$0xff]
      %v2444 = vld [vmem:[%s311 + $0x48] sm:$0xff]
      %v2445 = vld [vmem:[%s311 + $0x50] sm:$0xff]
      %v2446 = vld [vmem:[%s311 + $0x58] sm:$0xff]
      %v2447 = vld [vmem:[%s311 + $0x60] sm:$0xf]
      %v2448 = vld [vmem:[%s311 + $0x64] sm:$0xff]
      %v2449 = vld [vmem:[%s311 + $0x6c] sm:$0xff]
      %v2450 = vld [vmem:[%s311 + $0x74] sm:$0xff]
      %v2451 = vld [vmem:[%s311 + $0x7c] sm:$0xff]
      %v2452 = vld [vmem:[%s311 + $0x84] sm:$0xff]
      %v2453 = vld [vmem:[%s311 + $0x8c] sm:$0xff]
      %v2454 = vld [vmem:[%s311 + $0x94] sm:$0xff]
      %v2455 = vld [vmem:[%s311 + $0x9c] sm:$0xff]
      %v2456 = vld [vmem:[%s311 + $0xa4] sm:$0xff]
      %v2457 = vld [vmem:[%s311 + $0xac] sm:$0xff]
      %v2458 = vld [vmem:[%s311 + $0xb4] sm:$0xff]
      %v2459 = vld [vmem:[%s311 + $0xbc] sm:$0xff]
      %v2460 = vld [vmem:[%s311 + $0xc4] sm:$0xf]
      %v2487 = vunpack.c.l.b16 %v2435
      %v2488 = vunpack.c.h.b16 %v2435
      %v2489 = vunpack.c.l.b16 %v2436
      %v2490 = vunpack.c.h.b16 %v2436
      %v2491 = vunpack.c.l.b16 %v2437
      %v2492 = vunpack.c.h.b16 %v2437
      %v2493 = vunpack.c.l.b16 %v2438
      %v2494 = vunpack.c.h.b16 %v2438
      %v2495 = vunpack.c.l.b16 %v2439
      %v2496 = vunpack.c.h.b16 %v2439
      %v2497 = vunpack.c.l.b16 %v2440
      %v2498 = vunpack.c.h.b16 %v2440
      %v2499 = vunpack.c.l.b16 %v2441
      %v2500 = vunpack.c.h.b16 %v2441
      %v2501 = vunpack.c.l.b16 %v2442
      %v2502 = vunpack.c.h.b16 %v2442
      %v2503 = vunpack.c.l.b16 %v2443
      %v2504 = vunpack.c.h.b16 %v2443
      %v2505 = vunpack.c.l.b16 %v2444
      %v2506 = vunpack.c.h.b16 %v2444
      %v2507 = vunpack.c.l.b16 %v2445
      %v2508 = vunpack.c.h.b16 %v2445
      %v2509 = vunpack.c.l.b16 %v2446
      %v2510 = vunpack.c.h.b16 %v2446
      %v2511 = vunpack.c.l.b16 %v2447
      %v2512 = vunpack.c.l.b16 %v2448
      %v2513 = vunpack.c.h.b16 %v2448
      %v2514 = vunpack.c.l.b16 %v2449
      %v2515 = vunpack.c.h.b16 %v2449
      %v2516 = vunpack.c.l.b16 %v2450
      %v2517 = vunpack.c.h.b16 %v2450
      %v2518 = vunpack.c.l.b16 %v2451
      %v2519 = vunpack.c.h.b16 %v2451
      %v2520 = vunpack.c.l.b16 %v2452
      %v2521 = vunpack.c.h.b16 %v2452
      %v2522 = vunpack.c.l.b16 %v2453
      %v2523 = vunpack.c.h.b16 %v2453
      %v2524 = vunpack.c.l.b16 %v2454
      %v2525 = vunpack.c.h.b16 %v2454
      %v2526 = vunpack.c.l.b16 %v2455
      %v2527 = vunpack.c.h.b16 %v2455
      %v2528 = vunpack.c.l.b16 %v2456
      %v2529 = vunpack.c.h.b16 %v2456
      %v2530 = vunpack.c.l.b16 %v2457
      %v2531 = vunpack.c.h.b16 %v2457
      %v2532 = vunpack.c.l.b16 %v2458
      %v2533 = vunpack.c.h.b16 %v2458
      %v2534 = vunpack.c.l.b16 %v2459
      %v2535 = vunpack.c.h.b16 %v2459
      %v2536 = vunpack.c.l.b16 %v2460
      %v2537 = vpack.c.b16 %v2512, %v2487
      %v2538 = vpack.c.b16 %v2513, %v2488
      %v2539 = vpack.c.b16 %v2514, %v2489
      %v2540 = vpack.c.b16 %v2515, %v2490
      %v2541 = vpack.c.b16 %v2516, %v2491
      %v2542 = vpack.c.b16 %v2517, %v2492
      %v2543 = vpack.c.b16 %v2518, %v2493
      %v2544 = vpack.c.b16 %v2519, %v2494
      %v2545 = vpack.c.b16 %v2520, %v2495
      %v2546 = vpack.c.b16 %v2521, %v2496
      %v2547 = vpack.c.b16 %v2522, %v2497
      %v2548 = vpack.c.b16 %v2523, %v2498
      %v2549 = vpack.c.b16 %v2524, %v2499
      %v2550 = vpack.c.b16 %v2525, %v2500
      %v2551 = vpack.c.b16 %v2526, %v2501
      %v2552 = vpack.c.b16 %v2527, %v2502
      %v2553 = vpack.c.b16 %v2528, %v2503
      %v2554 = vpack.c.b16 %v2529, %v2504
      %v2555 = vpack.c.b16 %v2530, %v2505
      %v2556 = vpack.c.b16 %v2531, %v2506
      %v2557 = vpack.c.b16 %v2532, %v2507
      %v2558 = vpack.c.b16 %v2533, %v2508
      %v2559 = vpack.c.b16 %v2534, %v2509
      %v2560 = vpack.c.b16 %v2535, %v2510
      %v2561 = vpack.c.b16 %v2536, %v2511
      %2587 = vmatpush.bf16.msra.mxu0 %v1692
      %2588 = vmatpush.bf16.msra.mxu0 %v1691
      %2589 = vmatpush.bf16.msra.mxu0 %v1690
      %2590 = vmatpush.bf16.msra.mxu0 %v1689
      %2591 = vmatpush.bf16.msra.mxu0 %v1688
      %2592 = vmatpush.bf16.msra.mxu0 %v1687
      %2593 = vmatpush.bf16.msra.mxu0 %v1686
      %2594 = vmatpush.bf16.msra.mxu0 %v1685
      %2595 = vmatmul.bf16.gmra.mxu0 %v2537
      %v2596 = vpop.f32.mrf.mxu0
      %v2597 = vadd.f32 0.0, %v2596
      %v2598 = vpop.f32.mrf.mxu0
      %v2599 = vadd.f32 0.0, %v2598
      %2600 = vdwg.mxu0
      %2601 = vmatpush.bf16.msra.mxu0 %v1700
      %2602 = vmatpush.bf16.msra.mxu0 %v1699
      %2603 = vmatpush.bf16.msra.mxu0 %v1698
      %2604 = vmatpush.bf16.msra.mxu0 %v1697
      %2605 = vmatpush.bf16.msra.mxu0 %v1696
      %2606 = vmatpush.bf16.msra.mxu0 %v1695
      %2607 = vmatpush.bf16.msra.mxu0 %v1694
      %2608 = vmatpush.bf16.msra.mxu0 %v1693
      %2609 = vmatmul.bf16.gmra.mxu0 %v2538
      %v2610 = vpop.f32.mrf.mxu0
      %v2611 = vadd.f32 %v2597, %v2610
      %v2612 = vpop.f32.mrf.mxu0
      %v2613 = vadd.f32 %v2599, %v2612
      %2614 = vdwg.mxu0
      %2615 = vmatpush.bf16.msra.mxu0 %v1708
      %2616 = vmatpush.bf16.msra.mxu0 %v1707
      %2617 = vmatpush.bf16.msra.mxu0 %v1706
      %2618 = vmatpush.bf16.msra.mxu0 %v1705
      %2619 = vmatpush.bf16.msra.mxu0 %v1704
      %2620 = vmatpush.bf16.msra.mxu0 %v1703
      %2621 = vmatpush.bf16.msra.mxu0 %v1702
      %2622 = vmatpush.bf16.msra.mxu0 %v1701
      %2623 = vmatmul.bf16.gmra.mxu0 %v2539
      %v2624 = vpop.f32.mrf.mxu0
      %v2625 = vadd.f32 %v2611, %v2624
      %v2626 = vpop.f32.mrf.mxu0
      %v2627 = vadd.f32 %v2613, %v2626
      %2628 = vdwg.mxu0
      %2629 = vmatpush.bf16.msra.mxu0 %v1716
      %2630 = vmatpush.bf16.msra.mxu0 %v1715
      %2631 = vmatpush.bf16.msra.mxu0 %v1714
      %2632 = vmatpush.bf16.msra.mxu0 %v1713
      %2633 = vmatpush.bf16.msra.mxu0 %v1712
      %2634 = vmatpush.bf16.msra.mxu0 %v1711
      %2635 = vmatpush.bf16.msra.mxu0 %v1710
      %2636 = vmatpush.bf16.msra.mxu0 %v1709
      %2637 = vmatmul.bf16.gmra.mxu0 %v2540
      %v2638 = vpop.f32.mrf.mxu0
      %v2639 = vadd.f32 %v2625, %v2638
      %v2640 = vpop.f32.mrf.mxu0
      %v2641 = vadd.f32 %v2627, %v2640
      %2642 = vdwg.mxu0
      %2643 = vmatpush.bf16.msra.mxu0 %v1724
      %2644 = vmatpush.bf16.msra.mxu0 %v1723
      %2645 = vmatpush.bf16.msra.mxu0 %v1722
      %2646 = vmatpush.bf16.msra.mxu0 %v1721
      %2647 = vmatpush.bf16.msra.mxu0 %v1720
      %2648 = vmatpush.bf16.msra.mxu0 %v1719
      %2649 = vmatpush.bf16.msra.mxu0 %v1718
      %2650 = vmatpush.bf16.msra.mxu0 %v1717
      %2651 = vmatmul.bf16.gmra.mxu0 %v2541
      %v2652 = vpop.f32.mrf.mxu0
      %v2653 = vadd.f32 %v2639, %v2652
      %v2654 = vpop.f32.mrf.mxu0
      %v2655 = vadd.f32 %v2641, %v2654
      %2656 = vdwg.mxu0
      %2657 = vmatpush.bf16.msra.mxu0 %v1732
      %2658 = vmatpush.bf16.msra.mxu0 %v1731
      %2659 = vmatpush.bf16.msra.mxu0 %v1730
      %2660 = vmatpush.bf16.msra.mxu0 %v1729
      %2661 = vmatpush.bf16.msra.mxu0 %v1728
      %2662 = vmatpush.bf16.msra.mxu0 %v1727
      %2663 = vmatpush.bf16.msra.mxu0 %v1726
      %2664 = vmatpush.bf16.msra.mxu0 %v1725
      %2665 = vmatmul.bf16.gmra.mxu0 %v2542
      %v2666 = vpop.f32.mrf.mxu0
      %v2667 = vadd.f32 %v2653, %v2666
      %v2668 = vpop.f32.mrf.mxu0
      %v2669 = vadd.f32 %v2655, %v2668
      %2670 = vdwg.mxu0
      %2671 = vmatpush.bf16.msra.mxu0 %v1740
      %2672 = vmatpush.bf16.msra.mxu0 %v1739
      %2673 = vmatpush.bf16.msra.mxu0 %v1738
      %2674 = vmatpush.bf16.msra.mxu0 %v1737
      %2675 = vmatpush.bf16.msra.mxu0 %v1736
      %2676 = vmatpush.bf16.msra.mxu0 %v1735
      %2677 = vmatpush.bf16.msra.mxu0 %v1734
      %2678 = vmatpush.bf16.msra.mxu0 %v1733
      %2679 = vmatmul.bf16.gmra.mxu0 %v2543
      %v2680 = vpop.f32.mrf.mxu0
      %v2681 = vadd.f32 %v2667, %v2680
      %v2682 = vpop.f32.mrf.mxu0
      %v2683 = vadd.f32 %v2669, %v2682
      %2684 = vdwg.mxu0
      %2685 = vmatpush.bf16.msra.mxu0 %v1748
      %2686 = vmatpush.bf16.msra.mxu0 %v1747
      %2687 = vmatpush.bf16.msra.mxu0 %v1746
      %2688 = vmatpush.bf16.msra.mxu0 %v1745
      %2689 = vmatpush.bf16.msra.mxu0 %v1744
      %2690 = vmatpush.bf16.msra.mxu0 %v1743
      %2691 = vmatpush.bf16.msra.mxu0 %v1742
      %2692 = vmatpush.bf16.msra.mxu0 %v1741
      %2693 = vmatmul.bf16.gmra.mxu0 %v2544
      %v2694 = vpop.f32.mrf.mxu0
      %v2695 = vadd.f32 %v2681, %v2694
      %v2696 = vpop.f32.mrf.mxu0
      %v2697 = vadd.f32 %v2683, %v2696
      %2698 = vdwg.mxu0
      %2699 = vmatpush.bf16.msra.mxu0 %v1756
      %2700 = vmatpush.bf16.msra.mxu0 %v1755
      %2701 = vmatpush.bf16.msra.mxu0 %v1754
      %2702 = vmatpush.bf16.msra.mxu0 %v1753
      %2703 = vmatpush.bf16.msra.mxu0 %v1752
      %2704 = vmatpush.bf16.msra.mxu0 %v1751
      %2705 = vmatpush.bf16.msra.mxu0 %v1750
      %2706 = vmatpush.bf16.msra.mxu0 %v1749
      %2707 = vmatmul.bf16.gmra.mxu0 %v2545
      %v2708 = vpop.f32.mrf.mxu0
      %v2709 = vadd.f32 %v2695, %v2708
      %v2710 = vpop.f32.mrf.mxu0
      %v2711 = vadd.f32 %v2697, %v2710
      %2712 = vdwg.mxu0
      %2713 = vmatpush.bf16.msra.mxu0 %v1764
      %2714 = vmatpush.bf16.msra.mxu0 %v1763
      %2715 = vmatpush.bf16.msra.mxu0 %v1762
      %2716 = vmatpush.bf16.msra.mxu0 %v1761
      %2717 = vmatpush.bf16.msra.mxu0 %v1760
      %2718 = vmatpush.bf16.msra.mxu0 %v1759
      %2719 = vmatpush.bf16.msra.mxu0 %v1758
      %2720 = vmatpush.bf16.msra.mxu0 %v1757
      %2721 = vmatmul.bf16.gmra.mxu0 %v2546
      %v2722 = vpop.f32.mrf.mxu0
      %v2723 = vadd.f32 %v2709, %v2722
      %v2724 = vpop.f32.mrf.mxu0
      %v2725 = vadd.f32 %v2711, %v2724
      %2726 = vdwg.mxu0
      %2727 = vmatpush.bf16.msra.mxu0 %v1772
      %2728 = vmatpush.bf16.msra.mxu0 %v1771
      %2729 = vmatpush.bf16.msra.mxu0 %v1770
      %2730 = vmatpush.bf16.msra.mxu0 %v1769
      %2731 = vmatpush.bf16.msra.mxu0 %v1768
      %2732 = vmatpush.bf16.msra.mxu0 %v1767
      %2733 = vmatpush.bf16.msra.mxu0 %v1766
      %2734 = vmatpush.bf16.msra.mxu0 %v1765
      %2735 = vmatmul.bf16.gmra.mxu0 %v2547
      %v2736 = vpop.f32.mrf.mxu0
      %v2737 = vadd.f32 %v2723, %v2736
      %v2738 = vpop.f32.mrf.mxu0
      %v2739 = vadd.f32 %v2725, %v2738
      %2740 = vdwg.mxu0
      %2741 = vmatpush.bf16.msra.mxu0 %v1780
      %2742 = vmatpush.bf16.msra.mxu0 %v1779
      %2743 = vmatpush.bf16.msra.mxu0 %v1778
      %2744 = vmatpush.bf16.msra.mxu0 %v1777
      %2745 = vmatpush.bf16.msra.mxu0 %v1776
      %2746 = vmatpush.bf16.msra.mxu0 %v1775
      %2747 = vmatpush.bf16.msra.mxu0 %v1774
      %2748 = vmatpush.bf16.msra.mxu0 %v1773
      %2749 = vmatmul.bf16.gmra.mxu0 %v2548
      %v2750 = vpop.f32.mrf.mxu0
      %v2751 = vadd.f32 %v2737, %v2750
      %v2752 = vpop.f32.mrf.mxu0
      %v2753 = vadd.f32 %v2739, %v2752
      %2754 = vdwg.mxu0
      %2755 = vmatpush.bf16.msra.mxu0 %v1788
      %2756 = vmatpush.bf16.msra.mxu0 %v1787
      %2757 = vmatpush.bf16.msra.mxu0 %v1786
      %2758 = vmatpush.bf16.msra.mxu0 %v1785
      %2759 = vmatpush.bf16.msra.mxu0 %v1784
      %2760 = vmatpush.bf16.msra.mxu0 %v1783
      %2761 = vmatpush.bf16.msra.mxu0 %v1782
      %2762 = vmatpush.bf16.msra.mxu0 %v1781
      %2763 = vmatmul.bf16.gmra.mxu0 %v2549
      %v2764 = vpop.f32.mrf.mxu0
      %v2765 = vadd.f32 %v2751, %v2764
      %v2766 = vpop.f32.mrf.mxu0
      %v2767 = vadd.f32 %v2753, %v2766
      %2768 = vdwg.mxu0
      %2769 = vmatpush.bf16.msra.mxu0 %v1796
      %2770 = vmatpush.bf16.msra.mxu0 %v1795
      %2771 = vmatpush.bf16.msra.mxu0 %v1794
      %2772 = vmatpush.bf16.msra.mxu0 %v1793
      %2773 = vmatpush.bf16.msra.mxu0 %v1792
      %2774 = vmatpush.bf16.msra.mxu0 %v1791
      %2775 = vmatpush.bf16.msra.mxu0 %v1790
      %2776 = vmatpush.bf16.msra.mxu0 %v1789
      %2777 = vmatmul.bf16.gmra.mxu0 %v2550
      %v2778 = vpop.f32.mrf.mxu0
      %v2779 = vadd.f32 %v2765, %v2778
      %v2780 = vpop.f32.mrf.mxu0
      %v2781 = vadd.f32 %v2767, %v2780
      %2782 = vdwg.mxu0
      %2783 = vmatpush.bf16.msra.mxu0 %v1804
      %2784 = vmatpush.bf16.msra.mxu0 %v1803
      %2785 = vmatpush.bf16.msra.mxu0 %v1802
      %2786 = vmatpush.bf16.msra.mxu0 %v1801
      %2787 = vmatpush.bf16.msra.mxu0 %v1800
      %2788 = vmatpush.bf16.msra.mxu0 %v1799
      %2789 = vmatpush.bf16.msra.mxu0 %v1798
      %2790 = vmatpush.bf16.msra.mxu0 %v1797
      %2791 = vmatmul.bf16.gmra.mxu0 %v2551
      %v2792 = vpop.f32.mrf.mxu0
      %v2793 = vadd.f32 %v2779, %v2792
      %v2794 = vpop.f32.mrf.mxu0
      %v2795 = vadd.f32 %v2781, %v2794
      %2796 = vdwg.mxu0
      %2797 = vmatpush.bf16.msra.mxu0 %v1812
      %2798 = vmatpush.bf16.msra.mxu0 %v1811
      %2799 = vmatpush.bf16.msra.mxu0 %v1810
      %2800 = vmatpush.bf16.msra.mxu0 %v1809
      %2801 = vmatpush.bf16.msra.mxu0 %v1808
      %2802 = vmatpush.bf16.msra.mxu0 %v1807
      %2803 = vmatpush.bf16.msra.mxu0 %v1806
      %2804 = vmatpush.bf16.msra.mxu0 %v1805
      %2805 = vmatmul.bf16.gmra.mxu0 %v2552
      %v2806 = vpop.f32.mrf.mxu0
      %v2807 = vadd.f32 %v2793, %v2806
      %v2808 = vpop.f32.mrf.mxu0
      %v2809 = vadd.f32 %v2795, %v2808
      %2810 = vdwg.mxu0
      %2811 = vmatpush.bf16.msra.mxu0 %v1820
      %2812 = vmatpush.bf16.msra.mxu0 %v1819
      %2813 = vmatpush.bf16.msra.mxu0 %v1818
      %2814 = vmatpush.bf16.msra.mxu0 %v1817
      %2815 = vmatpush.bf16.msra.mxu0 %v1816
      %2816 = vmatpush.bf16.msra.mxu0 %v1815
      %2817 = vmatpush.bf16.msra.mxu0 %v1814
      %2818 = vmatpush.bf16.msra.mxu0 %v1813
      %2819 = vmatmul.bf16.gmra.mxu0 %v2553
      %v2820 = vpop.f32.mrf.mxu0
      %v2821 = vadd.f32 %v2807, %v2820
      %v2822 = vpop.f32.mrf.mxu0
      %v2823 = vadd.f32 %v2809, %v2822
      %2824 = vdwg.mxu0
      %2825 = vmatpush.bf16.msra.mxu0 %v1828
      %2826 = vmatpush.bf16.msra.mxu0 %v1827
      %2827 = vmatpush.bf16.msra.mxu0 %v1826
      %2828 = vmatpush.bf16.msra.mxu0 %v1825
      %2829 = vmatpush.bf16.msra.mxu0 %v1824
      %2830 = vmatpush.bf16.msra.mxu0 %v1823
      %2831 = vmatpush.bf16.msra.mxu0 %v1822
      %2832 = vmatpush.bf16.msra.mxu0 %v1821
      %2833 = vmatmul.bf16.gmra.mxu0 %v2554
      %v2834 = vpop.f32.mrf.mxu0
      %v2835 = vadd.f32 %v2821, %v2834
      %v2836 = vpop.f32.mrf.mxu0
      %v2837 = vadd.f32 %v2823, %v2836
      %2838 = vdwg.mxu0
      %2839 = vmatpush.bf16.msra.mxu0 %v1836
      %2840 = vmatpush.bf16.msra.mxu0 %v1835
      %2841 = vmatpush.bf16.msra.mxu0 %v1834
      %2842 = vmatpush.bf16.msra.mxu0 %v1833
      %2843 = vmatpush.bf16.msra.mxu0 %v1832
      %2844 = vmatpush.bf16.msra.mxu0 %v1831
      %2845 = vmatpush.bf16.msra.mxu0 %v1830
      %2846 = vmatpush.bf16.msra.mxu0 %v1829
      %2847 = vmatmul.bf16.gmra.mxu0 %v2555
      %v2848 = vpop.f32.mrf.mxu0
      %v2849 = vadd.f32 %v2835, %v2848
      %v2850 = vpop.f32.mrf.mxu0
      %v2851 = vadd.f32 %v2837, %v2850
      %2852 = vdwg.mxu0
      %2853 = vmatpush.bf16.msra.mxu0 %v1844
      %2854 = vmatpush.bf16.msra.mxu0 %v1843
      %2855 = vmatpush.bf16.msra.mxu0 %v1842
      %2856 = vmatpush.bf16.msra.mxu0 %v1841
      %2857 = vmatpush.bf16.msra.mxu0 %v1840
      %2858 = vmatpush.bf16.msra.mxu0 %v1839
      %2859 = vmatpush.bf16.msra.mxu0 %v1838
      %2860 = vmatpush.bf16.msra.mxu0 %v1837
      %2861 = vmatmul.bf16.gmra.mxu0 %v2556
      %v2862 = vpop.f32.mrf.mxu0
      %v2863 = vadd.f32 %v2849, %v2862
      %v2864 = vpop.f32.mrf.mxu0
      %v2865 = vadd.f32 %v2851, %v2864
      %2866 = vdwg.mxu0
      %2867 = vmatpush.bf16.msra.mxu0 %v1852
      %2868 = vmatpush.bf16.msra.mxu0 %v1851
      %2869 = vmatpush.bf16.msra.mxu0 %v1850
      %2870 = vmatpush.bf16.msra.mxu0 %v1849
      %2871 = vmatpush.bf16.msra.mxu0 %v1848
      %2872 = vmatpush.bf16.msra.mxu0 %v1847
      %2873 = vmatpush.bf16.msra.mxu0 %v1846
      %2874 = vmatpush.bf16.msra.mxu0 %v1845
      %2875 = vmatmul.bf16.gmra.mxu0 %v2557
      %v2876 = vpop.f32.mrf.mxu0
      %v2877 = vadd.f32 %v2863, %v2876
      %v2878 = vpop.f32.mrf.mxu0
      %v2879 = vadd.f32 %v2865, %v2878
      %2880 = vdwg.mxu0
      %2881 = vmatpush.bf16.msra.mxu0 %v1860
      %2882 = vmatpush.bf16.msra.mxu0 %v1859
      %2883 = vmatpush.bf16.msra.mxu0 %v1858
      %2884 = vmatpush.bf16.msra.mxu0 %v1857
      %2885 = vmatpush.bf16.msra.mxu0 %v1856
      %2886 = vmatpush.bf16.msra.mxu0 %v1855
      %2887 = vmatpush.bf16.msra.mxu0 %v1854
      %2888 = vmatpush.bf16.msra.mxu0 %v1853
      %2889 = vmatmul.bf16.gmra.mxu0 %v2558
      %v2890 = vpop.f32.mrf.mxu0
      %v2891 = vadd.f32 %v2877, %v2890
      %v2892 = vpop.f32.mrf.mxu0
      %v2893 = vadd.f32 %v2879, %v2892
      %2894 = vdwg.mxu0
      %2895 = vmatpush.bf16.msra.mxu0 %v1868
      %2896 = vmatpush.bf16.msra.mxu0 %v1867
      %2897 = vmatpush.bf16.msra.mxu0 %v1866
      %2898 = vmatpush.bf16.msra.mxu0 %v1865
      %2899 = vmatpush.bf16.msra.mxu0 %v1864
      %2900 = vmatpush.bf16.msra.mxu0 %v1863
      %2901 = vmatpush.bf16.msra.mxu0 %v1862
      %2902 = vmatpush.bf16.msra.mxu0 %v1861
      %2903 = vmatmul.bf16.gmra.mxu0 %v2559
      %v2904 = vpop.f32.mrf.mxu0
      %v2905 = vadd.f32 %v2891, %v2904
      %v2906 = vpop.f32.mrf.mxu0
      %v2907 = vadd.f32 %v2893, %v2906
      %2908 = vdwg.mxu0
      %2909 = vmatpush.bf16.msra.mxu0 %v1876
      %2910 = vmatpush.bf16.msra.mxu0 %v1875
      %2911 = vmatpush.bf16.msra.mxu0 %v1874
      %2912 = vmatpush.bf16.msra.mxu0 %v1873
      %2913 = vmatpush.bf16.msra.mxu0 %v1872
      %2914 = vmatpush.bf16.msra.mxu0 %v1871
      %2915 = vmatpush.bf16.msra.mxu0 %v1870
      %2916 = vmatpush.bf16.msra.mxu0 %v1869
      %2917 = vmatmul.bf16.gmra.mxu0 %v2560
      %v2918 = vpop.f32.mrf.mxu0
      %v2919 = vadd.f32 %v2905, %v2918
      %v2920 = vpop.f32.mrf.mxu0
      %v2921 = vadd.f32 %v2907, %v2920
      %2922 = vdwg.mxu0
      %2923 = vmatpush.bf16.msra.mxu0 %v1884
      %2924 = vmatpush.bf16.msra.mxu0 %v1883
      %2925 = vmatpush.bf16.msra.mxu0 %v1882
      %2926 = vmatpush.bf16.msra.mxu0 %v1881
      %2927 = vmatpush.bf16.msra.mxu0 %v1880
      %2928 = vmatpush.bf16.msra.mxu0 %v1879
      %2929 = vmatpush.bf16.msra.mxu0 %v1878
      %2930 = vmatpush.bf16.msra.mxu0 %v1877
      %2931 = vmatmul.bf16.gmra.mxu0 %v2561
      %v2932 = vpop.f32.mrf.mxu0
      %v2933 = vadd.f32 %v2919, %v2932
      %v2934 = vpop.f32.mrf.mxu0
      %v2935 = vadd.f32 %v2921, %v2934
      %2936 = vdwg.mxu0
      %v2937 = vld [vmem:[%s318] sm:$0xff]
      %v2938 = vld [vmem:[%s318 + $0x8] sm:$0xff]
      %v2939 = vld [vmem:[%s318 + $0x10] sm:$0xff]
      %v2940 = vld [vmem:[%s318 + $0x18] sm:$0xff]
      %v2941 = vld [vmem:[%s318 + $0x20] sm:$0xff]
      %v2942 = vld [vmem:[%s318 + $0x28] sm:$0xff]
      %v2943 = vld [vmem:[%s318 + $0x30] sm:$0xff]
      %v2944 = vld [vmem:[%s318 + $0x38] sm:$0xff]
      %v2945 = vld [vmem:[%s318 + $0x40] sm:$0xff]
      %v2946 = vld [vmem:[%s318 + $0x48] sm:$0xff]
      %v2947 = vld [vmem:[%s318 + $0x50] sm:$0xff]
      %v2948 = vld [vmem:[%s318 + $0x58] sm:$0xff]
      %v2949 = vld [vmem:[%s318 + $0x60] sm:$0xf]
      %v2950 = vld [vmem:[%s318 + $0x64] sm:$0xff]
      %v2951 = vld [vmem:[%s318 + $0x6c] sm:$0xff]
      %v2952 = vld [vmem:[%s318 + $0x74] sm:$0xff]
      %v2953 = vld [vmem:[%s318 + $0x7c] sm:$0xff]
      %v2954 = vld [vmem:[%s318 + $0x84] sm:$0xff]
      %v2955 = vld [vmem:[%s318 + $0x8c] sm:$0xff]
      %v2956 = vld [vmem:[%s318 + $0x94] sm:$0xff]
      %v2957 = vld [vmem:[%s318 + $0x9c] sm:$0xff]
      %v2958 = vld [vmem:[%s318 + $0xa4] sm:$0xff]
      %v2959 = vld [vmem:[%s318 + $0xac] sm:$0xff]
      %v2960 = vld [vmem:[%s318 + $0xb4] sm:$0xff]
      %v2961 = vld [vmem:[%s318 + $0xbc] sm:$0xff]
      %v2962 = vld [vmem:[%s318 + $0xc4] sm:$0xf]
      %v2989 = vunpack.c.l.b16 %v2937
      %v2990 = vunpack.c.h.b16 %v2937
      %v2991 = vunpack.c.l.b16 %v2938
      %v2992 = vunpack.c.h.b16 %v2938
      %v2993 = vunpack.c.l.b16 %v2939
      %v2994 = vunpack.c.h.b16 %v2939
      %v2995 = vunpack.c.l.b16 %v2940
      %v2996 = vunpack.c.h.b16 %v2940
      %v2997 = vunpack.c.l.b16 %v2941
      %v2998 = vunpack.c.h.b16 %v2941
      %v2999 = vunpack.c.l.b16 %v2942
      %v3000 = vunpack.c.h.b16 %v2942
      %v3001 = vunpack.c.l.b16 %v2943
      %v3002 = vunpack.c.h.b16 %v2943
      %v3003 = vunpack.c.l.b16 %v2944
      %v3004 = vunpack.c.h.b16 %v2944
      %v3005 = vunpack.c.l.b16 %v2945
      %v3006 = vunpack.c.h.b16 %v2945
      %v3007 = vunpack.c.l.b16 %v2946
      %v3008 = vunpack.c.h.b16 %v2946
      %v3009 = vunpack.c.l.b16 %v2947
      %v3010 = vunpack.c.h.b16 %v2947
      %v3011 = vunpack.c.l.b16 %v2948
      %v3012 = vunpack.c.h.b16 %v2948
      %v3013 = vunpack.c.l.b16 %v2949
      %v3014 = vunpack.c.l.b16 %v2950
      %v3015 = vunpack.c.h.b16 %v2950
      %v3016 = vunpack.c.l.b16 %v2951
      %v3017 = vunpack.c.h.b16 %v2951
      %v3018 = vunpack.c.l.b16 %v2952
      %v3019 = vunpack.c.h.b16 %v2952
      %v3020 = vunpack.c.l.b16 %v2953
      %v3021 = vunpack.c.h.b16 %v2953
      %v3022 = vunpack.c.l.b16 %v2954
      %v3023 = vunpack.c.h.b16 %v2954
      %v3024 = vunpack.c.l.b16 %v2955
      %v3025 = vunpack.c.h.b16 %v2955
      %v3026 = vunpack.c.l.b16 %v2956
      %v3027 = vunpack.c.h.b16 %v2956
      %v3028 = vunpack.c.l.b16 %v2957
      %v3029 = vunpack.c.h.b16 %v2957
      %v3030 = vunpack.c.l.b16 %v2958
      %v3031 = vunpack.c.h.b16 %v2958
      %v3032 = vunpack.c.l.b16 %v2959
      %v3033 = vunpack.c.h.b16 %v2959
      %v3034 = vunpack.c.l.b16 %v2960
      %v3035 = vunpack.c.h.b16 %v2960
      %v3036 = vunpack.c.l.b16 %v2961
      %v3037 = vunpack.c.h.b16 %v2961
      %v3038 = vunpack.c.l.b16 %v2962
      %v3039 = vpack.c.b16 %v3014, %v2989
      %v3040 = vpack.c.b16 %v3015, %v2990
      %v3041 = vpack.c.b16 %v3016, %v2991
      %v3042 = vpack.c.b16 %v3017, %v2992
      %v3043 = vpack.c.b16 %v3018, %v2993
      %v3044 = vpack.c.b16 %v3019, %v2994
      %v3045 = vpack.c.b16 %v3020, %v2995
      %v3046 = vpack.c.b16 %v3021, %v2996
      %v3047 = vpack.c.b16 %v3022, %v2997
      %v3048 = vpack.c.b16 %v3023, %v2998
      %v3049 = vpack.c.b16 %v3024, %v2999
      %v3050 = vpack.c.b16 %v3025, %v3000
      %v3051 = vpack.c.b16 %v3026, %v3001
      %v3052 = vpack.c.b16 %v3027, %v3002
      %v3053 = vpack.c.b16 %v3028, %v3003
      %v3054 = vpack.c.b16 %v3029, %v3004
      %v3055 = vpack.c.b16 %v3030, %v3005
      %v3056 = vpack.c.b16 %v3031, %v3006
      %v3057 = vpack.c.b16 %v3032, %v3007
      %v3058 = vpack.c.b16 %v3033, %v3008
      %v3059 = vpack.c.b16 %v3034, %v3009
      %v3060 = vpack.c.b16 %v3035, %v3010
      %v3061 = vpack.c.b16 %v3036, %v3011
      %v3062 = vpack.c.b16 %v3037, %v3012
      %v3063 = vpack.c.b16 %v3038, %v3013
      %3089 = vmatpush.bf16.msra.mxu0 %v1692
      %3090 = vmatpush.bf16.msra.mxu0 %v1691
      %3091 = vmatpush.bf16.msra.mxu0 %v1690
      %3092 = vmatpush.bf16.msra.mxu0 %v1689
      %3093 = vmatpush.bf16.msra.mxu0 %v1688
      %3094 = vmatpush.bf16.msra.mxu0 %v1687
      %3095 = vmatpush.bf16.msra.mxu0 %v1686
      %3096 = vmatpush.bf16.msra.mxu0 %v1685
      %3097 = vmatmul.bf16.gmra.mxu0 %v3039
      %v3098 = vpop.f32.mrf.mxu0
      %v3099 = vadd.f32 0.0, %v3098
      %v3100 = vpop.f32.mrf.mxu0
      %v3101 = vadd.f32 0.0, %v3100
      %3102 = vdwg.mxu0
      %3103 = vmatpush.bf16.msra.mxu0 %v1700
      %3104 = vmatpush.bf16.msra.mxu0 %v1699
      %3105 = vmatpush.bf16.msra.mxu0 %v1698
      %3106 = vmatpush.bf16.msra.mxu0 %v1697
      %3107 = vmatpush.bf16.msra.mxu0 %v1696
      %3108 = vmatpush.bf16.msra.mxu0 %v1695
      %3109 = vmatpush.bf16.msra.mxu0 %v1694
      %3110 = vmatpush.bf16.msra.mxu0 %v1693
      %3111 = vmatmul.bf16.gmra.mxu0 %v3040
      %v3112 = vpop.f32.mrf.mxu0
      %v3113 = vadd.f32 %v3099, %v3112
      %v3114 = vpop.f32.mrf.mxu0
      %v3115 = vadd.f32 %v3101, %v3114
      %3116 = vdwg.mxu0
      %3117 = vmatpush.bf16.msra.mxu0 %v1708
      %3118 = vmatpush.bf16.msra.mxu0 %v1707
      %3119 = vmatpush.bf16.msra.mxu0 %v1706
      %3120 = vmatpush.bf16.msra.mxu0 %v1705
      %3121 = vmatpush.bf16.msra.mxu0 %v1704
      %3122 = vmatpush.bf16.msra.mxu0 %v1703
      %3123 = vmatpush.bf16.msra.mxu0 %v1702
      %3124 = vmatpush.bf16.msra.mxu0 %v1701
      %3125 = vmatmul.bf16.gmra.mxu0 %v3041
      %v3126 = vpop.f32.mrf.mxu0
      %v3127 = vadd.f32 %v3113, %v3126
      %v3128 = vpop.f32.mrf.mxu0
      %v3129 = vadd.f32 %v3115, %v3128
      %3130 = vdwg.mxu0
      %3131 = vmatpush.bf16.msra.mxu0 %v1716
      %3132 = vmatpush.bf16.msra.mxu0 %v1715
      %3133 = vmatpush.bf16.msra.mxu0 %v1714
      %3134 = vmatpush.bf16.msra.mxu0 %v1713
      %3135 = vmatpush.bf16.msra.mxu0 %v1712
      %3136 = vmatpush.bf16.msra.mxu0 %v1711
      %3137 = vmatpush.bf16.msra.mxu0 %v1710
      %3138 = vmatpush.bf16.msra.mxu0 %v1709
      %3139 = vmatmul.bf16.gmra.mxu0 %v3042
      %v3140 = vpop.f32.mrf.mxu0
      %v3141 = vadd.f32 %v3127, %v3140
      %v3142 = vpop.f32.mrf.mxu0
      %v3143 = vadd.f32 %v3129, %v3142
      %3144 = vdwg.mxu0
      %3145 = vmatpush.bf16.msra.mxu0 %v1724
      %3146 = vmatpush.bf16.msra.mxu0 %v1723
      %3147 = vmatpush.bf16.msra.mxu0 %v1722
      %3148 = vmatpush.bf16.msra.mxu0 %v1721
      %3149 = vmatpush.bf16.msra.mxu0 %v1720
      %3150 = vmatpush.bf16.msra.mxu0 %v1719
      %3151 = vmatpush.bf16.msra.mxu0 %v1718
      %3152 = vmatpush.bf16.msra.mxu0 %v1717
      %3153 = vmatmul.bf16.gmra.mxu0 %v3043
      %v3154 = vpop.f32.mrf.mxu0
      %v3155 = vadd.f32 %v3141, %v3154
      %v3156 = vpop.f32.mrf.mxu0
      %v3157 = vadd.f32 %v3143, %v3156
      %3158 = vdwg.mxu0
      %3159 = vmatpush.bf16.msra.mxu0 %v1732
      %3160 = vmatpush.bf16.msra.mxu0 %v1731
      %3161 = vmatpush.bf16.msra.mxu0 %v1730
      %3162 = vmatpush.bf16.msra.mxu0 %v1729
      %3163 = vmatpush.bf16.msra.mxu0 %v1728
      %3164 = vmatpush.bf16.msra.mxu0 %v1727
      %3165 = vmatpush.bf16.msra.mxu0 %v1726
      %3166 = vmatpush.bf16.msra.mxu0 %v1725
      %3167 = vmatmul.bf16.gmra.mxu0 %v3044
      %v3168 = vpop.f32.mrf.mxu0
      %v3169 = vadd.f32 %v3155, %v3168
      %v3170 = vpop.f32.mrf.mxu0
      %v3171 = vadd.f32 %v3157, %v3170
      %3172 = vdwg.mxu0
      %3173 = vmatpush.bf16.msra.mxu0 %v1740
      %3174 = vmatpush.bf16.msra.mxu0 %v1739
      %3175 = vmatpush.bf16.msra.mxu0 %v1738
      %3176 = vmatpush.bf16.msra.mxu0 %v1737
      %3177 = vmatpush.bf16.msra.mxu0 %v1736
      %3178 = vmatpush.bf16.msra.mxu0 %v1735
      %3179 = vmatpush.bf16.msra.mxu0 %v1734
      %3180 = vmatpush.bf16.msra.mxu0 %v1733
      %3181 = vmatmul.bf16.gmra.mxu0 %v3045
      %v3182 = vpop.f32.mrf.mxu0
      %v3183 = vadd.f32 %v3169, %v3182
      %v3184 = vpop.f32.mrf.mxu0
      %v3185 = vadd.f32 %v3171, %v3184
      %3186 = vdwg.mxu0
      %3187 = vmatpush.bf16.msra.mxu0 %v1748
      %3188 = vmatpush.bf16.msra.mxu0 %v1747
      %3189 = vmatpush.bf16.msra.mxu0 %v1746
      %3190 = vmatpush.bf16.msra.mxu0 %v1745
      %3191 = vmatpush.bf16.msra.mxu0 %v1744
      %3192 = vmatpush.bf16.msra.mxu0 %v1743
      %3193 = vmatpush.bf16.msra.mxu0 %v1742
      %3194 = vmatpush.bf16.msra.mxu0 %v1741
      %3195 = vmatmul.bf16.gmra.mxu0 %v3046
      %v3196 = vpop.f32.mrf.mxu0
      %v3197 = vadd.f32 %v3183, %v3196
      %v3198 = vpop.f32.mrf.mxu0
      %v3199 = vadd.f32 %v3185, %v3198
      %3200 = vdwg.mxu0
      %3201 = vmatpush.bf16.msra.mxu0 %v1756
      %3202 = vmatpush.bf16.msra.mxu0 %v1755
      %3203 = vmatpush.bf16.msra.mxu0 %v1754
      %3204 = vmatpush.bf16.msra.mxu0 %v1753
      %3205 = vmatpush.bf16.msra.mxu0 %v1752
      %3206 = vmatpush.bf16.msra.mxu0 %v1751
      %3207 = vmatpush.bf16.msra.mxu0 %v1750
      %3208 = vmatpush.bf16.msra.mxu0 %v1749
      %3209 = vmatmul.bf16.gmra.mxu0 %v3047
      %v3210 = vpop.f32.mrf.mxu0
      %v3211 = vadd.f32 %v3197, %v3210
      %v3212 = vpop.f32.mrf.mxu0
      %v3213 = vadd.f32 %v3199, %v3212
      %3214 = vdwg.mxu0
      %3215 = vmatpush.bf16.msra.mxu0 %v1764
      %3216 = vmatpush.bf16.msra.mxu0 %v1763
      %3217 = vmatpush.bf16.msra.mxu0 %v1762
      %3218 = vmatpush.bf16.msra.mxu0 %v1761
      %3219 = vmatpush.bf16.msra.mxu0 %v1760
      %3220 = vmatpush.bf16.msra.mxu0 %v1759
      %3221 = vmatpush.bf16.msra.mxu0 %v1758
      %3222 = vmatpush.bf16.msra.mxu0 %v1757
      %3223 = vmatmul.bf16.gmra.mxu0 %v3048
      %v3224 = vpop.f32.mrf.mxu0
      %v3225 = vadd.f32 %v3211, %v3224
      %v3226 = vpop.f32.mrf.mxu0
      %v3227 = vadd.f32 %v3213, %v3226
      %3228 = vdwg.mxu0
      %3229 = vmatpush.bf16.msra.mxu0 %v1772
      %3230 = vmatpush.bf16.msra.mxu0 %v1771
      %3231 = vmatpush.bf16.msra.mxu0 %v1770
      %3232 = vmatpush.bf16.msra.mxu0 %v1769
      %3233 = vmatpush.bf16.msra.mxu0 %v1768
      %3234 = vmatpush.bf16.msra.mxu0 %v1767
      %3235 = vmatpush.bf16.msra.mxu0 %v1766
      %3236 = vmatpush.bf16.msra.mxu0 %v1765
      %3237 = vmatmul.bf16.gmra.mxu0 %v3049
      %v3238 = vpop.f32.mrf.mxu0
      %v3239 = vadd.f32 %v3225, %v3238
      %v3240 = vpop.f32.mrf.mxu0
      %v3241 = vadd.f32 %v3227, %v3240
      %3242 = vdwg.mxu0
      %3243 = vmatpush.bf16.msra.mxu0 %v1780
      %3244 = vmatpush.bf16.msra.mxu0 %v1779
      %3245 = vmatpush.bf16.msra.mxu0 %v1778
      %3246 = vmatpush.bf16.msra.mxu0 %v1777
      %3247 = vmatpush.bf16.msra.mxu0 %v1776
      %3248 = vmatpush.bf16.msra.mxu0 %v1775
      %3249 = vmatpush.bf16.msra.mxu0 %v1774
      %3250 = vmatpush.bf16.msra.mxu0 %v1773
      %3251 = vmatmul.bf16.gmra.mxu0 %v3050
      %v3252 = vpop.f32.mrf.mxu0
      %v3253 = vadd.f32 %v3239, %v3252
      %v3254 = vpop.f32.mrf.mxu0
      %v3255 = vadd.f32 %v3241, %v3254
      %3256 = vdwg.mxu0
      %3257 = vmatpush.bf16.msra.mxu0 %v1788
      %3258 = vmatpush.bf16.msra.mxu0 %v1787
      %3259 = vmatpush.bf16.msra.mxu0 %v1786
      %3260 = vmatpush.bf16.msra.mxu0 %v1785
      %3261 = vmatpush.bf16.msra.mxu0 %v1784
      %3262 = vmatpush.bf16.msra.mxu0 %v1783
      %3263 = vmatpush.bf16.msra.mxu0 %v1782
      %3264 = vmatpush.bf16.msra.mxu0 %v1781
      %3265 = vmatmul.bf16.gmra.mxu0 %v3051
      %v3266 = vpop.f32.mrf.mxu0
      %v3267 = vadd.f32 %v3253, %v3266
      %v3268 = vpop.f32.mrf.mxu0
      %v3269 = vadd.f32 %v3255, %v3268
      %3270 = vdwg.mxu0
      %3271 = vmatpush.bf16.msra.mxu0 %v1796
      %3272 = vmatpush.bf16.msra.mxu0 %v1795
      %3273 = vmatpush.bf16.msra.mxu0 %v1794
      %3274 = vmatpush.bf16.msra.mxu0 %v1793
      %3275 = vmatpush.bf16.msra.mxu0 %v1792
      %3276 = vmatpush.bf16.msra.mxu0 %v1791
      %3277 = vmatpush.bf16.msra.mxu0 %v1790
      %3278 = vmatpush.bf16.msra.mxu0 %v1789
      %3279 = vmatmul.bf16.gmra.mxu0 %v3052
      %v3280 = vpop.f32.mrf.mxu0
      %v3281 = vadd.f32 %v3267, %v3280
      %v3282 = vpop.f32.mrf.mxu0
      %v3283 = vadd.f32 %v3269, %v3282
      %3284 = vdwg.mxu0
      %3285 = vmatpush.bf16.msra.mxu0 %v1804
      %3286 = vmatpush.bf16.msra.mxu0 %v1803
      %3287 = vmatpush.bf16.msra.mxu0 %v1802
      %3288 = vmatpush.bf16.msra.mxu0 %v1801
      %3289 = vmatpush.bf16.msra.mxu0 %v1800
      %3290 = vmatpush.bf16.msra.mxu0 %v1799
      %3291 = vmatpush.bf16.msra.mxu0 %v1798
      %3292 = vmatpush.bf16.msra.mxu0 %v1797
      %3293 = vmatmul.bf16.gmra.mxu0 %v3053
      %v3294 = vpop.f32.mrf.mxu0
      %v3295 = vadd.f32 %v3281, %v3294
      %v3296 = vpop.f32.mrf.mxu0
      %v3297 = vadd.f32 %v3283, %v3296
      %3298 = vdwg.mxu0
      %3299 = vmatpush.bf16.msra.mxu0 %v1812
      %3300 = vmatpush.bf16.msra.mxu0 %v1811
      %3301 = vmatpush.bf16.msra.mxu0 %v1810
      %3302 = vmatpush.bf16.msra.mxu0 %v1809
      %3303 = vmatpush.bf16.msra.mxu0 %v1808
      %3304 = vmatpush.bf16.msra.mxu0 %v1807
      %3305 = vmatpush.bf16.msra.mxu0 %v1806
      %3306 = vmatpush.bf16.msra.mxu0 %v1805
      %3307 = vmatmul.bf16.gmra.mxu0 %v3054
      %v3308 = vpop.f32.mrf.mxu0
      %v3309 = vadd.f32 %v3295, %v3308
      %v3310 = vpop.f32.mrf.mxu0
      %v3311 = vadd.f32 %v3297, %v3310
      %3312 = vdwg.mxu0
      %3313 = vmatpush.bf16.msra.mxu0 %v1820
      %3314 = vmatpush.bf16.msra.mxu0 %v1819
      %3315 = vmatpush.bf16.msra.mxu0 %v1818
      %3316 = vmatpush.bf16.msra.mxu0 %v1817
      %3317 = vmatpush.bf16.msra.mxu0 %v1816
      %3318 = vmatpush.bf16.msra.mxu0 %v1815
      %3319 = vmatpush.bf16.msra.mxu0 %v1814
      %3320 = vmatpush.bf16.msra.mxu0 %v1813
      %3321 = vmatmul.bf16.gmra.mxu0 %v3055
      %v3322 = vpop.f32.mrf.mxu0
      %v3323 = vadd.f32 %v3309, %v3322
      %v3324 = vpop.f32.mrf.mxu0
      %v3325 = vadd.f32 %v3311, %v3324
      %3326 = vdwg.mxu0
      %3327 = vmatpush.bf16.msra.mxu0 %v1828
      %3328 = vmatpush.bf16.msra.mxu0 %v1827
      %3329 = vmatpush.bf16.msra.mxu0 %v1826
      %3330 = vmatpush.bf16.msra.mxu0 %v1825
      %3331 = vmatpush.bf16.msra.mxu0 %v1824
      %3332 = vmatpush.bf16.msra.mxu0 %v1823
      %3333 = vmatpush.bf16.msra.mxu0 %v1822
      %3334 = vmatpush.bf16.msra.mxu0 %v1821
      %3335 = vmatmul.bf16.gmra.mxu0 %v3056
      %v3336 = vpop.f32.mrf.mxu0
      %v3337 = vadd.f32 %v3323, %v3336
      %v3338 = vpop.f32.mrf.mxu0
      %v3339 = vadd.f32 %v3325, %v3338
      %3340 = vdwg.mxu0
      %3341 = vmatpush.bf16.msra.mxu0 %v1836
      %3342 = vmatpush.bf16.msra.mxu0 %v1835
      %3343 = vmatpush.bf16.msra.mxu0 %v1834
      %3344 = vmatpush.bf16.msra.mxu0 %v1833
      %3345 = vmatpush.bf16.msra.mxu0 %v1832
      %3346 = vmatpush.bf16.msra.mxu0 %v1831
      %3347 = vmatpush.bf16.msra.mxu0 %v1830
      %3348 = vmatpush.bf16.msra.mxu0 %v1829
      %3349 = vmatmul.bf16.gmra.mxu0 %v3057
      %v3350 = vpop.f32.mrf.mxu0
      %v3351 = vadd.f32 %v3337, %v3350
      %v3352 = vpop.f32.mrf.mxu0
      %v3353 = vadd.f32 %v3339, %v3352
      %3354 = vdwg.mxu0
      %3355 = vmatpush.bf16.msra.mxu0 %v1844
      %3356 = vmatpush.bf16.msra.mxu0 %v1843
      %3357 = vmatpush.bf16.msra.mxu0 %v1842
      %3358 = vmatpush.bf16.msra.mxu0 %v1841
      %3359 = vmatpush.bf16.msra.mxu0 %v1840
      %3360 = vmatpush.bf16.msra.mxu0 %v1839
      %3361 = vmatpush.bf16.msra.mxu0 %v1838
      %3362 = vmatpush.bf16.msra.mxu0 %v1837
      %3363 = vmatmul.bf16.gmra.mxu0 %v3058
      %v3364 = vpop.f32.mrf.mxu0
      %v3365 = vadd.f32 %v3351, %v3364
      %v3366 = vpop.f32.mrf.mxu0
      %v3367 = vadd.f32 %v3353, %v3366
      %3368 = vdwg.mxu0
      %3369 = vmatpush.bf16.msra.mxu0 %v1852
      %3370 = vmatpush.bf16.msra.mxu0 %v1851
      %3371 = vmatpush.bf16.msra.mxu0 %v1850
      %3372 = vmatpush.bf16.msra.mxu0 %v1849
      %3373 = vmatpush.bf16.msra.mxu0 %v1848
      %3374 = vmatpush.bf16.msra.mxu0 %v1847
      %3375 = vmatpush.bf16.msra.mxu0 %v1846
      %3376 = vmatpush.bf16.msra.mxu0 %v1845
      %3377 = vmatmul.bf16.gmra.mxu0 %v3059
      %v3378 = vpop.f32.mrf.mxu0
      %v3379 = vadd.f32 %v3365, %v3378
      %v3380 = vpop.f32.mrf.mxu0
      %v3381 = vadd.f32 %v3367, %v3380
      %3382 = vdwg.mxu0
      %3383 = vmatpush.bf16.msra.mxu0 %v1860
      %3384 = vmatpush.bf16.msra.mxu0 %v1859
      %3385 = vmatpush.bf16.msra.mxu0 %v1858
      %3386 = vmatpush.bf16.msra.mxu0 %v1857
      %3387 = vmatpush.bf16.msra.mxu0 %v1856
      %3388 = vmatpush.bf16.msra.mxu0 %v1855
      %3389 = vmatpush.bf16.msra.mxu0 %v1854
      %3390 = vmatpush.bf16.msra.mxu0 %v1853
      %3391 = vmatmul.bf16.gmra.mxu0 %v3060
      %v3392 = vpop.f32.mrf.mxu0
      %v3393 = vadd.f32 %v3379, %v3392
      %v3394 = vpop.f32.mrf.mxu0
      %v3395 = vadd.f32 %v3381, %v3394
      %3396 = vdwg.mxu0
      %3397 = vmatpush.bf16.msra.mxu0 %v1868
      %3398 = vmatpush.bf16.msra.mxu0 %v1867
      %3399 = vmatpush.bf16.msra.mxu0 %v1866
      %3400 = vmatpush.bf16.msra.mxu0 %v1865
      %3401 = vmatpush.bf16.msra.mxu0 %v1864
      %3402 = vmatpush.bf16.msra.mxu0 %v1863
      %3403 = vmatpush.bf16.msra.mxu0 %v1862
      %3404 = vmatpush.bf16.msra.mxu0 %v1861
      %3405 = vmatmul.bf16.gmra.mxu0 %v3061
      %v3406 = vpop.f32.mrf.mxu0
      %v3407 = vadd.f32 %v3393, %v3406
      %v3408 = vpop.f32.mrf.mxu0
      %v3409 = vadd.f32 %v3395, %v3408
      %3410 = vdwg.mxu0
      %3411 = vmatpush.bf16.msra.mxu0 %v1876
      %3412 = vmatpush.bf16.msra.mxu0 %v1875
      %3413 = vmatpush.bf16.msra.mxu0 %v1874
      %3414 = vmatpush.bf16.msra.mxu0 %v1873
      %3415 = vmatpush.bf16.msra.mxu0 %v1872
      %3416 = vmatpush.bf16.msra.mxu0 %v1871
      %3417 = vmatpush.bf16.msra.mxu0 %v1870
      %3418 = vmatpush.bf16.msra.mxu0 %v1869
      %3419 = vmatmul.bf16.gmra.mxu0 %v3062
      %v3420 = vpop.f32.mrf.mxu0
      %v3421 = vadd.f32 %v3407, %v3420
      %v3422 = vpop.f32.mrf.mxu0
      %v3423 = vadd.f32 %v3409, %v3422
      %3424 = vdwg.mxu0
      %3425 = vmatpush.bf16.msra.mxu0 %v1884
      %3426 = vmatpush.bf16.msra.mxu0 %v1883
      %3427 = vmatpush.bf16.msra.mxu0 %v1882
      %3428 = vmatpush.bf16.msra.mxu0 %v1881
      %3429 = vmatpush.bf16.msra.mxu0 %v1880
      %3430 = vmatpush.bf16.msra.mxu0 %v1879
      %3431 = vmatpush.bf16.msra.mxu0 %v1878
      %3432 = vmatpush.bf16.msra.mxu0 %v1877
      %3433 = vmatmul.bf16.gmra.mxu0 %v3063
      %v3434 = vpop.f32.mrf.mxu0
      %v3435 = vadd.f32 %v3421, %v3434
      %v3436 = vpop.f32.mrf.mxu0
      %v3437 = vadd.f32 %v3423, %v3436
      %3438 = vdwg.mxu0
      %v3439 = vld [vmem:[%s325] sm:$0xff]
      %v3440 = vld [vmem:[%s325 + $0x8] sm:$0xff]
      %v3441 = vld [vmem:[%s325 + $0x10] sm:$0xff]
      %v3442 = vld [vmem:[%s325 + $0x18] sm:$0xff]
      %v3443 = vld [vmem:[%s325 + $0x20] sm:$0xff]
      %v3444 = vld [vmem:[%s325 + $0x28] sm:$0xff]
      %v3445 = vld [vmem:[%s325 + $0x30] sm:$0xff]
      %v3446 = vld [vmem:[%s325 + $0x38] sm:$0xff]
      %v3447 = vld [vmem:[%s325 + $0x40] sm:$0xff]
      %v3448 = vld [vmem:[%s325 + $0x48] sm:$0xff]
      %v3449 = vld [vmem:[%s325 + $0x50] sm:$0xff]
      %v3450 = vld [vmem:[%s325 + $0x58] sm:$0xff]
      %v3451 = vld [vmem:[%s325 + $0x60] sm:$0xf]
      %v3452 = vld [vmem:[%s325 + $0x64] sm:$0xff]
      %v3453 = vld [vmem:[%s325 + $0x6c] sm:$0xff]
      %v3454 = vld [vmem:[%s325 + $0x74] sm:$0xff]
      %v3455 = vld [vmem:[%s325 + $0x7c] sm:$0xff]
      %v3456 = vld [vmem:[%s325 + $0x84] sm:$0xff]
      %v3457 = vld [vmem:[%s325 + $0x8c] sm:$0xff]
      %v3458 = vld [vmem:[%s325 + $0x94] sm:$0xff]
      %v3459 = vld [vmem:[%s325 + $0x9c] sm:$0xff]
      %v3460 = vld [vmem:[%s325 + $0xa4] sm:$0xff]
      %v3461 = vld [vmem:[%s325 + $0xac] sm:$0xff]
      %v3462 = vld [vmem:[%s325 + $0xb4] sm:$0xff]
      %v3463 = vld [vmem:[%s325 + $0xbc] sm:$0xff]
      %v3464 = vld [vmem:[%s325 + $0xc4] sm:$0xf]
      %v3491 = vunpack.c.l.b16 %v3439
      %v3492 = vunpack.c.h.b16 %v3439
      %v3493 = vunpack.c.l.b16 %v3440
      %v3494 = vunpack.c.h.b16 %v3440
      %v3495 = vunpack.c.l.b16 %v3441
      %v3496 = vunpack.c.h.b16 %v3441
      %v3497 = vunpack.c.l.b16 %v3442
      %v3498 = vunpack.c.h.b16 %v3442
      %v3499 = vunpack.c.l.b16 %v3443
      %v3500 = vunpack.c.h.b16 %v3443
      %v3501 = vunpack.c.l.b16 %v3444
      %v3502 = vunpack.c.h.b16 %v3444
      %v3503 = vunpack.c.l.b16 %v3445
      %v3504 = vunpack.c.h.b16 %v3445
      %v3505 = vunpack.c.l.b16 %v3446
      %v3506 = vunpack.c.h.b16 %v3446
      %v3507 = vunpack.c.l.b16 %v3447
      %v3508 = vunpack.c.h.b16 %v3447
      %v3509 = vunpack.c.l.b16 %v3448
      %v3510 = vunpack.c.h.b16 %v3448
      %v3511 = vunpack.c.l.b16 %v3449
      %v3512 = vunpack.c.h.b16 %v3449
      %v3513 = vunpack.c.l.b16 %v3450
      %v3514 = vunpack.c.h.b16 %v3450
      %v3515 = vunpack.c.l.b16 %v3451
      %v3516 = vunpack.c.l.b16 %v3452
      %v3517 = vunpack.c.h.b16 %v3452
      %v3518 = vunpack.c.l.b16 %v3453
      %v3519 = vunpack.c.h.b16 %v3453
      %v3520 = vunpack.c.l.b16 %v3454
      %v3521 = vunpack.c.h.b16 %v3454
      %v3522 = vunpack.c.l.b16 %v3455
      %v3523 = vunpack.c.h.b16 %v3455
      %v3524 = vunpack.c.l.b16 %v3456
      %v3525 = vunpack.c.h.b16 %v3456
      %v3526 = vunpack.c.l.b16 %v3457
      %v3527 = vunpack.c.h.b16 %v3457
      %v3528 = vunpack.c.l.b16 %v3458
      %v3529 = vunpack.c.h.b16 %v3458
      %v3530 = vunpack.c.l.b16 %v3459
      %v3531 = vunpack.c.h.b16 %v3459
      %v3532 = vunpack.c.l.b16 %v3460
      %v3533 = vunpack.c.h.b16 %v3460
      %v3534 = vunpack.c.l.b16 %v3461
      %v3535 = vunpack.c.h.b16 %v3461
      %v3536 = vunpack.c.l.b16 %v3462
      %v3537 = vunpack.c.h.b16 %v3462
      %v3538 = vunpack.c.l.b16 %v3463
      %v3539 = vunpack.c.h.b16 %v3463
      %v3540 = vunpack.c.l.b16 %v3464
      %v3541 = vpack.c.b16 %v3516, %v3491
      %v3542 = vpack.c.b16 %v3517, %v3492
      %v3543 = vpack.c.b16 %v3518, %v3493
      %v3544 = vpack.c.b16 %v3519, %v3494
      %v3545 = vpack.c.b16 %v3520, %v3495
      %v3546 = vpack.c.b16 %v3521, %v3496
      %v3547 = vpack.c.b16 %v3522, %v3497
      %v3548 = vpack.c.b16 %v3523, %v3498
      %v3549 = vpack.c.b16 %v3524, %v3499
      %v3550 = vpack.c.b16 %v3525, %v3500
      %v3551 = vpack.c.b16 %v3526, %v3501
      %v3552 = vpack.c.b16 %v3527, %v3502
      %v3553 = vpack.c.b16 %v3528, %v3503
      %v3554 = vpack.c.b16 %v3529, %v3504
      %v3555 = vpack.c.b16 %v3530, %v3505
      %v3556 = vpack.c.b16 %v3531, %v3506
      %v3557 = vpack.c.b16 %v3532, %v3507
      %v3558 = vpack.c.b16 %v3533, %v3508
      %v3559 = vpack.c.b16 %v3534, %v3509
      %v3560 = vpack.c.b16 %v3535, %v3510
      %v3561 = vpack.c.b16 %v3536, %v3511
      %v3562 = vpack.c.b16 %v3537, %v3512
      %v3563 = vpack.c.b16 %v3538, %v3513
      %v3564 = vpack.c.b16 %v3539, %v3514
      %v3565 = vpack.c.b16 %v3540, %v3515
      %3591 = vmatpush.bf16.msra.mxu0 %v1692
      %3592 = vmatpush.bf16.msra.mxu0 %v1691
      %3593 = vmatpush.bf16.msra.mxu0 %v1690
      %3594 = vmatpush.bf16.msra.mxu0 %v1689
      %3595 = vmatpush.bf16.msra.mxu0 %v1688
      %3596 = vmatpush.bf16.msra.mxu0 %v1687
      %3597 = vmatpush.bf16.msra.mxu0 %v1686
      %3598 = vmatpush.bf16.msra.mxu0 %v1685
      %3599 = vmatmul.bf16.gmra.mxu0 %v3541
      %v3600 = vpop.f32.mrf.mxu0
      %v3601 = vadd.f32 0.0, %v3600
      %v3602 = vpop.f32.mrf.mxu0
      %v3603 = vadd.f32 0.0, %v3602
      %3604 = vdwg.mxu0
      %3605 = vmatpush.bf16.msra.mxu0 %v1700
      %3606 = vmatpush.bf16.msra.mxu0 %v1699
      %3607 = vmatpush.bf16.msra.mxu0 %v1698
      %3608 = vmatpush.bf16.msra.mxu0 %v1697
      %3609 = vmatpush.bf16.msra.mxu0 %v1696
      %3610 = vmatpush.bf16.msra.mxu0 %v1695
      %3611 = vmatpush.bf16.msra.mxu0 %v1694
      %3612 = vmatpush.bf16.msra.mxu0 %v1693
      %3613 = vmatmul.bf16.gmra.mxu0 %v3542
      %v3614 = vpop.f32.mrf.mxu0
      %v3615 = vadd.f32 %v3601, %v3614
      %v3616 = vpop.f32.mrf.mxu0
      %v3617 = vadd.f32 %v3603, %v3616
      %3618 = vdwg.mxu0
      %3619 = vmatpush.bf16.msra.mxu0 %v1708
      %3620 = vmatpush.bf16.msra.mxu0 %v1707
      %3621 = vmatpush.bf16.msra.mxu0 %v1706
      %3622 = vmatpush.bf16.msra.mxu0 %v1705
      %3623 = vmatpush.bf16.msra.mxu0 %v1704
      %3624 = vmatpush.bf16.msra.mxu0 %v1703
      %3625 = vmatpush.bf16.msra.mxu0 %v1702
      %3626 = vmatpush.bf16.msra.mxu0 %v1701
      %3627 = vmatmul.bf16.gmra.mxu0 %v3543
      %v3628 = vpop.f32.mrf.mxu0
      %v3629 = vadd.f32 %v3615, %v3628
      %v3630 = vpop.f32.mrf.mxu0
      %v3631 = vadd.f32 %v3617, %v3630
      %3632 = vdwg.mxu0
      %3633 = vmatpush.bf16.msra.mxu0 %v1716
      %3634 = vmatpush.bf16.msra.mxu0 %v1715
      %3635 = vmatpush.bf16.msra.mxu0 %v1714
      %3636 = vmatpush.bf16.msra.mxu0 %v1713
      %3637 = vmatpush.bf16.msra.mxu0 %v1712
      %3638 = vmatpush.bf16.msra.mxu0 %v1711
      %3639 = vmatpush.bf16.msra.mxu0 %v1710
      %3640 = vmatpush.bf16.msra.mxu0 %v1709
      %3641 = vmatmul.bf16.gmra.mxu0 %v3544
      %v3642 = vpop.f32.mrf.mxu0
      %v3643 = vadd.f32 %v3629, %v3642
      %v3644 = vpop.f32.mrf.mxu0
      %v3645 = vadd.f32 %v3631, %v3644
      %3646 = vdwg.mxu0
      %3647 = vmatpush.bf16.msra.mxu0 %v1724
      %3648 = vmatpush.bf16.msra.mxu0 %v1723
      %3649 = vmatpush.bf16.msra.mxu0 %v1722
      %3650 = vmatpush.bf16.msra.mxu0 %v1721
      %3651 = vmatpush.bf16.msra.mxu0 %v1720
      %3652 = vmatpush.bf16.msra.mxu0 %v1719
      %3653 = vmatpush.bf16.msra.mxu0 %v1718
      %3654 = vmatpush.bf16.msra.mxu0 %v1717
      %3655 = vmatmul.bf16.gmra.mxu0 %v3545
      %v3656 = vpop.f32.mrf.mxu0
      %v3657 = vadd.f32 %v3643, %v3656
      %v3658 = vpop.f32.mrf.mxu0
      %v3659 = vadd.f32 %v3645, %v3658
      %3660 = vdwg.mxu0
      %3661 = vmatpush.bf16.msra.mxu0 %v1732
      %3662 = vmatpush.bf16.msra.mxu0 %v1731
      %3663 = vmatpush.bf16.msra.mxu0 %v1730
      %3664 = vmatpush.bf16.msra.mxu0 %v1729
      %3665 = vmatpush.bf16.msra.mxu0 %v1728
      %3666 = vmatpush.bf16.msra.mxu0 %v1727
      %3667 = vmatpush.bf16.msra.mxu0 %v1726
      %3668 = vmatpush.bf16.msra.mxu0 %v1725
      %3669 = vmatmul.bf16.gmra.mxu0 %v3546
      %v3670 = vpop.f32.mrf.mxu0
      %v3671 = vadd.f32 %v3657, %v3670
      %v3672 = vpop.f32.mrf.mxu0
      %v3673 = vadd.f32 %v3659, %v3672
      %3674 = vdwg.mxu0
      %3675 = vmatpush.bf16.msra.mxu0 %v1740
      %3676 = vmatpush.bf16.msra.mxu0 %v1739
      %3677 = vmatpush.bf16.msra.mxu0 %v1738
      %3678 = vmatpush.bf16.msra.mxu0 %v1737
      %3679 = vmatpush.bf16.msra.mxu0 %v1736
      %3680 = vmatpush.bf16.msra.mxu0 %v1735
      %3681 = vmatpush.bf16.msra.mxu0 %v1734
      %3682 = vmatpush.bf16.msra.mxu0 %v1733
      %3683 = vmatmul.bf16.gmra.mxu0 %v3547
      %v3684 = vpop.f32.mrf.mxu0
      %v3685 = vadd.f32 %v3671, %v3684
      %v3686 = vpop.f32.mrf.mxu0
      %v3687 = vadd.f32 %v3673, %v3686
      %3688 = vdwg.mxu0
      %3689 = vmatpush.bf16.msra.mxu0 %v1748
      %3690 = vmatpush.bf16.msra.mxu0 %v1747
      %3691 = vmatpush.bf16.msra.mxu0 %v1746
      %3692 = vmatpush.bf16.msra.mxu0 %v1745
      %3693 = vmatpush.bf16.msra.mxu0 %v1744
      %3694 = vmatpush.bf16.msra.mxu0 %v1743
      %3695 = vmatpush.bf16.msra.mxu0 %v1742
      %3696 = vmatpush.bf16.msra.mxu0 %v1741
      %3697 = vmatmul.bf16.gmra.mxu0 %v3548
      %v3698 = vpop.f32.mrf.mxu0
      %v3699 = vadd.f32 %v3685, %v3698
      %v3700 = vpop.f32.mrf.mxu0
      %v3701 = vadd.f32 %v3687, %v3700
      %3702 = vdwg.mxu0
      %3703 = vmatpush.bf16.msra.mxu0 %v1756
      %3704 = vmatpush.bf16.msra.mxu0 %v1755
      %3705 = vmatpush.bf16.msra.mxu0 %v1754
      %3706 = vmatpush.bf16.msra.mxu0 %v1753
      %3707 = vmatpush.bf16.msra.mxu0 %v1752
      %3708 = vmatpush.bf16.msra.mxu0 %v1751
      %3709 = vmatpush.bf16.msra.mxu0 %v1750
      %3710 = vmatpush.bf16.msra.mxu0 %v1749
      %3711 = vmatmul.bf16.gmra.mxu0 %v3549
      %v3712 = vpop.f32.mrf.mxu0
      %v3713 = vadd.f32 %v3699, %v3712
      %v3714 = vpop.f32.mrf.mxu0
      %v3715 = vadd.f32 %v3701, %v3714
      %3716 = vdwg.mxu0
      %3717 = vmatpush.bf16.msra.mxu0 %v1764
      %3718 = vmatpush.bf16.msra.mxu0 %v1763
      %3719 = vmatpush.bf16.msra.mxu0 %v1762
      %3720 = vmatpush.bf16.msra.mxu0 %v1761
      %3721 = vmatpush.bf16.msra.mxu0 %v1760
      %3722 = vmatpush.bf16.msra.mxu0 %v1759
      %3723 = vmatpush.bf16.msra.mxu0 %v1758
      %3724 = vmatpush.bf16.msra.mxu0 %v1757
      %3725 = vmatmul.bf16.gmra.mxu0 %v3550
      %v3726 = vpop.f32.mrf.mxu0
      %v3727 = vadd.f32 %v3713, %v3726
      %v3728 = vpop.f32.mrf.mxu0
      %v3729 = vadd.f32 %v3715, %v3728
      %3730 = vdwg.mxu0
      %3731 = vmatpush.bf16.msra.mxu0 %v1772
      %3732 = vmatpush.bf16.msra.mxu0 %v1771
      %3733 = vmatpush.bf16.msra.mxu0 %v1770
      %3734 = vmatpush.bf16.msra.mxu0 %v1769
      %3735 = vmatpush.bf16.msra.mxu0 %v1768
      %3736 = vmatpush.bf16.msra.mxu0 %v1767
      %3737 = vmatpush.bf16.msra.mxu0 %v1766
      %3738 = vmatpush.bf16.msra.mxu0 %v1765
      %3739 = vmatmul.bf16.gmra.mxu0 %v3551
      %v3740 = vpop.f32.mrf.mxu0
      %v3741 = vadd.f32 %v3727, %v3740
      %v3742 = vpop.f32.mrf.mxu0
      %v3743 = vadd.f32 %v3729, %v3742
      %3744 = vdwg.mxu0
      %3745 = vmatpush.bf16.msra.mxu0 %v1780
      %3746 = vmatpush.bf16.msra.mxu0 %v1779
      %3747 = vmatpush.bf16.msra.mxu0 %v1778
      %3748 = vmatpush.bf16.msra.mxu0 %v1777
      %3749 = vmatpush.bf16.msra.mxu0 %v1776
      %3750 = vmatpush.bf16.msra.mxu0 %v1775
      %3751 = vmatpush.bf16.msra.mxu0 %v1774
      %3752 = vmatpush.bf16.msra.mxu0 %v1773
      %3753 = vmatmul.bf16.gmra.mxu0 %v3552
      %v3754 = vpop.f32.mrf.mxu0
      %v3755 = vadd.f32 %v3741, %v3754
      %v3756 = vpop.f32.mrf.mxu0
      %v3757 = vadd.f32 %v3743, %v3756
      %3758 = vdwg.mxu0
      %3759 = vmatpush.bf16.msra.mxu0 %v1788
      %3760 = vmatpush.bf16.msra.mxu0 %v1787
      %3761 = vmatpush.bf16.msra.mxu0 %v1786
      %3762 = vmatpush.bf16.msra.mxu0 %v1785
      %3763 = vmatpush.bf16.msra.mxu0 %v1784
      %3764 = vmatpush.bf16.msra.mxu0 %v1783
      %3765 = vmatpush.bf16.msra.mxu0 %v1782
      %3766 = vmatpush.bf16.msra.mxu0 %v1781
      %3767 = vmatmul.bf16.gmra.mxu0 %v3553
      %v3768 = vpop.f32.mrf.mxu0
      %v3769 = vadd.f32 %v3755, %v3768
      %v3770 = vpop.f32.mrf.mxu0
      %v3771 = vadd.f32 %v3757, %v3770
      %3772 = vdwg.mxu0
      %3773 = vmatpush.bf16.msra.mxu0 %v1796
      %3774 = vmatpush.bf16.msra.mxu0 %v1795
      %3775 = vmatpush.bf16.msra.mxu0 %v1794
      %3776 = vmatpush.bf16.msra.mxu0 %v1793
      %3777 = vmatpush.bf16.msra.mxu0 %v1792
      %3778 = vmatpush.bf16.msra.mxu0 %v1791
      %3779 = vmatpush.bf16.msra.mxu0 %v1790
      %3780 = vmatpush.bf16.msra.mxu0 %v1789
      %3781 = vmatmul.bf16.gmra.mxu0 %v3554
      %v3782 = vpop.f32.mrf.mxu0
      %v3783 = vadd.f32 %v3769, %v3782
      %v3784 = vpop.f32.mrf.mxu0
      %v3785 = vadd.f32 %v3771, %v3784
      %3786 = vdwg.mxu0
      %3787 = vmatpush.bf16.msra.mxu0 %v1804
      %3788 = vmatpush.bf16.msra.mxu0 %v1803
      %3789 = vmatpush.bf16.msra.mxu0 %v1802
      %3790 = vmatpush.bf16.msra.mxu0 %v1801
      %3791 = vmatpush.bf16.msra.mxu0 %v1800
      %3792 = vmatpush.bf16.msra.mxu0 %v1799
      %3793 = vmatpush.bf16.msra.mxu0 %v1798
      %3794 = vmatpush.bf16.msra.mxu0 %v1797
      %3795 = vmatmul.bf16.gmra.mxu0 %v3555
      %v3796 = vpop.f32.mrf.mxu0
      %v3797 = vadd.f32 %v3783, %v3796
      %v3798 = vpop.f32.mrf.mxu0
      %v3799 = vadd.f32 %v3785, %v3798
      %3800 = vdwg.mxu0
      %3801 = vmatpush.bf16.msra.mxu0 %v1812
      %3802 = vmatpush.bf16.msra.mxu0 %v1811
      %3803 = vmatpush.bf16.msra.mxu0 %v1810
      %3804 = vmatpush.bf16.msra.mxu0 %v1809
      %3805 = vmatpush.bf16.msra.mxu0 %v1808
      %3806 = vmatpush.bf16.msra.mxu0 %v1807
      %3807 = vmatpush.bf16.msra.mxu0 %v1806
      %3808 = vmatpush.bf16.msra.mxu0 %v1805
      %3809 = vmatmul.bf16.gmra.mxu0 %v3556
      %v3810 = vpop.f32.mrf.mxu0
      %v3811 = vadd.f32 %v3797, %v3810
      %v3812 = vpop.f32.mrf.mxu0
      %v3813 = vadd.f32 %v3799, %v3812
      %3814 = vdwg.mxu0
      %3815 = vmatpush.bf16.msra.mxu0 %v1820
      %3816 = vmatpush.bf16.msra.mxu0 %v1819
      %3817 = vmatpush.bf16.msra.mxu0 %v1818
      %3818 = vmatpush.bf16.msra.mxu0 %v1817
      %3819 = vmatpush.bf16.msra.mxu0 %v1816
      %3820 = vmatpush.bf16.msra.mxu0 %v1815
      %3821 = vmatpush.bf16.msra.mxu0 %v1814
      %3822 = vmatpush.bf16.msra.mxu0 %v1813
      %3823 = vmatmul.bf16.gmra.mxu0 %v3557
      %v3824 = vpop.f32.mrf.mxu0
      %v3825 = vadd.f32 %v3811, %v3824
      %v3826 = vpop.f32.mrf.mxu0
      %v3827 = vadd.f32 %v3813, %v3826
      %3828 = vdwg.mxu0
      %3829 = vmatpush.bf16.msra.mxu0 %v1828
      %3830 = vmatpush.bf16.msra.mxu0 %v1827
      %3831 = vmatpush.bf16.msra.mxu0 %v1826
      %3832 = vmatpush.bf16.msra.mxu0 %v1825
      %3833 = vmatpush.bf16.msra.mxu0 %v1824
      %3834 = vmatpush.bf16.msra.mxu0 %v1823
      %3835 = vmatpush.bf16.msra.mxu0 %v1822
      %3836 = vmatpush.bf16.msra.mxu0 %v1821
      %3837 = vmatmul.bf16.gmra.mxu0 %v3558
      %v3838 = vpop.f32.mrf.mxu0
      %v3839 = vadd.f32 %v3825, %v3838
      %v3840 = vpop.f32.mrf.mxu0
      %v3841 = vadd.f32 %v3827, %v3840
      %3842 = vdwg.mxu0
      %3843 = vmatpush.bf16.msra.mxu0 %v1836
      %3844 = vmatpush.bf16.msra.mxu0 %v1835
      %3845 = vmatpush.bf16.msra.mxu0 %v1834
      %3846 = vmatpush.bf16.msra.mxu0 %v1833
      %3847 = vmatpush.bf16.msra.mxu0 %v1832
      %3848 = vmatpush.bf16.msra.mxu0 %v1831
      %3849 = vmatpush.bf16.msra.mxu0 %v1830
      %3850 = vmatpush.bf16.msra.mxu0 %v1829
      %3851 = vmatmul.bf16.gmra.mxu0 %v3559
      %v3852 = vpop.f32.mrf.mxu0
      %v3853 = vadd.f32 %v3839, %v3852
      %v3854 = vpop.f32.mrf.mxu0
      %v3855 = vadd.f32 %v3841, %v3854
      %3856 = vdwg.mxu0
      %3857 = vmatpush.bf16.msra.mxu0 %v1844
      %3858 = vmatpush.bf16.msra.mxu0 %v1843
      %3859 = vmatpush.bf16.msra.mxu0 %v1842
      %3860 = vmatpush.bf16.msra.mxu0 %v1841
      %3861 = vmatpush.bf16.msra.mxu0 %v1840
      %3862 = vmatpush.bf16.msra.mxu0 %v1839
      %3863 = vmatpush.bf16.msra.mxu0 %v1838
      %3864 = vmatpush.bf16.msra.mxu0 %v1837
      %3865 = vmatmul.bf16.gmra.mxu0 %v3560
      %v3866 = vpop.f32.mrf.mxu0
      %v3867 = vadd.f32 %v3853, %v3866
      %v3868 = vpop.f32.mrf.mxu0
      %v3869 = vadd.f32 %v3855, %v3868
      %3870 = vdwg.mxu0
      %3871 = vmatpush.bf16.msra.mxu0 %v1852
      %3872 = vmatpush.bf16.msra.mxu0 %v1851
      %3873 = vmatpush.bf16.msra.mxu0 %v1850
      %3874 = vmatpush.bf16.msra.mxu0 %v1849
      %3875 = vmatpush.bf16.msra.mxu0 %v1848
      %3876 = vmatpush.bf16.msra.mxu0 %v1847
      %3877 = vmatpush.bf16.msra.mxu0 %v1846
      %3878 = vmatpush.bf16.msra.mxu0 %v1845
      %3879 = vmatmul.bf16.gmra.mxu0 %v3561
      %v3880 = vpop.f32.mrf.mxu0
      %v3881 = vadd.f32 %v3867, %v3880
      %v3882 = vpop.f32.mrf.mxu0
      %v3883 = vadd.f32 %v3869, %v3882
      %3884 = vdwg.mxu0
      %3885 = vmatpush.bf16.msra.mxu0 %v1860
      %3886 = vmatpush.bf16.msra.mxu0 %v1859
      %3887 = vmatpush.bf16.msra.mxu0 %v1858
      %3888 = vmatpush.bf16.msra.mxu0 %v1857
      %3889 = vmatpush.bf16.msra.mxu0 %v1856
      %3890 = vmatpush.bf16.msra.mxu0 %v1855
      %3891 = vmatpush.bf16.msra.mxu0 %v1854
      %3892 = vmatpush.bf16.msra.mxu0 %v1853
      %3893 = vmatmul.bf16.gmra.mxu0 %v3562
      %v3894 = vpop.f32.mrf.mxu0
      %v3895 = vadd.f32 %v3881, %v3894
      %v3896 = vpop.f32.mrf.mxu0
      %v3897 = vadd.f32 %v3883, %v3896
      %3898 = vdwg.mxu0
      %3899 = vmatpush.bf16.msra.mxu0 %v1868
      %3900 = vmatpush.bf16.msra.mxu0 %v1867
      %3901 = vmatpush.bf16.msra.mxu0 %v1866
      %3902 = vmatpush.bf16.msra.mxu0 %v1865
      %3903 = vmatpush.bf16.msra.mxu0 %v1864
      %3904 = vmatpush.bf16.msra.mxu0 %v1863
      %3905 = vmatpush.bf16.msra.mxu0 %v1862
      %3906 = vmatpush.bf16.msra.mxu0 %v1861
      %3907 = vmatmul.bf16.gmra.mxu0 %v3563
      %v3908 = vpop.f32.mrf.mxu0
      %v3909 = vadd.f32 %v3895, %v3908
      %v3910 = vpop.f32.mrf.mxu0
      %v3911 = vadd.f32 %v3897, %v3910
      %3912 = vdwg.mxu0
      %3913 = vmatpush.bf16.msra.mxu0 %v1876
      %3914 = vmatpush.bf16.msra.mxu0 %v1875
      %3915 = vmatpush.bf16.msra.mxu0 %v1874
      %3916 = vmatpush.bf16.msra.mxu0 %v1873
      %3917 = vmatpush.bf16.msra.mxu0 %v1872
      %3918 = vmatpush.bf16.msra.mxu0 %v1871
      %3919 = vmatpush.bf16.msra.mxu0 %v1870
      %3920 = vmatpush.bf16.msra.mxu0 %v1869
      %3921 = vmatmul.bf16.gmra.mxu0 %v3564
      %v3922 = vpop.f32.mrf.mxu0
      %v3923 = vadd.f32 %v3909, %v3922
      %v3924 = vpop.f32.mrf.mxu0
      %v3925 = vadd.f32 %v3911, %v3924
      %3926 = vdwg.mxu0
      %3927 = vmatpush.bf16.msra.mxu0 %v1884
      %3928 = vmatpush.bf16.msra.mxu0 %v1883
      %3929 = vmatpush.bf16.msra.mxu0 %v1882
      %3930 = vmatpush.bf16.msra.mxu0 %v1881
      %3931 = vmatpush.bf16.msra.mxu0 %v1880
      %3932 = vmatpush.bf16.msra.mxu0 %v1879
      %3933 = vmatpush.bf16.msra.mxu0 %v1878
      %3934 = vmatpush.bf16.msra.mxu0 %v1877
      %3935 = vmatmul.bf16.gmra.mxu0 %v3565
      %v3936 = vpop.f32.mrf.mxu0
      %v3937 = vadd.f32 %v3923, %v3936
      %v3938 = vpop.f32.mrf.mxu0
      %v3939 = vadd.f32 %v3925, %v3938
      %3940 = vdwg.mxu0
      %v3941 = vmax.f32 %v2431, %v2933
      %v3942 = vmax.f32 %v2433, %v2935
      %v3943 = vmax.f32 %v3435, %v3937
      %v3944 = vmax.f32 %v3437, %v3939
      %v3945 = vmax.f32 %v3941, %v3943
      %v3946 = vmax.f32 %v3942, %v3944
      %v3947 = vld [vmem:[%s5] sm:$0x1]
      %v3949 = vperm.slane %v3947, 0
      %v3951 = vadd.f32 %v3945, %v3949
      %v3952 = vadd.f32 %v3946, %v3949
      %v3953 = vpack.c.bf16 %v3951, %v3951
      %v3954 = vpack.c.bf16 %v3952, %v3952
      %3955 = vst [vmem:[%s331] sm:$0xf] %v3953
      %3956 = vst [vmem:[%s331 + $0x4] sm:$0xf] %v3954
      %s3957 = smul.u32 2, %s17
      %p3958 = scmp.lt.s32.totalorder %s3957, 3
      %s3959 = scalar_select %p3958, %s3957, 3
      %s3960 = smul.addr %s3959, 4
      %s3961 = scalar_lea.vmem %s6, %s3960
      // Predicated region
      $region45: #{gration_forward.6} parent=43 // pred_check
        %p3962 = pneg %p181
      $region46: #{gration_forward.6} parent=43 // pred_check_branch
        %3964 = sbr.rel (%p3962) target = $region48
      $region47: #{gration_forward.6} parent=43 // pred_region
        %s3965 = smul.u32 2, %s17
      $region48: #{gration_forward.6} parent=43 // pred_fallthru
        _
    $region44: #{gration_forward.6} parent=5 // pred_fallthru
      _
    %p3966 = scmp.le.s32.totalorder 2, %s12
    // Predicated region
    $region49: #{gration_forward.6} parent=5 // pred_check
      %p3967 = pneg %p3966
    $region50: #{gration_forward.6} parent=5 // pred_check_branch
      %3969 = sbr.rel (%p3967) target = $region52
    $region51: #{gration_forward.6} parent=5 // pred_region
      %s3970 = ssub.s32 %s12, 2
      // Predicated region
      $region53: #{gration_forward.6} parent=51 // pred_check
        %p3971 = pneg %p187
      $region54: #{gration_forward.6} parent=51 // pred_check_branch
        %3973 = sbr.rel (%p3971) target = $region56
      $region55: #{gration_forward.6} parent=51 // pred_region
        %s3974 = smul.u32 2, %s18
        %p3975 = scmp.lt.s32.totalorder %s3974, 3
        %s3976 = scalar_select %p3975, %s3974, 3
        %s3977 = smul.addr %s3976, 4
        %s3978 = scalar_lea.vmem %s6, %s3977
      $region56: #{gration_forward.6} parent=51 // pred_fallthru
        _
    $region52: #{gration_forward.6} parent=5 // pred_fallthru
      _
  $region6: #{gration_forward.6} parent=0 // loop_footer
    %s16 = sadd.s32 1, %s12
  $region7: #{gration_forward.6} parent=0 // loop_footer_branch
    %11 = sbr.rel target = $region3
  $region8: #{gration_forward.6} parent=0 // loop_exit
    _

</llo_original>
